<compile_context>
chip_gen: v7x
topology: tpu7x:2x2x1
jax: 0.10.0
libtpu: 0.0.40
codegen_flags: <defaults>
</compile_context>

<pallas_src>
import jax
import jax.numpy as jnp
from jax import lax
from jax.experimental import pallas as pl
from jax.experimental.pallas import tpu as pltpu

# Small, TPU-friendly shapes consistent with the module (H plays the role of 500).
T = 8          # max sequence length
B = 8          # batch
H = 128        # hidden_size (and embedding dim)
VOCAB = 100    # voc.num_words


def bigru_kernel(x_ref,        # (T*B, H)   embedded tokens, flattened seq-major, bf16
                 len_ref,      # (B, 1)     int32 lengths
                 wi_ref,       # (H, 6H)    [W_ih_f^T | W_ih_b^T], bf16
                 bi_ref,       # (1, 6H)    folded input-side biases (b_ih + b_hh for r,z), f32
                 whfb_ref,     # (2H, 6H)   blockdiag(W_hh_f^T, W_hh_b^T), bf16
                 bhnf_ref,     # (1, H)     b_hh_n forward, f32
                 bhnb_ref,     # (1, H)     b_hh_n backward, f32
                 out_ref,      # (T, B, H)  summed outputs
                 hid_ref,      # (2, B, H)  final hidden (fwd, bwd)
                 gif_ref,      # scratch (T, B, 3H) hoisted input proj, forward (f32)
                 gib_ref,      # scratch (T, B, 3H) hoisted input proj, backward (f32)
                 outb_ref):    # scratch (T, B, H)  backward-direction outputs
    T_, B_, H_ = out_ref.shape
    H2 = 2 * H_
    H3 = 3 * H_

    # --- (1) hoisted bf16 input-side projection: one MXU call for everything, f32 acc ---
    gi = jnp.dot(x_ref[...], wi_ref[...],
                 preferred_element_type=jnp.float32) + bi_ref[...]          # (T*B, 6H) f32
    gif_ref[...] = gi[:, :H3].reshape(T_, B_, H3)
    gib_ref[...] = gi[:, H3:].reshape(T_, B_, H3)

    lengths = len_ref[...]                                   # (B, 1) int32
    # hoist the tiny bias broadcasts (2 vregs) out of the loop; JAX doesn't CSE them
    bhnf = jnp.broadcast_to(bhnf_ref[...], (B_, H_))
    bhnb = jnp.broadcast_to(bhnb_ref[...], (B_, H_))

    # --- (2) single unrolled loop; fwd processes t, bwd processes T-1-t ---
    def body(t, carry):
        hf, hb = carry
        tb = T_ - 1 - t

        # Fused 2H-deep block-diagonal recurrent matmul for BOTH directions.
        # whfb_ref is read INSIDE the loop (96 bf16 vregs -- never hold it live
        # across the unrolled loop) so vld streams straight into vmatmul.
        hcat = jnp.concatenate([hf, hb], axis=-1).astype(jnp.bfloat16)       # (B, 2H) bf16
        gh = jnp.dot(hcat, whfb_ref[...],
                     preferred_element_type=jnp.float32)                     # (B, 6H) f32
        # TODO(synk): on v5e, hold the RHS weight-stationary across all T steps via
        # pltpu.matmul_push_rhs / matmul_acc_lhs / matmul_pop (re-validate on v7x MRB).

        gi_f = gif_ref[t]                                                    # (B, 3H) f32
        gi_b = gib_ref[tb]

        # forward GRU cell; r/z sigmoids fused into one 2H-wide call
        rz_f = jax.nn.sigmoid(gi_f[:, :H2] + gh[:, :H2])
        r_f, z_f = rz_f[:, :H_], rz_f[:, H_:]
        n_f = jnp.tanh(gi_f[:, H2:] + r_f * (gh[:, H2:H3] + bhnf))
        hf_new = (1.0 - z_f) * n_f + z_f * hf

        # backward GRU cell
        rz_b = jax.nn.sigmoid(gi_b[:, :H2] + gh[:, H3:H3 + H2])
        r_b, z_b = rz_b[:, :H_], rz_b[:, H_:]
        n_b = jnp.tanh(gi_b[:, H2:] + r_b * (gh[:, H3 + H2:] + bhnb))
        hb_new = (1.0 - z_b) * n_b + z_b * hb

        mf = lengths > t                                     # (B, 1) bool
        mb = lengths > tb

        out_ref[t] = jnp.where(mf, hf_new, 0.0)              # padded steps -> 0
        outb_ref[tb] = jnp.where(mb, hb_new, 0.0)

        hf = jnp.where(mf, hf_new, hf)                       # freeze h past length
        hb = jnp.where(mb, hb_new, hb)
        return (hf, hb)

    h0 = jnp.zeros((B_, H_), jnp.float32)
    hf, hb = lax.fori_loop(0, T_, body, (h0, h0), unroll=True)

    # --- (3) one fused lane-dense combine of the two directions ---
    out_ref[...] = out_ref[...] + outb_ref[...]
    hid_ref[0] = hf
    hid_ref[1] = hb


def init_params(key):
    ks = jax.random.split(key, 9)
    scale = 1.0 / jnp.sqrt(jnp.float32(H))

    def u(k, shape):
        return jax.random.uniform(k, shape, jnp.float32, -scale, scale)

    return dict(
        embedding=jax.random.normal(ks[0], (VOCAB, H), jnp.float32),
        w_ih_f=u(ks[1], (3 * H, H)), w_hh_f=u(ks[2], (3 * H, H)),
        b_ih_f=u(ks[3], (3 * H,)), b_hh_f=u(ks[4], (3 * H,)),
        w_ih_b=u(ks[5], (3 * H, H)), w_hh_b=u(ks[6], (3 * H, H)),
        b_ih_b=u(ks[7], (3 * H,)), b_hh_b=u(ks[8], (3 * H,)),
    )


def _pack_params(params):
    """Host-side packing: transpose, concat directions, fold biases, cast matmul operands to bf16."""
    # input-side weights for both directions: (H, 6H), bf16
    wi = jnp.concatenate([params["w_ih_f"].T, params["w_ih_b"].T],
                         axis=1).astype(jnp.bfloat16)

    def fold_bias(b_ih, b_hh):
        # r,z gates: b_ih + b_hh can be summed; n gate: only b_ih goes here
        return jnp.concatenate([b_ih[:H] + b_hh[:H],
                                b_ih[H:2 * H] + b_hh[H:2 * H],
                                b_ih[2 * H:]])

    bi = jnp.concatenate([fold_bias(params["b_ih_f"], params["b_hh_f"]),
                          fold_bias(params["b_ih_b"], params["b_hh_b"])])[None, :]  # (1, 6H) f32

    # block-diagonal fused recurrent weights: (2H, 6H), bf16
    whfb = jnp.zeros((2 * H, 6 * H), jnp.float32)
    whfb = whfb.at[:H, :3 * H].set(params["w_hh_f"].T)
    whfb = whfb.at[H:, 3 * H:].set(params["w_hh_b"].T)
    whfb = whfb.astype(jnp.bfloat16)

    bhnf = params["b_hh_f"][2 * H:][None, :]      # (1, H) f32
    bhnb = params["b_hh_b"][2 * H:][None, :]
    return wi, bi, whfb, bhnf, bhnb


def encoder_rnn_forward(input_seq, input_lengths, params):
    # Glue: embedding gather stays in plain JAX (negligible at toy sizes).
    # TODO(synk): at real sizes, pull the gather into the kernel via
    # PrefetchScalarGridSpec(num_scalar_prefetch=1) + pl.Element row-gather on an
    # HBM-resident embedding table to avoid the extra HBM round-trip.
    emb = params["embedding"][input_seq].astype(jnp.bfloat16).reshape(T * B, H)   # (T*B, H) bf16
    lengths = input_lengths.astype(jnp.int32).reshape(B, 1)                       # (B, 1)
    wi, bi, whfb, bhnf, bhnb = _pack_params(params)

    vmem = pl.BlockSpec(memory_space=pltpu.MemorySpace.VMEM)
    outputs, hidden = pl.pallas_call(
        bigru_kernel,
        out_shape=(jax.ShapeDtypeStruct((T, B, H), jnp.float32),
                   jax.ShapeDtypeStruct((2, B, H), jnp.float32)),
        in_specs=[vmem] * 7,
        out_specs=(vmem, vmem),
        scratch_shapes=[pltpu.VMEM((T, B, 3 * H), jnp.float32),
                        pltpu.VMEM((T, B, 3 * H), jnp.float32),
                        pltpu.VMEM((T, B, H), jnp.float32)],
        # TODO(synk): at real sizes (H=500->512, large T/B) T-tile the hoisted input
        # projection with a grid axis + vmem_limit_bytes sized for v7x's 64 MiB VMEM,
        # and on v7x split the two directions across the two TensorCores (parallel
        # grid axis / pl.core_map) instead of the fused block-diagonal matmul.
    )(emb, lengths, wi, bi, whfb, bhnf, bhnb)
    return outputs, hidden


def reference_forward(input_seq, input_lengths, params, matmul_dtype=jnp.float32):
    """Pure-JAX reference matching PyTorch packed bidirectional GRU semantics.

    matmul_dtype=bf16 mirrors the kernel's MXU input precision (f32 accumulation,
    f32 gate math) for a tight-tolerance correctness check.
    """
    emb = params["embedding"][input_seq]
    mask = (jnp.arange(T)[:, None] < input_lengths[None, :]).astype(jnp.float32)[:, :, None]

    def cell(h, x, w_ih, w_hh, b_ih, b_hh):
        gi = jnp.dot(x.astype(matmul_dtype), w_ih.T.astype(matmul_dtype),
                     preferred_element_type=jnp.float32) + b_ih
        gh = jnp.dot(h.astype(matmul_dtype), w_hh.T.astype(matmul_dtype),
                     preferred_element_type=jnp.float32) + b_hh
        i_r, i_z, i_n = jnp.split(gi, 3, axis=-1)
        h_r, h_z, h_n = jnp.split(gh, 3, axis=-1)
        r = jax.nn.sigmoid(i_r + h_r)
        z = jax.nn.sigmoid(i_z + h_z)
        n = jnp.tanh(i_n + r * h_n)
        return (1 - z) * n + z * h

    def fwd_step(h, xm):
        x, m = xm
        h_new = cell(h, x, params["w_ih_f"], params["w_hh_f"],
                     params["b_ih_f"], params["b_hh_f"])
        return m * h_new + (1 - m) * h, m * h_new

    hf, out_f = lax.scan(fwd_step, jnp.zeros((B, H), jnp.float32), (emb, mask))

    def bwd_step(h, xm):
        x, m = xm
        h_new = cell(h, x, params["w_ih_b"], params["w_hh_b"],
                     params["b_ih_b"], params["b_hh_b"])
        return m * h_new + (1 - m) * h, m * h_new

    hb, out_b_rev = lax.scan(bwd_step, jnp.zeros((B, H), jnp.float32),
                             (emb[::-1], mask[::-1]))
    out_b = out_b_rev[::-1]
    return out_f + out_b, jnp.stack([hf, hb])


if __name__ == "__main__":
    key = jax.random.PRNGKey(0)
    pkey, skey = jax.random.split(key)
    params = init_params(pkey)

    input_seq = jax.random.randint(skey, (T, B), 0, VOCAB, dtype=jnp.int32)
    # pack_padded_sequence requires descending lengths, max length = T
    input_lengths = jnp.array([8, 7, 6, 5, 5, 4, 2, 1], dtype=jnp.int32)

    outputs, hidden = encoder_rnn_forward(input_seq, input_lengths, params)
    outputs = jax.block_until_ready(outputs)
    hidden = jax.block_until_ready(hidden)
    assert outputs.shape == (T, B, H) and hidden.shape == (2, B, H)

    # Tight check against a bf16-matmul-matched reference (same rounding as kernel).
    ref_out_bf16, ref_hid_bf16 = reference_forward(input_seq, input_lengths, params,
                                                   matmul_dtype=jnp.bfloat16)
    assert jnp.allclose(outputs, ref_out_bf16, rtol=5e-3, atol=5e-3)
    assert jnp.allclose(hidden, ref_hid_bf16, rtol=5e-3, atol=5e-3)

    # Looser semantic check against the full-f32 reference (bf16 MXU inputs drift).
    ref_out_f32, ref_hid_f32 = reference_forward(input_seq, input_lengths, params,
                                                 matmul_dtype=jnp.float32)
    assert jnp.allclose(outputs, ref_out_f32, rtol=5e-2, atol=5e-2)
    assert jnp.allclose(hidden, ref_hid_f32, rtol=5e-2, atol=5e-2)

    print("KERNEL_OK")
</pallas_src>

<mosaic_0001>
module attributes {stable_mosaic.version = 11 : i64} {
  func.func @bigru_kernel(%arg0: memref<64x128xbf16, #tpu.memory_space<vmem>>, %arg1: memref<8x1xi32, #tpu.memory_space<vmem>>, %arg2: memref<128x768xbf16, #tpu.memory_space<vmem>>, %arg3: memref<1x768xf32, #tpu.memory_space<vmem>>, %arg4: memref<256x768xbf16, #tpu.memory_space<vmem>>, %arg5: memref<1x128xf32, #tpu.memory_space<vmem>>, %arg6: memref<1x128xf32, #tpu.memory_space<vmem>>, %arg7: memref<8x8x128xf32, #tpu.memory_space<vmem>>, %arg8: memref<2x8x128xf32, #tpu.memory_space<vmem>>, %arg9: memref<8x8x384xf32, #tpu.memory_space<vmem>>, %arg10: memref<8x8x384xf32, #tpu.memory_space<vmem>>, %arg11: memref<8x8x128xf32, #tpu.memory_space<vmem>>) attributes {dimension_semantics = [], scalar_prefetch = 0 : i64, scratch_operands = 3 : i64, tpu.core_type = #tpu.core_type<tc>} {
    %c0 = arith.constant 0 : index
    %c0_0 = arith.constant 0 : index
    %0 = vector.load %arg0[%c0, %c0_0] : memref<64x128xbf16, #tpu.memory_space<vmem>>, vector<64x128xbf16>
    %c0_1 = arith.constant 0 : index
    %c0_2 = arith.constant 0 : index
    %1 = vector.load %arg2[%c0_1, %c0_2] : memref<128x768xbf16, #tpu.memory_space<vmem>>, vector<128x768xbf16>
    %cst = arith.constant dense<0.000000e+00> : vector<64x768xf32>
    %2 = tpu.matmul %0, %1, %cst {dimension_numbers = #tpu.dot_dimension_numbers<[1], [0], [0], [1], [0, 0, 1, 1], [], []>} : vector<64x128xbf16>, vector<128x768xbf16>, vector<64x768xf32> -> vector<64x768xf32>
    %c0_3 = arith.constant 0 : index
    %c0_4 = arith.constant 0 : index
    %3 = vector.load %arg3[%c0_3, %c0_4] : memref<1x768xf32, #tpu.memory_space<vmem>>, vector<1x768xf32>
    %4 = vector.broadcast %3 : vector<1x768xf32> to vector<64x768xf32>
    %5 = arith.addf %2, %4 : vector<64x768xf32>
    %6 = vector.extract_strided_slice %5 {offsets = [0, 0], sizes = [64, 384], strides = [1, 1]} : vector<64x768xf32> to vector<64x384xf32>
    %7 = vector.shape_cast %6 : vector<64x384xf32> to vector<8x8x384xf32>
    %c0_5 = arith.constant 0 : index
    %c0_6 = arith.constant 0 : index
    %c0_7 = arith.constant 0 : index
    %8 = vector.load %arg9[%c0_5, %c0_6, %c0_7] : memref<8x8x384xf32, #tpu.memory_space<vmem>>, vector<8x8x384xf32>
    tpu.vector_store %arg9[%c0_5, %c0_6, %c0_7], %7 {strides = array<i32>} : memref<8x8x384xf32, #tpu.memory_space<vmem>>, vector<8x8x384xf32>,
    %9 = vector.extract_strided_slice %5 {offsets = [0, 384], sizes = [64, 384], strides = [1, 1]} : vector<64x768xf32> to vector<64x384xf32>
    %10 = vector.shape_cast %9 : vector<64x384xf32> to vector<8x8x384xf32>
    %c0_8 = arith.constant 0 : index
    %c0_9 = arith.constant 0 : index
    %c0_10 = arith.constant 0 : index
    %11 = vector.load %arg10[%c0_8, %c0_9, %c0_10] : memref<8x8x384xf32, #tpu.memory_space<vmem>>, vector<8x8x384xf32>
    tpu.vector_store %arg10[%c0_8, %c0_9, %c0_10], %10 {strides = array<i32>} : memref<8x8x384xf32, #tpu.memory_space<vmem>>, vector<8x8x384xf32>,
    %c0_11 = arith.constant 0 : index
    %c0_12 = arith.constant 0 : index
    %12 = vector.load %arg1[%c0_11, %c0_12] : memref<8x1xi32, #tpu.memory_space<vmem>>, vector<8x1xi32>
    %c0_13 = arith.constant 0 : index
    %c0_14 = arith.constant 0 : index
    %13 = vector.load %arg5[%c0_13, %c0_14] : memref<1x128xf32, #tpu.memory_space<vmem>>, vector<1x128xf32>
    %14 = vector.shape_cast %13 : vector<1x128xf32> to vector<1x128xf32>
    %15 = vector.broadcast %14 : vector<1x128xf32> to vector<8x128xf32>
    %c0_15 = arith.constant 0 : index
    %c0_16 = arith.constant 0 : index
    %16 = vector.load %arg6[%c0_15, %c0_16] : memref<1x128xf32, #tpu.memory_space<vmem>>, vector<1x128xf32>
    %17 = vector.shape_cast %16 : vector<1x128xf32> to vector<1x128xf32>
    %18 = vector.broadcast %17 : vector<1x128xf32> to vector<8x128xf32>
    %cst_17 = arith.constant 0.000000e+00 : f32
    %19 = vector.broadcast %cst_17 : f32 to vector<8x128xf32>
    %c0_i32 = arith.constant 0 : i32
    %c7_i32 = arith.constant 7 : i32
    %20 = arith.subi %c7_i32, %c0_i32 : i32
    %21 = tpu.concatenate %19, %19 in 1 : vector<8x128xf32>, vector<8x128xf32> -> vector<8x256xf32>
    %22 = arith.truncf %21 : vector<8x256xf32> to vector<8x256xbf16>
    %c0_18 = arith.constant 0 : index
    %c0_19 = arith.constant 0 : index
    %23 = vector.load %arg4[%c0_18, %c0_19] : memref<256x768xbf16, #tpu.memory_space<vmem>>, vector<256x768xbf16>
    %cst_20 = arith.constant dense<0.000000e+00> : vector<8x768xf32>
    %24 = tpu.matmul %22, %23, %cst_20 {dimension_numbers = #tpu.dot_dimension_numbers<[1], [0], [0], [1], [0, 0, 1, 1], [], []>} : vector<8x256xbf16>, vector<256x768xbf16>, vector<8x768xf32> -> vector<8x768xf32>
    %25 = arith.index_cast %c0_i32 : i32 to index
    %c0_21 = arith.constant 0 : index
    %c0_22 = arith.constant 0 : index
    %26 = vector.load %arg9[%25, %c0_21, %c0_22] : memref<8x8x384xf32, #tpu.memory_space<vmem>>, vector<1x8x384xf32>
    %27 = vector.shape_cast %26 : vector<1x8x384xf32> to vector<8x384xf32>
    %28 = arith.index_cast %20 : i32 to index
    %c0_23 = arith.constant 0 : index
    %c0_24 = arith.constant 0 : index
    %29 = vector.load %arg10[%28, %c0_23, %c0_24] : memref<8x8x384xf32, #tpu.memory_space<vmem>>, vector<1x8x384xf32>
    %30 = vector.shape_cast %29 : vector<1x8x384xf32> to vector<8x384xf32>
    %31 = vector.extract_strided_slice %27 {offsets = [0, 0], sizes = [8, 256], strides = [1, 1]} : vector<8x384xf32> to vector<8x256xf32>
    %32 = vector.extract_strided_slice %24 {offsets = [0, 0], sizes = [8, 256], strides = [1, 1]} : vector<8x768xf32> to vector<8x256xf32>
    %33 = arith.addf %31, %32 : vector<8x256xf32>
    %34 = arith.negf %33 : vector<8x256xf32>
    %35 = math.exp %34 : vector<8x256xf32>
    %cst_25 = arith.constant 1.000000e+00 : f32
    %36 = vector.broadcast %cst_25 : f32 to vector<8x256xf32>
    %37 = arith.addf %36, %35 : vector<8x256xf32>
    %38 = arith.divf %36, %37 : vector<8x256xf32>
    %39 = vector.extract_strided_slice %38 {offsets = [0, 0], sizes = [8, 128], strides = [1, 1]} : vector<8x256xf32> to vector<8x128xf32>
    %40 = vector.extract_strided_slice %38 {offsets = [0, 128], sizes = [8, 128], strides = [1, 1]} : vector<8x256xf32> to vector<8x128xf32>
    %41 = vector.extract_strided_slice %27 {offsets = [0, 256], sizes = [8, 128], strides = [1, 1]} : vector<8x384xf32> to vector<8x128xf32>
    %42 = vector.extract_strided_slice %24 {offsets = [0, 256], sizes = [8, 128], strides = [1, 1]} : vector<8x768xf32> to vector<8x128xf32>
    %43 = arith.addf %42, %15 : vector<8x128xf32>
    %44 = arith.mulf %39, %43 : vector<8x128xf32>
    %45 = arith.addf %41, %44 : vector<8x128xf32>
    %46 = math.tanh %45 : vector<8x128xf32>
    %cst_26 = arith.constant 1.000000e+00 : f32
    %47 = vector.broadcast %cst_26 : f32 to vector<8x128xf32>
    %48 = arith.subf %47, %40 : vector<8x128xf32>
    %49 = arith.mulf %48, %46 : vector<8x128xf32>
    %50 = arith.mulf %40, %19 : vector<8x128xf32>
    %51 = arith.addf %49, %50 : vector<8x128xf32>
    %52 = vector.extract_strided_slice %30 {offsets = [0, 0], sizes = [8, 256], strides = [1, 1]} : vector<8x384xf32> to vector<8x256xf32>
    %53 = vector.extract_strided_slice %24 {offsets = [0, 384], sizes = [8, 256], strides = [1, 1]} : vector<8x768xf32> to vector<8x256xf32>
    %54 = arith.addf %52, %53 : vector<8x256xf32>
    %55 = arith.negf %54 : vector<8x256xf32>
    %56 = math.exp %55 : vector<8x256xf32>
    %cst_27 = arith.constant 1.000000e+00 : f32
    %57 = vector.broadcast %cst_27 : f32 to vector<8x256xf32>
    %58 = arith.addf %57, %56 : vector<8x256xf32>
    %59 = arith.divf %57, %58 : vector<8x256xf32>
    %60 = vector.extract_strided_slice %59 {offsets = [0, 0], sizes = [8, 128], strides = [1, 1]} : vector<8x256xf32> to vector<8x128xf32>
    %61 = vector.extract_strided_slice %59 {offsets = [0, 128], sizes = [8, 128], strides = [1, 1]} : vector<8x256xf32> to vector<8x128xf32>
    %62 = vector.extract_strided_slice %30 {offsets = [0, 256], sizes = [8, 128], strides = [1, 1]} : vector<8x384xf32> to vector<8x128xf32>
    %63 = vector.extract_strided_slice %24 {offsets = [0, 640], sizes = [8, 128], strides = [1, 1]} : vector<8x768xf32> to vector<8x128xf32>
    %64 = arith.addf %63, %18 : vector<8x128xf32>
    %65 = arith.mulf %60, %64 : vector<8x128xf32>
    %66 = arith.addf %62, %65 : vector<8x128xf32>
    %67 = math.tanh %66 : vector<8x128xf32>
    %cst_28 = arith.constant 1.000000e+00 : f32
    %68 = vector.broadcast %cst_28 : f32 to vector<8x128xf32>
    %69 = arith.subf %68, %61 : vector<8x128xf32>
    %70 = arith.mulf %69, %67 : vector<8x128xf32>
    %71 = arith.mulf %61, %19 : vector<8x128xf32>
    %72 = arith.addf %70, %71 : vector<8x128xf32>
    %73 = vector.broadcast %c0_i32 : i32 to vector<8x1xi32>
    %74 = arith.cmpi sgt, %12, %73 : vector<8x1xi32>
    %75 = vector.broadcast %20 : i32 to vector<8x1xi32>
    %76 = arith.cmpi sgt, %12, %75 : vector<8x1xi32>
    %cst_29 = arith.constant 0.000000e+00 : f32
    %77 = vector.shape_cast %74 : vector<8x1xi1> to vector<8x1xi1>
    %78 = vector.broadcast %77 : vector<8x1xi1> to vector<8x128xi1>
    %79 = vector.broadcast %cst_29 : f32 to vector<8x128xf32>
    %80 = arith.select %78, %51, %79 : vector<8x128xi1>, vector<8x128xf32>
    %81 = arith.index_cast %c0_i32 : i32 to index
    %c0_30 = arith.constant 0 : index
    %c0_31 = arith.constant 0 : index
    %82 = vector.load %arg7[%81, %c0_30, %c0_31] : memref<8x8x128xf32, #tpu.memory_space<vmem>>, vector<1x8x128xf32>
    %83 = vector.shape_cast %82 : vector<1x8x128xf32> to vector<8x128xf32>
    %84 = vector.shape_cast %80 : vector<8x128xf32> to vector<1x8x128xf32>
    tpu.vector_store %arg7[%81, %c0_30, %c0_31], %84 {strides = array<i32>} : memref<8x8x128xf32, #tpu.memory_space<vmem>>, vector<1x8x128xf32>,
    %cst_32 = arith.constant 0.000000e+00 : f32
    %85 = vector.shape_cast %76 : vector<8x1xi1> to vector<8x1xi1>
    %86 = vector.broadcast %85 : vector<8x1xi1> to vector<8x128xi1>
    %87 = vector.broadcast %cst_32 : f32 to vector<8x128xf32>
    %88 = arith.select %86, %72, %87 : vector<8x128xi1>, vector<8x128xf32>
    %89 = arith.index_cast %20 : i32 to index
    %c0_33 = arith.constant 0 : index
    %c0_34 = arith.constant 0 : index
    %90 = vector.load %arg11[%89, %c0_33, %c0_34] : memref<8x8x128xf32, #tpu.memory_space<vmem>>, vector<1x8x128xf32>
    %91 = vector.shape_cast %90 : vector<1x8x128xf32> to vector<8x128xf32>
    %92 = vector.shape_cast %88 : vector<8x128xf32> to vector<1x8x128xf32>
    tpu.vector_store %arg11[%89, %c0_33, %c0_34], %92 {strides = array<i32>} : memref<8x8x128xf32, #tpu.memory_space<vmem>>, vector<1x8x128xf32>,
    %93 = vector.shape_cast %74 : vector<8x1xi1> to vector<8x1xi1>
    %94 = vector.broadcast %93 : vector<8x1xi1> to vector<8x128xi1>
    %95 = arith.select %94, %51, %19 : vector<8x128xi1>, vector<8x128xf32>
    %96 = vector.shape_cast %76 : vector<8x1xi1> to vector<8x1xi1>
    %97 = vector.broadcast %96 : vector<8x1xi1> to vector<8x128xi1>
    %98 = arith.select %97, %72, %19 : vector<8x128xi1>, vector<8x128xf32>
    %c1_i32 = arith.constant 1 : i32
    %c7_i32_35 = arith.constant 7 : i32
    %99 = arith.subi %c7_i32_35, %c1_i32 : i32
    %100 = tpu.concatenate %95, %98 in 1 : vector<8x128xf32>, vector<8x128xf32> -> vector<8x256xf32>
    %101 = arith.truncf %100 : vector<8x256xf32> to vector<8x256xbf16>
    %c0_36 = arith.constant 0 : index
    %c0_37 = arith.constant 0 : index
    %102 = vector.load %arg4[%c0_36, %c0_37] : memref<256x768xbf16, #tpu.memory_space<vmem>>, vector<256x768xbf16>
    %cst_38 = arith.constant dense<0.000000e+00> : vector<8x768xf32>
    %103 = tpu.matmul %101, %102, %cst_38 {dimension_numbers = #tpu.dot_dimension_numbers<[1], [0], [0], [1], [0, 0, 1, 1], [], []>} : vector<8x256xbf16>, vector<256x768xbf16>, vector<8x768xf32> -> vector<8x768xf32>
    %104 = arith.index_cast %c1_i32 : i32 to index
    %c0_39 = arith.constant 0 : index
    %c0_40 = arith.constant 0 : index
    %105 = vector.load %arg9[%104, %c0_39, %c0_40] : memref<8x8x384xf32, #tpu.memory_space<vmem>>, vector<1x8x384xf32>
    %106 = vector.shape_cast %105 : vector<1x8x384xf32> to vector<8x384xf32>
    %107 = arith.index_cast %99 : i32 to index
    %c0_41 = arith.constant 0 : index
    %c0_42 = arith.constant 0 : index
    %108 = vector.load %arg10[%107, %c0_41, %c0_42] : memref<8x8x384xf32, #tpu.memory_space<vmem>>, vector<1x8x384xf32>
    %109 = vector.shape_cast %108 : vector<1x8x384xf32> to vector<8x384xf32>
    %110 = vector.extract_strided_slice %106 {offsets = [0, 0], sizes = [8, 256], strides = [1, 1]} : vector<8x384xf32> to vector<8x256xf32>
    %111 = vector.extract_strided_slice %103 {offsets = [0, 0], sizes = [8, 256], strides = [1, 1]} : vector<8x768xf32> to vector<8x256xf32>
    %112 = arith.addf %110, %111 : vector<8x256xf32>
    %113 = arith.negf %112 : vector<8x256xf32>
    %114 = math.exp %113 : vector<8x256xf32>
    %cst_43 = arith.constant 1.000000e+00 : f32
    %115 = vector.broadcast %cst_43 : f32 to vector<8x256xf32>
    %116 = arith.addf %115, %114 : vector<8x256xf32>
    %117 = arith.divf %115, %116 : vector<8x256xf32>
    %118 = vector.extract_strided_slice %117 {offsets = [0, 0], sizes = [8, 128], strides = [1, 1]} : vector<8x256xf32> to vector<8x128xf32>
    %119 = vector.extract_strided_slice %117 {offsets = [0, 128], sizes = [8, 128], strides = [1, 1]} : vector<8x256xf32> to vector<8x128xf32>
    %120 = vector.extract_strided_slice %106 {offsets = [0, 256], sizes = [8, 128], strides = [1, 1]} : vector<8x384xf32> to vector<8x128xf32>
    %121 = vector.extract_strided_slice %103 {offsets = [0, 256], sizes = [8, 128], strides = [1, 1]} : vector<8x768xf32> to vector<8x128xf32>
    %122 = arith.addf %121, %15 : vector<8x128xf32>
    %123 = arith.mulf %118, %122 : vector<8x128xf32>
    %124 = arith.addf %120, %123 : vector<8x128xf32>
    %125 = math.tanh %124 : vector<8x128xf32>
    %cst_44 = arith.constant 1.000000e+00 : f32
    %126 = vector.broadcast %cst_44 : f32 to vector<8x128xf32>
    %127 = arith.subf %126, %119 : vector<8x128xf32>
    %128 = arith.mulf %127, %125 : vector<8x128xf32>
    %129 = arith.mulf %119, %95 : vector<8x128xf32>
    %130 = arith.addf %128, %129 : vector<8x128xf32>
    %131 = vector.extract_strided_slice %109 {offsets = [0, 0], sizes = [8, 256], strides = [1, 1]} : vector<8x384xf32> to vector<8x256xf32>
    %132 = vector.extract_strided_slice %103 {offsets = [0, 384], sizes = [8, 256], strides = [1, 1]} : vector<8x768xf32> to vector<8x256xf32>
    %133 = arith.addf %131, %132 : vector<8x256xf32>
    %134 = arith.negf %133 : vector<8x256xf32>
    %135 = math.exp %134 : vector<8x256xf32>
    %cst_45 = arith.constant 1.000000e+00 : f32
    %136 = vector.broadcast %cst_45 : f32 to vector<8x256xf32>
    %137 = arith.addf %136, %135 : vector<8x256xf32>
    %138 = arith.divf %136, %137 : vector<8x256xf32>
    %139 = vector.extract_strided_slice %138 {offsets = [0, 0], sizes = [8, 128], strides = [1, 1]} : vector<8x256xf32> to vector<8x128xf32>
    %140 = vector.extract_strided_slice %138 {offsets = [0, 128], sizes = [8, 128], strides = [1, 1]} : vector<8x256xf32> to vector<8x128xf32>
    %141 = vector.extract_strided_slice %109 {offsets = [0, 256], sizes = [8, 128], strides = [1, 1]} : vector<8x384xf32> to vector<8x128xf32>
    %142 = vector.extract_strided_slice %103 {offsets = [0, 640], sizes = [8, 128], strides = [1, 1]} : vector<8x768xf32> to vector<8x128xf32>
    %143 = arith.addf %142, %18 : vector<8x128xf32>
    %144 = arith.mulf %139, %143 : vector<8x128xf32>
    %145 = arith.addf %141, %144 : vector<8x128xf32>
    %146 = math.tanh %145 : vector<8x128xf32>
    %cst_46 = arith.constant 1.000000e+00 : f32
    %147 = vector.broadcast %cst_46 : f32 to vector<8x128xf32>
    %148 = arith.subf %147, %140 : vector<8x128xf32>
    %149 = arith.mulf %148, %146 : vector<8x128xf32>
    %150 = arith.mulf %140, %98 : vector<8x128xf32>
    %151 = arith.addf %149, %150 : vector<8x128xf32>
    %152 = vector.broadcast %c1_i32 : i32 to vector<8x1xi32>
    %153 = arith.cmpi sgt, %12, %152 : vector<8x1xi32>
    %154 = vector.broadcast %99 : i32 to vector<8x1xi32>
    %155 = arith.cmpi sgt, %12, %154 : vector<8x1xi32>
    %cst_47 = arith.constant 0.000000e+00 : f32
    %156 = vector.shape_cast %153 : vector<8x1xi1> to vector<8x1xi1>
    %157 = vector.broadcast %156 : vector<8x1xi1> to vector<8x128xi1>
    %158 = vector.broadcast %cst_47 : f32 to vector<8x128xf32>
    %159 = arith.select %157, %130, %158 : vector<8x128xi1>, vector<8x128xf32>
    %160 = arith.index_cast %c1_i32 : i32 to index
    %c0_48 = arith.constant 0 : index
    %c0_49 = arith.constant 0 : index
    %161 = vector.load %arg7[%160, %c0_48, %c0_49] : memref<8x8x128xf32, #tpu.memory_space<vmem>>, vector<1x8x128xf32>
    %162 = vector.shape_cast %161 : vector<1x8x128xf32> to vector<8x128xf32>
    %163 = vector.shape_cast %159 : vector<8x128xf32> to vector<1x8x128xf32>
    tpu.vector_store %arg7[%160, %c0_48, %c0_49], %163 {strides = array<i32>} : memref<8x8x128xf32, #tpu.memory_space<vmem>>, vector<1x8x128xf32>,
    %cst_50 = arith.constant 0.000000e+00 : f32
    %164 = vector.shape_cast %155 : vector<8x1xi1> to vector<8x1xi1>
    %165 = vector.broadcast %164 : vector<8x1xi1> to vector<8x128xi1>
    %166 = vector.broadcast %cst_50 : f32 to vector<8x128xf32>
    %167 = arith.select %165, %151, %166 : vector<8x128xi1>, vector<8x128xf32>
    %168 = arith.index_cast %99 : i32 to index
    %c0_51 = arith.constant 0 : index
    %c0_52 = arith.constant 0 : index
    %169 = vector.load %arg11[%168, %c0_51, %c0_52] : memref<8x8x128xf32, #tpu.memory_space<vmem>>, vector<1x8x128xf32>
    %170 = vector.shape_cast %169 : vector<1x8x128xf32> to vector<8x128xf32>
    %171 = vector.shape_cast %167 : vector<8x128xf32> to vector<1x8x128xf32>
    tpu.vector_store %arg11[%168, %c0_51, %c0_52], %171 {strides = array<i32>} : memref<8x8x128xf32, #tpu.memory_space<vmem>>, vector<1x8x128xf32>,
    %172 = vector.shape_cast %153 : vector<8x1xi1> to vector<8x1xi1>
    %173 = vector.broadcast %172 : vector<8x1xi1> to vector<8x128xi1>
    %174 = arith.select %173, %130, %95 : vector<8x128xi1>, vector<8x128xf32>
    %175 = vector.shape_cast %155 : vector<8x1xi1> to vector<8x1xi1>
    %176 = vector.broadcast %175 : vector<8x1xi1> to vector<8x128xi1>
    %177 = arith.select %176, %151, %98 : vector<8x128xi1>, vector<8x128xf32>
    %c2_i32 = arith.constant 2 : i32
    %c7_i32_53 = arith.constant 7 : i32
    %178 = arith.subi %c7_i32_53, %c2_i32 : i32
    %179 = tpu.concatenate %174, %177 in 1 : vector<8x128xf32>, vector<8x128xf32> -> vector<8x256xf32>
    %180 = arith.truncf %179 : vector<8x256xf32> to vector<8x256xbf16>
    %c0_54 = arith.constant 0 : index
    %c0_55 = arith.constant 0 : index
    %181 = vector.load %arg4[%c0_54, %c0_55] : memref<256x768xbf16, #tpu.memory_space<vmem>>, vector<256x768xbf16>
    %cst_56 = arith.constant dense<0.000000e+00> : vector<8x768xf32>
    %182 = tpu.matmul %180, %181, %cst_56 {dimension_numbers = #tpu.dot_dimension_numbers<[1], [0], [0], [1], [0, 0, 1, 1], [], []>} : vector<8x256xbf16>, vector<256x768xbf16>, vector<8x768xf32> -> vector<8x768xf32>
    %183 = arith.index_cast %c2_i32 : i32 to index
    %c0_57 = arith.constant 0 : index
    %c0_58 = arith.constant 0 : index
    %184 = vector.load %arg9[%183, %c0_57, %c0_58] : memref<8x8x384xf32, #tpu.memory_space<vmem>>, vector<1x8x384xf32>
    %185 = vector.shape_cast %184 : vector<1x8x384xf32> to vector<8x384xf32>
    %186 = arith.index_cast %178 : i32 to index
    %c0_59 = arith.constant 0 : index
    %c0_60 = arith.constant 0 : index
    %187 = vector.load %arg10[%186, %c0_59, %c0_60] : memref<8x8x384xf32, #tpu.memory_space<vmem>>, vector<1x8x384xf32>
    %188 = vector.shape_cast %187 : vector<1x8x384xf32> to vector<8x384xf32>
    %189 = vector.extract_strided_slice %185 {offsets = [0, 0], sizes = [8, 256], strides = [1, 1]} : vector<8x384xf32> to vector<8x256xf32>
    %190 = vector.extract_strided_slice %182 {offsets = [0, 0], sizes = [8, 256], strides = [1, 1]} : vector<8x768xf32> to vector<8x256xf32>
    %191 = arith.addf %189, %190 : vector<8x256xf32>
    %192 = arith.negf %191 : vector<8x256xf32>
    %193 = math.exp %192 : vector<8x256xf32>
    %cst_61 = arith.constant 1.000000e+00 : f32
    %194 = vector.broadcast %cst_61 : f32 to vector<8x256xf32>
    %195 = arith.addf %194, %193 : vector<8x256xf32>
    %196 = arith.divf %194, %195 : vector<8x256xf32>
    %197 = vector.extract_strided_slice %196 {offsets = [0, 0], sizes = [8, 128], strides = [1, 1]} : vector<8x256xf32> to vector<8x128xf32>
    %198 = vector.extract_strided_slice %196 {offsets = [0, 128], sizes = [8, 128], strides = [1, 1]} : vector<8x256xf32> to vector<8x128xf32>
    %199 = vector.extract_strided_slice %185 {offsets = [0, 256], sizes = [8, 128], strides = [1, 1]} : vector<8x384xf32> to vector<8x128xf32>
    %200 = vector.extract_strided_slice %182 {offsets = [0, 256], sizes = [8, 128], strides = [1, 1]} : vector<8x768xf32> to vector<8x128xf32>
    %201 = arith.addf %200, %15 : vector<8x128xf32>
    %202 = arith.mulf %197, %201 : vector<8x128xf32>
    %203 = arith.addf %199, %202 : vector<8x128xf32>
    %204 = math.tanh %203 : vector<8x128xf32>
    %cst_62 = arith.constant 1.000000e+00 : f32
    %205 = vector.broadcast %cst_62 : f32 to vector<8x128xf32>
    %206 = arith.subf %205, %198 : vector<8x128xf32>
    %207 = arith.mulf %206, %204 : vector<8x128xf32>
    %208 = arith.mulf %198, %174 : vector<8x128xf32>
    %209 = arith.addf %207, %208 : vector<8x128xf32>
    %210 = vector.extract_strided_slice %188 {offsets = [0, 0], sizes = [8, 256], strides = [1, 1]} : vector<8x384xf32> to vector<8x256xf32>
    %211 = vector.extract_strided_slice %182 {offsets = [0, 384], sizes = [8, 256], strides = [1, 1]} : vector<8x768xf32> to vector<8x256xf32>
    %212 = arith.addf %210, %211 : vector<8x256xf32>
    %213 = arith.negf %212 : vector<8x256xf32>
    %214 = math.exp %213 : vector<8x256xf32>
    %cst_63 = arith.constant 1.000000e+00 : f32
    %215 = vector.broadcast %cst_63 : f32 to vector<8x256xf32>
    %216 = arith.addf %215, %214 : vector<8x256xf32>
    %217 = arith.divf %215, %216 : vector<8x256xf32>
    %218 = vector.extract_strided_slice %217 {offsets = [0, 0], sizes = [8, 128], strides = [1, 1]} : vector<8x256xf32> to vector<8x128xf32>
    %219 = vector.extract_strided_slice %217 {offsets = [0, 128], sizes = [8, 128], strides = [1, 1]} : vector<8x256xf32> to vector<8x128xf32>
    %220 = vector.extract_strided_slice %188 {offsets = [0, 256], sizes = [8, 128], strides = [1, 1]} : vector<8x384xf32> to vector<8x128xf32>
    %221 = vector.extract_strided_slice %182 {offsets = [0, 640], sizes = [8, 128], strides = [1, 1]} : vector<8x768xf32> to vector<8x128xf32>
    %222 = arith.addf %221, %18 : vector<8x128xf32>
    %223 = arith.mulf %218, %222 : vector<8x128xf32>
    %224 = arith.addf %220, %223 : vector<8x128xf32>
    %225 = math.tanh %224 : vector<8x128xf32>
    %cst_64 = arith.constant 1.000000e+00 : f32
    %226 = vector.broadcast %cst_64 : f32 to vector<8x128xf32>
    %227 = arith.subf %226, %219 : vector<8x128xf32>
    %228 = arith.mulf %227, %225 : vector<8x128xf32>
    %229 = arith.mulf %219, %177 : vector<8x128xf32>
    %230 = arith.addf %228, %229 : vector<8x128xf32>
    %231 = vector.broadcast %c2_i32 : i32 to vector<8x1xi32>
    %232 = arith.cmpi sgt, %12, %231 : vector<8x1xi32>
    %233 = vector.broadcast %178 : i32 to vector<8x1xi32>
    %234 = arith.cmpi sgt, %12, %233 : vector<8x1xi32>
    %cst_65 = arith.constant 0.000000e+00 : f32
    %235 = vector.shape_cast %232 : vector<8x1xi1> to vector<8x1xi1>
    %236 = vector.broadcast %235 : vector<8x1xi1> to vector<8x128xi1>
    %237 = vector.broadcast %cst_65 : f32 to vector<8x128xf32>
    %238 = arith.select %236, %209, %237 : vector<8x128xi1>, vector<8x128xf32>
    %239 = arith.index_cast %c2_i32 : i32 to index
    %c0_66 = arith.constant 0 : index
    %c0_67 = arith.constant 0 : index
    %240 = vector.load %arg7[%239, %c0_66, %c0_67] : memref<8x8x128xf32, #tpu.memory_space<vmem>>, vector<1x8x128xf32>
    %241 = vector.shape_cast %240 : vector<1x8x128xf32> to vector<8x128xf32>
    %242 = vector.shape_cast %238 : vector<8x128xf32> to vector<1x8x128xf32>
    tpu.vector_store %arg7[%239, %c0_66, %c0_67], %242 {strides = array<i32>} : memref<8x8x128xf32, #tpu.memory_space<vmem>>, vector<1x8x128xf32>,
    %cst_68 = arith.constant 0.000000e+00 : f32
    %243 = vector.shape_cast %234 : vector<8x1xi1> to vector<8x1xi1>
    %244 = vector.broadcast %243 : vector<8x1xi1> to vector<8x128xi1>
    %245 = vector.broadcast %cst_68 : f32 to vector<8x128xf32>
    %246 = arith.select %244, %230, %245 : vector<8x128xi1>, vector<8x128xf32>
    %247 = arith.index_cast %178 : i32 to index
    %c0_69 = arith.constant 0 : index
    %c0_70 = arith.constant 0 : index
    %248 = vector.load %arg11[%247, %c0_69, %c0_70] : memref<8x8x128xf32, #tpu.memory_space<vmem>>, vector<1x8x128xf32>
    %249 = vector.shape_cast %248 : vector<1x8x128xf32> to vector<8x128xf32>
    %250 = vector.shape_cast %246 : vector<8x128xf32> to vector<1x8x128xf32>
    tpu.vector_store %arg11[%247, %c0_69, %c0_70], %250 {strides = array<i32>} : memref<8x8x128xf32, #tpu.memory_space<vmem>>, vector<1x8x128xf32>,
    %251 = vector.shape_cast %232 : vector<8x1xi1> to vector<8x1xi1>
    %252 = vector.broadcast %251 : vector<8x1xi1> to vector<8x128xi1>
    %253 = arith.select %252, %209, %174 : vector<8x128xi1>, vector<8x128xf32>
    %254 = vector.shape_cast %234 : vector<8x1xi1> to vector<8x1xi1>
    %255 = vector.broadcast %254 : vector<8x1xi1> to vector<8x128xi1>
    %256 = arith.select %255, %230, %177 : vector<8x128xi1>, vector<8x128xf32>
    %c3_i32 = arith.constant 3 : i32
    %c7_i32_71 = arith.constant 7 : i32
    %257 = arith.subi %c7_i32_71, %c3_i32 : i32
    %258 = tpu.concatenate %253, %256 in 1 : vector<8x128xf32>, vector<8x128xf32> -> vector<8x256xf32>
    %259 = arith.truncf %258 : vector<8x256xf32> to vector<8x256xbf16>
    %c0_72 = arith.constant 0 : index
    %c0_73 = arith.constant 0 : index
    %260 = vector.load %arg4[%c0_72, %c0_73] : memref<256x768xbf16, #tpu.memory_space<vmem>>, vector<256x768xbf16>
    %cst_74 = arith.constant dense<0.000000e+00> : vector<8x768xf32>
    %261 = tpu.matmul %259, %260, %cst_74 {dimension_numbers = #tpu.dot_dimension_numbers<[1], [0], [0], [1], [0, 0, 1, 1], [], []>} : vector<8x256xbf16>, vector<256x768xbf16>, vector<8x768xf32> -> vector<8x768xf32>
    %262 = arith.index_cast %c3_i32 : i32 to index
    %c0_75 = arith.constant 0 : index
    %c0_76 = arith.constant 0 : index
    %263 = vector.load %arg9[%262, %c0_75, %c0_76] : memref<8x8x384xf32, #tpu.memory_space<vmem>>, vector<1x8x384xf32>
    %264 = vector.shape_cast %263 : vector<1x8x384xf32> to vector<8x384xf32>
    %265 = arith.index_cast %257 : i32 to index
    %c0_77 = arith.constant 0 : index
    %c0_78 = arith.constant 0 : index
    %266 = vector.load %arg10[%265, %c0_77, %c0_78] : memref<8x8x384xf32, #tpu.memory_space<vmem>>, vector<1x8x384xf32>
    %267 = vector.shape_cast %266 : vector<1x8x384xf32> to vector<8x384xf32>
    %268 = vector.extract_strided_slice %264 {offsets = [0, 0], sizes = [8, 256], strides = [1, 1]} : vector<8x384xf32> to vector<8x256xf32>
    %269 = vector.extract_strided_slice %261 {offsets = [0, 0], sizes = [8, 256], strides = [1, 1]} : vector<8x768xf32> to vector<8x256xf32>
    %270 = arith.addf %268, %269 : vector<8x256xf32>
    %271 = arith.negf %270 : vector<8x256xf32>
    %272 = math.exp %271 : vector<8x256xf32>
    %cst_79 = arith.constant 1.000000e+00 : f32
    %273 = vector.broadcast %cst_79 : f32 to vector<8x256xf32>
    %274 = arith.addf %273, %272 : vector<8x256xf32>
    %275 = arith.divf %273, %274 : vector<8x256xf32>
    %276 = vector.extract_strided_slice %275 {offsets = [0, 0], sizes = [8, 128], strides = [1, 1]} : vector<8x256xf32> to vector<8x128xf32>
    %277 = vector.extract_strided_slice %275 {offsets = [0, 128], sizes = [8, 128], strides = [1, 1]} : vector<8x256xf32> to vector<8x128xf32>
    %278 = vector.extract_strided_slice %264 {offsets = [0, 256], sizes = [8, 128], strides = [1, 1]} : vector<8x384xf32> to vector<8x128xf32>
    %279 = vector.extract_strided_slice %261 {offsets = [0, 256], sizes = [8, 128], strides = [1, 1]} : vector<8x768xf32> to vector<8x128xf32>
    %280 = arith.addf %279, %15 : vector<8x128xf32>
    %281 = arith.mulf %276, %280 : vector<8x128xf32>
    %282 = arith.addf %278, %281 : vector<8x128xf32>
    %283 = math.tanh %282 : vector<8x128xf32>
    %cst_80 = arith.constant 1.000000e+00 : f32
    %284 = vector.broadcast %cst_80 : f32 to vector<8x128xf32>
    %285 = arith.subf %284, %277 : vector<8x128xf32>
    %286 = arith.mulf %285, %283 : vector<8x128xf32>
    %287 = arith.mulf %277, %253 : vector<8x128xf32>
    %288 = arith.addf %286, %287 : vector<8x128xf32>
    %289 = vector.extract_strided_slice %267 {offsets = [0, 0], sizes = [8, 256], strides = [1, 1]} : vector<8x384xf32> to vector<8x256xf32>
    %290 = vector.extract_strided_slice %261 {offsets = [0, 384], sizes = [8, 256], strides = [1, 1]} : vector<8x768xf32> to vector<8x256xf32>
    %291 = arith.addf %289, %290 : vector<8x256xf32>
    %292 = arith.negf %291 : vector<8x256xf32>
    %293 = math.exp %292 : vector<8x256xf32>
    %cst_81 = arith.constant 1.000000e+00 : f32
    %294 = vector.broadcast %cst_81 : f32 to vector<8x256xf32>
    %295 = arith.addf %294, %293 : vector<8x256xf32>
    %296 = arith.divf %294, %295 : vector<8x256xf32>
    %297 = vector.extract_strided_slice %296 {offsets = [0, 0], sizes = [8, 128], strides = [1, 1]} : vector<8x256xf32> to vector<8x128xf32>
    %298 = vector.extract_strided_slice %296 {offsets = [0, 128], sizes = [8, 128], strides = [1, 1]} : vector<8x256xf32> to vector<8x128xf32>
    %299 = vector.extract_strided_slice %267 {offsets = [0, 256], sizes = [8, 128], strides = [1, 1]} : vector<8x384xf32> to vector<8x128xf32>
    %300 = vector.extract_strided_slice %261 {offsets = [0, 640], sizes = [8, 128], strides = [1, 1]} : vector<8x768xf32> to vector<8x128xf32>
    %301 = arith.addf %300, %18 : vector<8x128xf32>
    %302 = arith.mulf %297, %301 : vector<8x128xf32>
    %303 = arith.addf %299, %302 : vector<8x128xf32>
    %304 = math.tanh %303 : vector<8x128xf32>
    %cst_82 = arith.constant 1.000000e+00 : f32
    %305 = vector.broadcast %cst_82 : f32 to vector<8x128xf32>
    %306 = arith.subf %305, %298 : vector<8x128xf32>
    %307 = arith.mulf %306, %304 : vector<8x128xf32>
    %308 = arith.mulf %298, %256 : vector<8x128xf32>
    %309 = arith.addf %307, %308 : vector<8x128xf32>
    %310 = vector.broadcast %c3_i32 : i32 to vector<8x1xi32>
    %311 = arith.cmpi sgt, %12, %310 : vector<8x1xi32>
    %312 = vector.broadcast %257 : i32 to vector<8x1xi32>
    %313 = arith.cmpi sgt, %12, %312 : vector<8x1xi32>
    %cst_83 = arith.constant 0.000000e+00 : f32
    %314 = vector.shape_cast %311 : vector<8x1xi1> to vector<8x1xi1>
    %315 = vector.broadcast %314 : vector<8x1xi1> to vector<8x128xi1>
    %316 = vector.broadcast %cst_83 : f32 to vector<8x128xf32>
    %317 = arith.select %315, %288, %316 : vector<8x128xi1>, vector<8x128xf32>
    %318 = arith.index_cast %c3_i32 : i32 to index
    %c0_84 = arith.constant 0 : index
    %c0_85 = arith.constant 0 : index
    %319 = vector.load %arg7[%318, %c0_84, %c0_85] : memref<8x8x128xf32, #tpu.memory_space<vmem>>, vector<1x8x128xf32>
    %320 = vector.shape_cast %319 : vector<1x8x128xf32> to vector<8x128xf32>
    %321 = vector.shape_cast %317 : vector<8x128xf32> to vector<1x8x128xf32>
    tpu.vector_store %arg7[%318, %c0_84, %c0_85], %321 {strides = array<i32>} : memref<8x8x128xf32, #tpu.memory_space<vmem>>, vector<1x8x128xf32>,
    %cst_86 = arith.constant 0.000000e+00 : f32
    %322 = vector.shape_cast %313 : vector<8x1xi1> to vector<8x1xi1>
    %323 = vector.broadcast %322 : vector<8x1xi1> to vector<8x128xi1>
    %324 = vector.broadcast %cst_86 : f32 to vector<8x128xf32>
    %325 = arith.select %323, %309, %324 : vector<8x128xi1>, vector<8x128xf32>
    %326 = arith.index_cast %257 : i32 to index
    %c0_87 = arith.constant 0 : index
    %c0_88 = arith.constant 0 : index
    %327 = vector.load %arg11[%326, %c0_87, %c0_88] : memref<8x8x128xf32, #tpu.memory_space<vmem>>, vector<1x8x128xf32>
    %328 = vector.shape_cast %327 : vector<1x8x128xf32> to vector<8x128xf32>
    %329 = vector.shape_cast %325 : vector<8x128xf32> to vector<1x8x128xf32>
    tpu.vector_store %arg11[%326, %c0_87, %c0_88], %329 {strides = array<i32>} : memref<8x8x128xf32, #tpu.memory_space<vmem>>, vector<1x8x128xf32>,
    %330 = vector.shape_cast %311 : vector<8x1xi1> to vector<8x1xi1>
    %331 = vector.broadcast %330 : vector<8x1xi1> to vector<8x128xi1>
    %332 = arith.select %331, %288, %253 : vector<8x128xi1>, vector<8x128xf32>
    %333 = vector.shape_cast %313 : vector<8x1xi1> to vector<8x1xi1>
    %334 = vector.broadcast %333 : vector<8x1xi1> to vector<8x128xi1>
    %335 = arith.select %334, %309, %256 : vector<8x128xi1>, vector<8x128xf32>
    %c4_i32 = arith.constant 4 : i32
    %c7_i32_89 = arith.constant 7 : i32
    %336 = arith.subi %c7_i32_89, %c4_i32 : i32
    %337 = tpu.concatenate %332, %335 in 1 : vector<8x128xf32>, vector<8x128xf32> -> vector<8x256xf32>
    %338 = arith.truncf %337 : vector<8x256xf32> to vector<8x256xbf16>
    %c0_90 = arith.constant 0 : index
    %c0_91 = arith.constant 0 : index
    %339 = vector.load %arg4[%c0_90, %c0_91] : memref<256x768xbf16, #tpu.memory_space<vmem>>, vector<256x768xbf16>
    %cst_92 = arith.constant dense<0.000000e+00> : vector<8x768xf32>
    %340 = tpu.matmul %338, %339, %cst_92 {dimension_numbers = #tpu.dot_dimension_numbers<[1], [0], [0], [1], [0, 0, 1, 1], [], []>} : vector<8x256xbf16>, vector<256x768xbf16>, vector<8x768xf32> -> vector<8x768xf32>
    %341 = arith.index_cast %c4_i32 : i32 to index
    %c0_93 = arith.constant 0 : index
    %c0_94 = arith.constant 0 : index
    %342 = vector.load %arg9[%341, %c0_93, %c0_94] : memref<8x8x384xf32, #tpu.memory_space<vmem>>, vector<1x8x384xf32>
    %343 = vector.shape_cast %342 : vector<1x8x384xf32> to vector<8x384xf32>
    %344 = arith.index_cast %336 : i32 to index
    %c0_95 = arith.constant 0 : index
    %c0_96 = arith.constant 0 : index
    %345 = vector.load %arg10[%344, %c0_95, %c0_96] : memref<8x8x384xf32, #tpu.memory_space<vmem>>, vector<1x8x384xf32>
    %346 = vector.shape_cast %345 : vector<1x8x384xf32> to vector<8x384xf32>
    %347 = vector.extract_strided_slice %343 {offsets = [0, 0], sizes = [8, 256], strides = [1, 1]} : vector<8x384xf32> to vector<8x256xf32>
    %348 = vector.extract_strided_slice %340 {offsets = [0, 0], sizes = [8, 256], strides = [1, 1]} : vector<8x768xf32> to vector<8x256xf32>
    %349 = arith.addf %347, %348 : vector<8x256xf32>
    %350 = arith.negf %349 : vector<8x256xf32>
    %351 = math.exp %350 : vector<8x256xf32>
    %cst_97 = arith.constant 1.000000e+00 : f32
    %352 = vector.broadcast %cst_97 : f32 to vector<8x256xf32>
    %353 = arith.addf %352, %351 : vector<8x256xf32>
    %354 = arith.divf %352, %353 : vector<8x256xf32>
    %355 = vector.extract_strided_slice %354 {offsets = [0, 0], sizes = [8, 128], strides = [1, 1]} : vector<8x256xf32> to vector<8x128xf32>
    %356 = vector.extract_strided_slice %354 {offsets = [0, 128], sizes = [8, 128], strides = [1, 1]} : vector<8x256xf32> to vector<8x128xf32>
    %357 = vector.extract_strided_slice %343 {offsets = [0, 256], sizes = [8, 128], strides = [1, 1]} : vector<8x384xf32> to vector<8x128xf32>
    %358 = vector.extract_strided_slice %340 {offsets = [0, 256], sizes = [8, 128], strides = [1, 1]} : vector<8x768xf32> to vector<8x128xf32>
    %359 = arith.addf %358, %15 : vector<8x128xf32>
    %360 = arith.mulf %355, %359 : vector<8x128xf32>
    %361 = arith.addf %357, %360 : vector<8x128xf32>
    %362 = math.tanh %361 : vector<8x128xf32>
    %cst_98 = arith.constant 1.000000e+00 : f32
    %363 = vector.broadcast %cst_98 : f32 to vector<8x128xf32>
    %364 = arith.subf %363, %356 : vector<8x128xf32>
    %365 = arith.mulf %364, %362 : vector<8x128xf32>
    %366 = arith.mulf %356, %332 : vector<8x128xf32>
    %367 = arith.addf %365, %366 : vector<8x128xf32>
    %368 = vector.extract_strided_slice %346 {offsets = [0, 0], sizes = [8, 256], strides = [1, 1]} : vector<8x384xf32> to vector<8x256xf32>
    %369 = vector.extract_strided_slice %340 {offsets = [0, 384], sizes = [8, 256], strides = [1, 1]} : vector<8x768xf32> to vector<8x256xf32>
    %370 = arith.addf %368, %369 : vector<8x256xf32>
    %371 = arith.negf %370 : vector<8x256xf32>
    %372 = math.exp %371 : vector<8x256xf32>
    %cst_99 = arith.constant 1.000000e+00 : f32
    %373 = vector.broadcast %cst_99 : f32 to vector<8x256xf32>
    %374 = arith.addf %373, %372 : vector<8x256xf32>
    %375 = arith.divf %373, %374 : vector<8x256xf32>
    %376 = vector.extract_strided_slice %375 {offsets = [0, 0], sizes = [8, 128], strides = [1, 1]} : vector<8x256xf32> to vector<8x128xf32>
    %377 = vector.extract_strided_slice %375 {offsets = [0, 128], sizes = [8, 128], strides = [1, 1]} : vector<8x256xf32> to vector<8x128xf32>
    %378 = vector.extract_strided_slice %346 {offsets = [0, 256], sizes = [8, 128], strides = [1, 1]} : vector<8x384xf32> to vector<8x128xf32>
    %379 = vector.extract_strided_slice %340 {offsets = [0, 640], sizes = [8, 128], strides = [1, 1]} : vector<8x768xf32> to vector<8x128xf32>
    %380 = arith.addf %379, %18 : vector<8x128xf32>
    %381 = arith.mulf %376, %380 : vector<8x128xf32>
    %382 = arith.addf %378, %381 : vector<8x128xf32>
    %383 = math.tanh %382 : vector<8x128xf32>
    %cst_100 = arith.constant 1.000000e+00 : f32
    %384 = vector.broadcast %cst_100 : f32 to vector<8x128xf32>
    %385 = arith.subf %384, %377 : vector<8x128xf32>
    %386 = arith.mulf %385, %383 : vector<8x128xf32>
    %387 = arith.mulf %377, %335 : vector<8x128xf32>
    %388 = arith.addf %386, %387 : vector<8x128xf32>
    %389 = vector.broadcast %c4_i32 : i32 to vector<8x1xi32>
    %390 = arith.cmpi sgt, %12, %389 : vector<8x1xi32>
    %391 = vector.broadcast %336 : i32 to vector<8x1xi32>
    %392 = arith.cmpi sgt, %12, %391 : vector<8x1xi32>
    %cst_101 = arith.constant 0.000000e+00 : f32
    %393 = vector.shape_cast %390 : vector<8x1xi1> to vector<8x1xi1>
    %394 = vector.broadcast %393 : vector<8x1xi1> to vector<8x128xi1>
    %395 = vector.broadcast %cst_101 : f32 to vector<8x128xf32>
    %396 = arith.select %394, %367, %395 : vector<8x128xi1>, vector<8x128xf32>
    %397 = arith.index_cast %c4_i32 : i32 to index
    %c0_102 = arith.constant 0 : index
    %c0_103 = arith.constant 0 : index
    %398 = vector.load %arg7[%397, %c0_102, %c0_103] : memref<8x8x128xf32, #tpu.memory_space<vmem>>, vector<1x8x128xf32>
    %399 = vector.shape_cast %398 : vector<1x8x128xf32> to vector<8x128xf32>
    %400 = vector.shape_cast %396 : vector<8x128xf32> to vector<1x8x128xf32>
    tpu.vector_store %arg7[%397, %c0_102, %c0_103], %400 {strides = array<i32>} : memref<8x8x128xf32, #tpu.memory_space<vmem>>, vector<1x8x128xf32>,
    %cst_104 = arith.constant 0.000000e+00 : f32
    %401 = vector.shape_cast %392 : vector<8x1xi1> to vector<8x1xi1>
    %402 = vector.broadcast %401 : vector<8x1xi1> to vector<8x128xi1>
    %403 = vector.broadcast %cst_104 : f32 to vector<8x128xf32>
    %404 = arith.select %402, %388, %403 : vector<8x128xi1>, vector<8x128xf32>
    %405 = arith.index_cast %336 : i32 to index
    %c0_105 = arith.constant 0 : index
    %c0_106 = arith.constant 0 : index
    %406 = vector.load %arg11[%405, %c0_105, %c0_106] : memref<8x8x128xf32, #tpu.memory_space<vmem>>, vector<1x8x128xf32>
    %407 = vector.shape_cast %406 : vector<1x8x128xf32> to vector<8x128xf32>
    %408 = vector.shape_cast %404 : vector<8x128xf32> to vector<1x8x128xf32>
    tpu.vector_store %arg11[%405, %c0_105, %c0_106], %408 {strides = array<i32>} : memref<8x8x128xf32, #tpu.memory_space<vmem>>, vector<1x8x128xf32>,
    %409 = vector.shape_cast %390 : vector<8x1xi1> to vector<8x1xi1>
    %410 = vector.broadcast %409 : vector<8x1xi1> to vector<8x128xi1>
    %411 = arith.select %410, %367, %332 : vector<8x128xi1>, vector<8x128xf32>
    %412 = vector.shape_cast %392 : vector<8x1xi1> to vector<8x1xi1>
    %413 = vector.broadcast %412 : vector<8x1xi1> to vector<8x128xi1>
    %414 = arith.select %413, %388, %335 : vector<8x128xi1>, vector<8x128xf32>
    %c5_i32 = arith.constant 5 : i32
    %c7_i32_107 = arith.constant 7 : i32
    %415 = arith.subi %c7_i32_107, %c5_i32 : i32
    %416 = tpu.concatenate %411, %414 in 1 : vector<8x128xf32>, vector<8x128xf32> -> vector<8x256xf32>
    %417 = arith.truncf %416 : vector<8x256xf32> to vector<8x256xbf16>
    %c0_108 = arith.constant 0 : index
    %c0_109 = arith.constant 0 : index
    %418 = vector.load %arg4[%c0_108, %c0_109] : memref<256x768xbf16, #tpu.memory_space<vmem>>, vector<256x768xbf16>
    %cst_110 = arith.constant dense<0.000000e+00> : vector<8x768xf32>
    %419 = tpu.matmul %417, %418, %cst_110 {dimension_numbers = #tpu.dot_dimension_numbers<[1], [0], [0], [1], [0, 0, 1, 1], [], []>} : vector<8x256xbf16>, vector<256x768xbf16>, vector<8x768xf32> -> vector<8x768xf32>
    %420 = arith.index_cast %c5_i32 : i32 to index
    %c0_111 = arith.constant 0 : index
    %c0_112 = arith.constant 0 : index
    %421 = vector.load %arg9[%420, %c0_111, %c0_112] : memref<8x8x384xf32, #tpu.memory_space<vmem>>, vector<1x8x384xf32>
    %422 = vector.shape_cast %421 : vector<1x8x384xf32> to vector<8x384xf32>
    %423 = arith.index_cast %415 : i32 to index
    %c0_113 = arith.constant 0 : index
    %c0_114 = arith.constant 0 : index
    %424 = vector.load %arg10[%423, %c0_113, %c0_114] : memref<8x8x384xf32, #tpu.memory_space<vmem>>, vector<1x8x384xf32>
    %425 = vector.shape_cast %424 : vector<1x8x384xf32> to vector<8x384xf32>
    %426 = vector.extract_strided_slice %422 {offsets = [0, 0], sizes = [8, 256], strides = [1, 1]} : vector<8x384xf32> to vector<8x256xf32>
    %427 = vector.extract_strided_slice %419 {offsets = [0, 0], sizes = [8, 256], strides = [1, 1]} : vector<8x768xf32> to vector<8x256xf32>
    %428 = arith.addf %426, %427 : vector<8x256xf32>
    %429 = arith.negf %428 : vector<8x256xf32>
    %430 = math.exp %429 : vector<8x256xf32>
    %cst_115 = arith.constant 1.000000e+00 : f32
    %431 = vector.broadcast %cst_115 : f32 to vector<8x256xf32>
    %432 = arith.addf %431, %430 : vector<8x256xf32>
    %433 = arith.divf %431, %432 : vector<8x256xf32>
    %434 = vector.extract_strided_slice %433 {offsets = [0, 0], sizes = [8, 128], strides = [1, 1]} : vector<8x256xf32> to vector<8x128xf32>
    %435 = vector.extract_strided_slice %433 {offsets = [0, 128], sizes = [8, 128], strides = [1, 1]} : vector<8x256xf32> to vector<8x128xf32>
    %436 = vector.extract_strided_slice %422 {offsets = [0, 256], sizes = [8, 128], strides = [1, 1]} : vector<8x384xf32> to vector<8x128xf32>
    %437 = vector.extract_strided_slice %419 {offsets = [0, 256], sizes = [8, 128], strides = [1, 1]} : vector<8x768xf32> to vector<8x128xf32>
    %438 = arith.addf %437, %15 : vector<8x128xf32>
    %439 = arith.mulf %434, %438 : vector<8x128xf32>
    %440 = arith.addf %436, %439 : vector<8x128xf32>
    %441 = math.tanh %440 : vector<8x128xf32>
    %cst_116 = arith.constant 1.000000e+00 : f32
    %442 = vector.broadcast %cst_116 : f32 to vector<8x128xf32>
    %443 = arith.subf %442, %435 : vector<8x128xf32>
    %444 = arith.mulf %443, %441 : vector<8x128xf32>
    %445 = arith.mulf %435, %411 : vector<8x128xf32>
    %446 = arith.addf %444, %445 : vector<8x128xf32>
    %447 = vector.extract_strided_slice %425 {offsets = [0, 0], sizes = [8, 256], strides = [1, 1]} : vector<8x384xf32> to vector<8x256xf32>
    %448 = vector.extract_strided_slice %419 {offsets = [0, 384], sizes = [8, 256], strides = [1, 1]} : vector<8x768xf32> to vector<8x256xf32>
    %449 = arith.addf %447, %448 : vector<8x256xf32>
    %450 = arith.negf %449 : vector<8x256xf32>
    %451 = math.exp %450 : vector<8x256xf32>
    %cst_117 = arith.constant 1.000000e+00 : f32
    %452 = vector.broadcast %cst_117 : f32 to vector<8x256xf32>
    %453 = arith.addf %452, %451 : vector<8x256xf32>
    %454 = arith.divf %452, %453 : vector<8x256xf32>
    %455 = vector.extract_strided_slice %454 {offsets = [0, 0], sizes = [8, 128], strides = [1, 1]} : vector<8x256xf32> to vector<8x128xf32>
    %456 = vector.extract_strided_slice %454 {offsets = [0, 128], sizes = [8, 128], strides = [1, 1]} : vector<8x256xf32> to vector<8x128xf32>
    %457 = vector.extract_strided_slice %425 {offsets = [0, 256], sizes = [8, 128], strides = [1, 1]} : vector<8x384xf32> to vector<8x128xf32>
    %458 = vector.extract_strided_slice %419 {offsets = [0, 640], sizes = [8, 128], strides = [1, 1]} : vector<8x768xf32> to vector<8x128xf32>
    %459 = arith.addf %458, %18 : vector<8x128xf32>
    %460 = arith.mulf %455, %459 : vector<8x128xf32>
    %461 = arith.addf %457, %460 : vector<8x128xf32>
    %462 = math.tanh %461 : vector<8x128xf32>
    %cst_118 = arith.constant 1.000000e+00 : f32
    %463 = vector.broadcast %cst_118 : f32 to vector<8x128xf32>
    %464 = arith.subf %463, %456 : vector<8x128xf32>
    %465 = arith.mulf %464, %462 : vector<8x128xf32>
    %466 = arith.mulf %456, %414 : vector<8x128xf32>
    %467 = arith.addf %465, %466 : vector<8x128xf32>
    %468 = vector.broadcast %c5_i32 : i32 to vector<8x1xi32>
    %469 = arith.cmpi sgt, %12, %468 : vector<8x1xi32>
    %470 = vector.broadcast %415 : i32 to vector<8x1xi32>
    %471 = arith.cmpi sgt, %12, %470 : vector<8x1xi32>
    %cst_119 = arith.constant 0.000000e+00 : f32
    %472 = vector.shape_cast %469 : vector<8x1xi1> to vector<8x1xi1>
    %473 = vector.broadcast %472 : vector<8x1xi1> to vector<8x128xi1>
    %474 = vector.broadcast %cst_119 : f32 to vector<8x128xf32>
    %475 = arith.select %473, %446, %474 : vector<8x128xi1>, vector<8x128xf32>
    %476 = arith.index_cast %c5_i32 : i32 to index
    %c0_120 = arith.constant 0 : index
    %c0_121 = arith.constant 0 : index
    %477 = vector.load %arg7[%476, %c0_120, %c0_121] : memref<8x8x128xf32, #tpu.memory_space<vmem>>, vector<1x8x128xf32>
    %478 = vector.shape_cast %477 : vector<1x8x128xf32> to vector<8x128xf32>
    %479 = vector.shape_cast %475 : vector<8x128xf32> to vector<1x8x128xf32>
    tpu.vector_store %arg7[%476, %c0_120, %c0_121], %479 {strides = array<i32>} : memref<8x8x128xf32, #tpu.memory_space<vmem>>, vector<1x8x128xf32>,
    %cst_122 = arith.constant 0.000000e+00 : f32
    %480 = vector.shape_cast %471 : vector<8x1xi1> to vector<8x1xi1>
    %481 = vector.broadcast %480 : vector<8x1xi1> to vector<8x128xi1>
    %482 = vector.broadcast %cst_122 : f32 to vector<8x128xf32>
    %483 = arith.select %481, %467, %482 : vector<8x128xi1>, vector<8x128xf32>
    %484 = arith.index_cast %415 : i32 to index
    %c0_123 = arith.constant 0 : index
    %c0_124 = arith.constant 0 : index
    %485 = vector.load %arg11[%484, %c0_123, %c0_124] : memref<8x8x128xf32, #tpu.memory_space<vmem>>, vector<1x8x128xf32>
    %486 = vector.shape_cast %485 : vector<1x8x128xf32> to vector<8x128xf32>
    %487 = vector.shape_cast %483 : vector<8x128xf32> to vector<1x8x128xf32>
    tpu.vector_store %arg11[%484, %c0_123, %c0_124], %487 {strides = array<i32>} : memref<8x8x128xf32, #tpu.memory_space<vmem>>, vector<1x8x128xf32>,
    %488 = vector.shape_cast %469 : vector<8x1xi1> to vector<8x1xi1>
    %489 = vector.broadcast %488 : vector<8x1xi1> to vector<8x128xi1>
    %490 = arith.select %489, %446, %411 : vector<8x128xi1>, vector<8x128xf32>
    %491 = vector.shape_cast %471 : vector<8x1xi1> to vector<8x1xi1>
    %492 = vector.broadcast %491 : vector<8x1xi1> to vector<8x128xi1>
    %493 = arith.select %492, %467, %414 : vector<8x128xi1>, vector<8x128xf32>
    %c6_i32 = arith.constant 6 : i32
    %c7_i32_125 = arith.constant 7 : i32
    %494 = arith.subi %c7_i32_125, %c6_i32 : i32
    %495 = tpu.concatenate %490, %493 in 1 : vector<8x128xf32>, vector<8x128xf32> -> vector<8x256xf32>
    %496 = arith.truncf %495 : vector<8x256xf32> to vector<8x256xbf16>
    %c0_126 = arith.constant 0 : index
    %c0_127 = arith.constant 0 : index
    %497 = vector.load %arg4[%c0_126, %c0_127] : memref<256x768xbf16, #tpu.memory_space<vmem>>, vector<256x768xbf16>
    %cst_128 = arith.constant dense<0.000000e+00> : vector<8x768xf32>
    %498 = tpu.matmul %496, %497, %cst_128 {dimension_numbers = #tpu.dot_dimension_numbers<[1], [0], [0], [1], [0, 0, 1, 1], [], []>} : vector<8x256xbf16>, vector<256x768xbf16>, vector<8x768xf32> -> vector<8x768xf32>
    %499 = arith.index_cast %c6_i32 : i32 to index
    %c0_129 = arith.constant 0 : index
    %c0_130 = arith.constant 0 : index
    %500 = vector.load %arg9[%499, %c0_129, %c0_130] : memref<8x8x384xf32, #tpu.memory_space<vmem>>, vector<1x8x384xf32>
    %501 = vector.shape_cast %500 : vector<1x8x384xf32> to vector<8x384xf32>
    %502 = arith.index_cast %494 : i32 to index
    %c0_131 = arith.constant 0 : index
    %c0_132 = arith.constant 0 : index
    %503 = vector.load %arg10[%502, %c0_131, %c0_132] : memref<8x8x384xf32, #tpu.memory_space<vmem>>, vector<1x8x384xf32>
    %504 = vector.shape_cast %503 : vector<1x8x384xf32> to vector<8x384xf32>
    %505 = vector.extract_strided_slice %501 {offsets = [0, 0], sizes = [8, 256], strides = [1, 1]} : vector<8x384xf32> to vector<8x256xf32>
    %506 = vector.extract_strided_slice %498 {offsets = [0, 0], sizes = [8, 256], strides = [1, 1]} : vector<8x768xf32> to vector<8x256xf32>
    %507 = arith.addf %505, %506 : vector<8x256xf32>
    %508 = arith.negf %507 : vector<8x256xf32>
    %509 = math.exp %508 : vector<8x256xf32>
    %cst_133 = arith.constant 1.000000e+00 : f32
    %510 = vector.broadcast %cst_133 : f32 to vector<8x256xf32>
    %511 = arith.addf %510, %509 : vector<8x256xf32>
    %512 = arith.divf %510, %511 : vector<8x256xf32>
    %513 = vector.extract_strided_slice %512 {offsets = [0, 0], sizes = [8, 128], strides = [1, 1]} : vector<8x256xf32> to vector<8x128xf32>
    %514 = vector.extract_strided_slice %512 {offsets = [0, 128], sizes = [8, 128], strides = [1, 1]} : vector<8x256xf32> to vector<8x128xf32>
    %515 = vector.extract_strided_slice %501 {offsets = [0, 256], sizes = [8, 128], strides = [1, 1]} : vector<8x384xf32> to vector<8x128xf32>
    %516 = vector.extract_strided_slice %498 {offsets = [0, 256], sizes = [8, 128], strides = [1, 1]} : vector<8x768xf32> to vector<8x128xf32>
    %517 = arith.addf %516, %15 : vector<8x128xf32>
    %518 = arith.mulf %513, %517 : vector<8x128xf32>
    %519 = arith.addf %515, %518 : vector<8x128xf32>
    %520 = math.tanh %519 : vector<8x128xf32>
    %cst_134 = arith.constant 1.000000e+00 : f32
    %521 = vector.broadcast %cst_134 : f32 to vector<8x128xf32>
    %522 = arith.subf %521, %514 : vector<8x128xf32>
    %523 = arith.mulf %522, %520 : vector<8x128xf32>
    %524 = arith.mulf %514, %490 : vector<8x128xf32>
    %525 = arith.addf %523, %524 : vector<8x128xf32>
    %526 = vector.extract_strided_slice %504 {offsets = [0, 0], sizes = [8, 256], strides = [1, 1]} : vector<8x384xf32> to vector<8x256xf32>
    %527 = vector.extract_strided_slice %498 {offsets = [0, 384], sizes = [8, 256], strides = [1, 1]} : vector<8x768xf32> to vector<8x256xf32>
    %528 = arith.addf %526, %527 : vector<8x256xf32>
    %529 = arith.negf %528 : vector<8x256xf32>
    %530 = math.exp %529 : vector<8x256xf32>
    %cst_135 = arith.constant 1.000000e+00 : f32
    %531 = vector.broadcast %cst_135 : f32 to vector<8x256xf32>
    %532 = arith.addf %531, %530 : vector<8x256xf32>
    %533 = arith.divf %531, %532 : vector<8x256xf32>
    %534 = vector.extract_strided_slice %533 {offsets = [0, 0], sizes = [8, 128], strides = [1, 1]} : vector<8x256xf32> to vector<8x128xf32>
    %535 = vector.extract_strided_slice %533 {offsets = [0, 128], sizes = [8, 128], strides = [1, 1]} : vector<8x256xf32> to vector<8x128xf32>
    %536 = vector.extract_strided_slice %504 {offsets = [0, 256], sizes = [8, 128], strides = [1, 1]} : vector<8x384xf32> to vector<8x128xf32>
    %537 = vector.extract_strided_slice %498 {offsets = [0, 640], sizes = [8, 128], strides = [1, 1]} : vector<8x768xf32> to vector<8x128xf32>
    %538 = arith.addf %537, %18 : vector<8x128xf32>
    %539 = arith.mulf %534, %538 : vector<8x128xf32>
    %540 = arith.addf %536, %539 : vector<8x128xf32>
    %541 = math.tanh %540 : vector<8x128xf32>
    %cst_136 = arith.constant 1.000000e+00 : f32
    %542 = vector.broadcast %cst_136 : f32 to vector<8x128xf32>
    %543 = arith.subf %542, %535 : vector<8x128xf32>
    %544 = arith.mulf %543, %541 : vector<8x128xf32>
    %545 = arith.mulf %535, %493 : vector<8x128xf32>
    %546 = arith.addf %544, %545 : vector<8x128xf32>
    %547 = vector.broadcast %c6_i32 : i32 to vector<8x1xi32>
    %548 = arith.cmpi sgt, %12, %547 : vector<8x1xi32>
    %549 = vector.broadcast %494 : i32 to vector<8x1xi32>
    %550 = arith.cmpi sgt, %12, %549 : vector<8x1xi32>
    %cst_137 = arith.constant 0.000000e+00 : f32
    %551 = vector.shape_cast %548 : vector<8x1xi1> to vector<8x1xi1>
    %552 = vector.broadcast %551 : vector<8x1xi1> to vector<8x128xi1>
    %553 = vector.broadcast %cst_137 : f32 to vector<8x128xf32>
    %554 = arith.select %552, %525, %553 : vector<8x128xi1>, vector<8x128xf32>
    %555 = arith.index_cast %c6_i32 : i32 to index
    %c0_138 = arith.constant 0 : index
    %c0_139 = arith.constant 0 : index
    %556 = vector.load %arg7[%555, %c0_138, %c0_139] : memref<8x8x128xf32, #tpu.memory_space<vmem>>, vector<1x8x128xf32>
    %557 = vector.shape_cast %556 : vector<1x8x128xf32> to vector<8x128xf32>
    %558 = vector.shape_cast %554 : vector<8x128xf32> to vector<1x8x128xf32>
    tpu.vector_store %arg7[%555, %c0_138, %c0_139], %558 {strides = array<i32>} : memref<8x8x128xf32, #tpu.memory_space<vmem>>, vector<1x8x128xf32>,
    %cst_140 = arith.constant 0.000000e+00 : f32
    %559 = vector.shape_cast %550 : vector<8x1xi1> to vector<8x1xi1>
    %560 = vector.broadcast %559 : vector<8x1xi1> to vector<8x128xi1>
    %561 = vector.broadcast %cst_140 : f32 to vector<8x128xf32>
    %562 = arith.select %560, %546, %561 : vector<8x128xi1>, vector<8x128xf32>
    %563 = arith.index_cast %494 : i32 to index
    %c0_141 = arith.constant 0 : index
    %c0_142 = arith.constant 0 : index
    %564 = vector.load %arg11[%563, %c0_141, %c0_142] : memref<8x8x128xf32, #tpu.memory_space<vmem>>, vector<1x8x128xf32>
    %565 = vector.shape_cast %564 : vector<1x8x128xf32> to vector<8x128xf32>
    %566 = vector.shape_cast %562 : vector<8x128xf32> to vector<1x8x128xf32>
    tpu.vector_store %arg11[%563, %c0_141, %c0_142], %566 {strides = array<i32>} : memref<8x8x128xf32, #tpu.memory_space<vmem>>, vector<1x8x128xf32>,
    %567 = vector.shape_cast %548 : vector<8x1xi1> to vector<8x1xi1>
    %568 = vector.broadcast %567 : vector<8x1xi1> to vector<8x128xi1>
    %569 = arith.select %568, %525, %490 : vector<8x128xi1>, vector<8x128xf32>
    %570 = vector.shape_cast %550 : vector<8x1xi1> to vector<8x1xi1>
    %571 = vector.broadcast %570 : vector<8x1xi1> to vector<8x128xi1>
    %572 = arith.select %571, %546, %493 : vector<8x128xi1>, vector<8x128xf32>
    %c7_i32_143 = arith.constant 7 : i32
    %c7_i32_144 = arith.constant 7 : i32
    %573 = arith.subi %c7_i32_144, %c7_i32_143 : i32
    %574 = tpu.concatenate %569, %572 in 1 : vector<8x128xf32>, vector<8x128xf32> -> vector<8x256xf32>
    %575 = arith.truncf %574 : vector<8x256xf32> to vector<8x256xbf16>
    %c0_145 = arith.constant 0 : index
    %c0_146 = arith.constant 0 : index
    %576 = vector.load %arg4[%c0_145, %c0_146] : memref<256x768xbf16, #tpu.memory_space<vmem>>, vector<256x768xbf16>
    %cst_147 = arith.constant dense<0.000000e+00> : vector<8x768xf32>
    %577 = tpu.matmul %575, %576, %cst_147 {dimension_numbers = #tpu.dot_dimension_numbers<[1], [0], [0], [1], [0, 0, 1, 1], [], []>} : vector<8x256xbf16>, vector<256x768xbf16>, vector<8x768xf32> -> vector<8x768xf32>
    %578 = arith.index_cast %c7_i32_143 : i32 to index
    %c0_148 = arith.constant 0 : index
    %c0_149 = arith.constant 0 : index
    %579 = vector.load %arg9[%578, %c0_148, %c0_149] : memref<8x8x384xf32, #tpu.memory_space<vmem>>, vector<1x8x384xf32>
    %580 = vector.shape_cast %579 : vector<1x8x384xf32> to vector<8x384xf32>
    %581 = arith.index_cast %573 : i32 to index
    %c0_150 = arith.constant 0 : index
    %c0_151 = arith.constant 0 : index
    %582 = vector.load %arg10[%581, %c0_150, %c0_151] : memref<8x8x384xf32, #tpu.memory_space<vmem>>, vector<1x8x384xf32>
    %583 = vector.shape_cast %582 : vector<1x8x384xf32> to vector<8x384xf32>
    %584 = vector.extract_strided_slice %580 {offsets = [0, 0], sizes = [8, 256], strides = [1, 1]} : vector<8x384xf32> to vector<8x256xf32>
    %585 = vector.extract_strided_slice %577 {offsets = [0, 0], sizes = [8, 256], strides = [1, 1]} : vector<8x768xf32> to vector<8x256xf32>
    %586 = arith.addf %584, %585 : vector<8x256xf32>
    %587 = arith.negf %586 : vector<8x256xf32>
    %588 = math.exp %587 : vector<8x256xf32>
    %cst_152 = arith.constant 1.000000e+00 : f32
    %589 = vector.broadcast %cst_152 : f32 to vector<8x256xf32>
    %590 = arith.addf %589, %588 : vector<8x256xf32>
    %591 = arith.divf %589, %590 : vector<8x256xf32>
    %592 = vector.extract_strided_slice %591 {offsets = [0, 0], sizes = [8, 128], strides = [1, 1]} : vector<8x256xf32> to vector<8x128xf32>
    %593 = vector.extract_strided_slice %591 {offsets = [0, 128], sizes = [8, 128], strides = [1, 1]} : vector<8x256xf32> to vector<8x128xf32>
    %594 = vector.extract_strided_slice %580 {offsets = [0, 256], sizes = [8, 128], strides = [1, 1]} : vector<8x384xf32> to vector<8x128xf32>
    %595 = vector.extract_strided_slice %577 {offsets = [0, 256], sizes = [8, 128], strides = [1, 1]} : vector<8x768xf32> to vector<8x128xf32>
    %596 = arith.addf %595, %15 : vector<8x128xf32>
    %597 = arith.mulf %592, %596 : vector<8x128xf32>
    %598 = arith.addf %594, %597 : vector<8x128xf32>
    %599 = math.tanh %598 : vector<8x128xf32>
    %cst_153 = arith.constant 1.000000e+00 : f32
    %600 = vector.broadcast %cst_153 : f32 to vector<8x128xf32>
    %601 = arith.subf %600, %593 : vector<8x128xf32>
    %602 = arith.mulf %601, %599 : vector<8x128xf32>
    %603 = arith.mulf %593, %569 : vector<8x128xf32>
    %604 = arith.addf %602, %603 : vector<8x128xf32>
    %605 = vector.extract_strided_slice %583 {offsets = [0, 0], sizes = [8, 256], strides = [1, 1]} : vector<8x384xf32> to vector<8x256xf32>
    %606 = vector.extract_strided_slice %577 {offsets = [0, 384], sizes = [8, 256], strides = [1, 1]} : vector<8x768xf32> to vector<8x256xf32>
    %607 = arith.addf %605, %606 : vector<8x256xf32>
    %608 = arith.negf %607 : vector<8x256xf32>
    %609 = math.exp %608 : vector<8x256xf32>
    %cst_154 = arith.constant 1.000000e+00 : f32
    %610 = vector.broadcast %cst_154 : f32 to vector<8x256xf32>
    %611 = arith.addf %610, %609 : vector<8x256xf32>
    %612 = arith.divf %610, %611 : vector<8x256xf32>
    %613 = vector.extract_strided_slice %612 {offsets = [0, 0], sizes = [8, 128], strides = [1, 1]} : vector<8x256xf32> to vector<8x128xf32>
    %614 = vector.extract_strided_slice %612 {offsets = [0, 128], sizes = [8, 128], strides = [1, 1]} : vector<8x256xf32> to vector<8x128xf32>
    %615 = vector.extract_strided_slice %583 {offsets = [0, 256], sizes = [8, 128], strides = [1, 1]} : vector<8x384xf32> to vector<8x128xf32>
    %616 = vector.extract_strided_slice %577 {offsets = [0, 640], sizes = [8, 128], strides = [1, 1]} : vector<8x768xf32> to vector<8x128xf32>
    %617 = arith.addf %616, %18 : vector<8x128xf32>
    %618 = arith.mulf %613, %617 : vector<8x128xf32>
    %619 = arith.addf %615, %618 : vector<8x128xf32>
    %620 = math.tanh %619 : vector<8x128xf32>
    %cst_155 = arith.constant 1.000000e+00 : f32
    %621 = vector.broadcast %cst_155 : f32 to vector<8x128xf32>
    %622 = arith.subf %621, %614 : vector<8x128xf32>
    %623 = arith.mulf %622, %620 : vector<8x128xf32>
    %624 = arith.mulf %614, %572 : vector<8x128xf32>
    %625 = arith.addf %623, %624 : vector<8x128xf32>
    %626 = vector.broadcast %c7_i32_143 : i32 to vector<8x1xi32>
    %627 = arith.cmpi sgt, %12, %626 : vector<8x1xi32>
    %628 = vector.broadcast %573 : i32 to vector<8x1xi32>
    %629 = arith.cmpi sgt, %12, %628 : vector<8x1xi32>
    %cst_156 = arith.constant 0.000000e+00 : f32
    %630 = vector.shape_cast %627 : vector<8x1xi1> to vector<8x1xi1>
    %631 = vector.broadcast %630 : vector<8x1xi1> to vector<8x128xi1>
    %632 = vector.broadcast %cst_156 : f32 to vector<8x128xf32>
    %633 = arith.select %631, %604, %632 : vector<8x128xi1>, vector<8x128xf32>
    %634 = arith.index_cast %c7_i32_143 : i32 to index
    %c0_157 = arith.constant 0 : index
    %c0_158 = arith.constant 0 : index
    %635 = vector.load %arg7[%634, %c0_157, %c0_158] : memref<8x8x128xf32, #tpu.memory_space<vmem>>, vector<1x8x128xf32>
    %636 = vector.shape_cast %635 : vector<1x8x128xf32> to vector<8x128xf32>
    %637 = vector.shape_cast %633 : vector<8x128xf32> to vector<1x8x128xf32>
    tpu.vector_store %arg7[%634, %c0_157, %c0_158], %637 {strides = array<i32>} : memref<8x8x128xf32, #tpu.memory_space<vmem>>, vector<1x8x128xf32>,
    %cst_159 = arith.constant 0.000000e+00 : f32
    %638 = vector.shape_cast %629 : vector<8x1xi1> to vector<8x1xi1>
    %639 = vector.broadcast %638 : vector<8x1xi1> to vector<8x128xi1>
    %640 = vector.broadcast %cst_159 : f32 to vector<8x128xf32>
    %641 = arith.select %639, %625, %640 : vector<8x128xi1>, vector<8x128xf32>
    %642 = arith.index_cast %573 : i32 to index
    %c0_160 = arith.constant 0 : index
    %c0_161 = arith.constant 0 : index
    %643 = vector.load %arg11[%642, %c0_160, %c0_161] : memref<8x8x128xf32, #tpu.memory_space<vmem>>, vector<1x8x128xf32>
    %644 = vector.shape_cast %643 : vector<1x8x128xf32> to vector<8x128xf32>
    %645 = vector.shape_cast %641 : vector<8x128xf32> to vector<1x8x128xf32>
    tpu.vector_store %arg11[%642, %c0_160, %c0_161], %645 {strides = array<i32>} : memref<8x8x128xf32, #tpu.memory_space<vmem>>, vector<1x8x128xf32>,
    %646 = vector.shape_cast %627 : vector<8x1xi1> to vector<8x1xi1>
    %647 = vector.broadcast %646 : vector<8x1xi1> to vector<8x128xi1>
    %648 = arith.select %647, %604, %569 : vector<8x128xi1>, vector<8x128xf32>
    %649 = vector.shape_cast %629 : vector<8x1xi1> to vector<8x1xi1>
    %650 = vector.broadcast %649 : vector<8x1xi1> to vector<8x128xi1>
    %651 = arith.select %650, %625, %572 : vector<8x128xi1>, vector<8x128xf32>
    %c8_i32 = arith.constant 8 : i32
    %c0_162 = arith.constant 0 : index
    %c0_163 = arith.constant 0 : index
    %c0_164 = arith.constant 0 : index
    %652 = vector.load %arg7[%c0_162, %c0_163, %c0_164] : memref<8x8x128xf32, #tpu.memory_space<vmem>>, vector<8x8x128xf32>
    %c0_165 = arith.constant 0 : index
    %c0_166 = arith.constant 0 : index
    %c0_167 = arith.constant 0 : index
    %653 = vector.load %arg11[%c0_165, %c0_166, %c0_167] : memref<8x8x128xf32, #tpu.memory_space<vmem>>, vector<8x8x128xf32>
    %654 = arith.addf %652, %653 : vector<8x8x128xf32>
    %c0_168 = arith.constant 0 : index
    %c0_169 = arith.constant 0 : index
    %c0_170 = arith.constant 0 : index
    %655 = vector.load %arg7[%c0_168, %c0_169, %c0_170] : memref<8x8x128xf32, #tpu.memory_space<vmem>>, vector<8x8x128xf32>
    tpu.vector_store %arg7[%c0_168, %c0_169, %c0_170], %654 {strides = array<i32>} : memref<8x8x128xf32, #tpu.memory_space<vmem>>, vector<8x8x128xf32>,
    %c0_171 = arith.constant 0 : index
    %c0_172 = arith.constant 0 : index
    %c0_173 = arith.constant 0 : index
    %656 = vector.load %arg8[%c0_171, %c0_172, %c0_173] : memref<2x8x128xf32, #tpu.memory_space<vmem>>, vector<1x8x128xf32>
    %657 = vector.shape_cast %656 : vector<1x8x128xf32> to vector<8x128xf32>
    %658 = vector.shape_cast %648 : vector<8x128xf32> to vector<1x8x128xf32>
    tpu.vector_store %arg8[%c0_171, %c0_172, %c0_173], %658 {strides = array<i32>} : memref<2x8x128xf32, #tpu.memory_space<vmem>>, vector<1x8x128xf32>,
    %c1 = arith.constant 1 : index
    %c0_174 = arith.constant 0 : index
    %c0_175 = arith.constant 0 : index
    %659 = vector.load %arg8[%c1, %c0_174, %c0_175] : memref<2x8x128xf32, #tpu.memory_space<vmem>>, vector<1x8x128xf32>
    %660 = vector.shape_cast %659 : vector<1x8x128xf32> to vector<8x128xf32>
    %661 = vector.shape_cast %651 : vector<8x128xf32> to vector<1x8x128xf32>
    tpu.vector_store %arg8[%c1, %c0_174, %c0_175], %661 {strides = array<i32>} : memref<2x8x128xf32, #tpu.memory_space<vmem>>, vector<1x8x128xf32>,
    return
  }
}

</mosaic_0001>

<llo_original>
// kernel: tpu_custom_call.1
$region0: #{tpu_custom_call.1}
  #allocation0 [shape = 'u32[]', space=smem, size = 0x4, offset = 0x4, fixed_abs, tag = 'smem constant byte address 0x4 - core index']
  #allocation1 [shape = 'u32[144,128]{1,0:T(1,128)}', space=vmem, size = 0x12000, scoped, tag = 'internal scratch']
  #allocation2 [shape = 'f32[8,8,384]{2,1,0:T(8,128)}', space=vmem, size = 0x18000, scoped, tag = 'scratch operand']
  #allocation3 [shape = 'f32[8,8,384]{2,1,0:T(8,128)}', space=vmem, size = 0x18000, scoped, tag = 'scratch operand']
  #allocation4 [shape = 'f32[8,8,128]{2,1,0:T(8,128)}', space=vmem, size = 0x8000, scoped, tag = 'scratch operand']
  %s0 = inlined_call_operand.hbm [shape: bf16[64,128], index: 0, kind: input, shape index: {}]
  %s1 = inlined_call_operand.vmem [shape: s32[8,1], index: 1, kind: input, shape index: {}]
  %s2 = inlined_call_operand.hbm [shape: bf16[128,768], index: 2, kind: input, shape index: {}]
  %s3 = inlined_call_operand.vmem [shape: f32[1,768], index: 3, kind: input, shape index: {}]
  %s4 = inlined_call_operand.hbm [shape: bf16[256,768], index: 4, kind: input, shape index: {}]
  %s5 = inlined_call_operand.vmem [shape: f32[1,128], index: 5, kind: input, shape index: {}]
  %s6 = inlined_call_operand.vmem [shape: f32[1,128], index: 6, kind: input, shape index: {}]
  %s7 = inlined_call_operand.hbm [shape: f32[8,8,128], index: 7, kind: output, shape index: {0}]
  %s8 = inlined_call_operand.hbm [shape: f32[2,8,128], index: 8, kind: output, shape index: {1}]
  %9 = xla_tuple %s7, %s8
  %s10 = sld [smem:[#allocation0]]
  $region58: #{tpu_custom_call.1} parent=0
    _
  %s12 = ssub.s32 1, %s10
  %s13 = scalar_select 0, %s12, %s10
  $region1: #{tpu_custom_call.1} parent=0
    #allocation5 [shape = 'u8[16384]{0}', space=vmem, size = 0x4000, scoped, tag = 'input window, operand 0, single buffered']
    #allocation6 [shape = 's32[1]{0}', space=sflag, size = 0x4, scoped, tag = 'scoped memory for tpu_custom_call.1']
    #allocation7 [shape = 's32[1]{0}', space=sflag, size = 0x4, scoped, tag = 'scoped memory for tpu_custom_call.1']
    #allocation8 [shape = 'u8[196608]{0}', space=vmem, size = 0x30000, scoped, tag = 'input window, operand 2, single buffered']
    #allocation9 [shape = 's32[1]{0}', space=sflag, size = 0x4, scoped, tag = 'scoped memory for tpu_custom_call.1']
    #allocation10 [shape = 'u8[393216]{0}', space=vmem, size = 0x60000, scoped, tag = 'input window, operand 4, single buffered']
    #allocation11 [shape = 'u8[32768]{0}', space=vmem, size = 0x8000, scoped, tag = 'output window, operand 0, single buffered']
    #allocation12 [shape = 'u8[8192]{0}', space=vmem, size = 0x2000, scoped, tag = 'output window, operand 1, single buffered']
    #allocation13 [shape = 's32[1]{0}', space=sflag, size = 0x4, scoped, tag = 'scoped memory for tpu_custom_call.1']
    %14 = vsyncpa [#allocation6], 0
    %15 = vsyncpa [#allocation9], 0
    %16 = vsyncpa [#allocation7], 0
    %17 = vsyncpa [#allocation13], 0
    // Predicated region
    $region2: #{tpu_custom_call.1} parent=1 // pred_check
      _
    $region3: #{tpu_custom_call.1} parent=1 // pred_check_branch
      %19 = sbr.rel (0) target = $region5
    $region4: #{tpu_custom_call.1} parent=1 // pred_region
      %s21 = ssub.s32 512, 512
      %22 = vsyncadd [#allocation6], %s21
      %s23 = sshll.u32 [#allocation5], 4
      %s24 = int_to_ptr.vmem [resolvable:$true] %s23
      %29 = dma.hbm_to_vmem [thread:$0]  %s0, 512, %s24, [#allocation6], 64, 64, 4
    $region5: #{tpu_custom_call.1} parent=1 // pred_fallthru
      _
    // Predicated region
    $region6: #{tpu_custom_call.1} parent=1 // pred_check
      _
    $region7: #{tpu_custom_call.1} parent=1 // pred_check_branch
      %31 = sbr.rel (0) target = $region9
    $region8: #{tpu_custom_call.1} parent=1 // pred_region
      _
    $region9: #{tpu_custom_call.1} parent=1 // pred_fallthru
      _
    // Predicated region
    $region10: #{tpu_custom_call.1} parent=1 // pred_check
      _
    $region11: #{tpu_custom_call.1} parent=1 // pred_check_branch
      %33 = sbr.rel (0) target = $region13
    $region12: #{tpu_custom_call.1} parent=1 // pred_region
      %s35 = ssub.s32 6144, 6144
      %36 = vsyncadd [#allocation9], %s35
      %s37 = sshll.u32 [#allocation8], 4
      %s38 = int_to_ptr.vmem [resolvable:$true] %s37
      %43 = dma.hbm_to_vmem [thread:$0]  %s2, 6144, %s38, [#allocation9], 384, 384, 24
    $region13: #{tpu_custom_call.1} parent=1 // pred_fallthru
      _
    // Predicated region
    $region14: #{tpu_custom_call.1} parent=1 // pred_check
      _
    $region15: #{tpu_custom_call.1} parent=1 // pred_check_branch
      %45 = sbr.rel (0) target = $region17
    $region16: #{tpu_custom_call.1} parent=1 // pred_region
      _
    $region17: #{tpu_custom_call.1} parent=1 // pred_fallthru
      _
    // Predicated region
    $region18: #{tpu_custom_call.1} parent=1 // pred_check
      _
    $region19: #{tpu_custom_call.1} parent=1 // pred_check_branch
      %47 = sbr.rel (0) target = $region21
    $region20: #{tpu_custom_call.1} parent=1 // pred_region
      %s49 = ssub.s32 12288, 12288
      %50 = vsyncadd [#allocation9], %s49
      %s51 = sshll.u32 [#allocation10], 4
      %s52 = int_to_ptr.vmem [resolvable:$true] %s51
      %57 = dma.hbm_to_vmem [thread:$0]  %s4, 12288, %s52, [#allocation9], 384, 384, 24
    $region21: #{tpu_custom_call.1} parent=1 // pred_fallthru
      _
    // Predicated region
    $region22: #{tpu_custom_call.1} parent=1 // pred_check
      _
    $region23: #{tpu_custom_call.1} parent=1 // pred_check_branch
      %59 = sbr.rel (0) target = $region25
    $region24: #{tpu_custom_call.1} parent=1 // pred_region
      _
    $region25: #{tpu_custom_call.1} parent=1 // pred_fallthru
      _
    // Predicated region
    $region26: #{tpu_custom_call.1} parent=1 // pred_check
      _
    $region27: #{tpu_custom_call.1} parent=1 // pred_check_branch
      %61 = sbr.rel (0) target = $region29
    $region28: #{tpu_custom_call.1} parent=1 // pred_region
      _
    $region29: #{tpu_custom_call.1} parent=1 // pred_fallthru
      _
    // Predicated region
    $region30: #{tpu_custom_call.1} parent=1 // pred_check
      _
    $region31: #{tpu_custom_call.1} parent=1 // pred_check_branch
      %63 = sbr.rel (0) target = $region33
    $region32: #{tpu_custom_call.1} parent=1 // pred_region
      %64 = dma.done [#allocation6], 512
    $region33: #{tpu_custom_call.1} parent=1 // pred_fallthru
      _
    // Predicated region
    $region34: #{tpu_custom_call.1} parent=1 // pred_check
      _
    $region35: #{tpu_custom_call.1} parent=1 // pred_check_branch
      %66 = sbr.rel (0) target = $region37
    $region36: #{tpu_custom_call.1} parent=1 // pred_region
      %67 = dma.done [#allocation9], 6144
    $region37: #{tpu_custom_call.1} parent=1 // pred_fallthru
      _
    // Predicated region
    $region38: #{tpu_custom_call.1} parent=1 // pred_check
      _
    $region39: #{tpu_custom_call.1} parent=1 // pred_check_branch
      %69 = sbr.rel (0) target = $region41
    $region40: #{tpu_custom_call.1} parent=1 // pred_region
      %70 = dma.done [#allocation9], 12288
    $region41: #{tpu_custom_call.1} parent=1 // pred_fallthru
      _
    %v72 = vld [vmem:[#allocation5] sm:$0xf]
    %v73 = vld [vmem:[#allocation5 + $0x4] sm:$0xf]
    %v74 = vld [vmem:[#allocation5 + $0x8] sm:$0xf]
    %v75 = vld [vmem:[#allocation5 + $0xc] sm:$0xf]
    %v76 = vld [vmem:[#allocation5 + $0x10] sm:$0xf]
    %v77 = vld [vmem:[#allocation5 + $0x14] sm:$0xf]
    %v78 = vld [vmem:[#allocation5 + $0x18] sm:$0xf]
    %v79 = vld [vmem:[#allocation5 + $0x1c] sm:$0xf]
    %v80 = vld [vmem:[#allocation8] sm:$0xff]
    %v81 = vld [vmem:[#allocation8 + $0x8] sm:$0xff]
    %v82 = vld [vmem:[#allocation8 + $0x10] sm:$0xff]
    %v83 = vld [vmem:[#allocation8 + $0x18] sm:$0xff]
    %v84 = vld [vmem:[#allocation8 + $0x20] sm:$0xff]
    %v85 = vld [vmem:[#allocation8 + $0x28] sm:$0xff]
    %v86 = vld [vmem:[#allocation8 + $0x30] sm:$0xff]
    %v87 = vld [vmem:[#allocation8 + $0x38] sm:$0xff]
    %v88 = vld [vmem:[#allocation8 + $0x40] sm:$0xff]
    %v89 = vld [vmem:[#allocation8 + $0x48] sm:$0xff]
    %v90 = vld [vmem:[#allocation8 + $0x50] sm:$0xff]
    %v91 = vld [vmem:[#allocation8 + $0x58] sm:$0xff]
    %v92 = vld [vmem:[#allocation8 + $0x60] sm:$0xff]
    %v93 = vld [vmem:[#allocation8 + $0x68] sm:$0xff]
    %v94 = vld [vmem:[#allocation8 + $0x70] sm:$0xff]
    %v95 = vld [vmem:[#allocation8 + $0x78] sm:$0xff]
    %v96 = vld [vmem:[#allocation8 + $0x80] sm:$0xff]
    %v97 = vld [vmem:[#allocation8 + $0x88] sm:$0xff]
    %v98 = vld [vmem:[#allocation8 + $0x90] sm:$0xff]
    %v99 = vld [vmem:[#allocation8 + $0x98] sm:$0xff]
    %v100 = vld [vmem:[#allocation8 + $0xa0] sm:$0xff]
    %v101 = vld [vmem:[#allocation8 + $0xa8] sm:$0xff]
    %v102 = vld [vmem:[#allocation8 + $0xb0] sm:$0xff]
    %v103 = vld [vmem:[#allocation8 + $0xb8] sm:$0xff]
    %v104 = vld [vmem:[#allocation8 + $0xc0] sm:$0xff]
    %v105 = vld [vmem:[#allocation8 + $0xc8] sm:$0xff]
    %v106 = vld [vmem:[#allocation8 + $0xd0] sm:$0xff]
    %v107 = vld [vmem:[#allocation8 + $0xd8] sm:$0xff]
    %v108 = vld [vmem:[#allocation8 + $0xe0] sm:$0xff]
    %v109 = vld [vmem:[#allocation8 + $0xe8] sm:$0xff]
    %v110 = vld [vmem:[#allocation8 + $0xf0] sm:$0xff]
    %v111 = vld [vmem:[#allocation8 + $0xf8] sm:$0xff]
    %v112 = vld [vmem:[#allocation8 + $0x100] sm:$0xff]
    %v113 = vld [vmem:[#allocation8 + $0x108] sm:$0xff]
    %v114 = vld [vmem:[#allocation8 + $0x110] sm:$0xff]
    %v115 = vld [vmem:[#allocation8 + $0x118] sm:$0xff]
    %v116 = vld [vmem:[#allocation8 + $0x120] sm:$0xff]
    %v117 = vld [vmem:[#allocation8 + $0x128] sm:$0xff]
    %v118 = vld [vmem:[#allocation8 + $0x130] sm:$0xff]
    %v119 = vld [vmem:[#allocation8 + $0x138] sm:$0xff]
    %v120 = vld [vmem:[#allocation8 + $0x140] sm:$0xff]
    %v121 = vld [vmem:[#allocation8 + $0x148] sm:$0xff]
    %v122 = vld [vmem:[#allocation8 + $0x150] sm:$0xff]
    %v123 = vld [vmem:[#allocation8 + $0x158] sm:$0xff]
    %v124 = vld [vmem:[#allocation8 + $0x160] sm:$0xff]
    %v125 = vld [vmem:[#allocation8 + $0x168] sm:$0xff]
    %v126 = vld [vmem:[#allocation8 + $0x170] sm:$0xff]
    %v127 = vld [vmem:[#allocation8 + $0x178] sm:$0xff]
    %v128 = vld [vmem:[%s3] sm:$0x3f]
    %v130 = vlaneseq
    %v131 = vshrl.u32 %v130, 7
    %v132 = vsub.s32 0, %v131
    %v133 = vrot.slane %v128, %v132
    %v134 = vlaneseq
    %v135 = vshrl.u32 %v134, 7
    %v136 = vsub.s32 1, %v135
    %v137 = vrot.slane %v128, %v136
    %v138 = vlaneseq
    %v139 = vshrl.u32 %v138, 7
    %v140 = vsub.s32 2, %v139
    %v141 = vrot.slane %v128, %v140
    %v142 = vlaneseq
    %v143 = vshrl.u32 %v142, 7
    %v144 = vsub.s32 3, %v143
    %v145 = vrot.slane %v128, %v144
    %v146 = vlaneseq
    %v147 = vshrl.u32 %v146, 7
    %v148 = vsub.s32 4, %v147
    %v149 = vrot.slane %v128, %v148
    %v150 = vlaneseq
    %v151 = vshrl.u32 %v150, 7
    %v152 = vsub.s32 5, %v151
    %v153 = vrot.slane %v128, %v152
    %v168 = vunpack.c.l.b16 %v72
    %v169 = vunpack.c.l.b16 %v73
    %v170 = vunpack.c.l.b16 %v74
    %v171 = vunpack.c.l.b16 %v75
    %v172 = vunpack.c.l.b16 %v76
    %v173 = vunpack.c.l.b16 %v77
    %v174 = vunpack.c.l.b16 %v78
    %v175 = vunpack.c.l.b16 %v79
    %v176 = vpack.c.b16 %v169, %v168
    %v177 = vpack.c.b16 %v171, %v170
    %v178 = vpack.c.b16 %v173, %v172
    %v179 = vpack.c.b16 %v175, %v174
    %v232 = vunpack.c.l.b16 %v80
    %v233 = vunpack.c.h.b16 %v80
    %v234 = vunpack.c.l.b16 %v81
    %v235 = vunpack.c.h.b16 %v81
    %v236 = vunpack.c.l.b16 %v82
    %v237 = vunpack.c.h.b16 %v82
    %v238 = vunpack.c.l.b16 %v83
    %v239 = vunpack.c.h.b16 %v83
    %v240 = vunpack.c.l.b16 %v84
    %v241 = vunpack.c.h.b16 %v84
    %v242 = vunpack.c.l.b16 %v85
    %v243 = vunpack.c.h.b16 %v85
    %v244 = vunpack.c.l.b16 %v86
    %v245 = vunpack.c.h.b16 %v86
    %v246 = vunpack.c.l.b16 %v87
    %v247 = vunpack.c.h.b16 %v87
    %v248 = vunpack.c.l.b16 %v88
    %v249 = vunpack.c.h.b16 %v88
    %v250 = vunpack.c.l.b16 %v89
    %v251 = vunpack.c.h.b16 %v89
    %v252 = vunpack.c.l.b16 %v90
    %v253 = vunpack.c.h.b16 %v90
    %v254 = vunpack.c.l.b16 %v91
    %v255 = vunpack.c.h.b16 %v91
    %v256 = vunpack.c.l.b16 %v92
    %v257 = vunpack.c.h.b16 %v92
    %v258 = vunpack.c.l.b16 %v93
    %v259 = vunpack.c.h.b16 %v93
    %v260 = vunpack.c.l.b16 %v94
    %v261 = vunpack.c.h.b16 %v94
    %v262 = vunpack.c.l.b16 %v95
    %v263 = vunpack.c.h.b16 %v95
    %v264 = vunpack.c.l.b16 %v96
    %v265 = vunpack.c.h.b16 %v96
    %v266 = vunpack.c.l.b16 %v97
    %v267 = vunpack.c.h.b16 %v97
    %v268 = vunpack.c.l.b16 %v98
    %v269 = vunpack.c.h.b16 %v98
    %v270 = vunpack.c.l.b16 %v99
    %v271 = vunpack.c.h.b16 %v99
    %v272 = vunpack.c.l.b16 %v100
    %v273 = vunpack.c.h.b16 %v100
    %v274 = vunpack.c.l.b16 %v101
    %v275 = vunpack.c.h.b16 %v101
    %v276 = vunpack.c.l.b16 %v102
    %v277 = vunpack.c.h.b16 %v102
    %v278 = vunpack.c.l.b16 %v103
    %v279 = vunpack.c.h.b16 %v103
    %v280 = vunpack.c.l.b16 %v104
    %v281 = vunpack.c.h.b16 %v104
    %v282 = vunpack.c.l.b16 %v105
    %v283 = vunpack.c.h.b16 %v105
    %v284 = vunpack.c.l.b16 %v106
    %v285 = vunpack.c.h.b16 %v106
    %v286 = vunpack.c.l.b16 %v107
    %v287 = vunpack.c.h.b16 %v107
    %v288 = vunpack.c.l.b16 %v108
    %v289 = vunpack.c.h.b16 %v108
    %v290 = vunpack.c.l.b16 %v109
    %v291 = vunpack.c.h.b16 %v109
    %v292 = vunpack.c.l.b16 %v110
    %v293 = vunpack.c.h.b16 %v110
    %v294 = vunpack.c.l.b16 %v111
    %v295 = vunpack.c.h.b16 %v111
    %v296 = vunpack.c.l.b16 %v112
    %v297 = vunpack.c.h.b16 %v112
    %v298 = vunpack.c.l.b16 %v113
    %v299 = vunpack.c.h.b16 %v113
    %v300 = vunpack.c.l.b16 %v114
    %v301 = vunpack.c.h.b16 %v114
    %v302 = vunpack.c.l.b16 %v115
    %v303 = vunpack.c.h.b16 %v115
    %v304 = vunpack.c.l.b16 %v116
    %v305 = vunpack.c.h.b16 %v116
    %v306 = vunpack.c.l.b16 %v117
    %v307 = vunpack.c.h.b16 %v117
    %v308 = vunpack.c.l.b16 %v118
    %v309 = vunpack.c.h.b16 %v118
    %v310 = vunpack.c.l.b16 %v119
    %v311 = vunpack.c.h.b16 %v119
    %v312 = vunpack.c.l.b16 %v120
    %v313 = vunpack.c.h.b16 %v120
    %v314 = vunpack.c.l.b16 %v121
    %v315 = vunpack.c.h.b16 %v121
    %v316 = vunpack.c.l.b16 %v122
    %v317 = vunpack.c.h.b16 %v122
    %v318 = vunpack.c.l.b16 %v123
    %v319 = vunpack.c.h.b16 %v123
    %v320 = vunpack.c.l.b16 %v124
    %v321 = vunpack.c.h.b16 %v124
    %v322 = vunpack.c.l.b16 %v125
    %v323 = vunpack.c.h.b16 %v125
    %v324 = vunpack.c.l.b16 %v126
    %v325 = vunpack.c.h.b16 %v126
    %v326 = vunpack.c.l.b16 %v127
    %v327 = vunpack.c.h.b16 %v127
    %v328 = vpack.c.b16 %v238, %v232
    %v329 = vpack.c.b16 %v239, %v233
    %v330 = vpack.c.b16 %v240, %v234
    %v331 = vpack.c.b16 %v241, %v235
    %v332 = vpack.c.b16 %v242, %v236
    %v333 = vpack.c.b16 %v243, %v237
    %v334 = vpack.c.b16 %v250, %v244
    %v335 = vpack.c.b16 %v251, %v245
    %v336 = vpack.c.b16 %v252, %v246
    %v337 = vpack.c.b16 %v253, %v247
    %v338 = vpack.c.b16 %v254, %v248
    %v339 = vpack.c.b16 %v255, %v249
    %v340 = vpack.c.b16 %v262, %v256
    %v341 = vpack.c.b16 %v263, %v257
    %v342 = vpack.c.b16 %v264, %v258
    %v343 = vpack.c.b16 %v265, %v259
    %v344 = vpack.c.b16 %v266, %v260
    %v345 = vpack.c.b16 %v267, %v261
    %v346 = vpack.c.b16 %v274, %v268
    %v347 = vpack.c.b16 %v275, %v269
    %v348 = vpack.c.b16 %v276, %v270
    %v349 = vpack.c.b16 %v277, %v271
    %v350 = vpack.c.b16 %v278, %v272
    %v351 = vpack.c.b16 %v279, %v273
    %v352 = vpack.c.b16 %v286, %v280
    %v353 = vpack.c.b16 %v287, %v281
    %v354 = vpack.c.b16 %v288, %v282
    %v355 = vpack.c.b16 %v289, %v283
    %v356 = vpack.c.b16 %v290, %v284
    %v357 = vpack.c.b16 %v291, %v285
    %v358 = vpack.c.b16 %v298, %v292
    %v359 = vpack.c.b16 %v299, %v293
    %v360 = vpack.c.b16 %v300, %v294
    %v361 = vpack.c.b16 %v301, %v295
    %v362 = vpack.c.b16 %v302, %v296
    %v363 = vpack.c.b16 %v303, %v297
    %v364 = vpack.c.b16 %v310, %v304
    %v365 = vpack.c.b16 %v311, %v305
    %v366 = vpack.c.b16 %v312, %v306
    %v367 = vpack.c.b16 %v313, %v307
    %v368 = vpack.c.b16 %v314, %v308
    %v369 = vpack.c.b16 %v315, %v309
    %v370 = vpack.c.b16 %v322, %v316
    %v371 = vpack.c.b16 %v323, %v317
    %v372 = vpack.c.b16 %v324, %v318
    %v373 = vpack.c.b16 %v325, %v319
    %v374 = vpack.c.b16 %v326, %v320
    %v375 = vpack.c.b16 %v327, %v321
    %424 = vmatprep.subr.bf16.mxu0 %v329
    %425 = vmatpush1.bf16.msra.mxu0 %v328
    %426 = vmatprep.subr.bf16.mxu0 %v335
    %427 = vmatpush1.bf16.msra.mxu0 %v334
    %428 = vmatprep.subr.bf16.mxu0 %v341
    %429 = vmatpush1.bf16.msra.mxu0 %v340
    %430 = vmatprep.subr.bf16.mxu0 %v347
    %431 = vmatpush1.bf16.msra.mxu0 %v346
    %432 = vmatprep.subr.bf16.mxu0 %v353
    %433 = vmatpush1.bf16.msra.mxu0 %v352
    %434 = vmatprep.subr.bf16.mxu0 %v359
    %435 = vmatpush1.bf16.msra.mxu0 %v358
    %436 = vmatprep.subr.bf16.mxu0 %v365
    %437 = vmatpush1.bf16.msra.mxu0 %v364
    %438 = vmatprep.subr.bf16.mxu0 %v371
    %439 = vmatpush1.bf16.msra.mxu0 %v370
    %440 = vmatprep.subr.bf16.mxu0 0
    %441 = vmatpush1.bf16.msra.mxu0 0
    %442 = vmatprep.subr.bf16.mxu0 0
    %443 = vmatpush1.bf16.msra.mxu0 0
    %444 = vmatprep.subr.bf16.mxu0 0
    %445 = vmatpush1.bf16.msra.mxu0 0
    %446 = vmatprep.subr.bf16.mxu0 0
    %447 = vmatpush1.bf16.msra.mxu0 0
    %448 = vmatprep.subr.bf16.mxu0 0
    %449 = vmatpush1.bf16.msra.mxu0 0
    %450 = vmatprep.subr.bf16.mxu0 0
    %451 = vmatpush1.bf16.msra.mxu0 0
    %452 = vmatprep.subr.bf16.mxu0 0
    %453 = vmatpush1.bf16.msra.mxu0 0
    %454 = vmatprep.subr.bf16.mxu0 0
    %455 = vmatpush1.bf16.msra.mxu0 0
    %456 = vmatprep.mubr.bf16.mxu0 0
    %457 = vmatmul.mubr.bf16.gmra.mrb[0].mxu0 %v176
    %v458 = vpop.f32.mrb[0].mxu0
    %v459 = vadd.f32 %v133, %v458
    %v460 = vpop.f32.mrb[0].mxu0
    %v461 = vadd.f32 %v137, %v460
    %v462 = vpop.f32.mrb[0].mxu0
    %v463 = vadd.f32 %v133, %v462
    %v464 = vpop.f32.mrb[0].mxu0
    %v465 = vadd.f32 %v137, %v464
    %466 = vmatprep.mubr.bf16.mxu0 0
    %467 = vmatmul.mubr.bf16.gmra.mrb[0].mxu0 %v177
    %v468 = vpop.f32.mrb[0].mxu0
    %v469 = vadd.f32 %v133, %v468
    %v470 = vpop.f32.mrb[0].mxu0
    %v471 = vadd.f32 %v137, %v470
    %v472 = vpop.f32.mrb[0].mxu0
    %v473 = vadd.f32 %v133, %v472
    %v474 = vpop.f32.mrb[0].mxu0
    %v475 = vadd.f32 %v137, %v474
    %476 = vmatprep.mubr.bf16.mxu0 0
    %477 = vmatmul.mubr.bf16.gmra.mrb[0].mxu0 %v178
    %v478 = vpop.f32.mrb[0].mxu0
    %v479 = vadd.f32 %v133, %v478
    %v480 = vpop.f32.mrb[0].mxu0
    %v481 = vadd.f32 %v137, %v480
    %v482 = vpop.f32.mrb[0].mxu0
    %v483 = vadd.f32 %v133, %v482
    %v484 = vpop.f32.mrb[0].mxu0
    %v485 = vadd.f32 %v137, %v484
    %486 = vmatprep.mubr.bf16.mxu0 0
    %487 = vmatmul.mubr.bf16.gmra.mrb[0].mxu0 %v179
    %v488 = vpop.f32.mrb[0].mxu0
    %v489 = vadd.f32 %v133, %v488
    %v490 = vpop.f32.mrb[0].mxu0
    %v491 = vadd.f32 %v137, %v490
    %v492 = vpop.f32.mrb[0].mxu0
    %v493 = vadd.f32 %v133, %v492
    %v494 = vpop.f32.mrb[0].mxu0
    %v495 = vadd.f32 %v137, %v494
    %496 = vdwg.mxu0
    %497 = vmatprep.subr.bf16.mxu0 %v331
    %498 = vmatpush1.bf16.msra.mxu0 %v330
    %499 = vmatprep.subr.bf16.mxu0 %v337
    %500 = vmatpush1.bf16.msra.mxu0 %v336
    %501 = vmatprep.subr.bf16.mxu0 %v343
    %502 = vmatpush1.bf16.msra.mxu0 %v342
    %503 = vmatprep.subr.bf16.mxu0 %v349
    %504 = vmatpush1.bf16.msra.mxu0 %v348
    %505 = vmatprep.subr.bf16.mxu0 %v355
    %506 = vmatpush1.bf16.msra.mxu0 %v354
    %507 = vmatprep.subr.bf16.mxu0 %v361
    %508 = vmatpush1.bf16.msra.mxu0 %v360
    %509 = vmatprep.subr.bf16.mxu0 %v367
    %510 = vmatpush1.bf16.msra.mxu0 %v366
    %511 = vmatprep.subr.bf16.mxu0 %v373
    %512 = vmatpush1.bf16.msra.mxu0 %v372
    %513 = vmatprep.subr.bf16.mxu0 0
    %514 = vmatpush1.bf16.msra.mxu0 0
    %515 = vmatprep.subr.bf16.mxu0 0
    %516 = vmatpush1.bf16.msra.mxu0 0
    %517 = vmatprep.subr.bf16.mxu0 0
    %518 = vmatpush1.bf16.msra.mxu0 0
    %519 = vmatprep.subr.bf16.mxu0 0
    %520 = vmatpush1.bf16.msra.mxu0 0
    %521 = vmatprep.subr.bf16.mxu0 0
    %522 = vmatpush1.bf16.msra.mxu0 0
    %523 = vmatprep.subr.bf16.mxu0 0
    %524 = vmatpush1.bf16.msra.mxu0 0
    %525 = vmatprep.subr.bf16.mxu0 0
    %526 = vmatpush1.bf16.msra.mxu0 0
    %527 = vmatprep.subr.bf16.mxu0 0
    %528 = vmatpush1.bf16.msra.mxu0 0
    %529 = vmatprep.mubr.bf16.mxu0 0
    %530 = vmatmul.mubr.bf16.gmra.mrb[0].mxu0 %v176
    %v531 = vpop.f32.mrb[0].mxu0
    %v532 = vadd.f32 %v141, %v531
    %v533 = vpop.f32.mrb[0].mxu0
    %v534 = vadd.f32 %v145, %v533
    %v535 = vpop.f32.mrb[0].mxu0
    %v536 = vadd.f32 %v141, %v535
    %v537 = vpop.f32.mrb[0].mxu0
    %v538 = vadd.f32 %v145, %v537
    %539 = vmatprep.mubr.bf16.mxu0 0
    %540 = vmatmul.mubr.bf16.gmra.mrb[0].mxu0 %v177
    %v541 = vpop.f32.mrb[0].mxu0
    %v542 = vadd.f32 %v141, %v541
    %v543 = vpop.f32.mrb[0].mxu0
    %v544 = vadd.f32 %v145, %v543
    %v545 = vpop.f32.mrb[0].mxu0
    %v546 = vadd.f32 %v141, %v545
    %v547 = vpop.f32.mrb[0].mxu0
    %v548 = vadd.f32 %v145, %v547
    %549 = vmatprep.mubr.bf16.mxu0 0
    %550 = vmatmul.mubr.bf16.gmra.mrb[0].mxu0 %v178
    %v551 = vpop.f32.mrb[0].mxu0
    %v552 = vadd.f32 %v141, %v551
    %v553 = vpop.f32.mrb[0].mxu0
    %v554 = vadd.f32 %v145, %v553
    %v555 = vpop.f32.mrb[0].mxu0
    %v556 = vadd.f32 %v141, %v555
    %v557 = vpop.f32.mrb[0].mxu0
    %v558 = vadd.f32 %v145, %v557
    %559 = vmatprep.mubr.bf16.mxu0 0
    %560 = vmatmul.mubr.bf16.gmra.mrb[0].mxu0 %v179
    %v561 = vpop.f32.mrb[0].mxu0
    %v562 = vadd.f32 %v141, %v561
    %v563 = vpop.f32.mrb[0].mxu0
    %v564 = vadd.f32 %v145, %v563
    %v565 = vpop.f32.mrb[0].mxu0
    %v566 = vadd.f32 %v141, %v565
    %v567 = vpop.f32.mrb[0].mxu0
    %v568 = vadd.f32 %v145, %v567
    %569 = vdwg.mxu0
    %570 = vmatprep.subr.bf16.mxu0 %v333
    %571 = vmatpush1.bf16.msra.mxu0 %v332
    %572 = vmatprep.subr.bf16.mxu0 %v339
    %573 = vmatpush1.bf16.msra.mxu0 %v338
    %574 = vmatprep.subr.bf16.mxu0 %v345
    %575 = vmatpush1.bf16.msra.mxu0 %v344
    %576 = vmatprep.subr.bf16.mxu0 %v351
    %577 = vmatpush1.bf16.msra.mxu0 %v350
    %578 = vmatprep.subr.bf16.mxu0 %v357
    %579 = vmatpush1.bf16.msra.mxu0 %v356
    %580 = vmatprep.subr.bf16.mxu0 %v363
    %581 = vmatpush1.bf16.msra.mxu0 %v362
    %582 = vmatprep.subr.bf16.mxu0 %v369
    %583 = vmatpush1.bf16.msra.mxu0 %v368
    %584 = vmatprep.subr.bf16.mxu0 %v375
    %585 = vmatpush1.bf16.msra.mxu0 %v374
    %586 = vmatprep.subr.bf16.mxu0 0
    %587 = vmatpush1.bf16.msra.mxu0 0
    %588 = vmatprep.subr.bf16.mxu0 0
    %589 = vmatpush1.bf16.msra.mxu0 0
    %590 = vmatprep.subr.bf16.mxu0 0
    %591 = vmatpush1.bf16.msra.mxu0 0
    %592 = vmatprep.subr.bf16.mxu0 0
    %593 = vmatpush1.bf16.msra.mxu0 0
    %594 = vmatprep.subr.bf16.mxu0 0
    %595 = vmatpush1.bf16.msra.mxu0 0
    %596 = vmatprep.subr.bf16.mxu0 0
    %597 = vmatpush1.bf16.msra.mxu0 0
    %598 = vmatprep.subr.bf16.mxu0 0
    %599 = vmatpush1.bf16.msra.mxu0 0
    %600 = vmatprep.subr.bf16.mxu0 0
    %601 = vmatpush1.bf16.msra.mxu0 0
    %602 = vmatprep.mubr.bf16.mxu0 0
    %603 = vmatmul.mubr.bf16.gmra.mrb[0].mxu0 %v176
    %v604 = vpop.f32.mrb[0].mxu0
    %v605 = vadd.f32 %v149, %v604
    %v606 = vpop.f32.mrb[0].mxu0
    %v607 = vadd.f32 %v153, %v606
    %v608 = vpop.f32.mrb[0].mxu0
    %v609 = vadd.f32 %v149, %v608
    %v610 = vpop.f32.mrb[0].mxu0
    %v611 = vadd.f32 %v153, %v610
    %612 = vmatprep.mubr.bf16.mxu0 0
    %613 = vmatmul.mubr.bf16.gmra.mrb[0].mxu0 %v177
    %v614 = vpop.f32.mrb[0].mxu0
    %v615 = vadd.f32 %v149, %v614
    %v616 = vpop.f32.mrb[0].mxu0
    %v617 = vadd.f32 %v153, %v616
    %v618 = vpop.f32.mrb[0].mxu0
    %v619 = vadd.f32 %v149, %v618
    %v620 = vpop.f32.mrb[0].mxu0
    %v621 = vadd.f32 %v153, %v620
    %622 = vmatprep.mubr.bf16.mxu0 0
    %623 = vmatmul.mubr.bf16.gmra.mrb[0].mxu0 %v178
    %v624 = vpop.f32.mrb[0].mxu0
    %v625 = vadd.f32 %v149, %v624
    %v626 = vpop.f32.mrb[0].mxu0
    %v627 = vadd.f32 %v153, %v626
    %v628 = vpop.f32.mrb[0].mxu0
    %v629 = vadd.f32 %v149, %v628
    %v630 = vpop.f32.mrb[0].mxu0
    %v631 = vadd.f32 %v153, %v630
    %632 = vmatprep.mubr.bf16.mxu0 0
    %633 = vmatmul.mubr.bf16.gmra.mrb[0].mxu0 %v179
    %v634 = vpop.f32.mrb[0].mxu0
    %v635 = vadd.f32 %v149, %v634
    %v636 = vpop.f32.mrb[0].mxu0
    %v637 = vadd.f32 %v153, %v636
    %v638 = vpop.f32.mrb[0].mxu0
    %v639 = vadd.f32 %v149, %v638
    %v640 = vpop.f32.mrb[0].mxu0
    %v641 = vadd.f32 %v153, %v640
    %642 = vdwg.mxu0
    %643 = vst [vmem:[#allocation2] sm:$0xff] %v459
    %644 = vst [vmem:[#allocation2 + $0x8] sm:$0xff] %v461
    %645 = vst [vmem:[#allocation2 + $0x10] sm:$0xff] %v532
    %646 = vst [vmem:[#allocation2 + $0x18] sm:$0xff] %v463
    %647 = vst [vmem:[#allocation2 + $0x20] sm:$0xff] %v465
    %648 = vst [vmem:[#allocation2 + $0x28] sm:$0xff] %v536
    %649 = vst [vmem:[#allocation2 + $0x30] sm:$0xff] %v469
    %650 = vst [vmem:[#allocation2 + $0x38] sm:$0xff] %v471
    %651 = vst [vmem:[#allocation2 + $0x40] sm:$0xff] %v542
    %652 = vst [vmem:[#allocation2 + $0x48] sm:$0xff] %v473
    %653 = vst [vmem:[#allocation2 + $0x50] sm:$0xff] %v475
    %654 = vst [vmem:[#allocation2 + $0x58] sm:$0xff] %v546
    %655 = vst [vmem:[#allocation2 + $0x60] sm:$0xff] %v479
    %656 = vst [vmem:[#allocation2 + $0x68] sm:$0xff] %v481
    %657 = vst [vmem:[#allocation2 + $0x70] sm:$0xff] %v552
    %658 = vst [vmem:[#allocation2 + $0x78] sm:$0xff] %v483
    %659 = vst [vmem:[#allocation2 + $0x80] sm:$0xff] %v485
    %660 = vst [vmem:[#allocation2 + $0x88] sm:$0xff] %v556
    %661 = vst [vmem:[#allocation2 + $0x90] sm:$0xff] %v489
    %662 = vst [vmem:[#allocation2 + $0x98] sm:$0xff] %v491
    %663 = vst [vmem:[#allocation2 + $0xa0] sm:$0xff] %v562
    %664 = vst [vmem:[#allocation2 + $0xa8] sm:$0xff] %v493
    %665 = vst [vmem:[#allocation2 + $0xb0] sm:$0xff] %v495
    %666 = vst [vmem:[#allocation2 + $0xb8] sm:$0xff] %v566
    %667 = vst [vmem:[#allocation3] sm:$0xff] %v534
    %668 = vst [vmem:[#allocation3 + $0x8] sm:$0xff] %v605
    %669 = vst [vmem:[#allocation3 + $0x10] sm:$0xff] %v607
    %670 = vst [vmem:[#allocation3 + $0x18] sm:$0xff] %v538
    %671 = vst [vmem:[#allocation3 + $0x20] sm:$0xff] %v609
    %672 = vst [vmem:[#allocation3 + $0x28] sm:$0xff] %v611
    %673 = vst [vmem:[#allocation3 + $0x30] sm:$0xff] %v544
    %674 = vst [vmem:[#allocation3 + $0x38] sm:$0xff] %v615
    %675 = vst [vmem:[#allocation3 + $0x40] sm:$0xff] %v617
    %676 = vst [vmem:[#allocation3 + $0x48] sm:$0xff] %v548
    %677 = vst [vmem:[#allocation3 + $0x50] sm:$0xff] %v619
    %678 = vst [vmem:[#allocation3 + $0x58] sm:$0xff] %v621
    %679 = vst [vmem:[#allocation3 + $0x60] sm:$0xff] %v554
    %680 = vst [vmem:[#allocation3 + $0x68] sm:$0xff] %v625
    %681 = vst [vmem:[#allocation3 + $0x70] sm:$0xff] %v627
    %682 = vst [vmem:[#allocation3 + $0x78] sm:$0xff] %v558
    %683 = vst [vmem:[#allocation3 + $0x80] sm:$0xff] %v629
    %684 = vst [vmem:[#allocation3 + $0x88] sm:$0xff] %v631
    %685 = vst [vmem:[#allocation3 + $0x90] sm:$0xff] %v564
    %686 = vst [vmem:[#allocation3 + $0x98] sm:$0xff] %v635
    %687 = vst [vmem:[#allocation3 + $0xa0] sm:$0xff] %v637
    %688 = vst [vmem:[#allocation3 + $0xa8] sm:$0xff] %v568
    %689 = vst [vmem:[#allocation3 + $0xb0] sm:$0xff] %v639
    %690 = vst [vmem:[#allocation3 + $0xb8] sm:$0xff] %v641
    %v691 = vld [vmem:[%s1] sm:$0xff]
    %v692 = vld [vmem:[%s5] sm:$0x1]
    %v694 = vlaneseq
    %v695 = vshrl.u32 %v694, 7
    %v696 = vsub.s32 0, %v695
    %v697 = vrot.slane %v692, %v696
    %v699 = vld [vmem:[%s6] sm:$0x1]
    %v701 = vlaneseq
    %v702 = vshrl.u32 %v701, 7
    %v703 = vsub.s32 0, %v702
    %v704 = vrot.slane %v699, %v703
    %v706 = vpack.c.bf16 0.0, 0.0
    %v707 = vld [vmem:[#allocation10] sm:$0xff]
    %v708 = vld [vmem:[#allocation10 + $0x8] sm:$0xff]
    %v709 = vld [vmem:[#allocation10 + $0x10] sm:$0xff]
    %v710 = vld [vmem:[#allocation10 + $0x18] sm:$0xff]
    %v711 = vld [vmem:[#allocation10 + $0x20] sm:$0xff]
    %v712 = vld [vmem:[#allocation10 + $0x28] sm:$0xff]
    %v713 = vld [vmem:[#allocation10 + $0x30] sm:$0xff]
    %v714 = vld [vmem:[#allocation10 + $0x38] sm:$0xff]
    %v715 = vld [vmem:[#allocation10 + $0x40] sm:$0xff]
    %v716 = vld [vmem:[#allocation10 + $0x48] sm:$0xff]
    %v717 = vld [vmem:[#allocation10 + $0x50] sm:$0xff]
    %v718 = vld [vmem:[#allocation10 + $0x58] sm:$0xff]
    %v719 = vld [vmem:[#allocation10 + $0x60] sm:$0xff]
    %v720 = vld [vmem:[#allocation10 + $0x68] sm:$0xff]
    %v721 = vld [vmem:[#allocation10 + $0x70] sm:$0xff]
    %v722 = vld [vmem:[#allocation10 + $0x78] sm:$0xff]
    %v723 = vld [vmem:[#allocation10 + $0x80] sm:$0xff]
    %v724 = vld [vmem:[#allocation10 + $0x88] sm:$0xff]
    %v725 = vld [vmem:[#allocation10 + $0x90] sm:$0xff]
    %v726 = vld [vmem:[#allocation10 + $0x98] sm:$0xff]
    %v727 = vld [vmem:[#allocation10 + $0xa0] sm:$0xff]
    %v728 = vld [vmem:[#allocation10 + $0xa8] sm:$0xff]
    %v729 = vld [vmem:[#allocation10 + $0xb0] sm:$0xff]
    %v730 = vld [vmem:[#allocation10 + $0xb8] sm:$0xff]
    %v731 = vld [vmem:[#allocation10 + $0xc0] sm:$0xff]
    %v732 = vld [vmem:[#allocation10 + $0xc8] sm:$0xff]
    %v733 = vld [vmem:[#allocation10 + $0xd0] sm:$0xff]
    %v734 = vld [vmem:[#allocation10 + $0xd8] sm:$0xff]
    %v735 = vld [vmem:[#allocation10 + $0xe0] sm:$0xff]
    %v736 = vld [vmem:[#allocation10 + $0xe8] sm:$0xff]
    %v737 = vld [vmem:[#allocation10 + $0xf0] sm:$0xff]
    %v738 = vld [vmem:[#allocation10 + $0xf8] sm:$0xff]
    %v739 = vld [vmem:[#allocation10 + $0x100] sm:$0xff]
    %v740 = vld [vmem:[#allocation10 + $0x108] sm:$0xff]
    %v741 = vld [vmem:[#allocation10 + $0x110] sm:$0xff]
    %v742 = vld [vmem:[#allocation10 + $0x118] sm:$0xff]
    %v743 = vld [vmem:[#allocation10 + $0x120] sm:$0xff]
    %v744 = vld [vmem:[#allocation10 + $0x128] sm:$0xff]
    %v745 = vld [vmem:[#allocation10 + $0x130] sm:$0xff]
    %v746 = vld [vmem:[#allocation10 + $0x138] sm:$0xff]
    %v747 = vld [vmem:[#allocation10 + $0x140] sm:$0xff]
    %v748 = vld [vmem:[#allocation10 + $0x148] sm:$0xff]
    %v749 = vld [vmem:[#allocation10 + $0x150] sm:$0xff]
    %v750 = vld [vmem:[#allocation10 + $0x158] sm:$0xff]
    %v751 = vld [vmem:[#allocation10 + $0x160] sm:$0xff]
    %v752 = vld [vmem:[#allocation10 + $0x168] sm:$0xff]
    %v753 = vld [vmem:[#allocation10 + $0x170] sm:$0xff]
    %v754 = vld [vmem:[#allocation10 + $0x178] sm:$0xff]
    %v755 = vld [vmem:[#allocation10 + $0x180] sm:$0xff]
    %v756 = vld [vmem:[#allocation10 + $0x188] sm:$0xff]
    %v757 = vld [vmem:[#allocation10 + $0x190] sm:$0xff]
    %v758 = vld [vmem:[#allocation10 + $0x198] sm:$0xff]
    %v759 = vld [vmem:[#allocation10 + $0x1a0] sm:$0xff]
    %v760 = vld [vmem:[#allocation10 + $0x1a8] sm:$0xff]
    %v761 = vld [vmem:[#allocation10 + $0x1b0] sm:$0xff]
    %v762 = vld [vmem:[#allocation10 + $0x1b8] sm:$0xff]
    %v763 = vld [vmem:[#allocation10 + $0x1c0] sm:$0xff]
    %v764 = vld [vmem:[#allocation10 + $0x1c8] sm:$0xff]
    %v765 = vld [vmem:[#allocation10 + $0x1d0] sm:$0xff]
    %v766 = vld [vmem:[#allocation10 + $0x1d8] sm:$0xff]
    %v767 = vld [vmem:[#allocation10 + $0x1e0] sm:$0xff]
    %v768 = vld [vmem:[#allocation10 + $0x1e8] sm:$0xff]
    %v769 = vld [vmem:[#allocation10 + $0x1f0] sm:$0xff]
    %v770 = vld [vmem:[#allocation10 + $0x1f8] sm:$0xff]
    %v771 = vld [vmem:[#allocation10 + $0x200] sm:$0xff]
    %v772 = vld [vmem:[#allocation10 + $0x208] sm:$0xff]
    %v773 = vld [vmem:[#allocation10 + $0x210] sm:$0xff]
    %v774 = vld [vmem:[#allocation10 + $0x218] sm:$0xff]
    %v775 = vld [vmem:[#allocation10 + $0x220] sm:$0xff]
    %v776 = vld [vmem:[#allocation10 + $0x228] sm:$0xff]
    %v777 = vld [vmem:[#allocation10 + $0x230] sm:$0xff]
    %v778 = vld [vmem:[#allocation10 + $0x238] sm:$0xff]
    %v779 = vld [vmem:[#allocation10 + $0x240] sm:$0xff]
    %v780 = vld [vmem:[#allocation10 + $0x248] sm:$0xff]
    %v781 = vld [vmem:[#allocation10 + $0x250] sm:$0xff]
    %v782 = vld [vmem:[#allocation10 + $0x258] sm:$0xff]
    %v783 = vld [vmem:[#allocation10 + $0x260] sm:$0xff]
    %v784 = vld [vmem:[#allocation10 + $0x268] sm:$0xff]
    %v785 = vld [vmem:[#allocation10 + $0x270] sm:$0xff]
    %v786 = vld [vmem:[#allocation10 + $0x278] sm:$0xff]
    %v787 = vld [vmem:[#allocation10 + $0x280] sm:$0xff]
    %v788 = vld [vmem:[#allocation10 + $0x288] sm:$0xff]
    %v789 = vld [vmem:[#allocation10 + $0x290] sm:$0xff]
    %v790 = vld [vmem:[#allocation10 + $0x298] sm:$0xff]
    %v791 = vld [vmem:[#allocation10 + $0x2a0] sm:$0xff]
    %v792 = vld [vmem:[#allocation10 + $0x2a8] sm:$0xff]
    %v793 = vld [vmem:[#allocation10 + $0x2b0] sm:$0xff]
    %v794 = vld [vmem:[#allocation10 + $0x2b8] sm:$0xff]
    %v795 = vld [vmem:[#allocation10 + $0x2c0] sm:$0xff]
    %v796 = vld [vmem:[#allocation10 + $0x2c8] sm:$0xff]
    %v797 = vld [vmem:[#allocation10 + $0x2d0] sm:$0xff]
    %v798 = vld [vmem:[#allocation10 + $0x2d8] sm:$0xff]
    %v799 = vld [vmem:[#allocation10 + $0x2e0] sm:$0xff]
    %v800 = vld [vmem:[#allocation10 + $0x2e8] sm:$0xff]
    %v801 = vld [vmem:[#allocation10 + $0x2f0] sm:$0xff]
    %v802 = vld [vmem:[#allocation10 + $0x2f8] sm:$0xff]
    %v899 = vunpack.c.l.b16 %v707
    %v900 = vunpack.c.h.b16 %v707
    %v901 = vunpack.c.l.b16 %v708
    %v902 = vunpack.c.h.b16 %v708
    %v903 = vunpack.c.l.b16 %v709
    %v904 = vunpack.c.h.b16 %v709
    %v905 = vunpack.c.l.b16 %v710
    %v906 = vunpack.c.h.b16 %v710
    %v907 = vunpack.c.l.b16 %v711
    %v908 = vunpack.c.h.b16 %v711
    %v909 = vunpack.c.l.b16 %v712
    %v910 = vunpack.c.h.b16 %v712
    %v911 = vunpack.c.l.b16 %v713
    %v912 = vunpack.c.h.b16 %v713
    %v913 = vunpack.c.l.b16 %v714
    %v914 = vunpack.c.h.b16 %v714
    %v915 = vunpack.c.l.b16 %v715
    %v916 = vunpack.c.h.b16 %v715
    %v917 = vunpack.c.l.b16 %v716
    %v918 = vunpack.c.h.b16 %v716
    %v919 = vunpack.c.l.b16 %v717
    %v920 = vunpack.c.h.b16 %v717
    %v921 = vunpack.c.l.b16 %v718
    %v922 = vunpack.c.h.b16 %v718
    %v923 = vunpack.c.l.b16 %v719
    %v924 = vunpack.c.h.b16 %v719
    %v925 = vunpack.c.l.b16 %v720
    %v926 = vunpack.c.h.b16 %v720
    %v927 = vunpack.c.l.b16 %v721
    %v928 = vunpack.c.h.b16 %v721
    %v929 = vunpack.c.l.b16 %v722
    %v930 = vunpack.c.h.b16 %v722
    %v931 = vunpack.c.l.b16 %v723
    %v932 = vunpack.c.h.b16 %v723
    %v933 = vunpack.c.l.b16 %v724
    %v934 = vunpack.c.h.b16 %v724
    %v935 = vunpack.c.l.b16 %v725
    %v936 = vunpack.c.h.b16 %v725
    %v937 = vunpack.c.l.b16 %v726
    %v938 = vunpack.c.h.b16 %v726
    %v939 = vunpack.c.l.b16 %v727
    %v940 = vunpack.c.h.b16 %v727
    %v941 = vunpack.c.l.b16 %v728
    %v942 = vunpack.c.h.b16 %v728
    %v943 = vunpack.c.l.b16 %v729
    %v944 = vunpack.c.h.b16 %v729
    %v945 = vunpack.c.l.b16 %v730
    %v946 = vunpack.c.h.b16 %v730
    %v947 = vunpack.c.l.b16 %v731
    %v948 = vunpack.c.h.b16 %v731
    %v949 = vunpack.c.l.b16 %v732
    %v950 = vunpack.c.h.b16 %v732
    %v951 = vunpack.c.l.b16 %v733
    %v952 = vunpack.c.h.b16 %v733
    %v953 = vunpack.c.l.b16 %v734
    %v954 = vunpack.c.h.b16 %v734
    %v955 = vunpack.c.l.b16 %v735
    %v956 = vunpack.c.h.b16 %v735
    %v957 = vunpack.c.l.b16 %v736
    %v958 = vunpack.c.h.b16 %v736
    %v959 = vunpack.c.l.b16 %v737
    %v960 = vunpack.c.h.b16 %v737
    %v961 = vunpack.c.l.b16 %v738
    %v962 = vunpack.c.h.b16 %v738
    %v963 = vunpack.c.l.b16 %v739
    %v964 = vunpack.c.h.b16 %v739
    %v965 = vunpack.c.l.b16 %v740
    %v966 = vunpack.c.h.b16 %v740
    %v967 = vunpack.c.l.b16 %v741
    %v968 = vunpack.c.h.b16 %v741
    %v969 = vunpack.c.l.b16 %v742
    %v970 = vunpack.c.h.b16 %v742
    %v971 = vunpack.c.l.b16 %v743
    %v972 = vunpack.c.h.b16 %v743
    %v973 = vunpack.c.l.b16 %v744
    %v974 = vunpack.c.h.b16 %v744
    %v975 = vunpack.c.l.b16 %v745
    %v976 = vunpack.c.h.b16 %v745
    %v977 = vunpack.c.l.b16 %v746
    %v978 = vunpack.c.h.b16 %v746
    %v979 = vunpack.c.l.b16 %v747
    %v980 = vunpack.c.h.b16 %v747
    %v981 = vunpack.c.l.b16 %v748
    %v982 = vunpack.c.h.b16 %v748
    %v983 = vunpack.c.l.b16 %v749
    %v984 = vunpack.c.h.b16 %v749
    %v985 = vunpack.c.l.b16 %v750
    %v986 = vunpack.c.h.b16 %v750
    %v987 = vunpack.c.l.b16 %v751
    %v988 = vunpack.c.h.b16 %v751
    %v989 = vunpack.c.l.b16 %v752
    %v990 = vunpack.c.h.b16 %v752
    %v991 = vunpack.c.l.b16 %v753
    %v992 = vunpack.c.h.b16 %v753
    %v993 = vunpack.c.l.b16 %v754
    %v994 = vunpack.c.h.b16 %v754
    %v995 = vunpack.c.l.b16 %v755
    %v996 = vunpack.c.h.b16 %v755
    %v997 = vunpack.c.l.b16 %v756
    %v998 = vunpack.c.h.b16 %v756
    %v999 = vunpack.c.l.b16 %v757
    %v1000 = vunpack.c.h.b16 %v757
    %v1001 = vunpack.c.l.b16 %v758
    %v1002 = vunpack.c.h.b16 %v758
    %v1003 = vunpack.c.l.b16 %v759
    %v1004 = vunpack.c.h.b16 %v759
    %v1005 = vunpack.c.l.b16 %v760
    %v1006 = vunpack.c.h.b16 %v760
    %v1007 = vunpack.c.l.b16 %v761
    %v1008 = vunpack.c.h.b16 %v761
    %v1009 = vunpack.c.l.b16 %v762
    %v1010 = vunpack.c.h.b16 %v762
    %v1011 = vunpack.c.l.b16 %v763
    %v1012 = vunpack.c.h.b16 %v763
    %v1013 = vunpack.c.l.b16 %v764
    %v1014 = vunpack.c.h.b16 %v764
    %v1015 = vunpack.c.l.b16 %v765
    %v1016 = vunpack.c.h.b16 %v765
    %v1017 = vunpack.c.l.b16 %v766
    %v1018 = vunpack.c.h.b16 %v766
    %v1019 = vunpack.c.l.b16 %v767
    %v1020 = vunpack.c.h.b16 %v767
    %v1021 = vunpack.c.l.b16 %v768
    %v1022 = vunpack.c.h.b16 %v768
    %v1023 = vunpack.c.l.b16 %v769
    %v1024 = vunpack.c.h.b16 %v769
    %v1025 = vunpack.c.l.b16 %v770
    %v1026 = vunpack.c.h.b16 %v770
    %v1027 = vunpack.c.l.b16 %v771
    %v1028 = vunpack.c.h.b16 %v771
    %v1029 = vunpack.c.l.b16 %v772
    %v1030 = vunpack.c.h.b16 %v772
    %v1031 = vunpack.c.l.b16 %v773
    %v1032 = vunpack.c.h.b16 %v773
    %v1033 = vunpack.c.l.b16 %v774
    %v1034 = vunpack.c.h.b16 %v774
    %v1035 = vunpack.c.l.b16 %v775
    %v1036 = vunpack.c.h.b16 %v775
    %v1037 = vunpack.c.l.b16 %v776
    %v1038 = vunpack.c.h.b16 %v776
    %v1039 = vunpack.c.l.b16 %v777
    %v1040 = vunpack.c.h.b16 %v777
    %v1041 = vunpack.c.l.b16 %v778
    %v1042 = vunpack.c.h.b16 %v778
    %v1043 = vunpack.c.l.b16 %v779
    %v1044 = vunpack.c.h.b16 %v779
    %v1045 = vunpack.c.l.b16 %v780
    %v1046 = vunpack.c.h.b16 %v780
    %v1047 = vunpack.c.l.b16 %v781
    %v1048 = vunpack.c.h.b16 %v781
    %v1049 = vunpack.c.l.b16 %v782
    %v1050 = vunpack.c.h.b16 %v782
    %v1051 = vunpack.c.l.b16 %v783
    %v1052 = vunpack.c.h.b16 %v783
    %v1053 = vunpack.c.l.b16 %v784
    %v1054 = vunpack.c.h.b16 %v784
    %v1055 = vunpack.c.l.b16 %v785
    %v1056 = vunpack.c.h.b16 %v785
    %v1057 = vunpack.c.l.b16 %v786
    %v1058 = vunpack.c.h.b16 %v786
    %v1059 = vunpack.c.l.b16 %v787
    %v1060 = vunpack.c.h.b16 %v787
    %v1061 = vunpack.c.l.b16 %v788
    %v1062 = vunpack.c.h.b16 %v788
    %v1063 = vunpack.c.l.b16 %v789
    %v1064 = vunpack.c.h.b16 %v789
    %v1065 = vunpack.c.l.b16 %v790
    %v1066 = vunpack.c.h.b16 %v790
    %v1067 = vunpack.c.l.b16 %v791
    %v1068 = vunpack.c.h.b16 %v791
    %v1069 = vunpack.c.l.b16 %v792
    %v1070 = vunpack.c.h.b16 %v792
    %v1071 = vunpack.c.l.b16 %v793
    %v1072 = vunpack.c.h.b16 %v793
    %v1073 = vunpack.c.l.b16 %v794
    %v1074 = vunpack.c.h.b16 %v794
    %v1075 = vunpack.c.l.b16 %v795
    %v1076 = vunpack.c.h.b16 %v795
    %v1077 = vunpack.c.l.b16 %v796
    %v1078 = vunpack.c.h.b16 %v796
    %v1079 = vunpack.c.l.b16 %v797
    %v1080 = vunpack.c.h.b16 %v797
    %v1081 = vunpack.c.l.b16 %v798
    %v1082 = vunpack.c.h.b16 %v798
    %v1083 = vunpack.c.l.b16 %v799
    %v1084 = vunpack.c.h.b16 %v799
    %v1085 = vunpack.c.l.b16 %v800
    %v1086 = vunpack.c.h.b16 %v800
    %v1087 = vunpack.c.l.b16 %v801
    %v1088 = vunpack.c.h.b16 %v801
    %v1089 = vunpack.c.l.b16 %v802
    %v1090 = vunpack.c.h.b16 %v802
    %v1091 = vpack.c.b16 %v905, %v899
    %v1092 = vpack.c.b16 %v906, %v900
    %v1093 = vpack.c.b16 %v907, %v901
    %v1094 = vpack.c.b16 %v908, %v902
    %v1095 = vpack.c.b16 %v909, %v903
    %v1096 = vpack.c.b16 %v910, %v904
    %v1097 = vpack.c.b16 %v917, %v911
    %v1098 = vpack.c.b16 %v918, %v912
    %v1099 = vpack.c.b16 %v919, %v913
    %v1100 = vpack.c.b16 %v920, %v914
    %v1101 = vpack.c.b16 %v921, %v915
    %v1102 = vpack.c.b16 %v922, %v916
    %v1103 = vpack.c.b16 %v929, %v923
    %v1104 = vpack.c.b16 %v930, %v924
    %v1105 = vpack.c.b16 %v931, %v925
    %v1106 = vpack.c.b16 %v932, %v926
    %v1107 = vpack.c.b16 %v933, %v927
    %v1108 = vpack.c.b16 %v934, %v928
    %v1109 = vpack.c.b16 %v941, %v935
    %v1110 = vpack.c.b16 %v942, %v936
    %v1111 = vpack.c.b16 %v943, %v937
    %v1112 = vpack.c.b16 %v944, %v938
    %v1113 = vpack.c.b16 %v945, %v939
    %v1114 = vpack.c.b16 %v946, %v940
    %v1115 = vpack.c.b16 %v953, %v947
    %v1116 = vpack.c.b16 %v954, %v948
    %v1117 = vpack.c.b16 %v955, %v949
    %v1118 = vpack.c.b16 %v956, %v950
    %v1119 = vpack.c.b16 %v957, %v951
    %v1120 = vpack.c.b16 %v958, %v952
    %v1121 = vpack.c.b16 %v965, %v959
    %v1122 = vpack.c.b16 %v966, %v960
    %v1123 = vpack.c.b16 %v967, %v961
    %v1124 = vpack.c.b16 %v968, %v962
    %v1125 = vpack.c.b16 %v969, %v963
    %v1126 = vpack.c.b16 %v970, %v964
    %v1127 = vpack.c.b16 %v977, %v971
    %v1128 = vpack.c.b16 %v978, %v972
    %v1129 = vpack.c.b16 %v979, %v973
    %v1130 = vpack.c.b16 %v980, %v974
    %v1131 = vpack.c.b16 %v981, %v975
    %v1132 = vpack.c.b16 %v982, %v976
    %v1133 = vpack.c.b16 %v989, %v983
    %v1134 = vpack.c.b16 %v990, %v984
    %v1135 = vpack.c.b16 %v991, %v985
    %v1136 = vpack.c.b16 %v992, %v986
    %v1137 = vpack.c.b16 %v993, %v987
    %v1138 = vpack.c.b16 %v994, %v988
    %v1139 = vpack.c.b16 %v1001, %v995
    %v1140 = vpack.c.b16 %v1002, %v996
    %v1141 = vpack.c.b16 %v1003, %v997
    %v1142 = vpack.c.b16 %v1004, %v998
    %v1143 = vpack.c.b16 %v1005, %v999
    %v1144 = vpack.c.b16 %v1006, %v1000
    %v1145 = vpack.c.b16 %v1013, %v1007
    %v1146 = vpack.c.b16 %v1014, %v1008
    %v1147 = vpack.c.b16 %v1015, %v1009
    %v1148 = vpack.c.b16 %v1016, %v1010
    %v1149 = vpack.c.b16 %v1017, %v1011
    %v1150 = vpack.c.b16 %v1018, %v1012
    %v1151 = vpack.c.b16 %v1025, %v1019
    %v1152 = vpack.c.b16 %v1026, %v1020
    %v1153 = vpack.c.b16 %v1027, %v1021
    %v1154 = vpack.c.b16 %v1028, %v1022
    %v1155 = vpack.c.b16 %v1029, %v1023
    %v1156 = vpack.c.b16 %v1030, %v1024
    %v1157 = vpack.c.b16 %v1037, %v1031
    %v1158 = vpack.c.b16 %v1038, %v1032
    %v1159 = vpack.c.b16 %v1039, %v1033
    %v1160 = vpack.c.b16 %v1040, %v1034
    %v1161 = vpack.c.b16 %v1041, %v1035
    %v1162 = vpack.c.b16 %v1042, %v1036
    %v1163 = vpack.c.b16 %v1049, %v1043
    %v1164 = vpack.c.b16 %v1050, %v1044
    %v1165 = vpack.c.b16 %v1051, %v1045
    %v1166 = vpack.c.b16 %v1052, %v1046
    %v1167 = vpack.c.b16 %v1053, %v1047
    %v1168 = vpack.c.b16 %v1054, %v1048
    %v1169 = vpack.c.b16 %v1061, %v1055
    %v1170 = vpack.c.b16 %v1062, %v1056
    %v1171 = vpack.c.b16 %v1063, %v1057
    %v1172 = vpack.c.b16 %v1064, %v1058
    %v1173 = vpack.c.b16 %v1065, %v1059
    %v1174 = vpack.c.b16 %v1066, %v1060
    %v1175 = vpack.c.b16 %v1073, %v1067
    %v1176 = vpack.c.b16 %v1074, %v1068
    %v1177 = vpack.c.b16 %v1075, %v1069
    %v1178 = vpack.c.b16 %v1076, %v1070
    %v1179 = vpack.c.b16 %v1077, %v1071
    %v1180 = vpack.c.b16 %v1078, %v1072
    %v1181 = vpack.c.b16 %v1085, %v1079
    %v1182 = vpack.c.b16 %v1086, %v1080
    %v1183 = vpack.c.b16 %v1087, %v1081
    %v1184 = vpack.c.b16 %v1088, %v1082
    %v1185 = vpack.c.b16 %v1089, %v1083
    %v1186 = vpack.c.b16 %v1090, %v1084
    %1283 = vmatprep.subr.bf16.mxu0 %v1092
    %1284 = vmatpush1.bf16.msra.mxu0 %v1091
    %1285 = vmatprep.subr.bf16.mxu0 %v1098
    %1286 = vmatpush1.bf16.msra.mxu0 %v1097
    %1287 = vmatprep.subr.bf16.mxu0 %v1104
    %1288 = vmatpush1.bf16.msra.mxu0 %v1103
    %1289 = vmatprep.subr.bf16.mxu0 %v1110
    %1290 = vmatpush1.bf16.msra.mxu0 %v1109
    %1291 = vmatprep.subr.bf16.mxu0 %v1116
    %1292 = vmatpush1.bf16.msra.mxu0 %v1115
    %1293 = vmatprep.subr.bf16.mxu0 %v1122
    %1294 = vmatpush1.bf16.msra.mxu0 %v1121
    %1295 = vmatprep.subr.bf16.mxu0 %v1128
    %1296 = vmatpush1.bf16.msra.mxu0 %v1127
    %1297 = vmatprep.subr.bf16.mxu0 %v1134
    %1298 = vmatpush1.bf16.msra.mxu0 %v1133
    %1299 = vmatprep.subr.bf16.mxu0 %v1140
    %1300 = vmatpush1.bf16.msra.mxu0 %v1139
    %1301 = vmatprep.subr.bf16.mxu0 %v1146
    %1302 = vmatpush1.bf16.msra.mxu0 %v1145
    %1303 = vmatprep.subr.bf16.mxu0 %v1152
    %1304 = vmatpush1.bf16.msra.mxu0 %v1151
    %1305 = vmatprep.subr.bf16.mxu0 %v1158
    %1306 = vmatpush1.bf16.msra.mxu0 %v1157
    %1307 = vmatprep.subr.bf16.mxu0 %v1164
    %1308 = vmatpush1.bf16.msra.mxu0 %v1163
    %1309 = vmatprep.subr.bf16.mxu0 %v1170
    %1310 = vmatpush1.bf16.msra.mxu0 %v1169
    %1311 = vmatprep.subr.bf16.mxu0 %v1176
    %1312 = vmatpush1.bf16.msra.mxu0 %v1175
    %1313 = vmatprep.subr.bf16.mxu0 %v1182
    %1314 = vmatpush1.bf16.msra.mxu0 %v1181
    %1315 = vmatprep.mubr.bf16.mxu0 %v706
    %1316 = vmatmul.mubr.bf16.gmra.mrb[0].mxu0 %v706
    %v1317 = vpop.f32.mrb[0].mxu0
    %v1318 = vadd.f32 0.0, %v1317
    %v1319 = vpop.f32.mrb[0].mxu0
    %v1320 = vadd.f32 0.0, %v1319
    %v1321 = vpop.f32.mrb[0].mxu0
    %v1322 = vpop.f32.mrb[0].mxu0
    %1323 = vdwg.mxu0
    %1324 = vmatprep.subr.bf16.mxu0 %v1094
    %1325 = vmatpush1.bf16.msra.mxu0 %v1093
    %1326 = vmatprep.subr.bf16.mxu0 %v1100
    %1327 = vmatpush1.bf16.msra.mxu0 %v1099
    %1328 = vmatprep.subr.bf16.mxu0 %v1106
    %1329 = vmatpush1.bf16.msra.mxu0 %v1105
    %1330 = vmatprep.subr.bf16.mxu0 %v1112
    %1331 = vmatpush1.bf16.msra.mxu0 %v1111
    %1332 = vmatprep.subr.bf16.mxu0 %v1118
    %1333 = vmatpush1.bf16.msra.mxu0 %v1117
    %1334 = vmatprep.subr.bf16.mxu0 %v1124
    %1335 = vmatpush1.bf16.msra.mxu0 %v1123
    %1336 = vmatprep.subr.bf16.mxu0 %v1130
    %1337 = vmatpush1.bf16.msra.mxu0 %v1129
    %1338 = vmatprep.subr.bf16.mxu0 %v1136
    %1339 = vmatpush1.bf16.msra.mxu0 %v1135
    %1340 = vmatprep.subr.bf16.mxu0 %v1142
    %1341 = vmatpush1.bf16.msra.mxu0 %v1141
    %1342 = vmatprep.subr.bf16.mxu0 %v1148
    %1343 = vmatpush1.bf16.msra.mxu0 %v1147
    %1344 = vmatprep.subr.bf16.mxu0 %v1154
    %1345 = vmatpush1.bf16.msra.mxu0 %v1153
    %1346 = vmatprep.subr.bf16.mxu0 %v1160
    %1347 = vmatpush1.bf16.msra.mxu0 %v1159
    %1348 = vmatprep.subr.bf16.mxu0 %v1166
    %1349 = vmatpush1.bf16.msra.mxu0 %v1165
    %1350 = vmatprep.subr.bf16.mxu0 %v1172
    %1351 = vmatpush1.bf16.msra.mxu0 %v1171
    %1352 = vmatprep.subr.bf16.mxu0 %v1178
    %1353 = vmatpush1.bf16.msra.mxu0 %v1177
    %1354 = vmatprep.subr.bf16.mxu0 %v1184
    %1355 = vmatpush1.bf16.msra.mxu0 %v1183
    %1356 = vmatprep.mubr.bf16.mxu0 %v706
    %1357 = vmatmul.mubr.bf16.gmra.mrb[0].mxu0 %v706
    %v1358 = vpop.f32.mrb[0].mxu0
    %v1359 = vadd.f32 0.0, %v1358
    %v1360 = vpop.f32.mrb[0].mxu0
    %v1361 = vadd.f32 0.0, %v1360
    %v1362 = vpop.f32.mrb[0].mxu0
    %v1363 = vpop.f32.mrb[0].mxu0
    %1364 = vdwg.mxu0
    %1365 = vmatprep.subr.bf16.mxu0 %v1096
    %1366 = vmatpush1.bf16.msra.mxu0 %v1095
    %1367 = vmatprep.subr.bf16.mxu0 %v1102
    %1368 = vmatpush1.bf16.msra.mxu0 %v1101
    %1369 = vmatprep.subr.bf16.mxu0 %v1108
    %1370 = vmatpush1.bf16.msra.mxu0 %v1107
    %1371 = vmatprep.subr.bf16.mxu0 %v1114
    %1372 = vmatpush1.bf16.msra.mxu0 %v1113
    %1373 = vmatprep.subr.bf16.mxu0 %v1120
    %1374 = vmatpush1.bf16.msra.mxu0 %v1119
    %1375 = vmatprep.subr.bf16.mxu0 %v1126
    %1376 = vmatpush1.bf16.msra.mxu0 %v1125
    %1377 = vmatprep.subr.bf16.mxu0 %v1132
    %1378 = vmatpush1.bf16.msra.mxu0 %v1131
    %1379 = vmatprep.subr.bf16.mxu0 %v1138
    %1380 = vmatpush1.bf16.msra.mxu0 %v1137
    %1381 = vmatprep.subr.bf16.mxu0 %v1144
    %1382 = vmatpush1.bf16.msra.mxu0 %v1143
    %1383 = vmatprep.subr.bf16.mxu0 %v1150
    %1384 = vmatpush1.bf16.msra.mxu0 %v1149
    %1385 = vmatprep.subr.bf16.mxu0 %v1156
    %1386 = vmatpush1.bf16.msra.mxu0 %v1155
    %1387 = vmatprep.subr.bf16.mxu0 %v1162
    %1388 = vmatpush1.bf16.msra.mxu0 %v1161
    %1389 = vmatprep.subr.bf16.mxu0 %v1168
    %1390 = vmatpush1.bf16.msra.mxu0 %v1167
    %1391 = vmatprep.subr.bf16.mxu0 %v1174
    %1392 = vmatpush1.bf16.msra.mxu0 %v1173
    %1393 = vmatprep.subr.bf16.mxu0 %v1180
    %1394 = vmatpush1.bf16.msra.mxu0 %v1179
    %1395 = vmatprep.subr.bf16.mxu0 %v1186
    %1396 = vmatpush1.bf16.msra.mxu0 %v1185
    %1397 = vmatprep.mubr.bf16.mxu0 %v706
    %1398 = vmatmul.mubr.bf16.gmra.mrb[0].mxu0 %v706
    %v1399 = vpop.f32.mrb[0].mxu0
    %v1400 = vadd.f32 0.0, %v1399
    %v1401 = vpop.f32.mrb[0].mxu0
    %v1402 = vadd.f32 0.0, %v1401
    %v1403 = vpop.f32.mrb[0].mxu0
    %v1404 = vpop.f32.mrb[0].mxu0
    %1405 = vdwg.mxu0
    %v1406 = vld [vmem:[#allocation2] sm:$0xff]
    %v1407 = vld [vmem:[#allocation2 + $0x8] sm:$0xff]
    %v1408 = vld [vmem:[#allocation2 + $0x10] sm:$0xff]
    %s1409 = scalar_lea.vmem [#allocation3], 168
    %v1410 = vld [vmem:[%s1409] sm:$0xff]
    %v1411 = vld [vmem:[%s1409 + $0x8] sm:$0xff]
    %v1412 = vld [vmem:[%s1409 + $0x10] sm:$0xff]
    %v1413 = vadd.f32 %v1406, %v1318
    %v1414 = vadd.f32 %v1407, %v1320
    %v1415 = vxor.u32 %v1413, 2147483648
    %v1416 = vxor.u32 %v1414, 2147483648
    %v1417 = vmul.f32 %v1415, 1.442695
    %v1418 = vpow.pop %v1417
    %v1419 = vmul.f32 %v1416, 1.442695
    %v1420 = vpow.pop %v1419
    %v1421 = vadd.f32 %v1418, 1.0
    %v1422 = vadd.f32 %v1420, 1.0
    %v1423 = vrcp.pop %v1421
    %v1424 = vmul.f32 1.0, %v1423
    %v1425 = vrcp.pop %v1422
    %v1426 = vmul.f32 1.0, %v1425
    %v1427 = vadd.f32 %v1359, %v697
    %v1428 = vmul.f32 %v1424, %v1427
    %v1429 = vadd.f32 %v1408, %v1428
    %v1430 = vtanh.pop %v1429
    %v1431 = vsub.f32 1.0, %v1426
    %v1432 = vmul.f32 %v1431, %v1430
    %v1433 = vmul.f32 %v1426, 0.0
    %v1434 = vadd.f32 %v1432, %v1433
    %v1435 = vadd.f32 %v1410, %v1361
    %v1436 = vadd.f32 %v1411, %v1400
    %v1437 = vxor.u32 %v1435, 2147483648
    %v1438 = vxor.u32 %v1436, 2147483648
    %v1439 = vmul.f32 %v1437, 1.442695
    %v1440 = vpow.pop %v1439
    %v1441 = vmul.f32 %v1438, 1.442695
    %v1442 = vpow.pop %v1441
    %v1443 = vadd.f32 %v1440, 1.0
    %v1444 = vadd.f32 %v1442, 1.0
    %v1445 = vrcp.pop %v1443
    %v1446 = vmul.f32 1.0, %v1445
    %v1447 = vrcp.pop %v1444
    %v1448 = vmul.f32 1.0, %v1447
    %v1449 = vadd.f32 %v1402, %v704
    %v1450 = vmul.f32 %v1446, %v1449
    %v1451 = vadd.f32 %v1412, %v1450
    %v1452 = vtanh.pop %v1451
    %v1453 = vsub.f32 1.0, %v1448
    %v1454 = vmul.f32 %v1453, %v1452
    %v1455 = vmul.f32 %v1448, 0.0
    %v1456 = vadd.f32 %v1454, %v1455
    %vm1457 = vcmp.gt.s32.totalorder %v691, 0
    %vm1458 = vcmp.gt.s32.totalorder %v691, 7
    %v1459 = vsel %vm1457, 1, 0
    %1460 = vset.pattern.permute.xlu0 0
    %1461 = vperm.xlu0 %1460, %v1459
    %v1462 = vpop.permute.xlu0 %1461
    %vm1463 = vcmp.eq.s32.totalorder %v1462, 1
    %v1464 = vsel %vm1463, %v1434, 0.0
    %1465 = vst [vmem:[#allocation11] sm:$0xff] %v1464
    %v1466 = vsel %vm1458, 1, 0
    %1467 = vset.pattern.permute.xlu0 0
    %1468 = vperm.xlu0 %1467, %v1466
    %v1469 = vpop.permute.xlu0 %1468
    %vm1470 = vcmp.eq.s32.totalorder %v1469, 1
    %v1471 = vsel %vm1470, %v1456, 0.0
    %s1472 = scalar_lea.vmem [#allocation4], 56
    %1473 = vst [vmem:[%s1472] sm:$0xff] %v1471
    %v1474 = vpack.c.bf16 %v1464, %v1464
    %v1475 = vpack.c.bf16 %v1471, %v1471
    %v1476 = vld [vmem:[#allocation10] sm:$0xff]
    %v1477 = vld [vmem:[#allocation10 + $0x8] sm:$0xff]
    %v1478 = vld [vmem:[#allocation10 + $0x10] sm:$0xff]
    %v1479 = vld [vmem:[#allocation10 + $0x18] sm:$0xff]
    %v1480 = vld [vmem:[#allocation10 + $0x20] sm:$0xff]
    %v1481 = vld [vmem:[#allocation10 + $0x28] sm:$0xff]
    %v1482 = vld [vmem:[#allocation10 + $0x30] sm:$0xff]
    %v1483 = vld [vmem:[#allocation10 + $0x38] sm:$0xff]
    %v1484 = vld [vmem:[#allocation10 + $0x40] sm:$0xff]
    %v1485 = vld [vmem:[#allocation10 + $0x48] sm:$0xff]
    %v1486 = vld [vmem:[#allocation10 + $0x50] sm:$0xff]
    %v1487 = vld [vmem:[#allocation10 + $0x58] sm:$0xff]
    %v1488 = vld [vmem:[#allocation10 + $0x60] sm:$0xff]
    %v1489 = vld [vmem:[#allocation10 + $0x68] sm:$0xff]
    %v1490 = vld [vmem:[#allocation10 + $0x70] sm:$0xff]
    %v1491 = vld [vmem:[#allocation10 + $0x78] sm:$0xff]
    %v1492 = vld [vmem:[#allocation10 + $0x80] sm:$0xff]
    %v1493 = vld [vmem:[#allocation10 + $0x88] sm:$0xff]
    %v1494 = vld [vmem:[#allocation10 + $0x90] sm:$0xff]
    %v1495 = vld [vmem:[#allocation10 + $0x98] sm:$0xff]
    %v1496 = vld [vmem:[#allocation10 + $0xa0] sm:$0xff]
    %v1497 = vld [vmem:[#allocation10 + $0xa8] sm:$0xff]
    %v1498 = vld [vmem:[#allocation10 + $0xb0] sm:$0xff]
    %v1499 = vld [vmem:[#allocation10 + $0xb8] sm:$0xff]
    %v1500 = vld [vmem:[#allocation10 + $0xc0] sm:$0xff]
    %v1501 = vld [vmem:[#allocation10 + $0xc8] sm:$0xff]
    %v1502 = vld [vmem:[#allocation10 + $0xd0] sm:$0xff]
    %v1503 = vld [vmem:[#allocation10 + $0xd8] sm:$0xff]
    %v1504 = vld [vmem:[#allocation10 + $0xe0] sm:$0xff]
    %v1505 = vld [vmem:[#allocation10 + $0xe8] sm:$0xff]
    %v1506 = vld [vmem:[#allocation10 + $0xf0] sm:$0xff]
    %v1507 = vld [vmem:[#allocation10 + $0xf8] sm:$0xff]
    %v1508 = vld [vmem:[#allocation10 + $0x100] sm:$0xff]
    %v1509 = vld [vmem:[#allocation10 + $0x108] sm:$0xff]
    %v1510 = vld [vmem:[#allocation10 + $0x110] sm:$0xff]
    %v1511 = vld [vmem:[#allocation10 + $0x118] sm:$0xff]
    %v1512 = vld [vmem:[#allocation10 + $0x120] sm:$0xff]
    %v1513 = vld [vmem:[#allocation10 + $0x128] sm:$0xff]
    %v1514 = vld [vmem:[#allocation10 + $0x130] sm:$0xff]
    %v1515 = vld [vmem:[#allocation10 + $0x138] sm:$0xff]
    %v1516 = vld [vmem:[#allocation10 + $0x140] sm:$0xff]
    %v1517 = vld [vmem:[#allocation10 + $0x148] sm:$0xff]
    %v1518 = vld [vmem:[#allocation10 + $0x150] sm:$0xff]
    %v1519 = vld [vmem:[#allocation10 + $0x158] sm:$0xff]
    %v1520 = vld [vmem:[#allocation10 + $0x160] sm:$0xff]
    %v1521 = vld [vmem:[#allocation10 + $0x168] sm:$0xff]
    %v1522 = vld [vmem:[#allocation10 + $0x170] sm:$0xff]
    %v1523 = vld [vmem:[#allocation10 + $0x178] sm:$0xff]
    %v1524 = vld [vmem:[#allocation10 + $0x180] sm:$0xff]
    %v1525 = vld [vmem:[#allocation10 + $0x188] sm:$0xff]
    %v1526 = vld [vmem:[#allocation10 + $0x190] sm:$0xff]
    %v1527 = vld [vmem:[#allocation10 + $0x198] sm:$0xff]
    %v1528 = vld [vmem:[#allocation10 + $0x1a0] sm:$0xff]
    %v1529 = vld [vmem:[#allocation10 + $0x1a8] sm:$0xff]
    %v1530 = vld [vmem:[#allocation10 + $0x1b0] sm:$0xff]
    %v1531 = vld [vmem:[#allocation10 + $0x1b8] sm:$0xff]
    %v1532 = vld [vmem:[#allocation10 + $0x1c0] sm:$0xff]
    %v1533 = vld [vmem:[#allocation10 + $0x1c8] sm:$0xff]
    %v1534 = vld [vmem:[#allocation10 + $0x1d0] sm:$0xff]
    %v1535 = vld [vmem:[#allocation10 + $0x1d8] sm:$0xff]
    %v1536 = vld [vmem:[#allocation10 + $0x1e0] sm:$0xff]
    %v1537 = vld [vmem:[#allocation10 + $0x1e8] sm:$0xff]
    %v1538 = vld [vmem:[#allocation10 + $0x1f0] sm:$0xff]
    %v1539 = vld [vmem:[#allocation10 + $0x1f8] sm:$0xff]
    %v1540 = vld [vmem:[#allocation10 + $0x200] sm:$0xff]
    %v1541 = vld [vmem:[#allocation10 + $0x208] sm:$0xff]
    %v1542 = vld [vmem:[#allocation10 + $0x210] sm:$0xff]
    %v1543 = vld [vmem:[#allocation10 + $0x218] sm:$0xff]
    %v1544 = vld [vmem:[#allocation10 + $0x220] sm:$0xff]
    %v1545 = vld [vmem:[#allocation10 + $0x228] sm:$0xff]
    %v1546 = vld [vmem:[#allocation10 + $0x230] sm:$0xff]
    %v1547 = vld [vmem:[#allocation10 + $0x238] sm:$0xff]
    %v1548 = vld [vmem:[#allocation10 + $0x240] sm:$0xff]
    %v1549 = vld [vmem:[#allocation10 + $0x248] sm:$0xff]
    %v1550 = vld [vmem:[#allocation10 + $0x250] sm:$0xff]
    %v1551 = vld [vmem:[#allocation10 + $0x258] sm:$0xff]
    %v1552 = vld [vmem:[#allocation10 + $0x260] sm:$0xff]
    %v1553 = vld [vmem:[#allocation10 + $0x268] sm:$0xff]
    %v1554 = vld [vmem:[#allocation10 + $0x270] sm:$0xff]
    %v1555 = vld [vmem:[#allocation10 + $0x278] sm:$0xff]
    %v1556 = vld [vmem:[#allocation10 + $0x280] sm:$0xff]
    %v1557 = vld [vmem:[#allocation10 + $0x288] sm:$0xff]
    %v1558 = vld [vmem:[#allocation10 + $0x290] sm:$0xff]
    %v1559 = vld [vmem:[#allocation10 + $0x298] sm:$0xff]
    %v1560 = vld [vmem:[#allocation10 + $0x2a0] sm:$0xff]
    %v1561 = vld [vmem:[#allocation10 + $0x2a8] sm:$0xff]
    %v1562 = vld [vmem:[#allocation10 + $0x2b0] sm:$0xff]
    %v1563 = vld [vmem:[#allocation10 + $0x2b8] sm:$0xff]
    %v1564 = vld [vmem:[#allocation10 + $0x2c0] sm:$0xff]
    %v1565 = vld [vmem:[#allocation10 + $0x2c8] sm:$0xff]
    %v1566 = vld [vmem:[#allocation10 + $0x2d0] sm:$0xff]
    %v1567 = vld [vmem:[#allocation10 + $0x2d8] sm:$0xff]
    %v1568 = vld [vmem:[#allocation10 + $0x2e0] sm:$0xff]
    %v1569 = vld [vmem:[#allocation10 + $0x2e8] sm:$0xff]
    %v1570 = vld [vmem:[#allocation10 + $0x2f0] sm:$0xff]
    %v1571 = vld [vmem:[#allocation10 + $0x2f8] sm:$0xff]
    %v1668 = vunpack.c.l.b16 %v1476
    %v1669 = vunpack.c.h.b16 %v1476
    %v1670 = vunpack.c.l.b16 %v1477
    %v1671 = vunpack.c.h.b16 %v1477
    %v1672 = vunpack.c.l.b16 %v1478
    %v1673 = vunpack.c.h.b16 %v1478
    %v1674 = vunpack.c.l.b16 %v1479
    %v1675 = vunpack.c.h.b16 %v1479
    %v1676 = vunpack.c.l.b16 %v1480
    %v1677 = vunpack.c.h.b16 %v1480
    %v1678 = vunpack.c.l.b16 %v1481
    %v1679 = vunpack.c.h.b16 %v1481
    %v1680 = vunpack.c.l.b16 %v1482
    %v1681 = vunpack.c.h.b16 %v1482
    %v1682 = vunpack.c.l.b16 %v1483
    %v1683 = vunpack.c.h.b16 %v1483
    %v1684 = vunpack.c.l.b16 %v1484
    %v1685 = vunpack.c.h.b16 %v1484
    %v1686 = vunpack.c.l.b16 %v1485
    %v1687 = vunpack.c.h.b16 %v1485
    %v1688 = vunpack.c.l.b16 %v1486
    %v1689 = vunpack.c.h.b16 %v1486
    %v1690 = vunpack.c.l.b16 %v1487
    %v1691 = vunpack.c.h.b16 %v1487
    %v1692 = vunpack.c.l.b16 %v1488
    %v1693 = vunpack.c.h.b16 %v1488
    %v1694 = vunpack.c.l.b16 %v1489
    %v1695 = vunpack.c.h.b16 %v1489
    %v1696 = vunpack.c.l.b16 %v1490
    %v1697 = vunpack.c.h.b16 %v1490
    %v1698 = vunpack.c.l.b16 %v1491
    %v1699 = vunpack.c.h.b16 %v1491
    %v1700 = vunpack.c.l.b16 %v1492
    %v1701 = vunpack.c.h.b16 %v1492
    %v1702 = vunpack.c.l.b16 %v1493
    %v1703 = vunpack.c.h.b16 %v1493
    %v1704 = vunpack.c.l.b16 %v1494
    %v1705 = vunpack.c.h.b16 %v1494
    %v1706 = vunpack.c.l.b16 %v1495
    %v1707 = vunpack.c.h.b16 %v1495
    %v1708 = vunpack.c.l.b16 %v1496
    %v1709 = vunpack.c.h.b16 %v1496
    %v1710 = vunpack.c.l.b16 %v1497
    %v1711 = vunpack.c.h.b16 %v1497
    %v1712 = vunpack.c.l.b16 %v1498
    %v1713 = vunpack.c.h.b16 %v1498
    %v1714 = vunpack.c.l.b16 %v1499
    %v1715 = vunpack.c.h.b16 %v1499
    %v1716 = vunpack.c.l.b16 %v1500
    %v1717 = vunpack.c.h.b16 %v1500
    %v1718 = vunpack.c.l.b16 %v1501
    %v1719 = vunpack.c.h.b16 %v1501
    %v1720 = vunpack.c.l.b16 %v1502
    %v1721 = vunpack.c.h.b16 %v1502
    %v1722 = vunpack.c.l.b16 %v1503
    %v1723 = vunpack.c.h.b16 %v1503
    %v1724 = vunpack.c.l.b16 %v1504
    %v1725 = vunpack.c.h.b16 %v1504
    %v1726 = vunpack.c.l.b16 %v1505
    %v1727 = vunpack.c.h.b16 %v1505
    %v1728 = vunpack.c.l.b16 %v1506
    %v1729 = vunpack.c.h.b16 %v1506
    %v1730 = vunpack.c.l.b16 %v1507
    %v1731 = vunpack.c.h.b16 %v1507
    %v1732 = vunpack.c.l.b16 %v1508
    %v1733 = vunpack.c.h.b16 %v1508
    %v1734 = vunpack.c.l.b16 %v1509
    %v1735 = vunpack.c.h.b16 %v1509
    %v1736 = vunpack.c.l.b16 %v1510
    %v1737 = vunpack.c.h.b16 %v1510
    %v1738 = vunpack.c.l.b16 %v1511
    %v1739 = vunpack.c.h.b16 %v1511
    %v1740 = vunpack.c.l.b16 %v1512
    %v1741 = vunpack.c.h.b16 %v1512
    %v1742 = vunpack.c.l.b16 %v1513
    %v1743 = vunpack.c.h.b16 %v1513
    %v1744 = vunpack.c.l.b16 %v1514
    %v1745 = vunpack.c.h.b16 %v1514
    %v1746 = vunpack.c.l.b16 %v1515
    %v1747 = vunpack.c.h.b16 %v1515
    %v1748 = vunpack.c.l.b16 %v1516
    %v1749 = vunpack.c.h.b16 %v1516
    %v1750 = vunpack.c.l.b16 %v1517
    %v1751 = vunpack.c.h.b16 %v1517
    %v1752 = vunpack.c.l.b16 %v1518
    %v1753 = vunpack.c.h.b16 %v1518
    %v1754 = vunpack.c.l.b16 %v1519
    %v1755 = vunpack.c.h.b16 %v1519
    %v1756 = vunpack.c.l.b16 %v1520
    %v1757 = vunpack.c.h.b16 %v1520
    %v1758 = vunpack.c.l.b16 %v1521
    %v1759 = vunpack.c.h.b16 %v1521
    %v1760 = vunpack.c.l.b16 %v1522
    %v1761 = vunpack.c.h.b16 %v1522
    %v1762 = vunpack.c.l.b16 %v1523
    %v1763 = vunpack.c.h.b16 %v1523
    %v1764 = vunpack.c.l.b16 %v1524
    %v1765 = vunpack.c.h.b16 %v1524
    %v1766 = vunpack.c.l.b16 %v1525
    %v1767 = vunpack.c.h.b16 %v1525
    %v1768 = vunpack.c.l.b16 %v1526
    %v1769 = vunpack.c.h.b16 %v1526
    %v1770 = vunpack.c.l.b16 %v1527
    %v1771 = vunpack.c.h.b16 %v1527
    %v1772 = vunpack.c.l.b16 %v1528
    %v1773 = vunpack.c.h.b16 %v1528
    %v1774 = vunpack.c.l.b16 %v1529
    %v1775 = vunpack.c.h.b16 %v1529
    %v1776 = vunpack.c.l.b16 %v1530
    %v1777 = vunpack.c.h.b16 %v1530
    %v1778 = vunpack.c.l.b16 %v1531
    %v1779 = vunpack.c.h.b16 %v1531
    %v1780 = vunpack.c.l.b16 %v1532
    %v1781 = vunpack.c.h.b16 %v1532
    %v1782 = vunpack.c.l.b16 %v1533
    %v1783 = vunpack.c.h.b16 %v1533
    %v1784 = vunpack.c.l.b16 %v1534
    %v1785 = vunpack.c.h.b16 %v1534
    %v1786 = vunpack.c.l.b16 %v1535
    %v1787 = vunpack.c.h.b16 %v1535
    %v1788 = vunpack.c.l.b16 %v1536
    %v1789 = vunpack.c.h.b16 %v1536
    %v1790 = vunpack.c.l.b16 %v1537
    %v1791 = vunpack.c.h.b16 %v1537
    %v1792 = vunpack.c.l.b16 %v1538
    %v1793 = vunpack.c.h.b16 %v1538
    %v1794 = vunpack.c.l.b16 %v1539
    %v1795 = vunpack.c.h.b16 %v1539
    %v1796 = vunpack.c.l.b16 %v1540
    %v1797 = vunpack.c.h.b16 %v1540
    %v1798 = vunpack.c.l.b16 %v1541
    %v1799 = vunpack.c.h.b16 %v1541
    %v1800 = vunpack.c.l.b16 %v1542
    %v1801 = vunpack.c.h.b16 %v1542
    %v1802 = vunpack.c.l.b16 %v1543
    %v1803 = vunpack.c.h.b16 %v1543
    %v1804 = vunpack.c.l.b16 %v1544
    %v1805 = vunpack.c.h.b16 %v1544
    %v1806 = vunpack.c.l.b16 %v1545
    %v1807 = vunpack.c.h.b16 %v1545
    %v1808 = vunpack.c.l.b16 %v1546
    %v1809 = vunpack.c.h.b16 %v1546
    %v1810 = vunpack.c.l.b16 %v1547
    %v1811 = vunpack.c.h.b16 %v1547
    %v1812 = vunpack.c.l.b16 %v1548
    %v1813 = vunpack.c.h.b16 %v1548
    %v1814 = vunpack.c.l.b16 %v1549
    %v1815 = vunpack.c.h.b16 %v1549
    %v1816 = vunpack.c.l.b16 %v1550
    %v1817 = vunpack.c.h.b16 %v1550
    %v1818 = vunpack.c.l.b16 %v1551
    %v1819 = vunpack.c.h.b16 %v1551
    %v1820 = vunpack.c.l.b16 %v1552
    %v1821 = vunpack.c.h.b16 %v1552
    %v1822 = vunpack.c.l.b16 %v1553
    %v1823 = vunpack.c.h.b16 %v1553
    %v1824 = vunpack.c.l.b16 %v1554
    %v1825 = vunpack.c.h.b16 %v1554
    %v1826 = vunpack.c.l.b16 %v1555
    %v1827 = vunpack.c.h.b16 %v1555
    %v1828 = vunpack.c.l.b16 %v1556
    %v1829 = vunpack.c.h.b16 %v1556
    %v1830 = vunpack.c.l.b16 %v1557
    %v1831 = vunpack.c.h.b16 %v1557
    %v1832 = vunpack.c.l.b16 %v1558
    %v1833 = vunpack.c.h.b16 %v1558
    %v1834 = vunpack.c.l.b16 %v1559
    %v1835 = vunpack.c.h.b16 %v1559
    %v1836 = vunpack.c.l.b16 %v1560
    %v1837 = vunpack.c.h.b16 %v1560
    %v1838 = vunpack.c.l.b16 %v1561
    %v1839 = vunpack.c.h.b16 %v1561
    %v1840 = vunpack.c.l.b16 %v1562
    %v1841 = vunpack.c.h.b16 %v1562
    %v1842 = vunpack.c.l.b16 %v1563
    %v1843 = vunpack.c.h.b16 %v1563
    %v1844 = vunpack.c.l.b16 %v1564
    %v1845 = vunpack.c.h.b16 %v1564
    %v1846 = vunpack.c.l.b16 %v1565
    %v1847 = vunpack.c.h.b16 %v1565
    %v1848 = vunpack.c.l.b16 %v1566
    %v1849 = vunpack.c.h.b16 %v1566
    %v1850 = vunpack.c.l.b16 %v1567
    %v1851 = vunpack.c.h.b16 %v1567
    %v1852 = vunpack.c.l.b16 %v1568
    %v1853 = vunpack.c.h.b16 %v1568
    %v1854 = vunpack.c.l.b16 %v1569
    %v1855 = vunpack.c.h.b16 %v1569
    %v1856 = vunpack.c.l.b16 %v1570
    %v1857 = vunpack.c.h.b16 %v1570
    %v1858 = vunpack.c.l.b16 %v1571
    %v1859 = vunpack.c.h.b16 %v1571
    %v1860 = vpack.c.b16 %v1674, %v1668
    %v1861 = vpack.c.b16 %v1675, %v1669
    %v1862 = vpack.c.b16 %v1676, %v1670
    %v1863 = vpack.c.b16 %v1677, %v1671
    %v1864 = vpack.c.b16 %v1678, %v1672
    %v1865 = vpack.c.b16 %v1679, %v1673
    %v1866 = vpack.c.b16 %v1686, %v1680
    %v1867 = vpack.c.b16 %v1687, %v1681
    %v1868 = vpack.c.b16 %v1688, %v1682
    %v1869 = vpack.c.b16 %v1689, %v1683
    %v1870 = vpack.c.b16 %v1690, %v1684
    %v1871 = vpack.c.b16 %v1691, %v1685
    %v1872 = vpack.c.b16 %v1698, %v1692
    %v1873 = vpack.c.b16 %v1699, %v1693
    %v1874 = vpack.c.b16 %v1700, %v1694
    %v1875 = vpack.c.b16 %v1701, %v1695
    %v1876 = vpack.c.b16 %v1702, %v1696
    %v1877 = vpack.c.b16 %v1703, %v1697
    %v1878 = vpack.c.b16 %v1710, %v1704
    %v1879 = vpack.c.b16 %v1711, %v1705
    %v1880 = vpack.c.b16 %v1712, %v1706
    %v1881 = vpack.c.b16 %v1713, %v1707
    %v1882 = vpack.c.b16 %v1714, %v1708
    %v1883 = vpack.c.b16 %v1715, %v1709
    %v1884 = vpack.c.b16 %v1722, %v1716
    %v1885 = vpack.c.b16 %v1723, %v1717
    %v1886 = vpack.c.b16 %v1724, %v1718
    %v1887 = vpack.c.b16 %v1725, %v1719
    %v1888 = vpack.c.b16 %v1726, %v1720
    %v1889 = vpack.c.b16 %v1727, %v1721
    %v1890 = vpack.c.b16 %v1734, %v1728
    %v1891 = vpack.c.b16 %v1735, %v1729
    %v1892 = vpack.c.b16 %v1736, %v1730
    %v1893 = vpack.c.b16 %v1737, %v1731
    %v1894 = vpack.c.b16 %v1738, %v1732
    %v1895 = vpack.c.b16 %v1739, %v1733
    %v1896 = vpack.c.b16 %v1746, %v1740
    %v1897 = vpack.c.b16 %v1747, %v1741
    %v1898 = vpack.c.b16 %v1748, %v1742
    %v1899 = vpack.c.b16 %v1749, %v1743
    %v1900 = vpack.c.b16 %v1750, %v1744
    %v1901 = vpack.c.b16 %v1751, %v1745
    %v1902 = vpack.c.b16 %v1758, %v1752
    %v1903 = vpack.c.b16 %v1759, %v1753
    %v1904 = vpack.c.b16 %v1760, %v1754
    %v1905 = vpack.c.b16 %v1761, %v1755
    %v1906 = vpack.c.b16 %v1762, %v1756
    %v1907 = vpack.c.b16 %v1763, %v1757
    %v1908 = vpack.c.b16 %v1770, %v1764
    %v1909 = vpack.c.b16 %v1771, %v1765
    %v1910 = vpack.c.b16 %v1772, %v1766
    %v1911 = vpack.c.b16 %v1773, %v1767
    %v1912 = vpack.c.b16 %v1774, %v1768
    %v1913 = vpack.c.b16 %v1775, %v1769
    %v1914 = vpack.c.b16 %v1782, %v1776
    %v1915 = vpack.c.b16 %v1783, %v1777
    %v1916 = vpack.c.b16 %v1784, %v1778
    %v1917 = vpack.c.b16 %v1785, %v1779
    %v1918 = vpack.c.b16 %v1786, %v1780
    %v1919 = vpack.c.b16 %v1787, %v1781
    %v1920 = vpack.c.b16 %v1794, %v1788
    %v1921 = vpack.c.b16 %v1795, %v1789
    %v1922 = vpack.c.b16 %v1796, %v1790
    %v1923 = vpack.c.b16 %v1797, %v1791
    %v1924 = vpack.c.b16 %v1798, %v1792
    %v1925 = vpack.c.b16 %v1799, %v1793
    %v1926 = vpack.c.b16 %v1806, %v1800
    %v1927 = vpack.c.b16 %v1807, %v1801
    %v1928 = vpack.c.b16 %v1808, %v1802
    %v1929 = vpack.c.b16 %v1809, %v1803
    %v1930 = vpack.c.b16 %v1810, %v1804
    %v1931 = vpack.c.b16 %v1811, %v1805
    %v1932 = vpack.c.b16 %v1818, %v1812
    %v1933 = vpack.c.b16 %v1819, %v1813
    %v1934 = vpack.c.b16 %v1820, %v1814
    %v1935 = vpack.c.b16 %v1821, %v1815
    %v1936 = vpack.c.b16 %v1822, %v1816
    %v1937 = vpack.c.b16 %v1823, %v1817
    %v1938 = vpack.c.b16 %v1830, %v1824
    %v1939 = vpack.c.b16 %v1831, %v1825
    %v1940 = vpack.c.b16 %v1832, %v1826
    %v1941 = vpack.c.b16 %v1833, %v1827
    %v1942 = vpack.c.b16 %v1834, %v1828
    %v1943 = vpack.c.b16 %v1835, %v1829
    %v1944 = vpack.c.b16 %v1842, %v1836
    %v1945 = vpack.c.b16 %v1843, %v1837
    %v1946 = vpack.c.b16 %v1844, %v1838
    %v1947 = vpack.c.b16 %v1845, %v1839
    %v1948 = vpack.c.b16 %v1846, %v1840
    %v1949 = vpack.c.b16 %v1847, %v1841
    %v1950 = vpack.c.b16 %v1854, %v1848
    %v1951 = vpack.c.b16 %v1855, %v1849
    %v1952 = vpack.c.b16 %v1856, %v1850
    %v1953 = vpack.c.b16 %v1857, %v1851
    %v1954 = vpack.c.b16 %v1858, %v1852
    %v1955 = vpack.c.b16 %v1859, %v1853
    %2052 = vmatprep.subr.bf16.mxu0 %v1861
    %2053 = vmatpush1.bf16.msra.mxu0 %v1860
    %2054 = vmatprep.subr.bf16.mxu0 %v1867
    %2055 = vmatpush1.bf16.msra.mxu0 %v1866
    %2056 = vmatprep.subr.bf16.mxu0 %v1873
    %2057 = vmatpush1.bf16.msra.mxu0 %v1872
    %2058 = vmatprep.subr.bf16.mxu0 %v1879
    %2059 = vmatpush1.bf16.msra.mxu0 %v1878
    %2060 = vmatprep.subr.bf16.mxu0 %v1885
    %2061 = vmatpush1.bf16.msra.mxu0 %v1884
    %2062 = vmatprep.subr.bf16.mxu0 %v1891
    %2063 = vmatpush1.bf16.msra.mxu0 %v1890
    %2064 = vmatprep.subr.bf16.mxu0 %v1897
    %2065 = vmatpush1.bf16.msra.mxu0 %v1896
    %2066 = vmatprep.subr.bf16.mxu0 %v1903
    %2067 = vmatpush1.bf16.msra.mxu0 %v1902
    %2068 = vmatprep.subr.bf16.mxu0 %v1909
    %2069 = vmatpush1.bf16.msra.mxu0 %v1908
    %2070 = vmatprep.subr.bf16.mxu0 %v1915
    %2071 = vmatpush1.bf16.msra.mxu0 %v1914
    %2072 = vmatprep.subr.bf16.mxu0 %v1921
    %2073 = vmatpush1.bf16.msra.mxu0 %v1920
    %2074 = vmatprep.subr.bf16.mxu0 %v1927
    %2075 = vmatpush1.bf16.msra.mxu0 %v1926
    %2076 = vmatprep.subr.bf16.mxu0 %v1933
    %2077 = vmatpush1.bf16.msra.mxu0 %v1932
    %2078 = vmatprep.subr.bf16.mxu0 %v1939
    %2079 = vmatpush1.bf16.msra.mxu0 %v1938
    %2080 = vmatprep.subr.bf16.mxu0 %v1945
    %2081 = vmatpush1.bf16.msra.mxu0 %v1944
    %2082 = vmatprep.subr.bf16.mxu0 %v1951
    %2083 = vmatpush1.bf16.msra.mxu0 %v1950
    %2084 = vmatprep.mubr.bf16.mxu0 %v1475
    %2085 = vmatmul.mubr.bf16.gmra.mrb[0].mxu0 %v1474
    %v2086 = vpop.f32.mrb[0].mxu0
    %v2087 = vadd.f32 0.0, %v2086
    %v2088 = vpop.f32.mrb[0].mxu0
    %v2089 = vadd.f32 0.0, %v2088
    %v2090 = vpop.f32.mrb[0].mxu0
    %v2091 = vpop.f32.mrb[0].mxu0
    %2092 = vdwg.mxu0
    %2093 = vmatprep.subr.bf16.mxu0 %v1863
    %2094 = vmatpush1.bf16.msra.mxu0 %v1862
    %2095 = vmatprep.subr.bf16.mxu0 %v1869
    %2096 = vmatpush1.bf16.msra.mxu0 %v1868
    %2097 = vmatprep.subr.bf16.mxu0 %v1875
    %2098 = vmatpush1.bf16.msra.mxu0 %v1874
    %2099 = vmatprep.subr.bf16.mxu0 %v1881
    %2100 = vmatpush1.bf16.msra.mxu0 %v1880
    %2101 = vmatprep.subr.bf16.mxu0 %v1887
    %2102 = vmatpush1.bf16.msra.mxu0 %v1886
    %2103 = vmatprep.subr.bf16.mxu0 %v1893
    %2104 = vmatpush1.bf16.msra.mxu0 %v1892
    %2105 = vmatprep.subr.bf16.mxu0 %v1899
    %2106 = vmatpush1.bf16.msra.mxu0 %v1898
    %2107 = vmatprep.subr.bf16.mxu0 %v1905
    %2108 = vmatpush1.bf16.msra.mxu0 %v1904
    %2109 = vmatprep.subr.bf16.mxu0 %v1911
    %2110 = vmatpush1.bf16.msra.mxu0 %v1910
    %2111 = vmatprep.subr.bf16.mxu0 %v1917
    %2112 = vmatpush1.bf16.msra.mxu0 %v1916
    %2113 = vmatprep.subr.bf16.mxu0 %v1923
    %2114 = vmatpush1.bf16.msra.mxu0 %v1922
    %2115 = vmatprep.subr.bf16.mxu0 %v1929
    %2116 = vmatpush1.bf16.msra.mxu0 %v1928
    %2117 = vmatprep.subr.bf16.mxu0 %v1935
    %2118 = vmatpush1.bf16.msra.mxu0 %v1934
    %2119 = vmatprep.subr.bf16.mxu0 %v1941
    %2120 = vmatpush1.bf16.msra.mxu0 %v1940
    %2121 = vmatprep.subr.bf16.mxu0 %v1947
    %2122 = vmatpush1.bf16.msra.mxu0 %v1946
    %2123 = vmatprep.subr.bf16.mxu0 %v1953
    %2124 = vmatpush1.bf16.msra.mxu0 %v1952
    %2125 = vmatprep.mubr.bf16.mxu0 %v1475
    %2126 = vmatmul.mubr.bf16.gmra.mrb[0].mxu0 %v1474
    %v2127 = vpop.f32.mrb[0].mxu0
    %v2128 = vadd.f32 0.0, %v2127
    %v2129 = vpop.f32.mrb[0].mxu0
    %v2130 = vadd.f32 0.0, %v2129
    %v2131 = vpop.f32.mrb[0].mxu0
    %v2132 = vpop.f32.mrb[0].mxu0
    %2133 = vdwg.mxu0
    %2134 = vmatprep.subr.bf16.mxu0 %v1865
    %2135 = vmatpush1.bf16.msra.mxu0 %v1864
    %2136 = vmatprep.subr.bf16.mxu0 %v1871
    %2137 = vmatpush1.bf16.msra.mxu0 %v1870
    %2138 = vmatprep.subr.bf16.mxu0 %v1877
    %2139 = vmatpush1.bf16.msra.mxu0 %v1876
    %2140 = vmatprep.subr.bf16.mxu0 %v1883
    %2141 = vmatpush1.bf16.msra.mxu0 %v1882
    %2142 = vmatprep.subr.bf16.mxu0 %v1889
    %2143 = vmatpush1.bf16.msra.mxu0 %v1888
    %2144 = vmatprep.subr.bf16.mxu0 %v1895
    %2145 = vmatpush1.bf16.msra.mxu0 %v1894
    %2146 = vmatprep.subr.bf16.mxu0 %v1901
    %2147 = vmatpush1.bf16.msra.mxu0 %v1900
    %2148 = vmatprep.subr.bf16.mxu0 %v1907
    %2149 = vmatpush1.bf16.msra.mxu0 %v1906
    %2150 = vmatprep.subr.bf16.mxu0 %v1913
    %2151 = vmatpush1.bf16.msra.mxu0 %v1912
    %2152 = vmatprep.subr.bf16.mxu0 %v1919
    %2153 = vmatpush1.bf16.msra.mxu0 %v1918
    %2154 = vmatprep.subr.bf16.mxu0 %v1925
    %2155 = vmatpush1.bf16.msra.mxu0 %v1924
    %2156 = vmatprep.subr.bf16.mxu0 %v1931
    %2157 = vmatpush1.bf16.msra.mxu0 %v1930
    %2158 = vmatprep.subr.bf16.mxu0 %v1937
    %2159 = vmatpush1.bf16.msra.mxu0 %v1936
    %2160 = vmatprep.subr.bf16.mxu0 %v1943
    %2161 = vmatpush1.bf16.msra.mxu0 %v1942
    %2162 = vmatprep.subr.bf16.mxu0 %v1949
    %2163 = vmatpush1.bf16.msra.mxu0 %v1948
    %2164 = vmatprep.subr.bf16.mxu0 %v1955
    %2165 = vmatpush1.bf16.msra.mxu0 %v1954
    %2166 = vmatprep.mubr.bf16.mxu0 %v1475
    %2167 = vmatmul.mubr.bf16.gmra.mrb[0].mxu0 %v1474
    %v2168 = vpop.f32.mrb[0].mxu0
    %v2169 = vadd.f32 0.0, %v2168
    %v2170 = vpop.f32.mrb[0].mxu0
    %v2171 = vadd.f32 0.0, %v2170
    %v2172 = vpop.f32.mrb[0].mxu0
    %v2173 = vpop.f32.mrb[0].mxu0
    %2174 = vdwg.mxu0
    %s2175 = scalar_lea.vmem [#allocation2], 24
    %v2176 = vld [vmem:[%s2175] sm:$0xff]
    %v2177 = vld [vmem:[%s2175 + $0x8] sm:$0xff]
    %v2178 = vld [vmem:[%s2175 + $0x10] sm:$0xff]
    %s2179 = scalar_lea.vmem [#allocation3], 144
    %v2180 = vld [vmem:[%s2179] sm:$0xff]
    %v2181 = vld [vmem:[%s2179 + $0x8] sm:$0xff]
    %v2182 = vld [vmem:[%s2179 + $0x10] sm:$0xff]
    %v2183 = vadd.f32 %v2176, %v2087
    %v2184 = vadd.f32 %v2177, %v2089
    %v2185 = vxor.u32 %v2183, 2147483648
    %v2186 = vxor.u32 %v2184, 2147483648
    %v2187 = vmul.f32 %v2185, 1.442695
    %v2188 = vpow.pop %v2187
    %v2189 = vmul.f32 %v2186, 1.442695
    %v2190 = vpow.pop %v2189
    %v2191 = vadd.f32 %v2188, 1.0
    %v2192 = vadd.f32 %v2190, 1.0
    %v2193 = vrcp.pop %v2191
    %v2194 = vmul.f32 1.0, %v2193
    %v2195 = vrcp.pop %v2192
    %v2196 = vmul.f32 1.0, %v2195
    %v2197 = vadd.f32 %v2128, %v697
    %v2198 = vmul.f32 %v2194, %v2197
    %v2199 = vadd.f32 %v2178, %v2198
    %v2200 = vtanh.pop %v2199
    %v2201 = vsub.f32 1.0, %v2196
    %v2202 = vmul.f32 %v2201, %v2200
    %v2203 = vmul.f32 %v2196, %v1464
    %v2204 = vadd.f32 %v2202, %v2203
    %v2205 = vadd.f32 %v2180, %v2130
    %v2206 = vadd.f32 %v2181, %v2169
    %v2207 = vxor.u32 %v2205, 2147483648
    %v2208 = vxor.u32 %v2206, 2147483648
    %v2209 = vmul.f32 %v2207, 1.442695
    %v2210 = vpow.pop %v2209
    %v2211 = vmul.f32 %v2208, 1.442695
    %v2212 = vpow.pop %v2211
    %v2213 = vadd.f32 %v2210, 1.0
    %v2214 = vadd.f32 %v2212, 1.0
    %v2215 = vrcp.pop %v2213
    %v2216 = vmul.f32 1.0, %v2215
    %v2217 = vrcp.pop %v2214
    %v2218 = vmul.f32 1.0, %v2217
    %v2219 = vadd.f32 %v2171, %v704
    %v2220 = vmul.f32 %v2216, %v2219
    %v2221 = vadd.f32 %v2182, %v2220
    %v2222 = vtanh.pop %v2221
    %v2223 = vsub.f32 1.0, %v2218
    %v2224 = vmul.f32 %v2223, %v2222
    %v2225 = vmul.f32 %v2218, %v1471
    %v2226 = vadd.f32 %v2224, %v2225
    %vm2227 = vcmp.gt.s32.totalorder %v691, 1
    %vm2228 = vcmp.gt.s32.totalorder %v691, 6
    %v2229 = vsel %vm2227, 1, 0
    %2230 = vset.pattern.permute.xlu0 0
    %2231 = vperm.xlu0 %2230, %v2229
    %v2232 = vpop.permute.xlu0 %2231
    %vm2233 = vcmp.eq.s32.totalorder %v2232, 1
    %v2234 = vsel %vm2233, %v2204, 0.0
    %s2235 = scalar_lea.vmem [#allocation11], 8
    %2236 = vst [vmem:[%s2235] sm:$0xff] %v2234
    %v2237 = vsel %vm2228, 1, 0
    %2238 = vset.pattern.permute.xlu0 0
    %2239 = vperm.xlu0 %2238, %v2237
    %v2240 = vpop.permute.xlu0 %2239
    %vm2241 = vcmp.eq.s32.totalorder %v2240, 1
    %v2242 = vsel %vm2241, %v2226, 0.0
    %s2243 = scalar_lea.vmem [#allocation4], 48
    %2244 = vst [vmem:[%s2243] sm:$0xff] %v2242
    %v2245 = vsel %vm2233, %v2204, %v1464
    %v2246 = vsel %vm2241, %v2226, %v1471
    %v2247 = vpack.c.bf16 %v2245, %v2245
    %v2248 = vpack.c.bf16 %v2246, %v2246
    %v2249 = vld [vmem:[#allocation10] sm:$0xff]
    %v2250 = vld [vmem:[#allocation10 + $0x8] sm:$0xff]
    %v2251 = vld [vmem:[#allocation10 + $0x10] sm:$0xff]
    %v2252 = vld [vmem:[#allocation10 + $0x18] sm:$0xff]
    %v2253 = vld [vmem:[#allocation10 + $0x20] sm:$0xff]
    %v2254 = vld [vmem:[#allocation10 + $0x28] sm:$0xff]
    %v2255 = vld [vmem:[#allocation10 + $0x30] sm:$0xff]
    %v2256 = vld [vmem:[#allocation10 + $0x38] sm:$0xff]
    %v2257 = vld [vmem:[#allocation10 + $0x40] sm:$0xff]
    %v2258 = vld [vmem:[#allocation10 + $0x48] sm:$0xff]
    %v2259 = vld [vmem:[#allocation10 + $0x50] sm:$0xff]
    %v2260 = vld [vmem:[#allocation10 + $0x58] sm:$0xff]
    %v2261 = vld [vmem:[#allocation10 + $0x60] sm:$0xff]
    %v2262 = vld [vmem:[#allocation10 + $0x68] sm:$0xff]
    %v2263 = vld [vmem:[#allocation10 + $0x70] sm:$0xff]
    %v2264 = vld [vmem:[#allocation10 + $0x78] sm:$0xff]
    %v2265 = vld [vmem:[#allocation10 + $0x80] sm:$0xff]
    %v2266 = vld [vmem:[#allocation10 + $0x88] sm:$0xff]
    %v2267 = vld [vmem:[#allocation10 + $0x90] sm:$0xff]
    %v2268 = vld [vmem:[#allocation10 + $0x98] sm:$0xff]
    %v2269 = vld [vmem:[#allocation10 + $0xa0] sm:$0xff]
    %v2270 = vld [vmem:[#allocation10 + $0xa8] sm:$0xff]
    %v2271 = vld [vmem:[#allocation10 + $0xb0] sm:$0xff]
    %v2272 = vld [vmem:[#allocation10 + $0xb8] sm:$0xff]
    %v2273 = vld [vmem:[#allocation10 + $0xc0] sm:$0xff]
    %v2274 = vld [vmem:[#allocation10 + $0xc8] sm:$0xff]
    %v2275 = vld [vmem:[#allocation10 + $0xd0] sm:$0xff]
    %v2276 = vld [vmem:[#allocation10 + $0xd8] sm:$0xff]
    %v2277 = vld [vmem:[#allocation10 + $0xe0] sm:$0xff]
    %v2278 = vld [vmem:[#allocation10 + $0xe8] sm:$0xff]
    %v2279 = vld [vmem:[#allocation10 + $0xf0] sm:$0xff]
    %v2280 = vld [vmem:[#allocation10 + $0xf8] sm:$0xff]
    %v2281 = vld [vmem:[#allocation10 + $0x100] sm:$0xff]
    %v2282 = vld [vmem:[#allocation10 + $0x108] sm:$0xff]
    %v2283 = vld [vmem:[#allocation10 + $0x110] sm:$0xff]
    %v2284 = vld [vmem:[#allocation10 + $0x118] sm:$0xff]
    %v2285 = vld [vmem:[#allocation10 + $0x120] sm:$0xff]
    %v2286 = vld [vmem:[#allocation10 + $0x128] sm:$0xff]
    %v2287 = vld [vmem:[#allocation10 + $0x130] sm:$0xff]
    %v2288 = vld [vmem:[#allocation10 + $0x138] sm:$0xff]
    %v2289 = vld [vmem:[#allocation10 + $0x140] sm:$0xff]
    %v2290 = vld [vmem:[#allocation10 + $0x148] sm:$0xff]
    %v2291 = vld [vmem:[#allocation10 + $0x150] sm:$0xff]
    %v2292 = vld [vmem:[#allocation10 + $0x158] sm:$0xff]
    %v2293 = vld [vmem:[#allocation10 + $0x160] sm:$0xff]
    %v2294 = vld [vmem:[#allocation10 + $0x168] sm:$0xff]
    %v2295 = vld [vmem:[#allocation10 + $0x170] sm:$0xff]
    %v2296 = vld [vmem:[#allocation10 + $0x178] sm:$0xff]
    %v2297 = vld [vmem:[#allocation10 + $0x180] sm:$0xff]
    %v2298 = vld [vmem:[#allocation10 + $0x188] sm:$0xff]
    %v2299 = vld [vmem:[#allocation10 + $0x190] sm:$0xff]
    %v2300 = vld [vmem:[#allocation10 + $0x198] sm:$0xff]
    %v2301 = vld [vmem:[#allocation10 + $0x1a0] sm:$0xff]
    %v2302 = vld [vmem:[#allocation10 + $0x1a8] sm:$0xff]
    %v2303 = vld [vmem:[#allocation10 + $0x1b0] sm:$0xff]
    %v2304 = vld [vmem:[#allocation10 + $0x1b8] sm:$0xff]
    %v2305 = vld [vmem:[#allocation10 + $0x1c0] sm:$0xff]
    %v2306 = vld [vmem:[#allocation10 + $0x1c8] sm:$0xff]
    %v2307 = vld [vmem:[#allocation10 + $0x1d0] sm:$0xff]
    %v2308 = vld [vmem:[#allocation10 + $0x1d8] sm:$0xff]
    %v2309 = vld [vmem:[#allocation10 + $0x1e0] sm:$0xff]
    %v2310 = vld [vmem:[#allocation10 + $0x1e8] sm:$0xff]
    %v2311 = vld [vmem:[#allocation10 + $0x1f0] sm:$0xff]
    %v2312 = vld [vmem:[#allocation10 + $0x1f8] sm:$0xff]
    %v2313 = vld [vmem:[#allocation10 + $0x200] sm:$0xff]
    %v2314 = vld [vmem:[#allocation10 + $0x208] sm:$0xff]
    %v2315 = vld [vmem:[#allocation10 + $0x210] sm:$0xff]
    %v2316 = vld [vmem:[#allocation10 + $0x218] sm:$0xff]
    %v2317 = vld [vmem:[#allocation10 + $0x220] sm:$0xff]
    %v2318 = vld [vmem:[#allocation10 + $0x228] sm:$0xff]
    %v2319 = vld [vmem:[#allocation10 + $0x230] sm:$0xff]
    %v2320 = vld [vmem:[#allocation10 + $0x238] sm:$0xff]
    %v2321 = vld [vmem:[#allocation10 + $0x240] sm:$0xff]
    %v2322 = vld [vmem:[#allocation10 + $0x248] sm:$0xff]
    %v2323 = vld [vmem:[#allocation10 + $0x250] sm:$0xff]
    %v2324 = vld [vmem:[#allocation10 + $0x258] sm:$0xff]
    %v2325 = vld [vmem:[#allocation10 + $0x260] sm:$0xff]
    %v2326 = vld [vmem:[#allocation10 + $0x268] sm:$0xff]
    %v2327 = vld [vmem:[#allocation10 + $0x270] sm:$0xff]
    %v2328 = vld [vmem:[#allocation10 + $0x278] sm:$0xff]
    %v2329 = vld [vmem:[#allocation10 + $0x280] sm:$0xff]
    %v2330 = vld [vmem:[#allocation10 + $0x288] sm:$0xff]
    %v2331 = vld [vmem:[#allocation10 + $0x290] sm:$0xff]
    %v2332 = vld [vmem:[#allocation10 + $0x298] sm:$0xff]
    %v2333 = vld [vmem:[#allocation10 + $0x2a0] sm:$0xff]
    %v2334 = vld [vmem:[#allocation10 + $0x2a8] sm:$0xff]
    %v2335 = vld [vmem:[#allocation10 + $0x2b0] sm:$0xff]
    %v2336 = vld [vmem:[#allocation10 + $0x2b8] sm:$0xff]
    %v2337 = vld [vmem:[#allocation10 + $0x2c0] sm:$0xff]
    %v2338 = vld [vmem:[#allocation10 + $0x2c8] sm:$0xff]
    %v2339 = vld [vmem:[#allocation10 + $0x2d0] sm:$0xff]
    %v2340 = vld [vmem:[#allocation10 + $0x2d8] sm:$0xff]
    %v2341 = vld [vmem:[#allocation10 + $0x2e0] sm:$0xff]
    %v2342 = vld [vmem:[#allocation10 + $0x2e8] sm:$0xff]
    %v2343 = vld [vmem:[#allocation10 + $0x2f0] sm:$0xff]
    %v2344 = vld [vmem:[#allocation10 + $0x2f8] sm:$0xff]
    %v2441 = vunpack.c.l.b16 %v2249
    %v2442 = vunpack.c.h.b16 %v2249
    %v2443 = vunpack.c.l.b16 %v2250
    %v2444 = vunpack.c.h.b16 %v2250
    %v2445 = vunpack.c.l.b16 %v2251
    %v2446 = vunpack.c.h.b16 %v2251
    %v2447 = vunpack.c.l.b16 %v2252
    %v2448 = vunpack.c.h.b16 %v2252
    %v2449 = vunpack.c.l.b16 %v2253
    %v2450 = vunpack.c.h.b16 %v2253
    %v2451 = vunpack.c.l.b16 %v2254
    %v2452 = vunpack.c.h.b16 %v2254
    %v2453 = vunpack.c.l.b16 %v2255
    %v2454 = vunpack.c.h.b16 %v2255
    %v2455 = vunpack.c.l.b16 %v2256
    %v2456 = vunpack.c.h.b16 %v2256
    %v2457 = vunpack.c.l.b16 %v2257
    %v2458 = vunpack.c.h.b16 %v2257
    %v2459 = vunpack.c.l.b16 %v2258
    %v2460 = vunpack.c.h.b16 %v2258
    %v2461 = vunpack.c.l.b16 %v2259
    %v2462 = vunpack.c.h.b16 %v2259
    %v2463 = vunpack.c.l.b16 %v2260
    %v2464 = vunpack.c.h.b16 %v2260
    %v2465 = vunpack.c.l.b16 %v2261
    %v2466 = vunpack.c.h.b16 %v2261
    %v2467 = vunpack.c.l.b16 %v2262
    %v2468 = vunpack.c.h.b16 %v2262
    %v2469 = vunpack.c.l.b16 %v2263
    %v2470 = vunpack.c.h.b16 %v2263
    %v2471 = vunpack.c.l.b16 %v2264
    %v2472 = vunpack.c.h.b16 %v2264
    %v2473 = vunpack.c.l.b16 %v2265
    %v2474 = vunpack.c.h.b16 %v2265
    %v2475 = vunpack.c.l.b16 %v2266
    %v2476 = vunpack.c.h.b16 %v2266
    %v2477 = vunpack.c.l.b16 %v2267
    %v2478 = vunpack.c.h.b16 %v2267
    %v2479 = vunpack.c.l.b16 %v2268
    %v2480 = vunpack.c.h.b16 %v2268
    %v2481 = vunpack.c.l.b16 %v2269
    %v2482 = vunpack.c.h.b16 %v2269
    %v2483 = vunpack.c.l.b16 %v2270
    %v2484 = vunpack.c.h.b16 %v2270
    %v2485 = vunpack.c.l.b16 %v2271
    %v2486 = vunpack.c.h.b16 %v2271
    %v2487 = vunpack.c.l.b16 %v2272
    %v2488 = vunpack.c.h.b16 %v2272
    %v2489 = vunpack.c.l.b16 %v2273
    %v2490 = vunpack.c.h.b16 %v2273
    %v2491 = vunpack.c.l.b16 %v2274
    %v2492 = vunpack.c.h.b16 %v2274
    %v2493 = vunpack.c.l.b16 %v2275
    %v2494 = vunpack.c.h.b16 %v2275
    %v2495 = vunpack.c.l.b16 %v2276
    %v2496 = vunpack.c.h.b16 %v2276
    %v2497 = vunpack.c.l.b16 %v2277
    %v2498 = vunpack.c.h.b16 %v2277
    %v2499 = vunpack.c.l.b16 %v2278
    %v2500 = vunpack.c.h.b16 %v2278
    %v2501 = vunpack.c.l.b16 %v2279
    %v2502 = vunpack.c.h.b16 %v2279
    %v2503 = vunpack.c.l.b16 %v2280
    %v2504 = vunpack.c.h.b16 %v2280
    %v2505 = vunpack.c.l.b16 %v2281
    %v2506 = vunpack.c.h.b16 %v2281
    %v2507 = vunpack.c.l.b16 %v2282
    %v2508 = vunpack.c.h.b16 %v2282
    %v2509 = vunpack.c.l.b16 %v2283
    %v2510 = vunpack.c.h.b16 %v2283
    %v2511 = vunpack.c.l.b16 %v2284
    %v2512 = vunpack.c.h.b16 %v2284
    %v2513 = vunpack.c.l.b16 %v2285
    %v2514 = vunpack.c.h.b16 %v2285
    %v2515 = vunpack.c.l.b16 %v2286
    %v2516 = vunpack.c.h.b16 %v2286
    %v2517 = vunpack.c.l.b16 %v2287
    %v2518 = vunpack.c.h.b16 %v2287
    %v2519 = vunpack.c.l.b16 %v2288
    %v2520 = vunpack.c.h.b16 %v2288
    %v2521 = vunpack.c.l.b16 %v2289
    %v2522 = vunpack.c.h.b16 %v2289
    %v2523 = vunpack.c.l.b16 %v2290
    %v2524 = vunpack.c.h.b16 %v2290
    %v2525 = vunpack.c.l.b16 %v2291
    %v2526 = vunpack.c.h.b16 %v2291
    %v2527 = vunpack.c.l.b16 %v2292
    %v2528 = vunpack.c.h.b16 %v2292
    %v2529 = vunpack.c.l.b16 %v2293
    %v2530 = vunpack.c.h.b16 %v2293
    %v2531 = vunpack.c.l.b16 %v2294
    %v2532 = vunpack.c.h.b16 %v2294
    %v2533 = vunpack.c.l.b16 %v2295
    %v2534 = vunpack.c.h.b16 %v2295
    %v2535 = vunpack.c.l.b16 %v2296
    %v2536 = vunpack.c.h.b16 %v2296
    %v2537 = vunpack.c.l.b16 %v2297
    %v2538 = vunpack.c.h.b16 %v2297
    %v2539 = vunpack.c.l.b16 %v2298
    %v2540 = vunpack.c.h.b16 %v2298
    %v2541 = vunpack.c.l.b16 %v2299
    %v2542 = vunpack.c.h.b16 %v2299
    %v2543 = vunpack.c.l.b16 %v2300
    %v2544 = vunpack.c.h.b16 %v2300
    %v2545 = vunpack.c.l.b16 %v2301
    %v2546 = vunpack.c.h.b16 %v2301
    %v2547 = vunpack.c.l.b16 %v2302
    %v2548 = vunpack.c.h.b16 %v2302
    %v2549 = vunpack.c.l.b16 %v2303
    %v2550 = vunpack.c.h.b16 %v2303
    %v2551 = vunpack.c.l.b16 %v2304
    %v2552 = vunpack.c.h.b16 %v2304
    %v2553 = vunpack.c.l.b16 %v2305
    %v2554 = vunpack.c.h.b16 %v2305
    %v2555 = vunpack.c.l.b16 %v2306
    %v2556 = vunpack.c.h.b16 %v2306
    %v2557 = vunpack.c.l.b16 %v2307
    %v2558 = vunpack.c.h.b16 %v2307
    %v2559 = vunpack.c.l.b16 %v2308
    %v2560 = vunpack.c.h.b16 %v2308
    %v2561 = vunpack.c.l.b16 %v2309
    %v2562 = vunpack.c.h.b16 %v2309
    %v2563 = vunpack.c.l.b16 %v2310
    %v2564 = vunpack.c.h.b16 %v2310
    %v2565 = vunpack.c.l.b16 %v2311
    %v2566 = vunpack.c.h.b16 %v2311
    %v2567 = vunpack.c.l.b16 %v2312
    %v2568 = vunpack.c.h.b16 %v2312
    %v2569 = vunpack.c.l.b16 %v2313
    %v2570 = vunpack.c.h.b16 %v2313
    %v2571 = vunpack.c.l.b16 %v2314
    %v2572 = vunpack.c.h.b16 %v2314
    %v2573 = vunpack.c.l.b16 %v2315
    %v2574 = vunpack.c.h.b16 %v2315
    %v2575 = vunpack.c.l.b16 %v2316
    %v2576 = vunpack.c.h.b16 %v2316
    %v2577 = vunpack.c.l.b16 %v2317
    %v2578 = vunpack.c.h.b16 %v2317
    %v2579 = vunpack.c.l.b16 %v2318
    %v2580 = vunpack.c.h.b16 %v2318
    %v2581 = vunpack.c.l.b16 %v2319
    %v2582 = vunpack.c.h.b16 %v2319
    %v2583 = vunpack.c.l.b16 %v2320
    %v2584 = vunpack.c.h.b16 %v2320
    %v2585 = vunpack.c.l.b16 %v2321
    %v2586 = vunpack.c.h.b16 %v2321
    %v2587 = vunpack.c.l.b16 %v2322
    %v2588 = vunpack.c.h.b16 %v2322
    %v2589 = vunpack.c.l.b16 %v2323
    %v2590 = vunpack.c.h.b16 %v2323
    %v2591 = vunpack.c.l.b16 %v2324
    %v2592 = vunpack.c.h.b16 %v2324
    %v2593 = vunpack.c.l.b16 %v2325
    %v2594 = vunpack.c.h.b16 %v2325
    %v2595 = vunpack.c.l.b16 %v2326
    %v2596 = vunpack.c.h.b16 %v2326
    %v2597 = vunpack.c.l.b16 %v2327
    %v2598 = vunpack.c.h.b16 %v2327
    %v2599 = vunpack.c.l.b16 %v2328
    %v2600 = vunpack.c.h.b16 %v2328
    %v2601 = vunpack.c.l.b16 %v2329
    %v2602 = vunpack.c.h.b16 %v2329
    %v2603 = vunpack.c.l.b16 %v2330
    %v2604 = vunpack.c.h.b16 %v2330
    %v2605 = vunpack.c.l.b16 %v2331
    %v2606 = vunpack.c.h.b16 %v2331
    %v2607 = vunpack.c.l.b16 %v2332
    %v2608 = vunpack.c.h.b16 %v2332
    %v2609 = vunpack.c.l.b16 %v2333
    %v2610 = vunpack.c.h.b16 %v2333
    %v2611 = vunpack.c.l.b16 %v2334
    %v2612 = vunpack.c.h.b16 %v2334
    %v2613 = vunpack.c.l.b16 %v2335
    %v2614 = vunpack.c.h.b16 %v2335
    %v2615 = vunpack.c.l.b16 %v2336
    %v2616 = vunpack.c.h.b16 %v2336
    %v2617 = vunpack.c.l.b16 %v2337
    %v2618 = vunpack.c.h.b16 %v2337
    %v2619 = vunpack.c.l.b16 %v2338
    %v2620 = vunpack.c.h.b16 %v2338
    %v2621 = vunpack.c.l.b16 %v2339
    %v2622 = vunpack.c.h.b16 %v2339
    %v2623 = vunpack.c.l.b16 %v2340
    %v2624 = vunpack.c.h.b16 %v2340
    %v2625 = vunpack.c.l.b16 %v2341
    %v2626 = vunpack.c.h.b16 %v2341
    %v2627 = vunpack.c.l.b16 %v2342
    %v2628 = vunpack.c.h.b16 %v2342
    %v2629 = vunpack.c.l.b16 %v2343
    %v2630 = vunpack.c.h.b16 %v2343
    %v2631 = vunpack.c.l.b16 %v2344
    %v2632 = vunpack.c.h.b16 %v2344
    %v2633 = vpack.c.b16 %v2447, %v2441
    %v2634 = vpack.c.b16 %v2448, %v2442
    %v2635 = vpack.c.b16 %v2449, %v2443
    %v2636 = vpack.c.b16 %v2450, %v2444
    %v2637 = vpack.c.b16 %v2451, %v2445
    %v2638 = vpack.c.b16 %v2452, %v2446
    %v2639 = vpack.c.b16 %v2459, %v2453
    %v2640 = vpack.c.b16 %v2460, %v2454
    %v2641 = vpack.c.b16 %v2461, %v2455
    %v2642 = vpack.c.b16 %v2462, %v2456
    %v2643 = vpack.c.b16 %v2463, %v2457
    %v2644 = vpack.c.b16 %v2464, %v2458
    %v2645 = vpack.c.b16 %v2471, %v2465
    %v2646 = vpack.c.b16 %v2472, %v2466
    %v2647 = vpack.c.b16 %v2473, %v2467
    %v2648 = vpack.c.b16 %v2474, %v2468
    %v2649 = vpack.c.b16 %v2475, %v2469
    %v2650 = vpack.c.b16 %v2476, %v2470
    %v2651 = vpack.c.b16 %v2483, %v2477
    %v2652 = vpack.c.b16 %v2484, %v2478
    %v2653 = vpack.c.b16 %v2485, %v2479
    %v2654 = vpack.c.b16 %v2486, %v2480
    %v2655 = vpack.c.b16 %v2487, %v2481
    %v2656 = vpack.c.b16 %v2488, %v2482
    %v2657 = vpack.c.b16 %v2495, %v2489
    %v2658 = vpack.c.b16 %v2496, %v2490
    %v2659 = vpack.c.b16 %v2497, %v2491
    %v2660 = vpack.c.b16 %v2498, %v2492
    %v2661 = vpack.c.b16 %v2499, %v2493
    %v2662 = vpack.c.b16 %v2500, %v2494
    %v2663 = vpack.c.b16 %v2507, %v2501
    %v2664 = vpack.c.b16 %v2508, %v2502
    %v2665 = vpack.c.b16 %v2509, %v2503
    %v2666 = vpack.c.b16 %v2510, %v2504
    %v2667 = vpack.c.b16 %v2511, %v2505
    %v2668 = vpack.c.b16 %v2512, %v2506
    %v2669 = vpack.c.b16 %v2519, %v2513
    %v2670 = vpack.c.b16 %v2520, %v2514
    %v2671 = vpack.c.b16 %v2521, %v2515
    %v2672 = vpack.c.b16 %v2522, %v2516
    %v2673 = vpack.c.b16 %v2523, %v2517
    %v2674 = vpack.c.b16 %v2524, %v2518
    %v2675 = vpack.c.b16 %v2531, %v2525
    %v2676 = vpack.c.b16 %v2532, %v2526
    %v2677 = vpack.c.b16 %v2533, %v2527
    %v2678 = vpack.c.b16 %v2534, %v2528
    %v2679 = vpack.c.b16 %v2535, %v2529
    %v2680 = vpack.c.b16 %v2536, %v2530
    %v2681 = vpack.c.b16 %v2543, %v2537
    %v2682 = vpack.c.b16 %v2544, %v2538
    %v2683 = vpack.c.b16 %v2545, %v2539
    %v2684 = vpack.c.b16 %v2546, %v2540
    %v2685 = vpack.c.b16 %v2547, %v2541
    %v2686 = vpack.c.b16 %v2548, %v2542
    %v2687 = vpack.c.b16 %v2555, %v2549
    %v2688 = vpack.c.b16 %v2556, %v2550
    %v2689 = vpack.c.b16 %v2557, %v2551
    %v2690 = vpack.c.b16 %v2558, %v2552
    %v2691 = vpack.c.b16 %v2559, %v2553
    %v2692 = vpack.c.b16 %v2560, %v2554
    %v2693 = vpack.c.b16 %v2567, %v2561
    %v2694 = vpack.c.b16 %v2568, %v2562
    %v2695 = vpack.c.b16 %v2569, %v2563
    %v2696 = vpack.c.b16 %v2570, %v2564
    %v2697 = vpack.c.b16 %v2571, %v2565
    %v2698 = vpack.c.b16 %v2572, %v2566
    %v2699 = vpack.c.b16 %v2579, %v2573
    %v2700 = vpack.c.b16 %v2580, %v2574
    %v2701 = vpack.c.b16 %v2581, %v2575
    %v2702 = vpack.c.b16 %v2582, %v2576
    %v2703 = vpack.c.b16 %v2583, %v2577
    %v2704 = vpack.c.b16 %v2584, %v2578
    %v2705 = vpack.c.b16 %v2591, %v2585
    %v2706 = vpack.c.b16 %v2592, %v2586
    %v2707 = vpack.c.b16 %v2593, %v2587
    %v2708 = vpack.c.b16 %v2594, %v2588
    %v2709 = vpack.c.b16 %v2595, %v2589
    %v2710 = vpack.c.b16 %v2596, %v2590
    %v2711 = vpack.c.b16 %v2603, %v2597
    %v2712 = vpack.c.b16 %v2604, %v2598
    %v2713 = vpack.c.b16 %v2605, %v2599
    %v2714 = vpack.c.b16 %v2606, %v2600
    %v2715 = vpack.c.b16 %v2607, %v2601
    %v2716 = vpack.c.b16 %v2608, %v2602
    %v2717 = vpack.c.b16 %v2615, %v2609
    %v2718 = vpack.c.b16 %v2616, %v2610
    %v2719 = vpack.c.b16 %v2617, %v2611
    %v2720 = vpack.c.b16 %v2618, %v2612
    %v2721 = vpack.c.b16 %v2619, %v2613
    %v2722 = vpack.c.b16 %v2620, %v2614
    %v2723 = vpack.c.b16 %v2627, %v2621
    %v2724 = vpack.c.b16 %v2628, %v2622
    %v2725 = vpack.c.b16 %v2629, %v2623
    %v2726 = vpack.c.b16 %v2630, %v2624
    %v2727 = vpack.c.b16 %v2631, %v2625
    %v2728 = vpack.c.b16 %v2632, %v2626
    %2825 = vmatprep.subr.bf16.mxu0 %v2634
    %2826 = vmatpush1.bf16.msra.mxu0 %v2633
    %2827 = vmatprep.subr.bf16.mxu0 %v2640
    %2828 = vmatpush1.bf16.msra.mxu0 %v2639
    %2829 = vmatprep.subr.bf16.mxu0 %v2646
    %2830 = vmatpush1.bf16.msra.mxu0 %v2645
    %2831 = vmatprep.subr.bf16.mxu0 %v2652
    %2832 = vmatpush1.bf16.msra.mxu0 %v2651
    %2833 = vmatprep.subr.bf16.mxu0 %v2658
    %2834 = vmatpush1.bf16.msra.mxu0 %v2657
    %2835 = vmatprep.subr.bf16.mxu0 %v2664
    %2836 = vmatpush1.bf16.msra.mxu0 %v2663
    %2837 = vmatprep.subr.bf16.mxu0 %v2670
    %2838 = vmatpush1.bf16.msra.mxu0 %v2669
    %2839 = vmatprep.subr.bf16.mxu0 %v2676
    %2840 = vmatpush1.bf16.msra.mxu0 %v2675
    %2841 = vmatprep.subr.bf16.mxu0 %v2682
    %2842 = vmatpush1.bf16.msra.mxu0 %v2681
    %2843 = vmatprep.subr.bf16.mxu0 %v2688
    %2844 = vmatpush1.bf16.msra.mxu0 %v2687
    %2845 = vmatprep.subr.bf16.mxu0 %v2694
    %2846 = vmatpush1.bf16.msra.mxu0 %v2693
    %2847 = vmatprep.subr.bf16.mxu0 %v2700
    %2848 = vmatpush1.bf16.msra.mxu0 %v2699
    %2849 = vmatprep.subr.bf16.mxu0 %v2706
    %2850 = vmatpush1.bf16.msra.mxu0 %v2705
    %2851 = vmatprep.subr.bf16.mxu0 %v2712
    %2852 = vmatpush1.bf16.msra.mxu0 %v2711
    %2853 = vmatprep.subr.bf16.mxu0 %v2718
    %2854 = vmatpush1.bf16.msra.mxu0 %v2717
    %2855 = vmatprep.subr.bf16.mxu0 %v2724
    %2856 = vmatpush1.bf16.msra.mxu0 %v2723
    %2857 = vmatprep.mubr.bf16.mxu0 %v2248
    %2858 = vmatmul.mubr.bf16.gmra.mrb[0].mxu0 %v2247
    %v2859 = vpop.f32.mrb[0].mxu0
    %v2860 = vadd.f32 0.0, %v2859
    %v2861 = vpop.f32.mrb[0].mxu0
    %v2862 = vadd.f32 0.0, %v2861
    %v2863 = vpop.f32.mrb[0].mxu0
    %v2864 = vpop.f32.mrb[0].mxu0
    %2865 = vdwg.mxu0
    %2866 = vmatprep.subr.bf16.mxu0 %v2636
    %2867 = vmatpush1.bf16.msra.mxu0 %v2635
    %2868 = vmatprep.subr.bf16.mxu0 %v2642
    %2869 = vmatpush1.bf16.msra.mxu0 %v2641
    %2870 = vmatprep.subr.bf16.mxu0 %v2648
    %2871 = vmatpush1.bf16.msra.mxu0 %v2647
    %2872 = vmatprep.subr.bf16.mxu0 %v2654
    %2873 = vmatpush1.bf16.msra.mxu0 %v2653
    %2874 = vmatprep.subr.bf16.mxu0 %v2660
    %2875 = vmatpush1.bf16.msra.mxu0 %v2659
    %2876 = vmatprep.subr.bf16.mxu0 %v2666
    %2877 = vmatpush1.bf16.msra.mxu0 %v2665
    %2878 = vmatprep.subr.bf16.mxu0 %v2672
    %2879 = vmatpush1.bf16.msra.mxu0 %v2671
    %2880 = vmatprep.subr.bf16.mxu0 %v2678
    %2881 = vmatpush1.bf16.msra.mxu0 %v2677
    %2882 = vmatprep.subr.bf16.mxu0 %v2684
    %2883 = vmatpush1.bf16.msra.mxu0 %v2683
    %2884 = vmatprep.subr.bf16.mxu0 %v2690
    %2885 = vmatpush1.bf16.msra.mxu0 %v2689
    %2886 = vmatprep.subr.bf16.mxu0 %v2696
    %2887 = vmatpush1.bf16.msra.mxu0 %v2695
    %2888 = vmatprep.subr.bf16.mxu0 %v2702
    %2889 = vmatpush1.bf16.msra.mxu0 %v2701
    %2890 = vmatprep.subr.bf16.mxu0 %v2708
    %2891 = vmatpush1.bf16.msra.mxu0 %v2707
    %2892 = vmatprep.subr.bf16.mxu0 %v2714
    %2893 = vmatpush1.bf16.msra.mxu0 %v2713
    %2894 = vmatprep.subr.bf16.mxu0 %v2720
    %2895 = vmatpush1.bf16.msra.mxu0 %v2719
    %2896 = vmatprep.subr.bf16.mxu0 %v2726
    %2897 = vmatpush1.bf16.msra.mxu0 %v2725
    %2898 = vmatprep.mubr.bf16.mxu0 %v2248
    %2899 = vmatmul.mubr.bf16.gmra.mrb[0].mxu0 %v2247
    %v2900 = vpop.f32.mrb[0].mxu0
    %v2901 = vadd.f32 0.0, %v2900
    %v2902 = vpop.f32.mrb[0].mxu0
    %v2903 = vadd.f32 0.0, %v2902
    %v2904 = vpop.f32.mrb[0].mxu0
    %v2905 = vpop.f32.mrb[0].mxu0
    %2906 = vdwg.mxu0
    %2907 = vmatprep.subr.bf16.mxu0 %v2638
    %2908 = vmatpush1.bf16.msra.mxu0 %v2637
    %2909 = vmatprep.subr.bf16.mxu0 %v2644
    %2910 = vmatpush1.bf16.msra.mxu0 %v2643
    %2911 = vmatprep.subr.bf16.mxu0 %v2650
    %2912 = vmatpush1.bf16.msra.mxu0 %v2649
    %2913 = vmatprep.subr.bf16.mxu0 %v2656
    %2914 = vmatpush1.bf16.msra.mxu0 %v2655
    %2915 = vmatprep.subr.bf16.mxu0 %v2662
    %2916 = vmatpush1.bf16.msra.mxu0 %v2661
    %2917 = vmatprep.subr.bf16.mxu0 %v2668
    %2918 = vmatpush1.bf16.msra.mxu0 %v2667
    %2919 = vmatprep.subr.bf16.mxu0 %v2674
    %2920 = vmatpush1.bf16.msra.mxu0 %v2673
    %2921 = vmatprep.subr.bf16.mxu0 %v2680
    %2922 = vmatpush1.bf16.msra.mxu0 %v2679
    %2923 = vmatprep.subr.bf16.mxu0 %v2686
    %2924 = vmatpush1.bf16.msra.mxu0 %v2685
    %2925 = vmatprep.subr.bf16.mxu0 %v2692
    %2926 = vmatpush1.bf16.msra.mxu0 %v2691
    %2927 = vmatprep.subr.bf16.mxu0 %v2698
    %2928 = vmatpush1.bf16.msra.mxu0 %v2697
    %2929 = vmatprep.subr.bf16.mxu0 %v2704
    %2930 = vmatpush1.bf16.msra.mxu0 %v2703
    %2931 = vmatprep.subr.bf16.mxu0 %v2710
    %2932 = vmatpush1.bf16.msra.mxu0 %v2709
    %2933 = vmatprep.subr.bf16.mxu0 %v2716
    %2934 = vmatpush1.bf16.msra.mxu0 %v2715
    %2935 = vmatprep.subr.bf16.mxu0 %v2722
    %2936 = vmatpush1.bf16.msra.mxu0 %v2721
    %2937 = vmatprep.subr.bf16.mxu0 %v2728
    %2938 = vmatpush1.bf16.msra.mxu0 %v2727
    %2939 = vmatprep.mubr.bf16.mxu0 %v2248
    %2940 = vmatmul.mubr.bf16.gmra.mrb[0].mxu0 %v2247
    %v2941 = vpop.f32.mrb[0].mxu0
    %v2942 = vadd.f32 0.0, %v2941
    %v2943 = vpop.f32.mrb[0].mxu0
    %v2944 = vadd.f32 0.0, %v2943
    %v2945 = vpop.f32.mrb[0].mxu0
    %v2946 = vpop.f32.mrb[0].mxu0
    %2947 = vdwg.mxu0
    %s2948 = scalar_lea.vmem [#allocation2], 48
    %v2949 = vld [vmem:[%s2948] sm:$0xff]
    %v2950 = vld [vmem:[%s2948 + $0x8] sm:$0xff]
    %v2951 = vld [vmem:[%s2948 + $0x10] sm:$0xff]
    %s2952 = scalar_lea.vmem [#allocation3], 120
    %v2953 = vld [vmem:[%s2952] sm:$0xff]
    %v2954 = vld [vmem:[%s2952 + $0x8] sm:$0xff]
    %v2955 = vld [vmem:[%s2952 + $0x10] sm:$0xff]
    %v2956 = vadd.f32 %v2949, %v2860
    %v2957 = vadd.f32 %v2950, %v2862
    %v2958 = vxor.u32 %v2956, 2147483648
    %v2959 = vxor.u32 %v2957, 2147483648
    %v2960 = vmul.f32 %v2958, 1.442695
    %v2961 = vpow.pop %v2960
    %v2962 = vmul.f32 %v2959, 1.442695
    %v2963 = vpow.pop %v2962
    %v2964 = vadd.f32 %v2961, 1.0
    %v2965 = vadd.f32 %v2963, 1.0
    %v2966 = vrcp.pop %v2964
    %v2967 = vmul.f32 1.0, %v2966
    %v2968 = vrcp.pop %v2965
    %v2969 = vmul.f32 1.0, %v2968
    %v2970 = vadd.f32 %v2901, %v697
    %v2971 = vmul.f32 %v2967, %v2970
    %v2972 = vadd.f32 %v2951, %v2971
    %v2973 = vtanh.pop %v2972
    %v2974 = vsub.f32 1.0, %v2969
    %v2975 = vmul.f32 %v2974, %v2973
    %v2976 = vmul.f32 %v2969, %v2245
    %v2977 = vadd.f32 %v2975, %v2976
    %v2978 = vadd.f32 %v2953, %v2903
    %v2979 = vadd.f32 %v2954, %v2942
    %v2980 = vxor.u32 %v2978, 2147483648
    %v2981 = vxor.u32 %v2979, 2147483648
    %v2982 = vmul.f32 %v2980, 1.442695
    %v2983 = vpow.pop %v2982
    %v2984 = vmul.f32 %v2981, 1.442695
    %v2985 = vpow.pop %v2984
    %v2986 = vadd.f32 %v2983, 1.0
    %v2987 = vadd.f32 %v2985, 1.0
    %v2988 = vrcp.pop %v2986
    %v2989 = vmul.f32 1.0, %v2988
    %v2990 = vrcp.pop %v2987
    %v2991 = vmul.f32 1.0, %v2990
    %v2992 = vadd.f32 %v2944, %v704
    %v2993 = vmul.f32 %v2989, %v2992
    %v2994 = vadd.f32 %v2955, %v2993
    %v2995 = vtanh.pop %v2994
    %v2996 = vsub.f32 1.0, %v2991
    %v2997 = vmul.f32 %v2996, %v2995
    %v2998 = vmul.f32 %v2991, %v2246
    %v2999 = vadd.f32 %v2997, %v2998
    %vm3000 = vcmp.gt.s32.totalorder %v691, 2
    %vm3001 = vcmp.gt.s32.totalorder %v691, 5
    %v3002 = vsel %vm3000, 1, 0
    %3003 = vset.pattern.permute.xlu0 0
    %3004 = vperm.xlu0 %3003, %v3002
    %v3005 = vpop.permute.xlu0 %3004
    %vm3006 = vcmp.eq.s32.totalorder %v3005, 1
    %v3007 = vsel %vm3006, %v2977, 0.0
    %s3008 = scalar_lea.vmem [#allocation11], 16
    %3009 = vst [vmem:[%s3008] sm:$0xff] %v3007
    %v3010 = vsel %vm3001, 1, 0
    %3011 = vset.pattern.permute.xlu0 0
    %3012 = vperm.xlu0 %3011, %v3010
    %v3013 = vpop.permute.xlu0 %3012
    %vm3014 = vcmp.eq.s32.totalorder %v3013, 1
    %v3015 = vsel %vm3014, %v2999, 0.0
    %s3016 = scalar_lea.vmem [#allocation4], 40
    %3017 = vst [vmem:[%s3016] sm:$0xff] %v3015
    %v3018 = vsel %vm3006, %v2977, %v2245
    %v3019 = vsel %vm3014, %v2999, %v2246
    %v3020 = vpack.c.bf16 %v3018, %v3018
    %v3021 = vpack.c.bf16 %v3019, %v3019
    %v3022 = vld [vmem:[#allocation10] sm:$0xff]
    %v3023 = vld [vmem:[#allocation10 + $0x8] sm:$0xff]
    %v3024 = vld [vmem:[#allocation10 + $0x10] sm:$0xff]
    %v3025 = vld [vmem:[#allocation10 + $0x18] sm:$0xff]
    %v3026 = vld [vmem:[#allocation10 + $0x20] sm:$0xff]
    %v3027 = vld [vmem:[#allocation10 + $0x28] sm:$0xff]
    %v3028 = vld [vmem:[#allocation10 + $0x30] sm:$0xff]
    %v3029 = vld [vmem:[#allocation10 + $0x38] sm:$0xff]
    %v3030 = vld [vmem:[#allocation10 + $0x40] sm:$0xff]
    %v3031 = vld [vmem:[#allocation10 + $0x48] sm:$0xff]
    %v3032 = vld [vmem:[#allocation10 + $0x50] sm:$0xff]
    %v3033 = vld [vmem:[#allocation10 + $0x58] sm:$0xff]
    %v3034 = vld [vmem:[#allocation10 + $0x60] sm:$0xff]
    %v3035 = vld [vmem:[#allocation10 + $0x68] sm:$0xff]
    %v3036 = vld [vmem:[#allocation10 + $0x70] sm:$0xff]
    %v3037 = vld [vmem:[#allocation10 + $0x78] sm:$0xff]
    %v3038 = vld [vmem:[#allocation10 + $0x80] sm:$0xff]
    %v3039 = vld [vmem:[#allocation10 + $0x88] sm:$0xff]
    %v3040 = vld [vmem:[#allocation10 + $0x90] sm:$0xff]
    %v3041 = vld [vmem:[#allocation10 + $0x98] sm:$0xff]
    %v3042 = vld [vmem:[#allocation10 + $0xa0] sm:$0xff]
    %v3043 = vld [vmem:[#allocation10 + $0xa8] sm:$0xff]
    %v3044 = vld [vmem:[#allocation10 + $0xb0] sm:$0xff]
    %v3045 = vld [vmem:[#allocation10 + $0xb8] sm:$0xff]
    %v3046 = vld [vmem:[#allocation10 + $0xc0] sm:$0xff]
    %v3047 = vld [vmem:[#allocation10 + $0xc8] sm:$0xff]
    %v3048 = vld [vmem:[#allocation10 + $0xd0] sm:$0xff]
    %v3049 = vld [vmem:[#allocation10 + $0xd8] sm:$0xff]
    %v3050 = vld [vmem:[#allocation10 + $0xe0] sm:$0xff]
    %v3051 = vld [vmem:[#allocation10 + $0xe8] sm:$0xff]
    %v3052 = vld [vmem:[#allocation10 + $0xf0] sm:$0xff]
    %v3053 = vld [vmem:[#allocation10 + $0xf8] sm:$0xff]
    %v3054 = vld [vmem:[#allocation10 + $0x100] sm:$0xff]
    %v3055 = vld [vmem:[#allocation10 + $0x108] sm:$0xff]
    %v3056 = vld [vmem:[#allocation10 + $0x110] sm:$0xff]
    %v3057 = vld [vmem:[#allocation10 + $0x118] sm:$0xff]
    %v3058 = vld [vmem:[#allocation10 + $0x120] sm:$0xff]
    %v3059 = vld [vmem:[#allocation10 + $0x128] sm:$0xff]
    %v3060 = vld [vmem:[#allocation10 + $0x130] sm:$0xff]
    %v3061 = vld [vmem:[#allocation10 + $0x138] sm:$0xff]
    %v3062 = vld [vmem:[#allocation10 + $0x140] sm:$0xff]
    %v3063 = vld [vmem:[#allocation10 + $0x148] sm:$0xff]
    %v3064 = vld [vmem:[#allocation10 + $0x150] sm:$0xff]
    %v3065 = vld [vmem:[#allocation10 + $0x158] sm:$0xff]
    %v3066 = vld [vmem:[#allocation10 + $0x160] sm:$0xff]
    %v3067 = vld [vmem:[#allocation10 + $0x168] sm:$0xff]
    %v3068 = vld [vmem:[#allocation10 + $0x170] sm:$0xff]
    %v3069 = vld [vmem:[#allocation10 + $0x178] sm:$0xff]
    %v3070 = vld [vmem:[#allocation10 + $0x180] sm:$0xff]
    %v3071 = vld [vmem:[#allocation10 + $0x188] sm:$0xff]
    %v3072 = vld [vmem:[#allocation10 + $0x190] sm:$0xff]
    %v3073 = vld [vmem:[#allocation10 + $0x198] sm:$0xff]
    %v3074 = vld [vmem:[#allocation10 + $0x1a0] sm:$0xff]
    %v3075 = vld [vmem:[#allocation10 + $0x1a8] sm:$0xff]
    %v3076 = vld [vmem:[#allocation10 + $0x1b0] sm:$0xff]
    %v3077 = vld [vmem:[#allocation10 + $0x1b8] sm:$0xff]
    %v3078 = vld [vmem:[#allocation10 + $0x1c0] sm:$0xff]
    %v3079 = vld [vmem:[#allocation10 + $0x1c8] sm:$0xff]
    %v3080 = vld [vmem:[#allocation10 + $0x1d0] sm:$0xff]
    %v3081 = vld [vmem:[#allocation10 + $0x1d8] sm:$0xff]
    %v3082 = vld [vmem:[#allocation10 + $0x1e0] sm:$0xff]
    %v3083 = vld [vmem:[#allocation10 + $0x1e8] sm:$0xff]
    %v3084 = vld [vmem:[#allocation10 + $0x1f0] sm:$0xff]
    %v3085 = vld [vmem:[#allocation10 + $0x1f8] sm:$0xff]
    %v3086 = vld [vmem:[#allocation10 + $0x200] sm:$0xff]
    %v3087 = vld [vmem:[#allocation10 + $0x208] sm:$0xff]
    %v3088 = vld [vmem:[#allocation10 + $0x210] sm:$0xff]
    %v3089 = vld [vmem:[#allocation10 + $0x218] sm:$0xff]
    %v3090 = vld [vmem:[#allocation10 + $0x220] sm:$0xff]
    %v3091 = vld [vmem:[#allocation10 + $0x228] sm:$0xff]
    %v3092 = vld [vmem:[#allocation10 + $0x230] sm:$0xff]
    %v3093 = vld [vmem:[#allocation10 + $0x238] sm:$0xff]
    %v3094 = vld [vmem:[#allocation10 + $0x240] sm:$0xff]
    %v3095 = vld [vmem:[#allocation10 + $0x248] sm:$0xff]
    %v3096 = vld [vmem:[#allocation10 + $0x250] sm:$0xff]
    %v3097 = vld [vmem:[#allocation10 + $0x258] sm:$0xff]
    %v3098 = vld [vmem:[#allocation10 + $0x260] sm:$0xff]
    %v3099 = vld [vmem:[#allocation10 + $0x268] sm:$0xff]
    %v3100 = vld [vmem:[#allocation10 + $0x270] sm:$0xff]
    %v3101 = vld [vmem:[#allocation10 + $0x278] sm:$0xff]
    %v3102 = vld [vmem:[#allocation10 + $0x280] sm:$0xff]
    %v3103 = vld [vmem:[#allocation10 + $0x288] sm:$0xff]
    %v3104 = vld [vmem:[#allocation10 + $0x290] sm:$0xff]
    %v3105 = vld [vmem:[#allocation10 + $0x298] sm:$0xff]
    %v3106 = vld [vmem:[#allocation10 + $0x2a0] sm:$0xff]
    %v3107 = vld [vmem:[#allocation10 + $0x2a8] sm:$0xff]
    %v3108 = vld [vmem:[#allocation10 + $0x2b0] sm:$0xff]
    %v3109 = vld [vmem:[#allocation10 + $0x2b8] sm:$0xff]
    %v3110 = vld [vmem:[#allocation10 + $0x2c0] sm:$0xff]
    %v3111 = vld [vmem:[#allocation10 + $0x2c8] sm:$0xff]
    %v3112 = vld [vmem:[#allocation10 + $0x2d0] sm:$0xff]
    %v3113 = vld [vmem:[#allocation10 + $0x2d8] sm:$0xff]
    %v3114 = vld [vmem:[#allocation10 + $0x2e0] sm:$0xff]
    %v3115 = vld [vmem:[#allocation10 + $0x2e8] sm:$0xff]
    %v3116 = vld [vmem:[#allocation10 + $0x2f0] sm:$0xff]
    %v3117 = vld [vmem:[#allocation10 + $0x2f8] sm:$0xff]
    %v3214 = vunpack.c.l.b16 %v3022
    %v3215 = vunpack.c.h.b16 %v3022
    %v3216 = vunpack.c.l.b16 %v3023
    %v3217 = vunpack.c.h.b16 %v3023
    %v3218 = vunpack.c.l.b16 %v3024
    %v3219 = vunpack.c.h.b16 %v3024
    %v3220 = vunpack.c.l.b16 %v3025
    %v3221 = vunpack.c.h.b16 %v3025
    %v3222 = vunpack.c.l.b16 %v3026
    %v3223 = vunpack.c.h.b16 %v3026
    %v3224 = vunpack.c.l.b16 %v3027
    %v3225 = vunpack.c.h.b16 %v3027
    %v3226 = vunpack.c.l.b16 %v3028
    %v3227 = vunpack.c.h.b16 %v3028
    %v3228 = vunpack.c.l.b16 %v3029
    %v3229 = vunpack.c.h.b16 %v3029
    %v3230 = vunpack.c.l.b16 %v3030
    %v3231 = vunpack.c.h.b16 %v3030
    %v3232 = vunpack.c.l.b16 %v3031
    %v3233 = vunpack.c.h.b16 %v3031
    %v3234 = vunpack.c.l.b16 %v3032
    %v3235 = vunpack.c.h.b16 %v3032
    %v3236 = vunpack.c.l.b16 %v3033
    %v3237 = vunpack.c.h.b16 %v3033
    %v3238 = vunpack.c.l.b16 %v3034
    %v3239 = vunpack.c.h.b16 %v3034
    %v3240 = vunpack.c.l.b16 %v3035
    %v3241 = vunpack.c.h.b16 %v3035
    %v3242 = vunpack.c.l.b16 %v3036
    %v3243 = vunpack.c.h.b16 %v3036
    %v3244 = vunpack.c.l.b16 %v3037
    %v3245 = vunpack.c.h.b16 %v3037
    %v3246 = vunpack.c.l.b16 %v3038
    %v3247 = vunpack.c.h.b16 %v3038
    %v3248 = vunpack.c.l.b16 %v3039
    %v3249 = vunpack.c.h.b16 %v3039
    %v3250 = vunpack.c.l.b16 %v3040
    %v3251 = vunpack.c.h.b16 %v3040
    %v3252 = vunpack.c.l.b16 %v3041
    %v3253 = vunpack.c.h.b16 %v3041
    %v3254 = vunpack.c.l.b16 %v3042
    %v3255 = vunpack.c.h.b16 %v3042
    %v3256 = vunpack.c.l.b16 %v3043
    %v3257 = vunpack.c.h.b16 %v3043
    %v3258 = vunpack.c.l.b16 %v3044
    %v3259 = vunpack.c.h.b16 %v3044
    %v3260 = vunpack.c.l.b16 %v3045
    %v3261 = vunpack.c.h.b16 %v3045
    %v3262 = vunpack.c.l.b16 %v3046
    %v3263 = vunpack.c.h.b16 %v3046
    %v3264 = vunpack.c.l.b16 %v3047
    %v3265 = vunpack.c.h.b16 %v3047
    %v3266 = vunpack.c.l.b16 %v3048
    %v3267 = vunpack.c.h.b16 %v3048
    %v3268 = vunpack.c.l.b16 %v3049
    %v3269 = vunpack.c.h.b16 %v3049
    %v3270 = vunpack.c.l.b16 %v3050
    %v3271 = vunpack.c.h.b16 %v3050
    %v3272 = vunpack.c.l.b16 %v3051
    %v3273 = vunpack.c.h.b16 %v3051
    %v3274 = vunpack.c.l.b16 %v3052
    %v3275 = vunpack.c.h.b16 %v3052
    %v3276 = vunpack.c.l.b16 %v3053
    %v3277 = vunpack.c.h.b16 %v3053
    %v3278 = vunpack.c.l.b16 %v3054
    %v3279 = vunpack.c.h.b16 %v3054
    %v3280 = vunpack.c.l.b16 %v3055
    %v3281 = vunpack.c.h.b16 %v3055
    %v3282 = vunpack.c.l.b16 %v3056
    %v3283 = vunpack.c.h.b16 %v3056
    %v3284 = vunpack.c.l.b16 %v3057
    %v3285 = vunpack.c.h.b16 %v3057
    %v3286 = vunpack.c.l.b16 %v3058
    %v3287 = vunpack.c.h.b16 %v3058
    %v3288 = vunpack.c.l.b16 %v3059
    %v3289 = vunpack.c.h.b16 %v3059
    %v3290 = vunpack.c.l.b16 %v3060
    %v3291 = vunpack.c.h.b16 %v3060
    %v3292 = vunpack.c.l.b16 %v3061
    %v3293 = vunpack.c.h.b16 %v3061
    %v3294 = vunpack.c.l.b16 %v3062
    %v3295 = vunpack.c.h.b16 %v3062
    %v3296 = vunpack.c.l.b16 %v3063
    %v3297 = vunpack.c.h.b16 %v3063
    %v3298 = vunpack.c.l.b16 %v3064
    %v3299 = vunpack.c.h.b16 %v3064
    %v3300 = vunpack.c.l.b16 %v3065
    %v3301 = vunpack.c.h.b16 %v3065
    %v3302 = vunpack.c.l.b16 %v3066
    %v3303 = vunpack.c.h.b16 %v3066
    %v3304 = vunpack.c.l.b16 %v3067
    %v3305 = vunpack.c.h.b16 %v3067
    %v3306 = vunpack.c.l.b16 %v3068
    %v3307 = vunpack.c.h.b16 %v3068
    %v3308 = vunpack.c.l.b16 %v3069
    %v3309 = vunpack.c.h.b16 %v3069
    %v3310 = vunpack.c.l.b16 %v3070
    %v3311 = vunpack.c.h.b16 %v3070
    %v3312 = vunpack.c.l.b16 %v3071
    %v3313 = vunpack.c.h.b16 %v3071
    %v3314 = vunpack.c.l.b16 %v3072
    %v3315 = vunpack.c.h.b16 %v3072
    %v3316 = vunpack.c.l.b16 %v3073
    %v3317 = vunpack.c.h.b16 %v3073
    %v3318 = vunpack.c.l.b16 %v3074
    %v3319 = vunpack.c.h.b16 %v3074
    %v3320 = vunpack.c.l.b16 %v3075
    %v3321 = vunpack.c.h.b16 %v3075
    %v3322 = vunpack.c.l.b16 %v3076
    %v3323 = vunpack.c.h.b16 %v3076
    %v3324 = vunpack.c.l.b16 %v3077
    %v3325 = vunpack.c.h.b16 %v3077
    %v3326 = vunpack.c.l.b16 %v3078
    %v3327 = vunpack.c.h.b16 %v3078
    %v3328 = vunpack.c.l.b16 %v3079
    %v3329 = vunpack.c.h.b16 %v3079
    %v3330 = vunpack.c.l.b16 %v3080
    %v3331 = vunpack.c.h.b16 %v3080
    %v3332 = vunpack.c.l.b16 %v3081
    %v3333 = vunpack.c.h.b16 %v3081
    %v3334 = vunpack.c.l.b16 %v3082
    %v3335 = vunpack.c.h.b16 %v3082
    %v3336 = vunpack.c.l.b16 %v3083
    %v3337 = vunpack.c.h.b16 %v3083
    %v3338 = vunpack.c.l.b16 %v3084
    %v3339 = vunpack.c.h.b16 %v3084
    %v3340 = vunpack.c.l.b16 %v3085
    %v3341 = vunpack.c.h.b16 %v3085
    %v3342 = vunpack.c.l.b16 %v3086
    %v3343 = vunpack.c.h.b16 %v3086
    %v3344 = vunpack.c.l.b16 %v3087
    %v3345 = vunpack.c.h.b16 %v3087
    %v3346 = vunpack.c.l.b16 %v3088
    %v3347 = vunpack.c.h.b16 %v3088
    %v3348 = vunpack.c.l.b16 %v3089
    %v3349 = vunpack.c.h.b16 %v3089
    %v3350 = vunpack.c.l.b16 %v3090
    %v3351 = vunpack.c.h.b16 %v3090
    %v3352 = vunpack.c.l.b16 %v3091
    %v3353 = vunpack.c.h.b16 %v3091
    %v3354 = vunpack.c.l.b16 %v3092
    %v3355 = vunpack.c.h.b16 %v3092
    %v3356 = vunpack.c.l.b16 %v3093
    %v3357 = vunpack.c.h.b16 %v3093
    %v3358 = vunpack.c.l.b16 %v3094
    %v3359 = vunpack.c.h.b16 %v3094
    %v3360 = vunpack.c.l.b16 %v3095
    %v3361 = vunpack.c.h.b16 %v3095
    %v3362 = vunpack.c.l.b16 %v3096
    %v3363 = vunpack.c.h.b16 %v3096
    %v3364 = vunpack.c.l.b16 %v3097
    %v3365 = vunpack.c.h.b16 %v3097
    %v3366 = vunpack.c.l.b16 %v3098
    %v3367 = vunpack.c.h.b16 %v3098
    %v3368 = vunpack.c.l.b16 %v3099
    %v3369 = vunpack.c.h.b16 %v3099
    %v3370 = vunpack.c.l.b16 %v3100
    %v3371 = vunpack.c.h.b16 %v3100
    %v3372 = vunpack.c.l.b16 %v3101
    %v3373 = vunpack.c.h.b16 %v3101
    %v3374 = vunpack.c.l.b16 %v3102
    %v3375 = vunpack.c.h.b16 %v3102
    %v3376 = vunpack.c.l.b16 %v3103
    %v3377 = vunpack.c.h.b16 %v3103
    %v3378 = vunpack.c.l.b16 %v3104
    %v3379 = vunpack.c.h.b16 %v3104
    %v3380 = vunpack.c.l.b16 %v3105
    %v3381 = vunpack.c.h.b16 %v3105
    %v3382 = vunpack.c.l.b16 %v3106
    %v3383 = vunpack.c.h.b16 %v3106
    %v3384 = vunpack.c.l.b16 %v3107
    %v3385 = vunpack.c.h.b16 %v3107
    %v3386 = vunpack.c.l.b16 %v3108
    %v3387 = vunpack.c.h.b16 %v3108
    %v3388 = vunpack.c.l.b16 %v3109
    %v3389 = vunpack.c.h.b16 %v3109
    %v3390 = vunpack.c.l.b16 %v3110
    %v3391 = vunpack.c.h.b16 %v3110
    %v3392 = vunpack.c.l.b16 %v3111
    %v3393 = vunpack.c.h.b16 %v3111
    %v3394 = vunpack.c.l.b16 %v3112
    %v3395 = vunpack.c.h.b16 %v3112
    %v3396 = vunpack.c.l.b16 %v3113
    %v3397 = vunpack.c.h.b16 %v3113
    %v3398 = vunpack.c.l.b16 %v3114
    %v3399 = vunpack.c.h.b16 %v3114
    %v3400 = vunpack.c.l.b16 %v3115
    %v3401 = vunpack.c.h.b16 %v3115
    %v3402 = vunpack.c.l.b16 %v3116
    %v3403 = vunpack.c.h.b16 %v3116
    %v3404 = vunpack.c.l.b16 %v3117
    %v3405 = vunpack.c.h.b16 %v3117
    %v3406 = vpack.c.b16 %v3220, %v3214
    %v3407 = vpack.c.b16 %v3221, %v3215
    %v3408 = vpack.c.b16 %v3222, %v3216
    %v3409 = vpack.c.b16 %v3223, %v3217
    %v3410 = vpack.c.b16 %v3224, %v3218
    %v3411 = vpack.c.b16 %v3225, %v3219
    %v3412 = vpack.c.b16 %v3232, %v3226
    %v3413 = vpack.c.b16 %v3233, %v3227
    %v3414 = vpack.c.b16 %v3234, %v3228
    %v3415 = vpack.c.b16 %v3235, %v3229
    %v3416 = vpack.c.b16 %v3236, %v3230
    %v3417 = vpack.c.b16 %v3237, %v3231
    %v3418 = vpack.c.b16 %v3244, %v3238
    %v3419 = vpack.c.b16 %v3245, %v3239
    %v3420 = vpack.c.b16 %v3246, %v3240
    %v3421 = vpack.c.b16 %v3247, %v3241
    %v3422 = vpack.c.b16 %v3248, %v3242
    %v3423 = vpack.c.b16 %v3249, %v3243
    %v3424 = vpack.c.b16 %v3256, %v3250
    %v3425 = vpack.c.b16 %v3257, %v3251
    %v3426 = vpack.c.b16 %v3258, %v3252
    %v3427 = vpack.c.b16 %v3259, %v3253
    %v3428 = vpack.c.b16 %v3260, %v3254
    %v3429 = vpack.c.b16 %v3261, %v3255
    %v3430 = vpack.c.b16 %v3268, %v3262
    %v3431 = vpack.c.b16 %v3269, %v3263
    %v3432 = vpack.c.b16 %v3270, %v3264
    %v3433 = vpack.c.b16 %v3271, %v3265
    %v3434 = vpack.c.b16 %v3272, %v3266
    %v3435 = vpack.c.b16 %v3273, %v3267
    %v3436 = vpack.c.b16 %v3280, %v3274
    %v3437 = vpack.c.b16 %v3281, %v3275
    %v3438 = vpack.c.b16 %v3282, %v3276
    %v3439 = vpack.c.b16 %v3283, %v3277
    %v3440 = vpack.c.b16 %v3284, %v3278
    %v3441 = vpack.c.b16 %v3285, %v3279
    %v3442 = vpack.c.b16 %v3292, %v3286
    %v3443 = vpack.c.b16 %v3293, %v3287
    %v3444 = vpack.c.b16 %v3294, %v3288
    %v3445 = vpack.c.b16 %v3295, %v3289
    %v3446 = vpack.c.b16 %v3296, %v3290
    %v3447 = vpack.c.b16 %v3297, %v3291
    %v3448 = vpack.c.b16 %v3304, %v3298
    %v3449 = vpack.c.b16 %v3305, %v3299
    %v3450 = vpack.c.b16 %v3306, %v3300
    %v3451 = vpack.c.b16 %v3307, %v3301
    %v3452 = vpack.c.b16 %v3308, %v3302
    %v3453 = vpack.c.b16 %v3309, %v3303
    %v3454 = vpack.c.b16 %v3316, %v3310
    %v3455 = vpack.c.b16 %v3317, %v3311
    %v3456 = vpack.c.b16 %v3318, %v3312
    %v3457 = vpack.c.b16 %v3319, %v3313
    %v3458 = vpack.c.b16 %v3320, %v3314
    %v3459 = vpack.c.b16 %v3321, %v3315
    %v3460 = vpack.c.b16 %v3328, %v3322
    %v3461 = vpack.c.b16 %v3329, %v3323
    %v3462 = vpack.c.b16 %v3330, %v3324
    %v3463 = vpack.c.b16 %v3331, %v3325
    %v3464 = vpack.c.b16 %v3332, %v3326
    %v3465 = vpack.c.b16 %v3333, %v3327
    %v3466 = vpack.c.b16 %v3340, %v3334
    %v3467 = vpack.c.b16 %v3341, %v3335
    %v3468 = vpack.c.b16 %v3342, %v3336
    %v3469 = vpack.c.b16 %v3343, %v3337
    %v3470 = vpack.c.b16 %v3344, %v3338
    %v3471 = vpack.c.b16 %v3345, %v3339
    %v3472 = vpack.c.b16 %v3352, %v3346
    %v3473 = vpack.c.b16 %v3353, %v3347
    %v3474 = vpack.c.b16 %v3354, %v3348
    %v3475 = vpack.c.b16 %v3355, %v3349
    %v3476 = vpack.c.b16 %v3356, %v3350
    %v3477 = vpack.c.b16 %v3357, %v3351
    %v3478 = vpack.c.b16 %v3364, %v3358
    %v3479 = vpack.c.b16 %v3365, %v3359
    %v3480 = vpack.c.b16 %v3366, %v3360
    %v3481 = vpack.c.b16 %v3367, %v3361
    %v3482 = vpack.c.b16 %v3368, %v3362
    %v3483 = vpack.c.b16 %v3369, %v3363
    %v3484 = vpack.c.b16 %v3376, %v3370
    %v3485 = vpack.c.b16 %v3377, %v3371
    %v3486 = vpack.c.b16 %v3378, %v3372
    %v3487 = vpack.c.b16 %v3379, %v3373
    %v3488 = vpack.c.b16 %v3380, %v3374
    %v3489 = vpack.c.b16 %v3381, %v3375
    %v3490 = vpack.c.b16 %v3388, %v3382
    %v3491 = vpack.c.b16 %v3389, %v3383
    %v3492 = vpack.c.b16 %v3390, %v3384
    %v3493 = vpack.c.b16 %v3391, %v3385
    %v3494 = vpack.c.b16 %v3392, %v3386
    %v3495 = vpack.c.b16 %v3393, %v3387
    %v3496 = vpack.c.b16 %v3400, %v3394
    %v3497 = vpack.c.b16 %v3401, %v3395
    %v3498 = vpack.c.b16 %v3402, %v3396
    %v3499 = vpack.c.b16 %v3403, %v3397
    %v3500 = vpack.c.b16 %v3404, %v3398
    %v3501 = vpack.c.b16 %v3405, %v3399
    %3598 = vmatprep.subr.bf16.mxu0 %v3407
    %3599 = vmatpush1.bf16.msra.mxu0 %v3406
    %3600 = vmatprep.subr.bf16.mxu0 %v3413
    %3601 = vmatpush1.bf16.msra.mxu0 %v3412
    %3602 = vmatprep.subr.bf16.mxu0 %v3419
    %3603 = vmatpush1.bf16.msra.mxu0 %v3418
    %3604 = vmatprep.subr.bf16.mxu0 %v3425
    %3605 = vmatpush1.bf16.msra.mxu0 %v3424
    %3606 = vmatprep.subr.bf16.mxu0 %v3431
    %3607 = vmatpush1.bf16.msra.mxu0 %v3430
    %3608 = vmatprep.subr.bf16.mxu0 %v3437
    %3609 = vmatpush1.bf16.msra.mxu0 %v3436
    %3610 = vmatprep.subr.bf16.mxu0 %v3443
    %3611 = vmatpush1.bf16.msra.mxu0 %v3442
    %3612 = vmatprep.subr.bf16.mxu0 %v3449
    %3613 = vmatpush1.bf16.msra.mxu0 %v3448
    %3614 = vmatprep.subr.bf16.mxu0 %v3455
    %3615 = vmatpush1.bf16.msra.mxu0 %v3454
    %3616 = vmatprep.subr.bf16.mxu0 %v3461
    %3617 = vmatpush1.bf16.msra.mxu0 %v3460
    %3618 = vmatprep.subr.bf16.mxu0 %v3467
    %3619 = vmatpush1.bf16.msra.mxu0 %v3466
    %3620 = vmatprep.subr.bf16.mxu0 %v3473
    %3621 = vmatpush1.bf16.msra.mxu0 %v3472
    %3622 = vmatprep.subr.bf16.mxu0 %v3479
    %3623 = vmatpush1.bf16.msra.mxu0 %v3478
    %3624 = vmatprep.subr.bf16.mxu0 %v3485
    %3625 = vmatpush1.bf16.msra.mxu0 %v3484
    %3626 = vmatprep.subr.bf16.mxu0 %v3491
    %3627 = vmatpush1.bf16.msra.mxu0 %v3490
    %3628 = vmatprep.subr.bf16.mxu0 %v3497
    %3629 = vmatpush1.bf16.msra.mxu0 %v3496
    %3630 = vmatprep.mubr.bf16.mxu0 %v3021
    %3631 = vmatmul.mubr.bf16.gmra.mrb[0].mxu0 %v3020
    %v3632 = vpop.f32.mrb[0].mxu0
    %v3633 = vadd.f32 0.0, %v3632
    %v3634 = vpop.f32.mrb[0].mxu0
    %v3635 = vadd.f32 0.0, %v3634
    %v3636 = vpop.f32.mrb[0].mxu0
    %v3637 = vpop.f32.mrb[0].mxu0
    %3638 = vdwg.mxu0
    %3639 = vmatprep.subr.bf16.mxu0 %v3409
    %3640 = vmatpush1.bf16.msra.mxu0 %v3408
    %3641 = vmatprep.subr.bf16.mxu0 %v3415
    %3642 = vmatpush1.bf16.msra.mxu0 %v3414
    %3643 = vmatprep.subr.bf16.mxu0 %v3421
    %3644 = vmatpush1.bf16.msra.mxu0 %v3420
    %3645 = vmatprep.subr.bf16.mxu0 %v3427
    %3646 = vmatpush1.bf16.msra.mxu0 %v3426
    %3647 = vmatprep.subr.bf16.mxu0 %v3433
    %3648 = vmatpush1.bf16.msra.mxu0 %v3432
    %3649 = vmatprep.subr.bf16.mxu0 %v3439
    %3650 = vmatpush1.bf16.msra.mxu0 %v3438
    %3651 = vmatprep.subr.bf16.mxu0 %v3445
    %3652 = vmatpush1.bf16.msra.mxu0 %v3444
    %3653 = vmatprep.subr.bf16.mxu0 %v3451
    %3654 = vmatpush1.bf16.msra.mxu0 %v3450
    %3655 = vmatprep.subr.bf16.mxu0 %v3457
    %3656 = vmatpush1.bf16.msra.mxu0 %v3456
    %3657 = vmatprep.subr.bf16.mxu0 %v3463
    %3658 = vmatpush1.bf16.msra.mxu0 %v3462
    %3659 = vmatprep.subr.bf16.mxu0 %v3469
    %3660 = vmatpush1.bf16.msra.mxu0 %v3468
    %3661 = vmatprep.subr.bf16.mxu0 %v3475
    %3662 = vmatpush1.bf16.msra.mxu0 %v3474
    %3663 = vmatprep.subr.bf16.mxu0 %v3481
    %3664 = vmatpush1.bf16.msra.mxu0 %v3480
    %3665 = vmatprep.subr.bf16.mxu0 %v3487
    %3666 = vmatpush1.bf16.msra.mxu0 %v3486
    %3667 = vmatprep.subr.bf16.mxu0 %v3493
    %3668 = vmatpush1.bf16.msra.mxu0 %v3492
    %3669 = vmatprep.subr.bf16.mxu0 %v3499
    %3670 = vmatpush1.bf16.msra.mxu0 %v3498
    %3671 = vmatprep.mubr.bf16.mxu0 %v3021
    %3672 = vmatmul.mubr.bf16.gmra.mrb[0].mxu0 %v3020
    %v3673 = vpop.f32.mrb[0].mxu0
    %v3674 = vadd.f32 0.0, %v3673
    %v3675 = vpop.f32.mrb[0].mxu0
    %v3676 = vadd.f32 0.0, %v3675
    %v3677 = vpop.f32.mrb[0].mxu0
    %v3678 = vpop.f32.mrb[0].mxu0
    %3679 = vdwg.mxu0
    %3680 = vmatprep.subr.bf16.mxu0 %v3411
    %3681 = vmatpush1.bf16.msra.mxu0 %v3410
    %3682 = vmatprep.subr.bf16.mxu0 %v3417
    %3683 = vmatpush1.bf16.msra.mxu0 %v3416
    %3684 = vmatprep.subr.bf16.mxu0 %v3423
    %3685 = vmatpush1.bf16.msra.mxu0 %v3422
    %3686 = vmatprep.subr.bf16.mxu0 %v3429
    %3687 = vmatpush1.bf16.msra.mxu0 %v3428
    %3688 = vmatprep.subr.bf16.mxu0 %v3435
    %3689 = vmatpush1.bf16.msra.mxu0 %v3434
    %3690 = vmatprep.subr.bf16.mxu0 %v3441
    %3691 = vmatpush1.bf16.msra.mxu0 %v3440
    %3692 = vmatprep.subr.bf16.mxu0 %v3447
    %3693 = vmatpush1.bf16.msra.mxu0 %v3446
    %3694 = vmatprep.subr.bf16.mxu0 %v3453
    %3695 = vmatpush1.bf16.msra.mxu0 %v3452
    %3696 = vmatprep.subr.bf16.mxu0 %v3459
    %3697 = vmatpush1.bf16.msra.mxu0 %v3458
    %3698 = vmatprep.subr.bf16.mxu0 %v3465
    %3699 = vmatpush1.bf16.msra.mxu0 %v3464
    %3700 = vmatprep.subr.bf16.mxu0 %v3471
    %3701 = vmatpush1.bf16.msra.mxu0 %v3470
    %3702 = vmatprep.subr.bf16.mxu0 %v3477
    %3703 = vmatpush1.bf16.msra.mxu0 %v3476
    %3704 = vmatprep.subr.bf16.mxu0 %v3483
    %3705 = vmatpush1.bf16.msra.mxu0 %v3482
    %3706 = vmatprep.subr.bf16.mxu0 %v3489
    %3707 = vmatpush1.bf16.msra.mxu0 %v3488
    %3708 = vmatprep.subr.bf16.mxu0 %v3495
    %3709 = vmatpush1.bf16.msra.mxu0 %v3494
    %3710 = vmatprep.subr.bf16.mxu0 %v3501
    %3711 = vmatpush1.bf16.msra.mxu0 %v3500
    %3712 = vmatprep.mubr.bf16.mxu0 %v3021
    %3713 = vmatmul.mubr.bf16.gmra.mrb[0].mxu0 %v3020
    %v3714 = vpop.f32.mrb[0].mxu0
    %v3715 = vadd.f32 0.0, %v3714
    %v3716 = vpop.f32.mrb[0].mxu0
    %v3717 = vadd.f32 0.0, %v3716
    %v3718 = vpop.f32.mrb[0].mxu0
    %v3719 = vpop.f32.mrb[0].mxu0
    %3720 = vdwg.mxu0
    %s3721 = scalar_lea.vmem [#allocation2], 72
    %v3722 = vld [vmem:[%s3721] sm:$0xff]
    %v3723 = vld [vmem:[%s3721 + $0x8] sm:$0xff]
    %v3724 = vld [vmem:[%s3721 + $0x10] sm:$0xff]
    %s3725 = scalar_lea.vmem [#allocation3], 96
    %v3726 = vld [vmem:[%s3725] sm:$0xff]
    %v3727 = vld [vmem:[%s3725 + $0x8] sm:$0xff]
    %v3728 = vld [vmem:[%s3725 + $0x10] sm:$0xff]
    %v3729 = vadd.f32 %v3722, %v3633
    %v3730 = vadd.f32 %v3723, %v3635
    %v3731 = vxor.u32 %v3729, 2147483648
    %v3732 = vxor.u32 %v3730, 2147483648
    %v3733 = vmul.f32 %v3731, 1.442695
    %v3734 = vpow.pop %v3733
    %v3735 = vmul.f32 %v3732, 1.442695
    %v3736 = vpow.pop %v3735
    %v3737 = vadd.f32 %v3734, 1.0
    %v3738 = vadd.f32 %v3736, 1.0
    %v3739 = vrcp.pop %v3737
    %v3740 = vmul.f32 1.0, %v3739
    %v3741 = vrcp.pop %v3738
    %v3742 = vmul.f32 1.0, %v3741
    %v3743 = vadd.f32 %v3674, %v697
    %v3744 = vmul.f32 %v3740, %v3743
    %v3745 = vadd.f32 %v3724, %v3744
    %v3746 = vtanh.pop %v3745
    %v3747 = vsub.f32 1.0, %v3742
    %v3748 = vmul.f32 %v3747, %v3746
    %v3749 = vmul.f32 %v3742, %v3018
    %v3750 = vadd.f32 %v3748, %v3749
    %v3751 = vadd.f32 %v3726, %v3676
    %v3752 = vadd.f32 %v3727, %v3715
    %v3753 = vxor.u32 %v3751, 2147483648
    %v3754 = vxor.u32 %v3752, 2147483648
    %v3755 = vmul.f32 %v3753, 1.442695
    %v3756 = vpow.pop %v3755
    %v3757 = vmul.f32 %v3754, 1.442695
    %v3758 = vpow.pop %v3757
    %v3759 = vadd.f32 %v3756, 1.0
    %v3760 = vadd.f32 %v3758, 1.0
    %v3761 = vrcp.pop %v3759
    %v3762 = vmul.f32 1.0, %v3761
    %v3763 = vrcp.pop %v3760
    %v3764 = vmul.f32 1.0, %v3763
    %v3765 = vadd.f32 %v3717, %v704
    %v3766 = vmul.f32 %v3762, %v3765
    %v3767 = vadd.f32 %v3728, %v3766
    %v3768 = vtanh.pop %v3767
    %v3769 = vsub.f32 1.0, %v3764
    %v3770 = vmul.f32 %v3769, %v3768
    %v3771 = vmul.f32 %v3764, %v3019
    %v3772 = vadd.f32 %v3770, %v3771
    %vm3773 = vcmp.gt.s32.totalorder %v691, 3
    %vm3774 = vcmp.gt.s32.totalorder %v691, 4
    %v3775 = vsel %vm3773, 1, 0
    %3776 = vset.pattern.permute.xlu0 0
    %3777 = vperm.xlu0 %3776, %v3775
    %v3778 = vpop.permute.xlu0 %3777
    %vm3779 = vcmp.eq.s32.totalorder %v3778, 1
    %v3780 = vsel %vm3779, %v3750, 0.0
    %s3781 = scalar_lea.vmem [#allocation11], 24
    %3782 = vst [vmem:[%s3781] sm:$0xff] %v3780
    %v3783 = vsel %vm3774, 1, 0
    %3784 = vset.pattern.permute.xlu0 0
    %3785 = vperm.xlu0 %3784, %v3783
    %v3786 = vpop.permute.xlu0 %3785
    %vm3787 = vcmp.eq.s32.totalorder %v3786, 1
    %v3788 = vsel %vm3787, %v3772, 0.0
    %s3789 = scalar_lea.vmem [#allocation4], 32
    %3790 = vst [vmem:[%s3789] sm:$0xff] %v3788
    %v3791 = vsel %vm3779, %v3750, %v3018
    %v3792 = vsel %vm3787, %v3772, %v3019
    %v3793 = vpack.c.bf16 %v3791, %v3791
    %v3794 = vpack.c.bf16 %v3792, %v3792
    %v3795 = vld [vmem:[#allocation10] sm:$0xff]
    %v3796 = vld [vmem:[#allocation10 + $0x8] sm:$0xff]
    %v3797 = vld [vmem:[#allocation10 + $0x10] sm:$0xff]
    %v3798 = vld [vmem:[#allocation10 + $0x18] sm:$0xff]
    %v3799 = vld [vmem:[#allocation10 + $0x20] sm:$0xff]
    %v3800 = vld [vmem:[#allocation10 + $0x28] sm:$0xff]
    %v3801 = vld [vmem:[#allocation10 + $0x30] sm:$0xff]
    %v3802 = vld [vmem:[#allocation10 + $0x38] sm:$0xff]
    %v3803 = vld [vmem:[#allocation10 + $0x40] sm:$0xff]
    %v3804 = vld [vmem:[#allocation10 + $0x48] sm:$0xff]
    %v3805 = vld [vmem:[#allocation10 + $0x50] sm:$0xff]
    %v3806 = vld [vmem:[#allocation10 + $0x58] sm:$0xff]
    %v3807 = vld [vmem:[#allocation10 + $0x60] sm:$0xff]
    %v3808 = vld [vmem:[#allocation10 + $0x68] sm:$0xff]
    %v3809 = vld [vmem:[#allocation10 + $0x70] sm:$0xff]
    %v3810 = vld [vmem:[#allocation10 + $0x78] sm:$0xff]
    %v3811 = vld [vmem:[#allocation10 + $0x80] sm:$0xff]
    %v3812 = vld [vmem:[#allocation10 + $0x88] sm:$0xff]
    %v3813 = vld [vmem:[#allocation10 + $0x90] sm:$0xff]
    %v3814 = vld [vmem:[#allocation10 + $0x98] sm:$0xff]
    %v3815 = vld [vmem:[#allocation10 + $0xa0] sm:$0xff]
    %v3816 = vld [vmem:[#allocation10 + $0xa8] sm:$0xff]
    %v3817 = vld [vmem:[#allocation10 + $0xb0] sm:$0xff]
    %v3818 = vld [vmem:[#allocation10 + $0xb8] sm:$0xff]
    %v3819 = vld [vmem:[#allocation10 + $0xc0] sm:$0xff]
    %v3820 = vld [vmem:[#allocation10 + $0xc8] sm:$0xff]
    %v3821 = vld [vmem:[#allocation10 + $0xd0] sm:$0xff]
    %v3822 = vld [vmem:[#allocation10 + $0xd8] sm:$0xff]
    %v3823 = vld [vmem:[#allocation10 + $0xe0] sm:$0xff]
    %v3824 = vld [vmem:[#allocation10 + $0xe8] sm:$0xff]
    %v3825 = vld [vmem:[#allocation10 + $0xf0] sm:$0xff]
    %v3826 = vld [vmem:[#allocation10 + $0xf8] sm:$0xff]
    %v3827 = vld [vmem:[#allocation10 + $0x100] sm:$0xff]
    %v3828 = vld [vmem:[#allocation10 + $0x108] sm:$0xff]
    %v3829 = vld [vmem:[#allocation10 + $0x110] sm:$0xff]
    %v3830 = vld [vmem:[#allocation10 + $0x118] sm:$0xff]
    %v3831 = vld [vmem:[#allocation10 + $0x120] sm:$0xff]
    %v3832 = vld [vmem:[#allocation10 + $0x128] sm:$0xff]
    %v3833 = vld [vmem:[#allocation10 + $0x130] sm:$0xff]
    %v3834 = vld [vmem:[#allocation10 + $0x138] sm:$0xff]
    %v3835 = vld [vmem:[#allocation10 + $0x140] sm:$0xff]
    %v3836 = vld [vmem:[#allocation10 + $0x148] sm:$0xff]
    %v3837 = vld [vmem:[#allocation10 + $0x150] sm:$0xff]
    %v3838 = vld [vmem:[#allocation10 + $0x158] sm:$0xff]
    %v3839 = vld [vmem:[#allocation10 + $0x160] sm:$0xff]
    %v3840 = vld [vmem:[#allocation10 + $0x168] sm:$0xff]
    %v3841 = vld [vmem:[#allocation10 + $0x170] sm:$0xff]
    %v3842 = vld [vmem:[#allocation10 + $0x178] sm:$0xff]
    %v3843 = vld [vmem:[#allocation10 + $0x180] sm:$0xff]
    %v3844 = vld [vmem:[#allocation10 + $0x188] sm:$0xff]
    %v3845 = vld [vmem:[#allocation10 + $0x190] sm:$0xff]
    %v3846 = vld [vmem:[#allocation10 + $0x198] sm:$0xff]
    %v3847 = vld [vmem:[#allocation10 + $0x1a0] sm:$0xff]
    %v3848 = vld [vmem:[#allocation10 + $0x1a8] sm:$0xff]
    %v3849 = vld [vmem:[#allocation10 + $0x1b0] sm:$0xff]
    %v3850 = vld [vmem:[#allocation10 + $0x1b8] sm:$0xff]
    %v3851 = vld [vmem:[#allocation10 + $0x1c0] sm:$0xff]
    %v3852 = vld [vmem:[#allocation10 + $0x1c8] sm:$0xff]
    %v3853 = vld [vmem:[#allocation10 + $0x1d0] sm:$0xff]
    %v3854 = vld [vmem:[#allocation10 + $0x1d8] sm:$0xff]
    %v3855 = vld [vmem:[#allocation10 + $0x1e0] sm:$0xff]
    %v3856 = vld [vmem:[#allocation10 + $0x1e8] sm:$0xff]
    %v3857 = vld [vmem:[#allocation10 + $0x1f0] sm:$0xff]
    %v3858 = vld [vmem:[#allocation10 + $0x1f8] sm:$0xff]
    %v3859 = vld [vmem:[#allocation10 + $0x200] sm:$0xff]
    %v3860 = vld [vmem:[#allocation10 + $0x208] sm:$0xff]
    %v3861 = vld [vmem:[#allocation10 + $0x210] sm:$0xff]
    %v3862 = vld [vmem:[#allocation10 + $0x218] sm:$0xff]
    %v3863 = vld [vmem:[#allocation10 + $0x220] sm:$0xff]
    %v3864 = vld [vmem:[#allocation10 + $0x228] sm:$0xff]
    %v3865 = vld [vmem:[#allocation10 + $0x230] sm:$0xff]
    %v3866 = vld [vmem:[#allocation10 + $0x238] sm:$0xff]
    %v3867 = vld [vmem:[#allocation10 + $0x240] sm:$0xff]
    %v3868 = vld [vmem:[#allocation10 + $0x248] sm:$0xff]
    %v3869 = vld [vmem:[#allocation10 + $0x250] sm:$0xff]
    %v3870 = vld [vmem:[#allocation10 + $0x258] sm:$0xff]
    %v3871 = vld [vmem:[#allocation10 + $0x260] sm:$0xff]
    %v3872 = vld [vmem:[#allocation10 + $0x268] sm:$0xff]
    %v3873 = vld [vmem:[#allocation10 + $0x270] sm:$0xff]
    %v3874 = vld [vmem:[#allocation10 + $0x278] sm:$0xff]
    %v3875 = vld [vmem:[#allocation10 + $0x280] sm:$0xff]
    %v3876 = vld [vmem:[#allocation10 + $0x288] sm:$0xff]
    %v3877 = vld [vmem:[#allocation10 + $0x290] sm:$0xff]
    %v3878 = vld [vmem:[#allocation10 + $0x298] sm:$0xff]
    %v3879 = vld [vmem:[#allocation10 + $0x2a0] sm:$0xff]
    %v3880 = vld [vmem:[#allocation10 + $0x2a8] sm:$0xff]
    %v3881 = vld [vmem:[#allocation10 + $0x2b0] sm:$0xff]
    %v3882 = vld [vmem:[#allocation10 + $0x2b8] sm:$0xff]
    %v3883 = vld [vmem:[#allocation10 + $0x2c0] sm:$0xff]
    %v3884 = vld [vmem:[#allocation10 + $0x2c8] sm:$0xff]
    %v3885 = vld [vmem:[#allocation10 + $0x2d0] sm:$0xff]
    %v3886 = vld [vmem:[#allocation10 + $0x2d8] sm:$0xff]
    %v3887 = vld [vmem:[#allocation10 + $0x2e0] sm:$0xff]
    %v3888 = vld [vmem:[#allocation10 + $0x2e8] sm:$0xff]
    %v3889 = vld [vmem:[#allocation10 + $0x2f0] sm:$0xff]
    %v3890 = vld [vmem:[#allocation10 + $0x2f8] sm:$0xff]
    %v3987 = vunpack.c.l.b16 %v3795
    %v3988 = vunpack.c.h.b16 %v3795
    %v3989 = vunpack.c.l.b16 %v3796
    %v3990 = vunpack.c.h.b16 %v3796
    %v3991 = vunpack.c.l.b16 %v3797
    %v3992 = vunpack.c.h.b16 %v3797
    %v3993 = vunpack.c.l.b16 %v3798
    %v3994 = vunpack.c.h.b16 %v3798
    %v3995 = vunpack.c.l.b16 %v3799
    %v3996 = vunpack.c.h.b16 %v3799
    %v3997 = vunpack.c.l.b16 %v3800
    %v3998 = vunpack.c.h.b16 %v3800
    %v3999 = vunpack.c.l.b16 %v3801
    %v4000 = vunpack.c.h.b16 %v3801
    %v4001 = vunpack.c.l.b16 %v3802
    %v4002 = vunpack.c.h.b16 %v3802
    %v4003 = vunpack.c.l.b16 %v3803
    %v4004 = vunpack.c.h.b16 %v3803
    %v4005 = vunpack.c.l.b16 %v3804
    %v4006 = vunpack.c.h.b16 %v3804
    %v4007 = vunpack.c.l.b16 %v3805
    %v4008 = vunpack.c.h.b16 %v3805
    %v4009 = vunpack.c.l.b16 %v3806
    %v4010 = vunpack.c.h.b16 %v3806
    %v4011 = vunpack.c.l.b16 %v3807
    %v4012 = vunpack.c.h.b16 %v3807
    %v4013 = vunpack.c.l.b16 %v3808
    %v4014 = vunpack.c.h.b16 %v3808
    %v4015 = vunpack.c.l.b16 %v3809
    %v4016 = vunpack.c.h.b16 %v3809
    %v4017 = vunpack.c.l.b16 %v3810
    %v4018 = vunpack.c.h.b16 %v3810
    %v4019 = vunpack.c.l.b16 %v3811
    %v4020 = vunpack.c.h.b16 %v3811
    %v4021 = vunpack.c.l.b16 %v3812
    %v4022 = vunpack.c.h.b16 %v3812
    %v4023 = vunpack.c.l.b16 %v3813
    %v4024 = vunpack.c.h.b16 %v3813
    %v4025 = vunpack.c.l.b16 %v3814
    %v4026 = vunpack.c.h.b16 %v3814
    %v4027 = vunpack.c.l.b16 %v3815
    %v4028 = vunpack.c.h.b16 %v3815
    %v4029 = vunpack.c.l.b16 %v3816
    %v4030 = vunpack.c.h.b16 %v3816
    %v4031 = vunpack.c.l.b16 %v3817
    %v4032 = vunpack.c.h.b16 %v3817
    %v4033 = vunpack.c.l.b16 %v3818
    %v4034 = vunpack.c.h.b16 %v3818
    %v4035 = vunpack.c.l.b16 %v3819
    %v4036 = vunpack.c.h.b16 %v3819
    %v4037 = vunpack.c.l.b16 %v3820
    %v4038 = vunpack.c.h.b16 %v3820
    %v4039 = vunpack.c.l.b16 %v3821
    %v4040 = vunpack.c.h.b16 %v3821
    %v4041 = vunpack.c.l.b16 %v3822
    %v4042 = vunpack.c.h.b16 %v3822
    %v4043 = vunpack.c.l.b16 %v3823
    %v4044 = vunpack.c.h.b16 %v3823
    %v4045 = vunpack.c.l.b16 %v3824
    %v4046 = vunpack.c.h.b16 %v3824
    %v4047 = vunpack.c.l.b16 %v3825
    %v4048 = vunpack.c.h.b16 %v3825
    %v4049 = vunpack.c.l.b16 %v3826
    %v4050 = vunpack.c.h.b16 %v3826
    %v4051 = vunpack.c.l.b16 %v3827
    %v4052 = vunpack.c.h.b16 %v3827
    %v4053 = vunpack.c.l.b16 %v3828
    %v4054 = vunpack.c.h.b16 %v3828
    %v4055 = vunpack.c.l.b16 %v3829
    %v4056 = vunpack.c.h.b16 %v3829
    %v4057 = vunpack.c.l.b16 %v3830
    %v4058 = vunpack.c.h.b16 %v3830
    %v4059 = vunpack.c.l.b16 %v3831
    %v4060 = vunpack.c.h.b16 %v3831
    %v4061 = vunpack.c.l.b16 %v3832
    %v4062 = vunpack.c.h.b16 %v3832
    %v4063 = vunpack.c.l.b16 %v3833
    %v4064 = vunpack.c.h.b16 %v3833
    %v4065 = vunpack.c.l.b16 %v3834
    %v4066 = vunpack.c.h.b16 %v3834
    %v4067 = vunpack.c.l.b16 %v3835
    %v4068 = vunpack.c.h.b16 %v3835
    %v4069 = vunpack.c.l.b16 %v3836
    %v4070 = vunpack.c.h.b16 %v3836
    %v4071 = vunpack.c.l.b16 %v3837
    %v4072 = vunpack.c.h.b16 %v3837
    %v4073 = vunpack.c.l.b16 %v3838
    %v4074 = vunpack.c.h.b16 %v3838
    %v4075 = vunpack.c.l.b16 %v3839
    %v4076 = vunpack.c.h.b16 %v3839
    %v4077 = vunpack.c.l.b16 %v3840
    %v4078 = vunpack.c.h.b16 %v3840
    %v4079 = vunpack.c.l.b16 %v3841
    %v4080 = vunpack.c.h.b16 %v3841
    %v4081 = vunpack.c.l.b16 %v3842
    %v4082 = vunpack.c.h.b16 %v3842
    %v4083 = vunpack.c.l.b16 %v3843
    %v4084 = vunpack.c.h.b16 %v3843
    %v4085 = vunpack.c.l.b16 %v3844
    %v4086 = vunpack.c.h.b16 %v3844
    %v4087 = vunpack.c.l.b16 %v3845
    %v4088 = vunpack.c.h.b16 %v3845
    %v4089 = vunpack.c.l.b16 %v3846
    %v4090 = vunpack.c.h.b16 %v3846
    %v4091 = vunpack.c.l.b16 %v3847
    %v4092 = vunpack.c.h.b16 %v3847
    %v4093 = vunpack.c.l.b16 %v3848
    %v4094 = vunpack.c.h.b16 %v3848
    %v4095 = vunpack.c.l.b16 %v3849
    %v4096 = vunpack.c.h.b16 %v3849
    %v4097 = vunpack.c.l.b16 %v3850
    %v4098 = vunpack.c.h.b16 %v3850
    %v4099 = vunpack.c.l.b16 %v3851
    %v4100 = vunpack.c.h.b16 %v3851
    %v4101 = vunpack.c.l.b16 %v3852
    %v4102 = vunpack.c.h.b16 %v3852
    %v4103 = vunpack.c.l.b16 %v3853
    %v4104 = vunpack.c.h.b16 %v3853
    %v4105 = vunpack.c.l.b16 %v3854
    %v4106 = vunpack.c.h.b16 %v3854
    %v4107 = vunpack.c.l.b16 %v3855
    %v4108 = vunpack.c.h.b16 %v3855
    %v4109 = vunpack.c.l.b16 %v3856
    %v4110 = vunpack.c.h.b16 %v3856
    %v4111 = vunpack.c.l.b16 %v3857
    %v4112 = vunpack.c.h.b16 %v3857
    %v4113 = vunpack.c.l.b16 %v3858
    %v4114 = vunpack.c.h.b16 %v3858
    %v4115 = vunpack.c.l.b16 %v3859
    %v4116 = vunpack.c.h.b16 %v3859
    %v4117 = vunpack.c.l.b16 %v3860
    %v4118 = vunpack.c.h.b16 %v3860
    %v4119 = vunpack.c.l.b16 %v3861
    %v4120 = vunpack.c.h.b16 %v3861
    %v4121 = vunpack.c.l.b16 %v3862
    %v4122 = vunpack.c.h.b16 %v3862
    %v4123 = vunpack.c.l.b16 %v3863
    %v4124 = vunpack.c.h.b16 %v3863
    %v4125 = vunpack.c.l.b16 %v3864
    %v4126 = vunpack.c.h.b16 %v3864
    %v4127 = vunpack.c.l.b16 %v3865
    %v4128 = vunpack.c.h.b16 %v3865
    %v4129 = vunpack.c.l.b16 %v3866
    %v4130 = vunpack.c.h.b16 %v3866
    %v4131 = vunpack.c.l.b16 %v3867
    %v4132 = vunpack.c.h.b16 %v3867
    %v4133 = vunpack.c.l.b16 %v3868
    %v4134 = vunpack.c.h.b16 %v3868
    %v4135 = vunpack.c.l.b16 %v3869
    %v4136 = vunpack.c.h.b16 %v3869
    %v4137 = vunpack.c.l.b16 %v3870
    %v4138 = vunpack.c.h.b16 %v3870
    %v4139 = vunpack.c.l.b16 %v3871
    %v4140 = vunpack.c.h.b16 %v3871
    %v4141 = vunpack.c.l.b16 %v3872
    %v4142 = vunpack.c.h.b16 %v3872
    %v4143 = vunpack.c.l.b16 %v3873
    %v4144 = vunpack.c.h.b16 %v3873
    %v4145 = vunpack.c.l.b16 %v3874
    %v4146 = vunpack.c.h.b16 %v3874
    %v4147 = vunpack.c.l.b16 %v3875
    %v4148 = vunpack.c.h.b16 %v3875
    %v4149 = vunpack.c.l.b16 %v3876
    %v4150 = vunpack.c.h.b16 %v3876
    %v4151 = vunpack.c.l.b16 %v3877
    %v4152 = vunpack.c.h.b16 %v3877
    %v4153 = vunpack.c.l.b16 %v3878
    %v4154 = vunpack.c.h.b16 %v3878
    %v4155 = vunpack.c.l.b16 %v3879
    %v4156 = vunpack.c.h.b16 %v3879
    %v4157 = vunpack.c.l.b16 %v3880
    %v4158 = vunpack.c.h.b16 %v3880
    %v4159 = vunpack.c.l.b16 %v3881
    %v4160 = vunpack.c.h.b16 %v3881
    %v4161 = vunpack.c.l.b16 %v3882
    %v4162 = vunpack.c.h.b16 %v3882
    %v4163 = vunpack.c.l.b16 %v3883
    %v4164 = vunpack.c.h.b16 %v3883
    %v4165 = vunpack.c.l.b16 %v3884
    %v4166 = vunpack.c.h.b16 %v3884
    %v4167 = vunpack.c.l.b16 %v3885
    %v4168 = vunpack.c.h.b16 %v3885
    %v4169 = vunpack.c.l.b16 %v3886
    %v4170 = vunpack.c.h.b16 %v3886
    %v4171 = vunpack.c.l.b16 %v3887
    %v4172 = vunpack.c.h.b16 %v3887
    %v4173 = vunpack.c.l.b16 %v3888
    %v4174 = vunpack.c.h.b16 %v3888
    %v4175 = vunpack.c.l.b16 %v3889
    %v4176 = vunpack.c.h.b16 %v3889
    %v4177 = vunpack.c.l.b16 %v3890
    %v4178 = vunpack.c.h.b16 %v3890
    %v4179 = vpack.c.b16 %v3993, %v3987
    %v4180 = vpack.c.b16 %v3994, %v3988
    %v4181 = vpack.c.b16 %v3995, %v3989
    %v4182 = vpack.c.b16 %v3996, %v3990
    %v4183 = vpack.c.b16 %v3997, %v3991
    %v4184 = vpack.c.b16 %v3998, %v3992
    %v4185 = vpack.c.b16 %v4005, %v3999
    %v4186 = vpack.c.b16 %v4006, %v4000
    %v4187 = vpack.c.b16 %v4007, %v4001
    %v4188 = vpack.c.b16 %v4008, %v4002
    %v4189 = vpack.c.b16 %v4009, %v4003
    %v4190 = vpack.c.b16 %v4010, %v4004
    %v4191 = vpack.c.b16 %v4017, %v4011
    %v4192 = vpack.c.b16 %v4018, %v4012
    %v4193 = vpack.c.b16 %v4019, %v4013
    %v4194 = vpack.c.b16 %v4020, %v4014
    %v4195 = vpack.c.b16 %v4021, %v4015
    %v4196 = vpack.c.b16 %v4022, %v4016
    %v4197 = vpack.c.b16 %v4029, %v4023
    %v4198 = vpack.c.b16 %v4030, %v4024
    %v4199 = vpack.c.b16 %v4031, %v4025
    %v4200 = vpack.c.b16 %v4032, %v4026
    %v4201 = vpack.c.b16 %v4033, %v4027
    %v4202 = vpack.c.b16 %v4034, %v4028
    %v4203 = vpack.c.b16 %v4041, %v4035
    %v4204 = vpack.c.b16 %v4042, %v4036
    %v4205 = vpack.c.b16 %v4043, %v4037
    %v4206 = vpack.c.b16 %v4044, %v4038
    %v4207 = vpack.c.b16 %v4045, %v4039
    %v4208 = vpack.c.b16 %v4046, %v4040
    %v4209 = vpack.c.b16 %v4053, %v4047
    %v4210 = vpack.c.b16 %v4054, %v4048
    %v4211 = vpack.c.b16 %v4055, %v4049
    %v4212 = vpack.c.b16 %v4056, %v4050
    %v4213 = vpack.c.b16 %v4057, %v4051
    %v4214 = vpack.c.b16 %v4058, %v4052
    %v4215 = vpack.c.b16 %v4065, %v4059
    %v4216 = vpack.c.b16 %v4066, %v4060
    %v4217 = vpack.c.b16 %v4067, %v4061
    %v4218 = vpack.c.b16 %v4068, %v4062
    %v4219 = vpack.c.b16 %v4069, %v4063
    %v4220 = vpack.c.b16 %v4070, %v4064
    %v4221 = vpack.c.b16 %v4077, %v4071
    %v4222 = vpack.c.b16 %v4078, %v4072
    %v4223 = vpack.c.b16 %v4079, %v4073
    %v4224 = vpack.c.b16 %v4080, %v4074
    %v4225 = vpack.c.b16 %v4081, %v4075
    %v4226 = vpack.c.b16 %v4082, %v4076
    %v4227 = vpack.c.b16 %v4089, %v4083
    %v4228 = vpack.c.b16 %v4090, %v4084
    %v4229 = vpack.c.b16 %v4091, %v4085
    %v4230 = vpack.c.b16 %v4092, %v4086
    %v4231 = vpack.c.b16 %v4093, %v4087
    %v4232 = vpack.c.b16 %v4094, %v4088
    %v4233 = vpack.c.b16 %v4101, %v4095
    %v4234 = vpack.c.b16 %v4102, %v4096
    %v4235 = vpack.c.b16 %v4103, %v4097
    %v4236 = vpack.c.b16 %v4104, %v4098
    %v4237 = vpack.c.b16 %v4105, %v4099
    %v4238 = vpack.c.b16 %v4106, %v4100
    %v4239 = vpack.c.b16 %v4113, %v4107
    %v4240 = vpack.c.b16 %v4114, %v4108
    %v4241 = vpack.c.b16 %v4115, %v4109
    %v4242 = vpack.c.b16 %v4116, %v4110
    %v4243 = vpack.c.b16 %v4117, %v4111
    %v4244 = vpack.c.b16 %v4118, %v4112
    %v4245 = vpack.c.b16 %v4125, %v4119
    %v4246 = vpack.c.b16 %v4126, %v4120
    %v4247 = vpack.c.b16 %v4127, %v4121
    %v4248 = vpack.c.b16 %v4128, %v4122
    %v4249 = vpack.c.b16 %v4129, %v4123
    %v4250 = vpack.c.b16 %v4130, %v4124
    %v4251 = vpack.c.b16 %v4137, %v4131
    %v4252 = vpack.c.b16 %v4138, %v4132
    %v4253 = vpack.c.b16 %v4139, %v4133
    %v4254 = vpack.c.b16 %v4140, %v4134
    %v4255 = vpack.c.b16 %v4141, %v4135
    %v4256 = vpack.c.b16 %v4142, %v4136
    %v4257 = vpack.c.b16 %v4149, %v4143
    %v4258 = vpack.c.b16 %v4150, %v4144
    %v4259 = vpack.c.b16 %v4151, %v4145
    %v4260 = vpack.c.b16 %v4152, %v4146
    %v4261 = vpack.c.b16 %v4153, %v4147
    %v4262 = vpack.c.b16 %v4154, %v4148
    %v4263 = vpack.c.b16 %v4161, %v4155
    %v4264 = vpack.c.b16 %v4162, %v4156
    %v4265 = vpack.c.b16 %v4163, %v4157
    %v4266 = vpack.c.b16 %v4164, %v4158
    %v4267 = vpack.c.b16 %v4165, %v4159
    %v4268 = vpack.c.b16 %v4166, %v4160
    %v4269 = vpack.c.b16 %v4173, %v4167
    %v4270 = vpack.c.b16 %v4174, %v4168
    %v4271 = vpack.c.b16 %v4175, %v4169
    %v4272 = vpack.c.b16 %v4176, %v4170
    %v4273 = vpack.c.b16 %v4177, %v4171
    %v4274 = vpack.c.b16 %v4178, %v4172
    %4371 = vmatprep.subr.bf16.mxu0 %v4180
    %4372 = vmatpush1.bf16.msra.mxu0 %v4179
    %4373 = vmatprep.subr.bf16.mxu0 %v4186
    %4374 = vmatpush1.bf16.msra.mxu0 %v4185
    %4375 = vmatprep.subr.bf16.mxu0 %v4192
    %4376 = vmatpush1.bf16.msra.mxu0 %v4191
    %4377 = vmatprep.subr.bf16.mxu0 %v4198
    %4378 = vmatpush1.bf16.msra.mxu0 %v4197
    %4379 = vmatprep.subr.bf16.mxu0 %v4204
    %4380 = vmatpush1.bf16.msra.mxu0 %v4203
    %4381 = vmatprep.subr.bf16.mxu0 %v4210
    %4382 = vmatpush1.bf16.msra.mxu0 %v4209
    %4383 = vmatprep.subr.bf16.mxu0 %v4216
    %4384 = vmatpush1.bf16.msra.mxu0 %v4215
    %4385 = vmatprep.subr.bf16.mxu0 %v4222
    %4386 = vmatpush1.bf16.msra.mxu0 %v4221
    %4387 = vmatprep.subr.bf16.mxu0 %v4228
    %4388 = vmatpush1.bf16.msra.mxu0 %v4227
    %4389 = vmatprep.subr.bf16.mxu0 %v4234
    %4390 = vmatpush1.bf16.msra.mxu0 %v4233
    %4391 = vmatprep.subr.bf16.mxu0 %v4240
    %4392 = vmatpush1.bf16.msra.mxu0 %v4239
    %4393 = vmatprep.subr.bf16.mxu0 %v4246
    %4394 = vmatpush1.bf16.msra.mxu0 %v4245
    %4395 = vmatprep.subr.bf16.mxu0 %v4252
    %4396 = vmatpush1.bf16.msra.mxu0 %v4251
    %4397 = vmatprep.subr.bf16.mxu0 %v4258
    %4398 = vmatpush1.bf16.msra.mxu0 %v4257
    %4399 = vmatprep.subr.bf16.mxu0 %v4264
    %4400 = vmatpush1.bf16.msra.mxu0 %v4263
    %4401 = vmatprep.subr.bf16.mxu0 %v4270
    %4402 = vmatpush1.bf16.msra.mxu0 %v4269
    %4403 = vmatprep.mubr.bf16.mxu0 %v3794
    %4404 = vmatmul.mubr.bf16.gmra.mrb[0].mxu0 %v3793
    %v4405 = vpop.f32.mrb[0].mxu0
    %v4406 = vadd.f32 0.0, %v4405
    %v4407 = vpop.f32.mrb[0].mxu0
    %v4408 = vadd.f32 0.0, %v4407
    %v4409 = vpop.f32.mrb[0].mxu0
    %v4410 = vpop.f32.mrb[0].mxu0
    %4411 = vdwg.mxu0
    %4412 = vmatprep.subr.bf16.mxu0 %v4182
    %4413 = vmatpush1.bf16.msra.mxu0 %v4181
    %4414 = vmatprep.subr.bf16.mxu0 %v4188
    %4415 = vmatpush1.bf16.msra.mxu0 %v4187
    %4416 = vmatprep.subr.bf16.mxu0 %v4194
    %4417 = vmatpush1.bf16.msra.mxu0 %v4193
    %4418 = vmatprep.subr.bf16.mxu0 %v4200
    %4419 = vmatpush1.bf16.msra.mxu0 %v4199
    %4420 = vmatprep.subr.bf16.mxu0 %v4206
    %4421 = vmatpush1.bf16.msra.mxu0 %v4205
    %4422 = vmatprep.subr.bf16.mxu0 %v4212
    %4423 = vmatpush1.bf16.msra.mxu0 %v4211
    %4424 = vmatprep.subr.bf16.mxu0 %v4218
    %4425 = vmatpush1.bf16.msra.mxu0 %v4217
    %4426 = vmatprep.subr.bf16.mxu0 %v4224
    %4427 = vmatpush1.bf16.msra.mxu0 %v4223
    %4428 = vmatprep.subr.bf16.mxu0 %v4230
    %4429 = vmatpush1.bf16.msra.mxu0 %v4229
    %4430 = vmatprep.subr.bf16.mxu0 %v4236
    %4431 = vmatpush1.bf16.msra.mxu0 %v4235
    %4432 = vmatprep.subr.bf16.mxu0 %v4242
    %4433 = vmatpush1.bf16.msra.mxu0 %v4241
    %4434 = vmatprep.subr.bf16.mxu0 %v4248
    %4435 = vmatpush1.bf16.msra.mxu0 %v4247
    %4436 = vmatprep.subr.bf16.mxu0 %v4254
    %4437 = vmatpush1.bf16.msra.mxu0 %v4253
    %4438 = vmatprep.subr.bf16.mxu0 %v4260
    %4439 = vmatpush1.bf16.msra.mxu0 %v4259
    %4440 = vmatprep.subr.bf16.mxu0 %v4266
    %4441 = vmatpush1.bf16.msra.mxu0 %v4265
    %4442 = vmatprep.subr.bf16.mxu0 %v4272
    %4443 = vmatpush1.bf16.msra.mxu0 %v4271
    %4444 = vmatprep.mubr.bf16.mxu0 %v3794
    %4445 = vmatmul.mubr.bf16.gmra.mrb[0].mxu0 %v3793
    %v4446 = vpop.f32.mrb[0].mxu0
    %v4447 = vadd.f32 0.0, %v4446
    %v4448 = vpop.f32.mrb[0].mxu0
    %v4449 = vadd.f32 0.0, %v4448
    %v4450 = vpop.f32.mrb[0].mxu0
    %v4451 = vpop.f32.mrb[0].mxu0
    %4452 = vdwg.mxu0
    %4453 = vmatprep.subr.bf16.mxu0 %v4184
    %4454 = vmatpush1.bf16.msra.mxu0 %v4183
    %4455 = vmatprep.subr.bf16.mxu0 %v4190
    %4456 = vmatpush1.bf16.msra.mxu0 %v4189
    %4457 = vmatprep.subr.bf16.mxu0 %v4196
    %4458 = vmatpush1.bf16.msra.mxu0 %v4195
    %4459 = vmatprep.subr.bf16.mxu0 %v4202
    %4460 = vmatpush1.bf16.msra.mxu0 %v4201
    %4461 = vmatprep.subr.bf16.mxu0 %v4208
    %4462 = vmatpush1.bf16.msra.mxu0 %v4207
    %4463 = vmatprep.subr.bf16.mxu0 %v4214
    %4464 = vmatpush1.bf16.msra.mxu0 %v4213
    %4465 = vmatprep.subr.bf16.mxu0 %v4220
    %4466 = vmatpush1.bf16.msra.mxu0 %v4219
    %4467 = vmatprep.subr.bf16.mxu0 %v4226
    %4468 = vmatpush1.bf16.msra.mxu0 %v4225
    %4469 = vmatprep.subr.bf16.mxu0 %v4232
    %4470 = vmatpush1.bf16.msra.mxu0 %v4231
    %4471 = vmatprep.subr.bf16.mxu0 %v4238
    %4472 = vmatpush1.bf16.msra.mxu0 %v4237
    %4473 = vmatprep.subr.bf16.mxu0 %v4244
    %4474 = vmatpush1.bf16.msra.mxu0 %v4243
    %4475 = vmatprep.subr.bf16.mxu0 %v4250
    %4476 = vmatpush1.bf16.msra.mxu0 %v4249
    %4477 = vmatprep.subr.bf16.mxu0 %v4256
    %4478 = vmatpush1.bf16.msra.mxu0 %v4255
    %4479 = vmatprep.subr.bf16.mxu0 %v4262
    %4480 = vmatpush1.bf16.msra.mxu0 %v4261
    %4481 = vmatprep.subr.bf16.mxu0 %v4268
    %4482 = vmatpush1.bf16.msra.mxu0 %v4267
    %4483 = vmatprep.subr.bf16.mxu0 %v4274
    %4484 = vmatpush1.bf16.msra.mxu0 %v4273
    %4485 = vmatprep.mubr.bf16.mxu0 %v3794
    %4486 = vmatmul.mubr.bf16.gmra.mrb[0].mxu0 %v3793
    %v4487 = vpop.f32.mrb[0].mxu0
    %v4488 = vadd.f32 0.0, %v4487
    %v4489 = vpop.f32.mrb[0].mxu0
    %v4490 = vadd.f32 0.0, %v4489
    %v4491 = vpop.f32.mrb[0].mxu0
    %v4492 = vpop.f32.mrb[0].mxu0
    %4493 = vdwg.mxu0
    %s4494 = scalar_lea.vmem [#allocation2], 96
    %v4495 = vld [vmem:[%s4494] sm:$0xff]
    %v4496 = vld [vmem:[%s4494 + $0x8] sm:$0xff]
    %v4497 = vld [vmem:[%s4494 + $0x10] sm:$0xff]
    %s4498 = scalar_lea.vmem [#allocation3], 72
    %v4499 = vld [vmem:[%s4498] sm:$0xff]
    %v4500 = vld [vmem:[%s4498 + $0x8] sm:$0xff]
    %v4501 = vld [vmem:[%s4498 + $0x10] sm:$0xff]
    %v4502 = vadd.f32 %v4495, %v4406
    %v4503 = vadd.f32 %v4496, %v4408
    %v4504 = vxor.u32 %v4502, 2147483648
    %v4505 = vxor.u32 %v4503, 2147483648
    %v4506 = vmul.f32 %v4504, 1.442695
    %v4507 = vpow.pop %v4506
    %v4508 = vmul.f32 %v4505, 1.442695
    %v4509 = vpow.pop %v4508
    %v4510 = vadd.f32 %v4507, 1.0
    %v4511 = vadd.f32 %v4509, 1.0
    %v4512 = vrcp.pop %v4510
    %v4513 = vmul.f32 1.0, %v4512
    %v4514 = vrcp.pop %v4511
    %v4515 = vmul.f32 1.0, %v4514
    %v4516 = vadd.f32 %v4447, %v697
    %v4517 = vmul.f32 %v4513, %v4516
    %v4518 = vadd.f32 %v4497, %v4517
    %v4519 = vtanh.pop %v4518
    %v4520 = vsub.f32 1.0, %v4515
    %v4521 = vmul.f32 %v4520, %v4519
    %v4522 = vmul.f32 %v4515, %v3791
    %v4523 = vadd.f32 %v4521, %v4522
    %v4524 = vadd.f32 %v4499, %v4449
    %v4525 = vadd.f32 %v4500, %v4488
    %v4526 = vxor.u32 %v4524, 2147483648
    %v4527 = vxor.u32 %v4525, 2147483648
    %v4528 = vmul.f32 %v4526, 1.442695
    %v4529 = vpow.pop %v4528
    %v4530 = vmul.f32 %v4527, 1.442695
    %v4531 = vpow.pop %v4530
    %v4532 = vadd.f32 %v4529, 1.0
    %v4533 = vadd.f32 %v4531, 1.0
    %v4534 = vrcp.pop %v4532
    %v4535 = vmul.f32 1.0, %v4534
    %v4536 = vrcp.pop %v4533
    %v4537 = vmul.f32 1.0, %v4536
    %v4538 = vadd.f32 %v4490, %v704
    %v4539 = vmul.f32 %v4535, %v4538
    %v4540 = vadd.f32 %v4501, %v4539
    %v4541 = vtanh.pop %v4540
    %v4542 = vsub.f32 1.0, %v4537
    %v4543 = vmul.f32 %v4542, %v4541
    %v4544 = vmul.f32 %v4537, %v3792
    %v4545 = vadd.f32 %v4543, %v4544
    %v4546 = vsel %vm3787, %v4523, 0.0
    %s4547 = scalar_lea.vmem [#allocation11], 32
    %4548 = vst [vmem:[%s4547] sm:$0xff] %v4546
    %v4549 = vsel %vm3779, %v4545, 0.0
    %s4550 = scalar_lea.vmem [#allocation4], 24
    %4551 = vst [vmem:[%s4550] sm:$0xff] %v4549
    %v4552 = vsel %vm3787, %v4523, %v3791
    %v4553 = vsel %vm3779, %v4545, %v3792
    %v4554 = vpack.c.bf16 %v4552, %v4552
    %v4555 = vpack.c.bf16 %v4553, %v4553
    %v4556 = vld [vmem:[#allocation10] sm:$0xff]
    %v4557 = vld [vmem:[#allocation10 + $0x8] sm:$0xff]
    %v4558 = vld [vmem:[#allocation10 + $0x10] sm:$0xff]
    %v4559 = vld [vmem:[#allocation10 + $0x18] sm:$0xff]
    %v4560 = vld [vmem:[#allocation10 + $0x20] sm:$0xff]
    %v4561 = vld [vmem:[#allocation10 + $0x28] sm:$0xff]
    %v4562 = vld [vmem:[#allocation10 + $0x30] sm:$0xff]
    %v4563 = vld [vmem:[#allocation10 + $0x38] sm:$0xff]
    %v4564 = vld [vmem:[#allocation10 + $0x40] sm:$0xff]
    %v4565 = vld [vmem:[#allocation10 + $0x48] sm:$0xff]
    %v4566 = vld [vmem:[#allocation10 + $0x50] sm:$0xff]
    %v4567 = vld [vmem:[#allocation10 + $0x58] sm:$0xff]
    %v4568 = vld [vmem:[#allocation10 + $0x60] sm:$0xff]
    %v4569 = vld [vmem:[#allocation10 + $0x68] sm:$0xff]
    %v4570 = vld [vmem:[#allocation10 + $0x70] sm:$0xff]
    %v4571 = vld [vmem:[#allocation10 + $0x78] sm:$0xff]
    %v4572 = vld [vmem:[#allocation10 + $0x80] sm:$0xff]
    %v4573 = vld [vmem:[#allocation10 + $0x88] sm:$0xff]
    %v4574 = vld [vmem:[#allocation10 + $0x90] sm:$0xff]
    %v4575 = vld [vmem:[#allocation10 + $0x98] sm:$0xff]
    %v4576 = vld [vmem:[#allocation10 + $0xa0] sm:$0xff]
    %v4577 = vld [vmem:[#allocation10 + $0xa8] sm:$0xff]
    %v4578 = vld [vmem:[#allocation10 + $0xb0] sm:$0xff]
    %v4579 = vld [vmem:[#allocation10 + $0xb8] sm:$0xff]
    %v4580 = vld [vmem:[#allocation10 + $0xc0] sm:$0xff]
    %v4581 = vld [vmem:[#allocation10 + $0xc8] sm:$0xff]
    %v4582 = vld [vmem:[#allocation10 + $0xd0] sm:$0xff]
    %v4583 = vld [vmem:[#allocation10 + $0xd8] sm:$0xff]
    %v4584 = vld [vmem:[#allocation10 + $0xe0] sm:$0xff]
    %v4585 = vld [vmem:[#allocation10 + $0xe8] sm:$0xff]
    %v4586 = vld [vmem:[#allocation10 + $0xf0] sm:$0xff]
    %v4587 = vld [vmem:[#allocation10 + $0xf8] sm:$0xff]
    %v4588 = vld [vmem:[#allocation10 + $0x100] sm:$0xff]
    %v4589 = vld [vmem:[#allocation10 + $0x108] sm:$0xff]
    %v4590 = vld [vmem:[#allocation10 + $0x110] sm:$0xff]
    %v4591 = vld [vmem:[#allocation10 + $0x118] sm:$0xff]
    %v4592 = vld [vmem:[#allocation10 + $0x120] sm:$0xff]
    %v4593 = vld [vmem:[#allocation10 + $0x128] sm:$0xff]
    %v4594 = vld [vmem:[#allocation10 + $0x130] sm:$0xff]
    %v4595 = vld [vmem:[#allocation10 + $0x138] sm:$0xff]
    %v4596 = vld [vmem:[#allocation10 + $0x140] sm:$0xff]
    %v4597 = vld [vmem:[#allocation10 + $0x148] sm:$0xff]
    %v4598 = vld [vmem:[#allocation10 + $0x150] sm:$0xff]
    %v4599 = vld [vmem:[#allocation10 + $0x158] sm:$0xff]
    %v4600 = vld [vmem:[#allocation10 + $0x160] sm:$0xff]
    %v4601 = vld [vmem:[#allocation10 + $0x168] sm:$0xff]
    %v4602 = vld [vmem:[#allocation10 + $0x170] sm:$0xff]
    %v4603 = vld [vmem:[#allocation10 + $0x178] sm:$0xff]
    %v4604 = vld [vmem:[#allocation10 + $0x180] sm:$0xff]
    %v4605 = vld [vmem:[#allocation10 + $0x188] sm:$0xff]
    %v4606 = vld [vmem:[#allocation10 + $0x190] sm:$0xff]
    %v4607 = vld [vmem:[#allocation10 + $0x198] sm:$0xff]
    %v4608 = vld [vmem:[#allocation10 + $0x1a0] sm:$0xff]
    %v4609 = vld [vmem:[#allocation10 + $0x1a8] sm:$0xff]
    %v4610 = vld [vmem:[#allocation10 + $0x1b0] sm:$0xff]
    %v4611 = vld [vmem:[#allocation10 + $0x1b8] sm:$0xff]
    %v4612 = vld [vmem:[#allocation10 + $0x1c0] sm:$0xff]
    %v4613 = vld [vmem:[#allocation10 + $0x1c8] sm:$0xff]
    %v4614 = vld [vmem:[#allocation10 + $0x1d0] sm:$0xff]
    %v4615 = vld [vmem:[#allocation10 + $0x1d8] sm:$0xff]
    %v4616 = vld [vmem:[#allocation10 + $0x1e0] sm:$0xff]
    %v4617 = vld [vmem:[#allocation10 + $0x1e8] sm:$0xff]
    %v4618 = vld [vmem:[#allocation10 + $0x1f0] sm:$0xff]
    %v4619 = vld [vmem:[#allocation10 + $0x1f8] sm:$0xff]
    %v4620 = vld [vmem:[#allocation10 + $0x200] sm:$0xff]
    %v4621 = vld [vmem:[#allocation10 + $0x208] sm:$0xff]
    %v4622 = vld [vmem:[#allocation10 + $0x210] sm:$0xff]
    %v4623 = vld [vmem:[#allocation10 + $0x218] sm:$0xff]
    %v4624 = vld [vmem:[#allocation10 + $0x220] sm:$0xff]
    %v4625 = vld [vmem:[#allocation10 + $0x228] sm:$0xff]
    %v4626 = vld [vmem:[#allocation10 + $0x230] sm:$0xff]
    %v4627 = vld [vmem:[#allocation10 + $0x238] sm:$0xff]
    %v4628 = vld [vmem:[#allocation10 + $0x240] sm:$0xff]
    %v4629 = vld [vmem:[#allocation10 + $0x248] sm:$0xff]
    %v4630 = vld [vmem:[#allocation10 + $0x250] sm:$0xff]
    %v4631 = vld [vmem:[#allocation10 + $0x258] sm:$0xff]
    %v4632 = vld [vmem:[#allocation10 + $0x260] sm:$0xff]
    %v4633 = vld [vmem:[#allocation10 + $0x268] sm:$0xff]
    %v4634 = vld [vmem:[#allocation10 + $0x270] sm:$0xff]
    %v4635 = vld [vmem:[#allocation10 + $0x278] sm:$0xff]
    %v4636 = vld [vmem:[#allocation10 + $0x280] sm:$0xff]
    %v4637 = vld [vmem:[#allocation10 + $0x288] sm:$0xff]
    %v4638 = vld [vmem:[#allocation10 + $0x290] sm:$0xff]
    %v4639 = vld [vmem:[#allocation10 + $0x298] sm:$0xff]
    %v4640 = vld [vmem:[#allocation10 + $0x2a0] sm:$0xff]
    %v4641 = vld [vmem:[#allocation10 + $0x2a8] sm:$0xff]
    %v4642 = vld [vmem:[#allocation10 + $0x2b0] sm:$0xff]
    %v4643 = vld [vmem:[#allocation10 + $0x2b8] sm:$0xff]
    %v4644 = vld [vmem:[#allocation10 + $0x2c0] sm:$0xff]
    %v4645 = vld [vmem:[#allocation10 + $0x2c8] sm:$0xff]
    %v4646 = vld [vmem:[#allocation10 + $0x2d0] sm:$0xff]
    %v4647 = vld [vmem:[#allocation10 + $0x2d8] sm:$0xff]
    %v4648 = vld [vmem:[#allocation10 + $0x2e0] sm:$0xff]
    %v4649 = vld [vmem:[#allocation10 + $0x2e8] sm:$0xff]
    %v4650 = vld [vmem:[#allocation10 + $0x2f0] sm:$0xff]
    %v4651 = vld [vmem:[#allocation10 + $0x2f8] sm:$0xff]
    %v4748 = vunpack.c.l.b16 %v4556
    %v4749 = vunpack.c.h.b16 %v4556
    %v4750 = vunpack.c.l.b16 %v4557
    %v4751 = vunpack.c.h.b16 %v4557
    %v4752 = vunpack.c.l.b16 %v4558
    %v4753 = vunpack.c.h.b16 %v4558
    %v4754 = vunpack.c.l.b16 %v4559
    %v4755 = vunpack.c.h.b16 %v4559
    %v4756 = vunpack.c.l.b16 %v4560
    %v4757 = vunpack.c.h.b16 %v4560
    %v4758 = vunpack.c.l.b16 %v4561
    %v4759 = vunpack.c.h.b16 %v4561
    %v4760 = vunpack.c.l.b16 %v4562
    %v4761 = vunpack.c.h.b16 %v4562
    %v4762 = vunpack.c.l.b16 %v4563
    %v4763 = vunpack.c.h.b16 %v4563
    %v4764 = vunpack.c.l.b16 %v4564
    %v4765 = vunpack.c.h.b16 %v4564
    %v4766 = vunpack.c.l.b16 %v4565
    %v4767 = vunpack.c.h.b16 %v4565
    %v4768 = vunpack.c.l.b16 %v4566
    %v4769 = vunpack.c.h.b16 %v4566
    %v4770 = vunpack.c.l.b16 %v4567
    %v4771 = vunpack.c.h.b16 %v4567
    %v4772 = vunpack.c.l.b16 %v4568
    %v4773 = vunpack.c.h.b16 %v4568
    %v4774 = vunpack.c.l.b16 %v4569
    %v4775 = vunpack.c.h.b16 %v4569
    %v4776 = vunpack.c.l.b16 %v4570
    %v4777 = vunpack.c.h.b16 %v4570
    %v4778 = vunpack.c.l.b16 %v4571
    %v4779 = vunpack.c.h.b16 %v4571
    %v4780 = vunpack.c.l.b16 %v4572
    %v4781 = vunpack.c.h.b16 %v4572
    %v4782 = vunpack.c.l.b16 %v4573
    %v4783 = vunpack.c.h.b16 %v4573
    %v4784 = vunpack.c.l.b16 %v4574
    %v4785 = vunpack.c.h.b16 %v4574
    %v4786 = vunpack.c.l.b16 %v4575
    %v4787 = vunpack.c.h.b16 %v4575
    %v4788 = vunpack.c.l.b16 %v4576
    %v4789 = vunpack.c.h.b16 %v4576
    %v4790 = vunpack.c.l.b16 %v4577
    %v4791 = vunpack.c.h.b16 %v4577
    %v4792 = vunpack.c.l.b16 %v4578
    %v4793 = vunpack.c.h.b16 %v4578
    %v4794 = vunpack.c.l.b16 %v4579
    %v4795 = vunpack.c.h.b16 %v4579
    %v4796 = vunpack.c.l.b16 %v4580
    %v4797 = vunpack.c.h.b16 %v4580
    %v4798 = vunpack.c.l.b16 %v4581
    %v4799 = vunpack.c.h.b16 %v4581
    %v4800 = vunpack.c.l.b16 %v4582
    %v4801 = vunpack.c.h.b16 %v4582
    %v4802 = vunpack.c.l.b16 %v4583
    %v4803 = vunpack.c.h.b16 %v4583
    %v4804 = vunpack.c.l.b16 %v4584
    %v4805 = vunpack.c.h.b16 %v4584
    %v4806 = vunpack.c.l.b16 %v4585
    %v4807 = vunpack.c.h.b16 %v4585
    %v4808 = vunpack.c.l.b16 %v4586
    %v4809 = vunpack.c.h.b16 %v4586
    %v4810 = vunpack.c.l.b16 %v4587
    %v4811 = vunpack.c.h.b16 %v4587
    %v4812 = vunpack.c.l.b16 %v4588
    %v4813 = vunpack.c.h.b16 %v4588
    %v4814 = vunpack.c.l.b16 %v4589
    %v4815 = vunpack.c.h.b16 %v4589
    %v4816 = vunpack.c.l.b16 %v4590
    %v4817 = vunpack.c.h.b16 %v4590
    %v4818 = vunpack.c.l.b16 %v4591
    %v4819 = vunpack.c.h.b16 %v4591
    %v4820 = vunpack.c.l.b16 %v4592
    %v4821 = vunpack.c.h.b16 %v4592
    %v4822 = vunpack.c.l.b16 %v4593
    %v4823 = vunpack.c.h.b16 %v4593
    %v4824 = vunpack.c.l.b16 %v4594
    %v4825 = vunpack.c.h.b16 %v4594
    %v4826 = vunpack.c.l.b16 %v4595
    %v4827 = vunpack.c.h.b16 %v4595
    %v4828 = vunpack.c.l.b16 %v4596
    %v4829 = vunpack.c.h.b16 %v4596
    %v4830 = vunpack.c.l.b16 %v4597
    %v4831 = vunpack.c.h.b16 %v4597
    %v4832 = vunpack.c.l.b16 %v4598
    %v4833 = vunpack.c.h.b16 %v4598
    %v4834 = vunpack.c.l.b16 %v4599
    %v4835 = vunpack.c.h.b16 %v4599
    %v4836 = vunpack.c.l.b16 %v4600
    %v4837 = vunpack.c.h.b16 %v4600
    %v4838 = vunpack.c.l.b16 %v4601
    %v4839 = vunpack.c.h.b16 %v4601
    %v4840 = vunpack.c.l.b16 %v4602
    %v4841 = vunpack.c.h.b16 %v4602
    %v4842 = vunpack.c.l.b16 %v4603
    %v4843 = vunpack.c.h.b16 %v4603
    %v4844 = vunpack.c.l.b16 %v4604
    %v4845 = vunpack.c.h.b16 %v4604
    %v4846 = vunpack.c.l.b16 %v4605
    %v4847 = vunpack.c.h.b16 %v4605
    %v4848 = vunpack.c.l.b16 %v4606
    %v4849 = vunpack.c.h.b16 %v4606
    %v4850 = vunpack.c.l.b16 %v4607
    %v4851 = vunpack.c.h.b16 %v4607
    %v4852 = vunpack.c.l.b16 %v4608
    %v4853 = vunpack.c.h.b16 %v4608
    %v4854 = vunpack.c.l.b16 %v4609
    %v4855 = vunpack.c.h.b16 %v4609
    %v4856 = vunpack.c.l.b16 %v4610
    %v4857 = vunpack.c.h.b16 %v4610
    %v4858 = vunpack.c.l.b16 %v4611
    %v4859 = vunpack.c.h.b16 %v4611
    %v4860 = vunpack.c.l.b16 %v4612
    %v4861 = vunpack.c.h.b16 %v4612
    %v4862 = vunpack.c.l.b16 %v4613
    %v4863 = vunpack.c.h.b16 %v4613
    %v4864 = vunpack.c.l.b16 %v4614
    %v4865 = vunpack.c.h.b16 %v4614
    %v4866 = vunpack.c.l.b16 %v4615
    %v4867 = vunpack.c.h.b16 %v4615
    %v4868 = vunpack.c.l.b16 %v4616
    %v4869 = vunpack.c.h.b16 %v4616
    %v4870 = vunpack.c.l.b16 %v4617
    %v4871 = vunpack.c.h.b16 %v4617
    %v4872 = vunpack.c.l.b16 %v4618
    %v4873 = vunpack.c.h.b16 %v4618
    %v4874 = vunpack.c.l.b16 %v4619
    %v4875 = vunpack.c.h.b16 %v4619
    %v4876 = vunpack.c.l.b16 %v4620
    %v4877 = vunpack.c.h.b16 %v4620
    %v4878 = vunpack.c.l.b16 %v4621
    %v4879 = vunpack.c.h.b16 %v4621
    %v4880 = vunpack.c.l.b16 %v4622
    %v4881 = vunpack.c.h.b16 %v4622
    %v4882 = vunpack.c.l.b16 %v4623
    %v4883 = vunpack.c.h.b16 %v4623
    %v4884 = vunpack.c.l.b16 %v4624
    %v4885 = vunpack.c.h.b16 %v4624
    %v4886 = vunpack.c.l.b16 %v4625
    %v4887 = vunpack.c.h.b16 %v4625
    %v4888 = vunpack.c.l.b16 %v4626
    %v4889 = vunpack.c.h.b16 %v4626
    %v4890 = vunpack.c.l.b16 %v4627
    %v4891 = vunpack.c.h.b16 %v4627
    %v4892 = vunpack.c.l.b16 %v4628
    %v4893 = vunpack.c.h.b16 %v4628
    %v4894 = vunpack.c.l.b16 %v4629
    %v4895 = vunpack.c.h.b16 %v4629
    %v4896 = vunpack.c.l.b16 %v4630
    %v4897 = vunpack.c.h.b16 %v4630
    %v4898 = vunpack.c.l.b16 %v4631
    %v4899 = vunpack.c.h.b16 %v4631
    %v4900 = vunpack.c.l.b16 %v4632
    %v4901 = vunpack.c.h.b16 %v4632
    %v4902 = vunpack.c.l.b16 %v4633
    %v4903 = vunpack.c.h.b16 %v4633
    %v4904 = vunpack.c.l.b16 %v4634
    %v4905 = vunpack.c.h.b16 %v4634
    %v4906 = vunpack.c.l.b16 %v4635
    %v4907 = vunpack.c.h.b16 %v4635
    %v4908 = vunpack.c.l.b16 %v4636
    %v4909 = vunpack.c.h.b16 %v4636
    %v4910 = vunpack.c.l.b16 %v4637
    %v4911 = vunpack.c.h.b16 %v4637
    %v4912 = vunpack.c.l.b16 %v4638
    %v4913 = vunpack.c.h.b16 %v4638
    %v4914 = vunpack.c.l.b16 %v4639
    %v4915 = vunpack.c.h.b16 %v4639
    %v4916 = vunpack.c.l.b16 %v4640
    %v4917 = vunpack.c.h.b16 %v4640
    %v4918 = vunpack.c.l.b16 %v4641
    %v4919 = vunpack.c.h.b16 %v4641
    %v4920 = vunpack.c.l.b16 %v4642
    %v4921 = vunpack.c.h.b16 %v4642
    %v4922 = vunpack.c.l.b16 %v4643
    %v4923 = vunpack.c.h.b16 %v4643
    %v4924 = vunpack.c.l.b16 %v4644
    %v4925 = vunpack.c.h.b16 %v4644
    %v4926 = vunpack.c.l.b16 %v4645
    %v4927 = vunpack.c.h.b16 %v4645
    %v4928 = vunpack.c.l.b16 %v4646
    %v4929 = vunpack.c.h.b16 %v4646
    %v4930 = vunpack.c.l.b16 %v4647
    %v4931 = vunpack.c.h.b16 %v4647
    %v4932 = vunpack.c.l.b16 %v4648
    %v4933 = vunpack.c.h.b16 %v4648
    %v4934 = vunpack.c.l.b16 %v4649
    %v4935 = vunpack.c.h.b16 %v4649
    %v4936 = vunpack.c.l.b16 %v4650
    %v4937 = vunpack.c.h.b16 %v4650
    %v4938 = vunpack.c.l.b16 %v4651
    %v4939 = vunpack.c.h.b16 %v4651
    %v4940 = vpack.c.b16 %v4754, %v4748
    %v4941 = vpack.c.b16 %v4755, %v4749
    %v4942 = vpack.c.b16 %v4756, %v4750
    %v4943 = vpack.c.b16 %v4757, %v4751
    %v4944 = vpack.c.b16 %v4758, %v4752
    %v4945 = vpack.c.b16 %v4759, %v4753
    %v4946 = vpack.c.b16 %v4766, %v4760
    %v4947 = vpack.c.b16 %v4767, %v4761
    %v4948 = vpack.c.b16 %v4768, %v4762
    %v4949 = vpack.c.b16 %v4769, %v4763
    %v4950 = vpack.c.b16 %v4770, %v4764
    %v4951 = vpack.c.b16 %v4771, %v4765
    %v4952 = vpack.c.b16 %v4778, %v4772
    %v4953 = vpack.c.b16 %v4779, %v4773
    %v4954 = vpack.c.b16 %v4780, %v4774
    %v4955 = vpack.c.b16 %v4781, %v4775
    %v4956 = vpack.c.b16 %v4782, %v4776
    %v4957 = vpack.c.b16 %v4783, %v4777
    %v4958 = vpack.c.b16 %v4790, %v4784
    %v4959 = vpack.c.b16 %v4791, %v4785
    %v4960 = vpack.c.b16 %v4792, %v4786
    %v4961 = vpack.c.b16 %v4793, %v4787
    %v4962 = vpack.c.b16 %v4794, %v4788
    %v4963 = vpack.c.b16 %v4795, %v4789
    %v4964 = vpack.c.b16 %v4802, %v4796
    %v4965 = vpack.c.b16 %v4803, %v4797
    %v4966 = vpack.c.b16 %v4804, %v4798
    %v4967 = vpack.c.b16 %v4805, %v4799
    %v4968 = vpack.c.b16 %v4806, %v4800
    %v4969 = vpack.c.b16 %v4807, %v4801
    %v4970 = vpack.c.b16 %v4814, %v4808
    %v4971 = vpack.c.b16 %v4815, %v4809
    %v4972 = vpack.c.b16 %v4816, %v4810
    %v4973 = vpack.c.b16 %v4817, %v4811
    %v4974 = vpack.c.b16 %v4818, %v4812
    %v4975 = vpack.c.b16 %v4819, %v4813
    %v4976 = vpack.c.b16 %v4826, %v4820
    %v4977 = vpack.c.b16 %v4827, %v4821
    %v4978 = vpack.c.b16 %v4828, %v4822
    %v4979 = vpack.c.b16 %v4829, %v4823
    %v4980 = vpack.c.b16 %v4830, %v4824
    %v4981 = vpack.c.b16 %v4831, %v4825
    %v4982 = vpack.c.b16 %v4838, %v4832
    %v4983 = vpack.c.b16 %v4839, %v4833
    %v4984 = vpack.c.b16 %v4840, %v4834
    %v4985 = vpack.c.b16 %v4841, %v4835
    %v4986 = vpack.c.b16 %v4842, %v4836
    %v4987 = vpack.c.b16 %v4843, %v4837
    %v4988 = vpack.c.b16 %v4850, %v4844
    %v4989 = vpack.c.b16 %v4851, %v4845
    %v4990 = vpack.c.b16 %v4852, %v4846
    %v4991 = vpack.c.b16 %v4853, %v4847
    %v4992 = vpack.c.b16 %v4854, %v4848
    %v4993 = vpack.c.b16 %v4855, %v4849
    %v4994 = vpack.c.b16 %v4862, %v4856
    %v4995 = vpack.c.b16 %v4863, %v4857
    %v4996 = vpack.c.b16 %v4864, %v4858
    %v4997 = vpack.c.b16 %v4865, %v4859
    %v4998 = vpack.c.b16 %v4866, %v4860
    %v4999 = vpack.c.b16 %v4867, %v4861
    %v5000 = vpack.c.b16 %v4874, %v4868
    %v5001 = vpack.c.b16 %v4875, %v4869
    %v5002 = vpack.c.b16 %v4876, %v4870
    %v5003 = vpack.c.b16 %v4877, %v4871
    %v5004 = vpack.c.b16 %v4878, %v4872
    %v5005 = vpack.c.b16 %v4879, %v4873
    %v5006 = vpack.c.b16 %v4886, %v4880
    %v5007 = vpack.c.b16 %v4887, %v4881
    %v5008 = vpack.c.b16 %v4888, %v4882
    %v5009 = vpack.c.b16 %v4889, %v4883
    %v5010 = vpack.c.b16 %v4890, %v4884
    %v5011 = vpack.c.b16 %v4891, %v4885
    %v5012 = vpack.c.b16 %v4898, %v4892
    %v5013 = vpack.c.b16 %v4899, %v4893
    %v5014 = vpack.c.b16 %v4900, %v4894
    %v5015 = vpack.c.b16 %v4901, %v4895
    %v5016 = vpack.c.b16 %v4902, %v4896
    %v5017 = vpack.c.b16 %v4903, %v4897
    %v5018 = vpack.c.b16 %v4910, %v4904
    %v5019 = vpack.c.b16 %v4911, %v4905
    %v5020 = vpack.c.b16 %v4912, %v4906
    %v5021 = vpack.c.b16 %v4913, %v4907
    %v5022 = vpack.c.b16 %v4914, %v4908
    %v5023 = vpack.c.b16 %v4915, %v4909
    %v5024 = vpack.c.b16 %v4922, %v4916
    %v5025 = vpack.c.b16 %v4923, %v4917
    %v5026 = vpack.c.b16 %v4924, %v4918
    %v5027 = vpack.c.b16 %v4925, %v4919
    %v5028 = vpack.c.b16 %v4926, %v4920
    %v5029 = vpack.c.b16 %v4927, %v4921
    %v5030 = vpack.c.b16 %v4934, %v4928
    %v5031 = vpack.c.b16 %v4935, %v4929
    %v5032 = vpack.c.b16 %v4936, %v4930
    %v5033 = vpack.c.b16 %v4937, %v4931
    %v5034 = vpack.c.b16 %v4938, %v4932
    %v5035 = vpack.c.b16 %v4939, %v4933
    %5132 = vmatprep.subr.bf16.mxu0 %v4941
    %5133 = vmatpush1.bf16.msra.mxu0 %v4940
    %5134 = vmatprep.subr.bf16.mxu0 %v4947
    %5135 = vmatpush1.bf16.msra.mxu0 %v4946
    %5136 = vmatprep.subr.bf16.mxu0 %v4953
    %5137 = vmatpush1.bf16.msra.mxu0 %v4952
    %5138 = vmatprep.subr.bf16.mxu0 %v4959
    %5139 = vmatpush1.bf16.msra.mxu0 %v4958
    %5140 = vmatprep.subr.bf16.mxu0 %v4965
    %5141 = vmatpush1.bf16.msra.mxu0 %v4964
    %5142 = vmatprep.subr.bf16.mxu0 %v4971
    %5143 = vmatpush1.bf16.msra.mxu0 %v4970
    %5144 = vmatprep.subr.bf16.mxu0 %v4977
    %5145 = vmatpush1.bf16.msra.mxu0 %v4976
    %5146 = vmatprep.subr.bf16.mxu0 %v4983
    %5147 = vmatpush1.bf16.msra.mxu0 %v4982
    %5148 = vmatprep.subr.bf16.mxu0 %v4989
    %5149 = vmatpush1.bf16.msra.mxu0 %v4988
    %5150 = vmatprep.subr.bf16.mxu0 %v4995
    %5151 = vmatpush1.bf16.msra.mxu0 %v4994
    %5152 = vmatprep.subr.bf16.mxu0 %v5001
    %5153 = vmatpush1.bf16.msra.mxu0 %v5000
    %5154 = vmatprep.subr.bf16.mxu0 %v5007
    %5155 = vmatpush1.bf16.msra.mxu0 %v5006
    %5156 = vmatprep.subr.bf16.mxu0 %v5013
    %5157 = vmatpush1.bf16.msra.mxu0 %v5012
    %5158 = vmatprep.subr.bf16.mxu0 %v5019
    %5159 = vmatpush1.bf16.msra.mxu0 %v5018
    %5160 = vmatprep.subr.bf16.mxu0 %v5025
    %5161 = vmatpush1.bf16.msra.mxu0 %v5024
    %5162 = vmatprep.subr.bf16.mxu0 %v5031
    %5163 = vmatpush1.bf16.msra.mxu0 %v5030
    %5164 = vmatprep.mubr.bf16.mxu0 %v4555
    %5165 = vmatmul.mubr.bf16.gmra.mrb[0].mxu0 %v4554
    %v5166 = vpop.f32.mrb[0].mxu0
    %v5167 = vadd.f32 0.0, %v5166
    %v5168 = vpop.f32.mrb[0].mxu0
    %v5169 = vadd.f32 0.0, %v5168
    %v5170 = vpop.f32.mrb[0].mxu0
    %v5171 = vpop.f32.mrb[0].mxu0
    %5172 = vdwg.mxu0
    %5173 = vmatprep.subr.bf16.mxu0 %v4943
    %5174 = vmatpush1.bf16.msra.mxu0 %v4942
    %5175 = vmatprep.subr.bf16.mxu0 %v4949
    %5176 = vmatpush1.bf16.msra.mxu0 %v4948
    %5177 = vmatprep.subr.bf16.mxu0 %v4955
    %5178 = vmatpush1.bf16.msra.mxu0 %v4954
    %5179 = vmatprep.subr.bf16.mxu0 %v4961
    %5180 = vmatpush1.bf16.msra.mxu0 %v4960
    %5181 = vmatprep.subr.bf16.mxu0 %v4967
    %5182 = vmatpush1.bf16.msra.mxu0 %v4966
    %5183 = vmatprep.subr.bf16.mxu0 %v4973
    %5184 = vmatpush1.bf16.msra.mxu0 %v4972
    %5185 = vmatprep.subr.bf16.mxu0 %v4979
    %5186 = vmatpush1.bf16.msra.mxu0 %v4978
    %5187 = vmatprep.subr.bf16.mxu0 %v4985
    %5188 = vmatpush1.bf16.msra.mxu0 %v4984
    %5189 = vmatprep.subr.bf16.mxu0 %v4991
    %5190 = vmatpush1.bf16.msra.mxu0 %v4990
    %5191 = vmatprep.subr.bf16.mxu0 %v4997
    %5192 = vmatpush1.bf16.msra.mxu0 %v4996
    %5193 = vmatprep.subr.bf16.mxu0 %v5003
    %5194 = vmatpush1.bf16.msra.mxu0 %v5002
    %5195 = vmatprep.subr.bf16.mxu0 %v5009
    %5196 = vmatpush1.bf16.msra.mxu0 %v5008
    %5197 = vmatprep.subr.bf16.mxu0 %v5015
    %5198 = vmatpush1.bf16.msra.mxu0 %v5014
    %5199 = vmatprep.subr.bf16.mxu0 %v5021
    %5200 = vmatpush1.bf16.msra.mxu0 %v5020
    %5201 = vmatprep.subr.bf16.mxu0 %v5027
    %5202 = vmatpush1.bf16.msra.mxu0 %v5026
    %5203 = vmatprep.subr.bf16.mxu0 %v5033
    %5204 = vmatpush1.bf16.msra.mxu0 %v5032
    %5205 = vmatprep.mubr.bf16.mxu0 %v4555
    %5206 = vmatmul.mubr.bf16.gmra.mrb[0].mxu0 %v4554
    %v5207 = vpop.f32.mrb[0].mxu0
    %v5208 = vadd.f32 0.0, %v5207
    %v5209 = vpop.f32.mrb[0].mxu0
    %v5210 = vadd.f32 0.0, %v5209
    %v5211 = vpop.f32.mrb[0].mxu0
    %v5212 = vpop.f32.mrb[0].mxu0
    %5213 = vdwg.mxu0
    %5214 = vmatprep.subr.bf16.mxu0 %v4945
    %5215 = vmatpush1.bf16.msra.mxu0 %v4944
    %5216 = vmatprep.subr.bf16.mxu0 %v4951
    %5217 = vmatpush1.bf16.msra.mxu0 %v4950
    %5218 = vmatprep.subr.bf16.mxu0 %v4957
    %5219 = vmatpush1.bf16.msra.mxu0 %v4956
    %5220 = vmatprep.subr.bf16.mxu0 %v4963
    %5221 = vmatpush1.bf16.msra.mxu0 %v4962
    %5222 = vmatprep.subr.bf16.mxu0 %v4969
    %5223 = vmatpush1.bf16.msra.mxu0 %v4968
    %5224 = vmatprep.subr.bf16.mxu0 %v4975
    %5225 = vmatpush1.bf16.msra.mxu0 %v4974
    %5226 = vmatprep.subr.bf16.mxu0 %v4981
    %5227 = vmatpush1.bf16.msra.mxu0 %v4980
    %5228 = vmatprep.subr.bf16.mxu0 %v4987
    %5229 = vmatpush1.bf16.msra.mxu0 %v4986
    %5230 = vmatprep.subr.bf16.mxu0 %v4993
    %5231 = vmatpush1.bf16.msra.mxu0 %v4992
    %5232 = vmatprep.subr.bf16.mxu0 %v4999
    %5233 = vmatpush1.bf16.msra.mxu0 %v4998
    %5234 = vmatprep.subr.bf16.mxu0 %v5005
    %5235 = vmatpush1.bf16.msra.mxu0 %v5004
    %5236 = vmatprep.subr.bf16.mxu0 %v5011
    %5237 = vmatpush1.bf16.msra.mxu0 %v5010
    %5238 = vmatprep.subr.bf16.mxu0 %v5017
    %5239 = vmatpush1.bf16.msra.mxu0 %v5016
    %5240 = vmatprep.subr.bf16.mxu0 %v5023
    %5241 = vmatpush1.bf16.msra.mxu0 %v5022
    %5242 = vmatprep.subr.bf16.mxu0 %v5029
    %5243 = vmatpush1.bf16.msra.mxu0 %v5028
    %5244 = vmatprep.subr.bf16.mxu0 %v5035
    %5245 = vmatpush1.bf16.msra.mxu0 %v5034
    %5246 = vmatprep.mubr.bf16.mxu0 %v4555
    %5247 = vmatmul.mubr.bf16.gmra.mrb[0].mxu0 %v4554
    %v5248 = vpop.f32.mrb[0].mxu0
    %v5249 = vadd.f32 0.0, %v5248
    %v5250 = vpop.f32.mrb[0].mxu0
    %v5251 = vadd.f32 0.0, %v5250
    %v5252 = vpop.f32.mrb[0].mxu0
    %v5253 = vpop.f32.mrb[0].mxu0
    %5254 = vdwg.mxu0
    %s5255 = scalar_lea.vmem [#allocation2], 120
    %v5256 = vld [vmem:[%s5255] sm:$0xff]
    %v5257 = vld [vmem:[%s5255 + $0x8] sm:$0xff]
    %v5258 = vld [vmem:[%s5255 + $0x10] sm:$0xff]
    %s5259 = scalar_lea.vmem [#allocation3], 48
    %v5260 = vld [vmem:[%s5259] sm:$0xff]
    %v5261 = vld [vmem:[%s5259 + $0x8] sm:$0xff]
    %v5262 = vld [vmem:[%s5259 + $0x10] sm:$0xff]
    %v5263 = vadd.f32 %v5256, %v5167
    %v5264 = vadd.f32 %v5257, %v5169
    %v5265 = vxor.u32 %v5263, 2147483648
    %v5266 = vxor.u32 %v5264, 2147483648
    %v5267 = vmul.f32 %v5265, 1.442695
    %v5268 = vpow.pop %v5267
    %v5269 = vmul.f32 %v5266, 1.442695
    %v5270 = vpow.pop %v5269
    %v5271 = vadd.f32 %v5268, 1.0
    %v5272 = vadd.f32 %v5270, 1.0
    %v5273 = vrcp.pop %v5271
    %v5274 = vmul.f32 1.0, %v5273
    %v5275 = vrcp.pop %v5272
    %v5276 = vmul.f32 1.0, %v5275
    %v5277 = vadd.f32 %v5208, %v697
    %v5278 = vmul.f32 %v5274, %v5277
    %v5279 = vadd.f32 %v5258, %v5278
    %v5280 = vtanh.pop %v5279
    %v5281 = vsub.f32 1.0, %v5276
    %v5282 = vmul.f32 %v5281, %v5280
    %v5283 = vmul.f32 %v5276, %v4552
    %v5284 = vadd.f32 %v5282, %v5283
    %v5285 = vadd.f32 %v5260, %v5210
    %v5286 = vadd.f32 %v5261, %v5249
    %v5287 = vxor.u32 %v5285, 2147483648
    %v5288 = vxor.u32 %v5286, 2147483648
    %v5289 = vmul.f32 %v5287, 1.442695
    %v5290 = vpow.pop %v5289
    %v5291 = vmul.f32 %v5288, 1.442695
    %v5292 = vpow.pop %v5291
    %v5293 = vadd.f32 %v5290, 1.0
    %v5294 = vadd.f32 %v5292, 1.0
    %v5295 = vrcp.pop %v5293
    %v5296 = vmul.f32 1.0, %v5295
    %v5297 = vrcp.pop %v5294
    %v5298 = vmul.f32 1.0, %v5297
    %v5299 = vadd.f32 %v5251, %v704
    %v5300 = vmul.f32 %v5296, %v5299
    %v5301 = vadd.f32 %v5262, %v5300
    %v5302 = vtanh.pop %v5301
    %v5303 = vsub.f32 1.0, %v5298
    %v5304 = vmul.f32 %v5303, %v5302
    %v5305 = vmul.f32 %v5298, %v4553
    %v5306 = vadd.f32 %v5304, %v5305
    %v5307 = vsel %vm3014, %v5284, 0.0
    %s5308 = scalar_lea.vmem [#allocation11], 40
    %5309 = vst [vmem:[%s5308] sm:$0xff] %v5307
    %v5310 = vsel %vm3006, %v5306, 0.0
    %s5311 = scalar_lea.vmem [#allocation4], 16
    %5312 = vst [vmem:[%s5311] sm:$0xff] %v5310
    %v5313 = vsel %vm3014, %v5284, %v4552
    %v5314 = vsel %vm3006, %v5306, %v4553
    %v5315 = vpack.c.bf16 %v5313, %v5313
    %v5316 = vpack.c.bf16 %v5314, %v5314
    %v5317 = vld [vmem:[#allocation10] sm:$0xff]
    %v5318 = vld [vmem:[#allocation10 + $0x8] sm:$0xff]
    %v5319 = vld [vmem:[#allocation10 + $0x10] sm:$0xff]
    %v5320 = vld [vmem:[#allocation10 + $0x18] sm:$0xff]
    %v5321 = vld [vmem:[#allocation10 + $0x20] sm:$0xff]
    %v5322 = vld [vmem:[#allocation10 + $0x28] sm:$0xff]
    %v5323 = vld [vmem:[#allocation10 + $0x30] sm:$0xff]
    %v5324 = vld [vmem:[#allocation10 + $0x38] sm:$0xff]
    %v5325 = vld [vmem:[#allocation10 + $0x40] sm:$0xff]
    %v5326 = vld [vmem:[#allocation10 + $0x48] sm:$0xff]
    %v5327 = vld [vmem:[#allocation10 + $0x50] sm:$0xff]
    %v5328 = vld [vmem:[#allocation10 + $0x58] sm:$0xff]
    %v5329 = vld [vmem:[#allocation10 + $0x60] sm:$0xff]
    %v5330 = vld [vmem:[#allocation10 + $0x68] sm:$0xff]
    %v5331 = vld [vmem:[#allocation10 + $0x70] sm:$0xff]
    %v5332 = vld [vmem:[#allocation10 + $0x78] sm:$0xff]
    %v5333 = vld [vmem:[#allocation10 + $0x80] sm:$0xff]
    %v5334 = vld [vmem:[#allocation10 + $0x88] sm:$0xff]
    %v5335 = vld [vmem:[#allocation10 + $0x90] sm:$0xff]
    %v5336 = vld [vmem:[#allocation10 + $0x98] sm:$0xff]
    %v5337 = vld [vmem:[#allocation10 + $0xa0] sm:$0xff]
    %v5338 = vld [vmem:[#allocation10 + $0xa8] sm:$0xff]
    %v5339 = vld [vmem:[#allocation10 + $0xb0] sm:$0xff]
    %v5340 = vld [vmem:[#allocation10 + $0xb8] sm:$0xff]
    %v5341 = vld [vmem:[#allocation10 + $0xc0] sm:$0xff]
    %v5342 = vld [vmem:[#allocation10 + $0xc8] sm:$0xff]
    %v5343 = vld [vmem:[#allocation10 + $0xd0] sm:$0xff]
    %v5344 = vld [vmem:[#allocation10 + $0xd8] sm:$0xff]
    %v5345 = vld [vmem:[#allocation10 + $0xe0] sm:$0xff]
    %v5346 = vld [vmem:[#allocation10 + $0xe8] sm:$0xff]
    %v5347 = vld [vmem:[#allocation10 + $0xf0] sm:$0xff]
    %v5348 = vld [vmem:[#allocation10 + $0xf8] sm:$0xff]
    %v5349 = vld [vmem:[#allocation10 + $0x100] sm:$0xff]
    %v5350 = vld [vmem:[#allocation10 + $0x108] sm:$0xff]
    %v5351 = vld [vmem:[#allocation10 + $0x110] sm:$0xff]
    %v5352 = vld [vmem:[#allocation10 + $0x118] sm:$0xff]
    %v5353 = vld [vmem:[#allocation10 + $0x120] sm:$0xff]
    %v5354 = vld [vmem:[#allocation10 + $0x128] sm:$0xff]
    %v5355 = vld [vmem:[#allocation10 + $0x130] sm:$0xff]
    %v5356 = vld [vmem:[#allocation10 + $0x138] sm:$0xff]
    %v5357 = vld [vmem:[#allocation10 + $0x140] sm:$0xff]
    %v5358 = vld [vmem:[#allocation10 + $0x148] sm:$0xff]
    %v5359 = vld [vmem:[#allocation10 + $0x150] sm:$0xff]
    %v5360 = vld [vmem:[#allocation10 + $0x158] sm:$0xff]
    %v5361 = vld [vmem:[#allocation10 + $0x160] sm:$0xff]
    %v5362 = vld [vmem:[#allocation10 + $0x168] sm:$0xff]
    %v5363 = vld [vmem:[#allocation10 + $0x170] sm:$0xff]
    %v5364 = vld [vmem:[#allocation10 + $0x178] sm:$0xff]
    %v5365 = vld [vmem:[#allocation10 + $0x180] sm:$0xff]
    %v5366 = vld [vmem:[#allocation10 + $0x188] sm:$0xff]
    %v5367 = vld [vmem:[#allocation10 + $0x190] sm:$0xff]
    %v5368 = vld [vmem:[#allocation10 + $0x198] sm:$0xff]
    %v5369 = vld [vmem:[#allocation10 + $0x1a0] sm:$0xff]
    %v5370 = vld [vmem:[#allocation10 + $0x1a8] sm:$0xff]
    %v5371 = vld [vmem:[#allocation10 + $0x1b0] sm:$0xff]
    %v5372 = vld [vmem:[#allocation10 + $0x1b8] sm:$0xff]
    %v5373 = vld [vmem:[#allocation10 + $0x1c0] sm:$0xff]
    %v5374 = vld [vmem:[#allocation10 + $0x1c8] sm:$0xff]
    %v5375 = vld [vmem:[#allocation10 + $0x1d0] sm:$0xff]
    %v5376 = vld [vmem:[#allocation10 + $0x1d8] sm:$0xff]
    %v5377 = vld [vmem:[#allocation10 + $0x1e0] sm:$0xff]
    %v5378 = vld [vmem:[#allocation10 + $0x1e8] sm:$0xff]
    %v5379 = vld [vmem:[#allocation10 + $0x1f0] sm:$0xff]
    %v5380 = vld [vmem:[#allocation10 + $0x1f8] sm:$0xff]
    %v5381 = vld [vmem:[#allocation10 + $0x200] sm:$0xff]
    %v5382 = vld [vmem:[#allocation10 + $0x208] sm:$0xff]
    %v5383 = vld [vmem:[#allocation10 + $0x210] sm:$0xff]
    %v5384 = vld [vmem:[#allocation10 + $0x218] sm:$0xff]
    %v5385 = vld [vmem:[#allocation10 + $0x220] sm:$0xff]
    %v5386 = vld [vmem:[#allocation10 + $0x228] sm:$0xff]
    %v5387 = vld [vmem:[#allocation10 + $0x230] sm:$0xff]
    %v5388 = vld [vmem:[#allocation10 + $0x238] sm:$0xff]
    %v5389 = vld [vmem:[#allocation10 + $0x240] sm:$0xff]
    %v5390 = vld [vmem:[#allocation10 + $0x248] sm:$0xff]
    %v5391 = vld [vmem:[#allocation10 + $0x250] sm:$0xff]
    %v5392 = vld [vmem:[#allocation10 + $0x258] sm:$0xff]
    %v5393 = vld [vmem:[#allocation10 + $0x260] sm:$0xff]
    %v5394 = vld [vmem:[#allocation10 + $0x268] sm:$0xff]
    %v5395 = vld [vmem:[#allocation10 + $0x270] sm:$0xff]
    %v5396 = vld [vmem:[#allocation10 + $0x278] sm:$0xff]
    %v5397 = vld [vmem:[#allocation10 + $0x280] sm:$0xff]
    %v5398 = vld [vmem:[#allocation10 + $0x288] sm:$0xff]
    %v5399 = vld [vmem:[#allocation10 + $0x290] sm:$0xff]
    %v5400 = vld [vmem:[#allocation10 + $0x298] sm:$0xff]
    %v5401 = vld [vmem:[#allocation10 + $0x2a0] sm:$0xff]
    %v5402 = vld [vmem:[#allocation10 + $0x2a8] sm:$0xff]
    %v5403 = vld [vmem:[#allocation10 + $0x2b0] sm:$0xff]
    %v5404 = vld [vmem:[#allocation10 + $0x2b8] sm:$0xff]
    %v5405 = vld [vmem:[#allocation10 + $0x2c0] sm:$0xff]
    %v5406 = vld [vmem:[#allocation10 + $0x2c8] sm:$0xff]
    %v5407 = vld [vmem:[#allocation10 + $0x2d0] sm:$0xff]
    %v5408 = vld [vmem:[#allocation10 + $0x2d8] sm:$0xff]
    %v5409 = vld [vmem:[#allocation10 + $0x2e0] sm:$0xff]
    %v5410 = vld [vmem:[#allocation10 + $0x2e8] sm:$0xff]
    %v5411 = vld [vmem:[#allocation10 + $0x2f0] sm:$0xff]
    %v5412 = vld [vmem:[#allocation10 + $0x2f8] sm:$0xff]
    %v5509 = vunpack.c.l.b16 %v5317
    %v5510 = vunpack.c.h.b16 %v5317
    %v5511 = vunpack.c.l.b16 %v5318
    %v5512 = vunpack.c.h.b16 %v5318
    %v5513 = vunpack.c.l.b16 %v5319
    %v5514 = vunpack.c.h.b16 %v5319
    %v5515 = vunpack.c.l.b16 %v5320
    %v5516 = vunpack.c.h.b16 %v5320
    %v5517 = vunpack.c.l.b16 %v5321
    %v5518 = vunpack.c.h.b16 %v5321
    %v5519 = vunpack.c.l.b16 %v5322
    %v5520 = vunpack.c.h.b16 %v5322
    %v5521 = vunpack.c.l.b16 %v5323
    %v5522 = vunpack.c.h.b16 %v5323
    %v5523 = vunpack.c.l.b16 %v5324
    %v5524 = vunpack.c.h.b16 %v5324
    %v5525 = vunpack.c.l.b16 %v5325
    %v5526 = vunpack.c.h.b16 %v5325
    %v5527 = vunpack.c.l.b16 %v5326
    %v5528 = vunpack.c.h.b16 %v5326
    %v5529 = vunpack.c.l.b16 %v5327
    %v5530 = vunpack.c.h.b16 %v5327
    %v5531 = vunpack.c.l.b16 %v5328
    %v5532 = vunpack.c.h.b16 %v5328
    %v5533 = vunpack.c.l.b16 %v5329
    %v5534 = vunpack.c.h.b16 %v5329
    %v5535 = vunpack.c.l.b16 %v5330
    %v5536 = vunpack.c.h.b16 %v5330
    %v5537 = vunpack.c.l.b16 %v5331
    %v5538 = vunpack.c.h.b16 %v5331
    %v5539 = vunpack.c.l.b16 %v5332
    %v5540 = vunpack.c.h.b16 %v5332
    %v5541 = vunpack.c.l.b16 %v5333
    %v5542 = vunpack.c.h.b16 %v5333
    %v5543 = vunpack.c.l.b16 %v5334
    %v5544 = vunpack.c.h.b16 %v5334
    %v5545 = vunpack.c.l.b16 %v5335
    %v5546 = vunpack.c.h.b16 %v5335
    %v5547 = vunpack.c.l.b16 %v5336
    %v5548 = vunpack.c.h.b16 %v5336
    %v5549 = vunpack.c.l.b16 %v5337
    %v5550 = vunpack.c.h.b16 %v5337
    %v5551 = vunpack.c.l.b16 %v5338
    %v5552 = vunpack.c.h.b16 %v5338
    %v5553 = vunpack.c.l.b16 %v5339
    %v5554 = vunpack.c.h.b16 %v5339
    %v5555 = vunpack.c.l.b16 %v5340
    %v5556 = vunpack.c.h.b16 %v5340
    %v5557 = vunpack.c.l.b16 %v5341
    %v5558 = vunpack.c.h.b16 %v5341
    %v5559 = vunpack.c.l.b16 %v5342
    %v5560 = vunpack.c.h.b16 %v5342
    %v5561 = vunpack.c.l.b16 %v5343
    %v5562 = vunpack.c.h.b16 %v5343
    %v5563 = vunpack.c.l.b16 %v5344
    %v5564 = vunpack.c.h.b16 %v5344
    %v5565 = vunpack.c.l.b16 %v5345
    %v5566 = vunpack.c.h.b16 %v5345
    %v5567 = vunpack.c.l.b16 %v5346
    %v5568 = vunpack.c.h.b16 %v5346
    %v5569 = vunpack.c.l.b16 %v5347
    %v5570 = vunpack.c.h.b16 %v5347
    %v5571 = vunpack.c.l.b16 %v5348
    %v5572 = vunpack.c.h.b16 %v5348
    %v5573 = vunpack.c.l.b16 %v5349
    %v5574 = vunpack.c.h.b16 %v5349
    %v5575 = vunpack.c.l.b16 %v5350
    %v5576 = vunpack.c.h.b16 %v5350
    %v5577 = vunpack.c.l.b16 %v5351
    %v5578 = vunpack.c.h.b16 %v5351
    %v5579 = vunpack.c.l.b16 %v5352
    %v5580 = vunpack.c.h.b16 %v5352
    %v5581 = vunpack.c.l.b16 %v5353
    %v5582 = vunpack.c.h.b16 %v5353
    %v5583 = vunpack.c.l.b16 %v5354
    %v5584 = vunpack.c.h.b16 %v5354
    %v5585 = vunpack.c.l.b16 %v5355
    %v5586 = vunpack.c.h.b16 %v5355
    %v5587 = vunpack.c.l.b16 %v5356
    %v5588 = vunpack.c.h.b16 %v5356
    %v5589 = vunpack.c.l.b16 %v5357
    %v5590 = vunpack.c.h.b16 %v5357
    %v5591 = vunpack.c.l.b16 %v5358
    %v5592 = vunpack.c.h.b16 %v5358
    %v5593 = vunpack.c.l.b16 %v5359
    %v5594 = vunpack.c.h.b16 %v5359
    %v5595 = vunpack.c.l.b16 %v5360
    %v5596 = vunpack.c.h.b16 %v5360
    %v5597 = vunpack.c.l.b16 %v5361
    %v5598 = vunpack.c.h.b16 %v5361
    %v5599 = vunpack.c.l.b16 %v5362
    %v5600 = vunpack.c.h.b16 %v5362
    %v5601 = vunpack.c.l.b16 %v5363
    %v5602 = vunpack.c.h.b16 %v5363
    %v5603 = vunpack.c.l.b16 %v5364
    %v5604 = vunpack.c.h.b16 %v5364
    %v5605 = vunpack.c.l.b16 %v5365
    %v5606 = vunpack.c.h.b16 %v5365
    %v5607 = vunpack.c.l.b16 %v5366
    %v5608 = vunpack.c.h.b16 %v5366
    %v5609 = vunpack.c.l.b16 %v5367
    %v5610 = vunpack.c.h.b16 %v5367
    %v5611 = vunpack.c.l.b16 %v5368
    %v5612 = vunpack.c.h.b16 %v5368
    %v5613 = vunpack.c.l.b16 %v5369
    %v5614 = vunpack.c.h.b16 %v5369
    %v5615 = vunpack.c.l.b16 %v5370
    %v5616 = vunpack.c.h.b16 %v5370
    %v5617 = vunpack.c.l.b16 %v5371
    %v5618 = vunpack.c.h.b16 %v5371
    %v5619 = vunpack.c.l.b16 %v5372
    %v5620 = vunpack.c.h.b16 %v5372
    %v5621 = vunpack.c.l.b16 %v5373
    %v5622 = vunpack.c.h.b16 %v5373
    %v5623 = vunpack.c.l.b16 %v5374
    %v5624 = vunpack.c.h.b16 %v5374
    %v5625 = vunpack.c.l.b16 %v5375
    %v5626 = vunpack.c.h.b16 %v5375
    %v5627 = vunpack.c.l.b16 %v5376
    %v5628 = vunpack.c.h.b16 %v5376
    %v5629 = vunpack.c.l.b16 %v5377
    %v5630 = vunpack.c.h.b16 %v5377
    %v5631 = vunpack.c.l.b16 %v5378
    %v5632 = vunpack.c.h.b16 %v5378
    %v5633 = vunpack.c.l.b16 %v5379
    %v5634 = vunpack.c.h.b16 %v5379
    %v5635 = vunpack.c.l.b16 %v5380
    %v5636 = vunpack.c.h.b16 %v5380
    %v5637 = vunpack.c.l.b16 %v5381
    %v5638 = vunpack.c.h.b16 %v5381
    %v5639 = vunpack.c.l.b16 %v5382
    %v5640 = vunpack.c.h.b16 %v5382
    %v5641 = vunpack.c.l.b16 %v5383
    %v5642 = vunpack.c.h.b16 %v5383
    %v5643 = vunpack.c.l.b16 %v5384
    %v5644 = vunpack.c.h.b16 %v5384
    %v5645 = vunpack.c.l.b16 %v5385
    %v5646 = vunpack.c.h.b16 %v5385
    %v5647 = vunpack.c.l.b16 %v5386
    %v5648 = vunpack.c.h.b16 %v5386
    %v5649 = vunpack.c.l.b16 %v5387
    %v5650 = vunpack.c.h.b16 %v5387
    %v5651 = vunpack.c.l.b16 %v5388
    %v5652 = vunpack.c.h.b16 %v5388
    %v5653 = vunpack.c.l.b16 %v5389
    %v5654 = vunpack.c.h.b16 %v5389
    %v5655 = vunpack.c.l.b16 %v5390
    %v5656 = vunpack.c.h.b16 %v5390
    %v5657 = vunpack.c.l.b16 %v5391
    %v5658 = vunpack.c.h.b16 %v5391
    %v5659 = vunpack.c.l.b16 %v5392
    %v5660 = vunpack.c.h.b16 %v5392
    %v5661 = vunpack.c.l.b16 %v5393
    %v5662 = vunpack.c.h.b16 %v5393
    %v5663 = vunpack.c.l.b16 %v5394
    %v5664 = vunpack.c.h.b16 %v5394
    %v5665 = vunpack.c.l.b16 %v5395
    %v5666 = vunpack.c.h.b16 %v5395
    %v5667 = vunpack.c.l.b16 %v5396
    %v5668 = vunpack.c.h.b16 %v5396
    %v5669 = vunpack.c.l.b16 %v5397
    %v5670 = vunpack.c.h.b16 %v5397
    %v5671 = vunpack.c.l.b16 %v5398
    %v5672 = vunpack.c.h.b16 %v5398
    %v5673 = vunpack.c.l.b16 %v5399
    %v5674 = vunpack.c.h.b16 %v5399
    %v5675 = vunpack.c.l.b16 %v5400
    %v5676 = vunpack.c.h.b16 %v5400
    %v5677 = vunpack.c.l.b16 %v5401
    %v5678 = vunpack.c.h.b16 %v5401
    %v5679 = vunpack.c.l.b16 %v5402
    %v5680 = vunpack.c.h.b16 %v5402
    %v5681 = vunpack.c.l.b16 %v5403
    %v5682 = vunpack.c.h.b16 %v5403
    %v5683 = vunpack.c.l.b16 %v5404
    %v5684 = vunpack.c.h.b16 %v5404
    %v5685 = vunpack.c.l.b16 %v5405
    %v5686 = vunpack.c.h.b16 %v5405
    %v5687 = vunpack.c.l.b16 %v5406
    %v5688 = vunpack.c.h.b16 %v5406
    %v5689 = vunpack.c.l.b16 %v5407
    %v5690 = vunpack.c.h.b16 %v5407
    %v5691 = vunpack.c.l.b16 %v5408
    %v5692 = vunpack.c.h.b16 %v5408
    %v5693 = vunpack.c.l.b16 %v5409
    %v5694 = vunpack.c.h.b16 %v5409
    %v5695 = vunpack.c.l.b16 %v5410
    %v5696 = vunpack.c.h.b16 %v5410
    %v5697 = vunpack.c.l.b16 %v5411
    %v5698 = vunpack.c.h.b16 %v5411
    %v5699 = vunpack.c.l.b16 %v5412
    %v5700 = vunpack.c.h.b16 %v5412
    %v5701 = vpack.c.b16 %v5515, %v5509
    %v5702 = vpack.c.b16 %v5516, %v5510
    %v5703 = vpack.c.b16 %v5517, %v5511
    %v5704 = vpack.c.b16 %v5518, %v5512
    %v5705 = vpack.c.b16 %v5519, %v5513
    %v5706 = vpack.c.b16 %v5520, %v5514
    %v5707 = vpack.c.b16 %v5527, %v5521
    %v5708 = vpack.c.b16 %v5528, %v5522
    %v5709 = vpack.c.b16 %v5529, %v5523
    %v5710 = vpack.c.b16 %v5530, %v5524
    %v5711 = vpack.c.b16 %v5531, %v5525
    %v5712 = vpack.c.b16 %v5532, %v5526
    %v5713 = vpack.c.b16 %v5539, %v5533
    %v5714 = vpack.c.b16 %v5540, %v5534
    %v5715 = vpack.c.b16 %v5541, %v5535
    %v5716 = vpack.c.b16 %v5542, %v5536
    %v5717 = vpack.c.b16 %v5543, %v5537
    %v5718 = vpack.c.b16 %v5544, %v5538
    %v5719 = vpack.c.b16 %v5551, %v5545
    %v5720 = vpack.c.b16 %v5552, %v5546
    %v5721 = vpack.c.b16 %v5553, %v5547
    %v5722 = vpack.c.b16 %v5554, %v5548
    %v5723 = vpack.c.b16 %v5555, %v5549
    %v5724 = vpack.c.b16 %v5556, %v5550
    %v5725 = vpack.c.b16 %v5563, %v5557
    %v5726 = vpack.c.b16 %v5564, %v5558
    %v5727 = vpack.c.b16 %v5565, %v5559
    %v5728 = vpack.c.b16 %v5566, %v5560
    %v5729 = vpack.c.b16 %v5567, %v5561
    %v5730 = vpack.c.b16 %v5568, %v5562
    %v5731 = vpack.c.b16 %v5575, %v5569
    %v5732 = vpack.c.b16 %v5576, %v5570
    %v5733 = vpack.c.b16 %v5577, %v5571
    %v5734 = vpack.c.b16 %v5578, %v5572
    %v5735 = vpack.c.b16 %v5579, %v5573
    %v5736 = vpack.c.b16 %v5580, %v5574
    %v5737 = vpack.c.b16 %v5587, %v5581
    %v5738 = vpack.c.b16 %v5588, %v5582
    %v5739 = vpack.c.b16 %v5589, %v5583
    %v5740 = vpack.c.b16 %v5590, %v5584
    %v5741 = vpack.c.b16 %v5591, %v5585
    %v5742 = vpack.c.b16 %v5592, %v5586
    %v5743 = vpack.c.b16 %v5599, %v5593
    %v5744 = vpack.c.b16 %v5600, %v5594
    %v5745 = vpack.c.b16 %v5601, %v5595
    %v5746 = vpack.c.b16 %v5602, %v5596
    %v5747 = vpack.c.b16 %v5603, %v5597
    %v5748 = vpack.c.b16 %v5604, %v5598
    %v5749 = vpack.c.b16 %v5611, %v5605
    %v5750 = vpack.c.b16 %v5612, %v5606
    %v5751 = vpack.c.b16 %v5613, %v5607
    %v5752 = vpack.c.b16 %v5614, %v5608
    %v5753 = vpack.c.b16 %v5615, %v5609
    %v5754 = vpack.c.b16 %v5616, %v5610
    %v5755 = vpack.c.b16 %v5623, %v5617
    %v5756 = vpack.c.b16 %v5624, %v5618
    %v5757 = vpack.c.b16 %v5625, %v5619
    %v5758 = vpack.c.b16 %v5626, %v5620
    %v5759 = vpack.c.b16 %v5627, %v5621
    %v5760 = vpack.c.b16 %v5628, %v5622
    %v5761 = vpack.c.b16 %v5635, %v5629
    %v5762 = vpack.c.b16 %v5636, %v5630
    %v5763 = vpack.c.b16 %v5637, %v5631
    %v5764 = vpack.c.b16 %v5638, %v5632
    %v5765 = vpack.c.b16 %v5639, %v5633
    %v5766 = vpack.c.b16 %v5640, %v5634
    %v5767 = vpack.c.b16 %v5647, %v5641
    %v5768 = vpack.c.b16 %v5648, %v5642
    %v5769 = vpack.c.b16 %v5649, %v5643
    %v5770 = vpack.c.b16 %v5650, %v5644
    %v5771 = vpack.c.b16 %v5651, %v5645
    %v5772 = vpack.c.b16 %v5652, %v5646
    %v5773 = vpack.c.b16 %v5659, %v5653
    %v5774 = vpack.c.b16 %v5660, %v5654
    %v5775 = vpack.c.b16 %v5661, %v5655
    %v5776 = vpack.c.b16 %v5662, %v5656
    %v5777 = vpack.c.b16 %v5663, %v5657
    %v5778 = vpack.c.b16 %v5664, %v5658
    %v5779 = vpack.c.b16 %v5671, %v5665
    %v5780 = vpack.c.b16 %v5672, %v5666
    %v5781 = vpack.c.b16 %v5673, %v5667
    %v5782 = vpack.c.b16 %v5674, %v5668
    %v5783 = vpack.c.b16 %v5675, %v5669
    %v5784 = vpack.c.b16 %v5676, %v5670
    %v5785 = vpack.c.b16 %v5683, %v5677
    %v5786 = vpack.c.b16 %v5684, %v5678
    %v5787 = vpack.c.b16 %v5685, %v5679
    %v5788 = vpack.c.b16 %v5686, %v5680
    %v5789 = vpack.c.b16 %v5687, %v5681
    %v5790 = vpack.c.b16 %v5688, %v5682
    %v5791 = vpack.c.b16 %v5695, %v5689
    %v5792 = vpack.c.b16 %v5696, %v5690
    %v5793 = vpack.c.b16 %v5697, %v5691
    %v5794 = vpack.c.b16 %v5698, %v5692
    %v5795 = vpack.c.b16 %v5699, %v5693
    %v5796 = vpack.c.b16 %v5700, %v5694
    %5893 = vmatprep.subr.bf16.mxu0 %v5702
    %5894 = vmatpush1.bf16.msra.mxu0 %v5701
    %5895 = vmatprep.subr.bf16.mxu0 %v5708
    %5896 = vmatpush1.bf16.msra.mxu0 %v5707
    %5897 = vmatprep.subr.bf16.mxu0 %v5714
    %5898 = vmatpush1.bf16.msra.mxu0 %v5713
    %5899 = vmatprep.subr.bf16.mxu0 %v5720
    %5900 = vmatpush1.bf16.msra.mxu0 %v5719
    %5901 = vmatprep.subr.bf16.mxu0 %v5726
    %5902 = vmatpush1.bf16.msra.mxu0 %v5725
    %5903 = vmatprep.subr.bf16.mxu0 %v5732
    %5904 = vmatpush1.bf16.msra.mxu0 %v5731
    %5905 = vmatprep.subr.bf16.mxu0 %v5738
    %5906 = vmatpush1.bf16.msra.mxu0 %v5737
    %5907 = vmatprep.subr.bf16.mxu0 %v5744
    %5908 = vmatpush1.bf16.msra.mxu0 %v5743
    %5909 = vmatprep.subr.bf16.mxu0 %v5750
    %5910 = vmatpush1.bf16.msra.mxu0 %v5749
    %5911 = vmatprep.subr.bf16.mxu0 %v5756
    %5912 = vmatpush1.bf16.msra.mxu0 %v5755
    %5913 = vmatprep.subr.bf16.mxu0 %v5762
    %5914 = vmatpush1.bf16.msra.mxu0 %v5761
    %5915 = vmatprep.subr.bf16.mxu0 %v5768
    %5916 = vmatpush1.bf16.msra.mxu0 %v5767
    %5917 = vmatprep.subr.bf16.mxu0 %v5774
    %5918 = vmatpush1.bf16.msra.mxu0 %v5773
    %5919 = vmatprep.subr.bf16.mxu0 %v5780
    %5920 = vmatpush1.bf16.msra.mxu0 %v5779
    %5921 = vmatprep.subr.bf16.mxu0 %v5786
    %5922 = vmatpush1.bf16.msra.mxu0 %v5785
    %5923 = vmatprep.subr.bf16.mxu0 %v5792
    %5924 = vmatpush1.bf16.msra.mxu0 %v5791
    %5925 = vmatprep.mubr.bf16.mxu0 %v5316
    %5926 = vmatmul.mubr.bf16.gmra.mrb[0].mxu0 %v5315
    %v5927 = vpop.f32.mrb[0].mxu0
    %v5928 = vadd.f32 0.0, %v5927
    %v5929 = vpop.f32.mrb[0].mxu0
    %v5930 = vadd.f32 0.0, %v5929
    %v5931 = vpop.f32.mrb[0].mxu0
    %v5932 = vpop.f32.mrb[0].mxu0
    %5933 = vdwg.mxu0
    %5934 = vmatprep.subr.bf16.mxu0 %v5704
    %5935 = vmatpush1.bf16.msra.mxu0 %v5703
    %5936 = vmatprep.subr.bf16.mxu0 %v5710
    %5937 = vmatpush1.bf16.msra.mxu0 %v5709
    %5938 = vmatprep.subr.bf16.mxu0 %v5716
    %5939 = vmatpush1.bf16.msra.mxu0 %v5715
    %5940 = vmatprep.subr.bf16.mxu0 %v5722
    %5941 = vmatpush1.bf16.msra.mxu0 %v5721
    %5942 = vmatprep.subr.bf16.mxu0 %v5728
    %5943 = vmatpush1.bf16.msra.mxu0 %v5727
    %5944 = vmatprep.subr.bf16.mxu0 %v5734
    %5945 = vmatpush1.bf16.msra.mxu0 %v5733
    %5946 = vmatprep.subr.bf16.mxu0 %v5740
    %5947 = vmatpush1.bf16.msra.mxu0 %v5739
    %5948 = vmatprep.subr.bf16.mxu0 %v5746
    %5949 = vmatpush1.bf16.msra.mxu0 %v5745
    %5950 = vmatprep.subr.bf16.mxu0 %v5752
    %5951 = vmatpush1.bf16.msra.mxu0 %v5751
    %5952 = vmatprep.subr.bf16.mxu0 %v5758
    %5953 = vmatpush1.bf16.msra.mxu0 %v5757
    %5954 = vmatprep.subr.bf16.mxu0 %v5764
    %5955 = vmatpush1.bf16.msra.mxu0 %v5763
    %5956 = vmatprep.subr.bf16.mxu0 %v5770
    %5957 = vmatpush1.bf16.msra.mxu0 %v5769
    %5958 = vmatprep.subr.bf16.mxu0 %v5776
    %5959 = vmatpush1.bf16.msra.mxu0 %v5775
    %5960 = vmatprep.subr.bf16.mxu0 %v5782
    %5961 = vmatpush1.bf16.msra.mxu0 %v5781
    %5962 = vmatprep.subr.bf16.mxu0 %v5788
    %5963 = vmatpush1.bf16.msra.mxu0 %v5787
    %5964 = vmatprep.subr.bf16.mxu0 %v5794
    %5965 = vmatpush1.bf16.msra.mxu0 %v5793
    %5966 = vmatprep.mubr.bf16.mxu0 %v5316
    %5967 = vmatmul.mubr.bf16.gmra.mrb[0].mxu0 %v5315
    %v5968 = vpop.f32.mrb[0].mxu0
    %v5969 = vadd.f32 0.0, %v5968
    %v5970 = vpop.f32.mrb[0].mxu0
    %v5971 = vadd.f32 0.0, %v5970
    %v5972 = vpop.f32.mrb[0].mxu0
    %v5973 = vpop.f32.mrb[0].mxu0
    %5974 = vdwg.mxu0
    %5975 = vmatprep.subr.bf16.mxu0 %v5706
    %5976 = vmatpush1.bf16.msra.mxu0 %v5705
    %5977 = vmatprep.subr.bf16.mxu0 %v5712
    %5978 = vmatpush1.bf16.msra.mxu0 %v5711
    %5979 = vmatprep.subr.bf16.mxu0 %v5718
    %5980 = vmatpush1.bf16.msra.mxu0 %v5717
    %5981 = vmatprep.subr.bf16.mxu0 %v5724
    %5982 = vmatpush1.bf16.msra.mxu0 %v5723
    %5983 = vmatprep.subr.bf16.mxu0 %v5730
    %5984 = vmatpush1.bf16.msra.mxu0 %v5729
    %5985 = vmatprep.subr.bf16.mxu0 %v5736
    %5986 = vmatpush1.bf16.msra.mxu0 %v5735
    %5987 = vmatprep.subr.bf16.mxu0 %v5742
    %5988 = vmatpush1.bf16.msra.mxu0 %v5741
    %5989 = vmatprep.subr.bf16.mxu0 %v5748
    %5990 = vmatpush1.bf16.msra.mxu0 %v5747
    %5991 = vmatprep.subr.bf16.mxu0 %v5754
    %5992 = vmatpush1.bf16.msra.mxu0 %v5753
    %5993 = vmatprep.subr.bf16.mxu0 %v5760
    %5994 = vmatpush1.bf16.msra.mxu0 %v5759
    %5995 = vmatprep.subr.bf16.mxu0 %v5766
    %5996 = vmatpush1.bf16.msra.mxu0 %v5765
    %5997 = vmatprep.subr.bf16.mxu0 %v5772
    %5998 = vmatpush1.bf16.msra.mxu0 %v5771
    %5999 = vmatprep.subr.bf16.mxu0 %v5778
    %6000 = vmatpush1.bf16.msra.mxu0 %v5777
    %6001 = vmatprep.subr.bf16.mxu0 %v5784
    %6002 = vmatpush1.bf16.msra.mxu0 %v5783
    %6003 = vmatprep.subr.bf16.mxu0 %v5790
    %6004 = vmatpush1.bf16.msra.mxu0 %v5789
    %6005 = vmatprep.subr.bf16.mxu0 %v5796
    %6006 = vmatpush1.bf16.msra.mxu0 %v5795
    %6007 = vmatprep.mubr.bf16.mxu0 %v5316
    %6008 = vmatmul.mubr.bf16.gmra.mrb[0].mxu0 %v5315
    %v6009 = vpop.f32.mrb[0].mxu0
    %v6010 = vadd.f32 0.0, %v6009
    %v6011 = vpop.f32.mrb[0].mxu0
    %v6012 = vadd.f32 0.0, %v6011
    %v6013 = vpop.f32.mrb[0].mxu0
    %v6014 = vpop.f32.mrb[0].mxu0
    %6015 = vdwg.mxu0
    %s6016 = scalar_lea.vmem [#allocation2], 144
    %v6017 = vld [vmem:[%s6016] sm:$0xff]
    %v6018 = vld [vmem:[%s6016 + $0x8] sm:$0xff]
    %v6019 = vld [vmem:[%s6016 + $0x10] sm:$0xff]
    %s6020 = scalar_lea.vmem [#allocation3], 24
    %v6021 = vld [vmem:[%s6020] sm:$0xff]
    %v6022 = vld [vmem:[%s6020 + $0x8] sm:$0xff]
    %v6023 = vld [vmem:[%s6020 + $0x10] sm:$0xff]
    %v6024 = vadd.f32 %v6017, %v5928
    %v6025 = vadd.f32 %v6018, %v5930
    %v6026 = vxor.u32 %v6024, 2147483648
    %v6027 = vxor.u32 %v6025, 2147483648
    %v6028 = vmul.f32 %v6026, 1.442695
    %v6029 = vpow.pop %v6028
    %v6030 = vmul.f32 %v6027, 1.442695
    %v6031 = vpow.pop %v6030
    %v6032 = vadd.f32 %v6029, 1.0
    %v6033 = vadd.f32 %v6031, 1.0
    %v6034 = vrcp.pop %v6032
    %v6035 = vmul.f32 1.0, %v6034
    %v6036 = vrcp.pop %v6033
    %v6037 = vmul.f32 1.0, %v6036
    %v6038 = vadd.f32 %v5969, %v697
    %v6039 = vmul.f32 %v6035, %v6038
    %v6040 = vadd.f32 %v6019, %v6039
    %v6041 = vtanh.pop %v6040
    %v6042 = vsub.f32 1.0, %v6037
    %v6043 = vmul.f32 %v6042, %v6041
    %v6044 = vmul.f32 %v6037, %v5313
    %v6045 = vadd.f32 %v6043, %v6044
    %v6046 = vadd.f32 %v6021, %v5971
    %v6047 = vadd.f32 %v6022, %v6010
    %v6048 = vxor.u32 %v6046, 2147483648
    %v6049 = vxor.u32 %v6047, 2147483648
    %v6050 = vmul.f32 %v6048, 1.442695
    %v6051 = vpow.pop %v6050
    %v6052 = vmul.f32 %v6049, 1.442695
    %v6053 = vpow.pop %v6052
    %v6054 = vadd.f32 %v6051, 1.0
    %v6055 = vadd.f32 %v6053, 1.0
    %v6056 = vrcp.pop %v6054
    %v6057 = vmul.f32 1.0, %v6056
    %v6058 = vrcp.pop %v6055
    %v6059 = vmul.f32 1.0, %v6058
    %v6060 = vadd.f32 %v6012, %v704
    %v6061 = vmul.f32 %v6057, %v6060
    %v6062 = vadd.f32 %v6023, %v6061
    %v6063 = vtanh.pop %v6062
    %v6064 = vsub.f32 1.0, %v6059
    %v6065 = vmul.f32 %v6064, %v6063
    %v6066 = vmul.f32 %v6059, %v5314
    %v6067 = vadd.f32 %v6065, %v6066
    %v6068 = vsel %vm2241, %v6045, 0.0
    %s6069 = scalar_lea.vmem [#allocation11], 48
    %6070 = vst [vmem:[%s6069] sm:$0xff] %v6068
    %v6071 = vsel %vm2233, %v6067, 0.0
    %s6072 = scalar_lea.vmem [#allocation4], 8
    %6073 = vst [vmem:[%s6072] sm:$0xff] %v6071
    %v6074 = vsel %vm2241, %v6045, %v5313
    %v6075 = vsel %vm2233, %v6067, %v5314
    %v6076 = vpack.c.bf16 %v6074, %v6074
    %v6077 = vpack.c.bf16 %v6075, %v6075
    %v6078 = vld [vmem:[#allocation10] sm:$0xff]
    %v6079 = vld [vmem:[#allocation10 + $0x8] sm:$0xff]
    %v6080 = vld [vmem:[#allocation10 + $0x10] sm:$0xff]
    %v6081 = vld [vmem:[#allocation10 + $0x18] sm:$0xff]
    %v6082 = vld [vmem:[#allocation10 + $0x20] sm:$0xff]
    %v6083 = vld [vmem:[#allocation10 + $0x28] sm:$0xff]
    %v6084 = vld [vmem:[#allocation10 + $0x30] sm:$0xff]
    %v6085 = vld [vmem:[#allocation10 + $0x38] sm:$0xff]
    %v6086 = vld [vmem:[#allocation10 + $0x40] sm:$0xff]
    %v6087 = vld [vmem:[#allocation10 + $0x48] sm:$0xff]
    %v6088 = vld [vmem:[#allocation10 + $0x50] sm:$0xff]
    %v6089 = vld [vmem:[#allocation10 + $0x58] sm:$0xff]
    %v6090 = vld [vmem:[#allocation10 + $0x60] sm:$0xff]
    %v6091 = vld [vmem:[#allocation10 + $0x68] sm:$0xff]
    %v6092 = vld [vmem:[#allocation10 + $0x70] sm:$0xff]
    %v6093 = vld [vmem:[#allocation10 + $0x78] sm:$0xff]
    %v6094 = vld [vmem:[#allocation10 + $0x80] sm:$0xff]
    %v6095 = vld [vmem:[#allocation10 + $0x88] sm:$0xff]
    %v6096 = vld [vmem:[#allocation10 + $0x90] sm:$0xff]
    %v6097 = vld [vmem:[#allocation10 + $0x98] sm:$0xff]
    %v6098 = vld [vmem:[#allocation10 + $0xa0] sm:$0xff]
    %v6099 = vld [vmem:[#allocation10 + $0xa8] sm:$0xff]
    %v6100 = vld [vmem:[#allocation10 + $0xb0] sm:$0xff]
    %v6101 = vld [vmem:[#allocation10 + $0xb8] sm:$0xff]
    %v6102 = vld [vmem:[#allocation10 + $0xc0] sm:$0xff]
    %v6103 = vld [vmem:[#allocation10 + $0xc8] sm:$0xff]
    %v6104 = vld [vmem:[#allocation10 + $0xd0] sm:$0xff]
    %v6105 = vld [vmem:[#allocation10 + $0xd8] sm:$0xff]
    %v6106 = vld [vmem:[#allocation10 + $0xe0] sm:$0xff]
    %v6107 = vld [vmem:[#allocation10 + $0xe8] sm:$0xff]
    %v6108 = vld [vmem:[#allocation10 + $0xf0] sm:$0xff]
    %v6109 = vld [vmem:[#allocation10 + $0xf8] sm:$0xff]
    %v6110 = vld [vmem:[#allocation10 + $0x100] sm:$0xff]
    %v6111 = vld [vmem:[#allocation10 + $0x108] sm:$0xff]
    %v6112 = vld [vmem:[#allocation10 + $0x110] sm:$0xff]
    %v6113 = vld [vmem:[#allocation10 + $0x118] sm:$0xff]
    %v6114 = vld [vmem:[#allocation10 + $0x120] sm:$0xff]
    %v6115 = vld [vmem:[#allocation10 + $0x128] sm:$0xff]
    %v6116 = vld [vmem:[#allocation10 + $0x130] sm:$0xff]
    %v6117 = vld [vmem:[#allocation10 + $0x138] sm:$0xff]
    %v6118 = vld [vmem:[#allocation10 + $0x140] sm:$0xff]
    %v6119 = vld [vmem:[#allocation10 + $0x148] sm:$0xff]
    %v6120 = vld [vmem:[#allocation10 + $0x150] sm:$0xff]
    %v6121 = vld [vmem:[#allocation10 + $0x158] sm:$0xff]
    %v6122 = vld [vmem:[#allocation10 + $0x160] sm:$0xff]
    %v6123 = vld [vmem:[#allocation10 + $0x168] sm:$0xff]
    %v6124 = vld [vmem:[#allocation10 + $0x170] sm:$0xff]
    %v6125 = vld [vmem:[#allocation10 + $0x178] sm:$0xff]
    %v6126 = vld [vmem:[#allocation10 + $0x180] sm:$0xff]
    %v6127 = vld [vmem:[#allocation10 + $0x188] sm:$0xff]
    %v6128 = vld [vmem:[#allocation10 + $0x190] sm:$0xff]
    %v6129 = vld [vmem:[#allocation10 + $0x198] sm:$0xff]
    %v6130 = vld [vmem:[#allocation10 + $0x1a0] sm:$0xff]
    %v6131 = vld [vmem:[#allocation10 + $0x1a8] sm:$0xff]
    %v6132 = vld [vmem:[#allocation10 + $0x1b0] sm:$0xff]
    %v6133 = vld [vmem:[#allocation10 + $0x1b8] sm:$0xff]
    %v6134 = vld [vmem:[#allocation10 + $0x1c0] sm:$0xff]
    %v6135 = vld [vmem:[#allocation10 + $0x1c8] sm:$0xff]
    %v6136 = vld [vmem:[#allocation10 + $0x1d0] sm:$0xff]
    %v6137 = vld [vmem:[#allocation10 + $0x1d8] sm:$0xff]
    %v6138 = vld [vmem:[#allocation10 + $0x1e0] sm:$0xff]
    %v6139 = vld [vmem:[#allocation10 + $0x1e8] sm:$0xff]
    %v6140 = vld [vmem:[#allocation10 + $0x1f0] sm:$0xff]
    %v6141 = vld [vmem:[#allocation10 + $0x1f8] sm:$0xff]
    %v6142 = vld [vmem:[#allocation10 + $0x200] sm:$0xff]
    %v6143 = vld [vmem:[#allocation10 + $0x208] sm:$0xff]
    %v6144 = vld [vmem:[#allocation10 + $0x210] sm:$0xff]
    %v6145 = vld [vmem:[#allocation10 + $0x218] sm:$0xff]
    %v6146 = vld [vmem:[#allocation10 + $0x220] sm:$0xff]
    %v6147 = vld [vmem:[#allocation10 + $0x228] sm:$0xff]
    %v6148 = vld [vmem:[#allocation10 + $0x230] sm:$0xff]
    %v6149 = vld [vmem:[#allocation10 + $0x238] sm:$0xff]
    %v6150 = vld [vmem:[#allocation10 + $0x240] sm:$0xff]
    %v6151 = vld [vmem:[#allocation10 + $0x248] sm:$0xff]
    %v6152 = vld [vmem:[#allocation10 + $0x250] sm:$0xff]
    %v6153 = vld [vmem:[#allocation10 + $0x258] sm:$0xff]
    %v6154 = vld [vmem:[#allocation10 + $0x260] sm:$0xff]
    %v6155 = vld [vmem:[#allocation10 + $0x268] sm:$0xff]
    %v6156 = vld [vmem:[#allocation10 + $0x270] sm:$0xff]
    %v6157 = vld [vmem:[#allocation10 + $0x278] sm:$0xff]
    %v6158 = vld [vmem:[#allocation10 + $0x280] sm:$0xff]
    %v6159 = vld [vmem:[#allocation10 + $0x288] sm:$0xff]
    %v6160 = vld [vmem:[#allocation10 + $0x290] sm:$0xff]
    %v6161 = vld [vmem:[#allocation10 + $0x298] sm:$0xff]
    %v6162 = vld [vmem:[#allocation10 + $0x2a0] sm:$0xff]
    %v6163 = vld [vmem:[#allocation10 + $0x2a8] sm:$0xff]
    %v6164 = vld [vmem:[#allocation10 + $0x2b0] sm:$0xff]
    %v6165 = vld [vmem:[#allocation10 + $0x2b8] sm:$0xff]
    %v6166 = vld [vmem:[#allocation10 + $0x2c0] sm:$0xff]
    %v6167 = vld [vmem:[#allocation10 + $0x2c8] sm:$0xff]
    %v6168 = vld [vmem:[#allocation10 + $0x2d0] sm:$0xff]
    %v6169 = vld [vmem:[#allocation10 + $0x2d8] sm:$0xff]
    %v6170 = vld [vmem:[#allocation10 + $0x2e0] sm:$0xff]
    %v6171 = vld [vmem:[#allocation10 + $0x2e8] sm:$0xff]
    %v6172 = vld [vmem:[#allocation10 + $0x2f0] sm:$0xff]
    %v6173 = vld [vmem:[#allocation10 + $0x2f8] sm:$0xff]
    %v6270 = vunpack.c.l.b16 %v6078
    %v6271 = vunpack.c.h.b16 %v6078
    %v6272 = vunpack.c.l.b16 %v6079
    %v6273 = vunpack.c.h.b16 %v6079
    %v6274 = vunpack.c.l.b16 %v6080
    %v6275 = vunpack.c.h.b16 %v6080
    %v6276 = vunpack.c.l.b16 %v6081
    %v6277 = vunpack.c.h.b16 %v6081
    %v6278 = vunpack.c.l.b16 %v6082
    %v6279 = vunpack.c.h.b16 %v6082
    %v6280 = vunpack.c.l.b16 %v6083
    %v6281 = vunpack.c.h.b16 %v6083
    %v6282 = vunpack.c.l.b16 %v6084
    %v6283 = vunpack.c.h.b16 %v6084
    %v6284 = vunpack.c.l.b16 %v6085
    %v6285 = vunpack.c.h.b16 %v6085
    %v6286 = vunpack.c.l.b16 %v6086
    %v6287 = vunpack.c.h.b16 %v6086
    %v6288 = vunpack.c.l.b16 %v6087
    %v6289 = vunpack.c.h.b16 %v6087
    %v6290 = vunpack.c.l.b16 %v6088
    %v6291 = vunpack.c.h.b16 %v6088
    %v6292 = vunpack.c.l.b16 %v6089
    %v6293 = vunpack.c.h.b16 %v6089
    %v6294 = vunpack.c.l.b16 %v6090
    %v6295 = vunpack.c.h.b16 %v6090
    %v6296 = vunpack.c.l.b16 %v6091
    %v6297 = vunpack.c.h.b16 %v6091
    %v6298 = vunpack.c.l.b16 %v6092
    %v6299 = vunpack.c.h.b16 %v6092
    %v6300 = vunpack.c.l.b16 %v6093
    %v6301 = vunpack.c.h.b16 %v6093
    %v6302 = vunpack.c.l.b16 %v6094
    %v6303 = vunpack.c.h.b16 %v6094
    %v6304 = vunpack.c.l.b16 %v6095
    %v6305 = vunpack.c.h.b16 %v6095
    %v6306 = vunpack.c.l.b16 %v6096
    %v6307 = vunpack.c.h.b16 %v6096
    %v6308 = vunpack.c.l.b16 %v6097
    %v6309 = vunpack.c.h.b16 %v6097
    %v6310 = vunpack.c.l.b16 %v6098
    %v6311 = vunpack.c.h.b16 %v6098
    %v6312 = vunpack.c.l.b16 %v6099
    %v6313 = vunpack.c.h.b16 %v6099
    %v6314 = vunpack.c.l.b16 %v6100
    %v6315 = vunpack.c.h.b16 %v6100
    %v6316 = vunpack.c.l.b16 %v6101
    %v6317 = vunpack.c.h.b16 %v6101
    %v6318 = vunpack.c.l.b16 %v6102
    %v6319 = vunpack.c.h.b16 %v6102
    %v6320 = vunpack.c.l.b16 %v6103
    %v6321 = vunpack.c.h.b16 %v6103
    %v6322 = vunpack.c.l.b16 %v6104
    %v6323 = vunpack.c.h.b16 %v6104
    %v6324 = vunpack.c.l.b16 %v6105
    %v6325 = vunpack.c.h.b16 %v6105
    %v6326 = vunpack.c.l.b16 %v6106
    %v6327 = vunpack.c.h.b16 %v6106
    %v6328 = vunpack.c.l.b16 %v6107
    %v6329 = vunpack.c.h.b16 %v6107
    %v6330 = vunpack.c.l.b16 %v6108
    %v6331 = vunpack.c.h.b16 %v6108
    %v6332 = vunpack.c.l.b16 %v6109
    %v6333 = vunpack.c.h.b16 %v6109
    %v6334 = vunpack.c.l.b16 %v6110
    %v6335 = vunpack.c.h.b16 %v6110
    %v6336 = vunpack.c.l.b16 %v6111
    %v6337 = vunpack.c.h.b16 %v6111
    %v6338 = vunpack.c.l.b16 %v6112
    %v6339 = vunpack.c.h.b16 %v6112
    %v6340 = vunpack.c.l.b16 %v6113
    %v6341 = vunpack.c.h.b16 %v6113
    %v6342 = vunpack.c.l.b16 %v6114
    %v6343 = vunpack.c.h.b16 %v6114
    %v6344 = vunpack.c.l.b16 %v6115
    %v6345 = vunpack.c.h.b16 %v6115
    %v6346 = vunpack.c.l.b16 %v6116
    %v6347 = vunpack.c.h.b16 %v6116
    %v6348 = vunpack.c.l.b16 %v6117
    %v6349 = vunpack.c.h.b16 %v6117
    %v6350 = vunpack.c.l.b16 %v6118
    %v6351 = vunpack.c.h.b16 %v6118
    %v6352 = vunpack.c.l.b16 %v6119
    %v6353 = vunpack.c.h.b16 %v6119
    %v6354 = vunpack.c.l.b16 %v6120
    %v6355 = vunpack.c.h.b16 %v6120
    %v6356 = vunpack.c.l.b16 %v6121
    %v6357 = vunpack.c.h.b16 %v6121
    %v6358 = vunpack.c.l.b16 %v6122
    %v6359 = vunpack.c.h.b16 %v6122
    %v6360 = vunpack.c.l.b16 %v6123
    %v6361 = vunpack.c.h.b16 %v6123
    %v6362 = vunpack.c.l.b16 %v6124
    %v6363 = vunpack.c.h.b16 %v6124
    %v6364 = vunpack.c.l.b16 %v6125
    %v6365 = vunpack.c.h.b16 %v6125
    %v6366 = vunpack.c.l.b16 %v6126
    %v6367 = vunpack.c.h.b16 %v6126
    %v6368 = vunpack.c.l.b16 %v6127
    %v6369 = vunpack.c.h.b16 %v6127
    %v6370 = vunpack.c.l.b16 %v6128
    %v6371 = vunpack.c.h.b16 %v6128
    %v6372 = vunpack.c.l.b16 %v6129
    %v6373 = vunpack.c.h.b16 %v6129
    %v6374 = vunpack.c.l.b16 %v6130
    %v6375 = vunpack.c.h.b16 %v6130
    %v6376 = vunpack.c.l.b16 %v6131
    %v6377 = vunpack.c.h.b16 %v6131
    %v6378 = vunpack.c.l.b16 %v6132
    %v6379 = vunpack.c.h.b16 %v6132
    %v6380 = vunpack.c.l.b16 %v6133
    %v6381 = vunpack.c.h.b16 %v6133
    %v6382 = vunpack.c.l.b16 %v6134
    %v6383 = vunpack.c.h.b16 %v6134
    %v6384 = vunpack.c.l.b16 %v6135
    %v6385 = vunpack.c.h.b16 %v6135
    %v6386 = vunpack.c.l.b16 %v6136
    %v6387 = vunpack.c.h.b16 %v6136
    %v6388 = vunpack.c.l.b16 %v6137
    %v6389 = vunpack.c.h.b16 %v6137
    %v6390 = vunpack.c.l.b16 %v6138
    %v6391 = vunpack.c.h.b16 %v6138
    %v6392 = vunpack.c.l.b16 %v6139
    %v6393 = vunpack.c.h.b16 %v6139
    %v6394 = vunpack.c.l.b16 %v6140
    %v6395 = vunpack.c.h.b16 %v6140
    %v6396 = vunpack.c.l.b16 %v6141
    %v6397 = vunpack.c.h.b16 %v6141
    %v6398 = vunpack.c.l.b16 %v6142
    %v6399 = vunpack.c.h.b16 %v6142
    %v6400 = vunpack.c.l.b16 %v6143
    %v6401 = vunpack.c.h.b16 %v6143
    %v6402 = vunpack.c.l.b16 %v6144
    %v6403 = vunpack.c.h.b16 %v6144
    %v6404 = vunpack.c.l.b16 %v6145
    %v6405 = vunpack.c.h.b16 %v6145
    %v6406 = vunpack.c.l.b16 %v6146
    %v6407 = vunpack.c.h.b16 %v6146
    %v6408 = vunpack.c.l.b16 %v6147
    %v6409 = vunpack.c.h.b16 %v6147
    %v6410 = vunpack.c.l.b16 %v6148
    %v6411 = vunpack.c.h.b16 %v6148
    %v6412 = vunpack.c.l.b16 %v6149
    %v6413 = vunpack.c.h.b16 %v6149
    %v6414 = vunpack.c.l.b16 %v6150
    %v6415 = vunpack.c.h.b16 %v6150
    %v6416 = vunpack.c.l.b16 %v6151
    %v6417 = vunpack.c.h.b16 %v6151
    %v6418 = vunpack.c.l.b16 %v6152
    %v6419 = vunpack.c.h.b16 %v6152
    %v6420 = vunpack.c.l.b16 %v6153
    %v6421 = vunpack.c.h.b16 %v6153
    %v6422 = vunpack.c.l.b16 %v6154
    %v6423 = vunpack.c.h.b16 %v6154
    %v6424 = vunpack.c.l.b16 %v6155
    %v6425 = vunpack.c.h.b16 %v6155
    %v6426 = vunpack.c.l.b16 %v6156
    %v6427 = vunpack.c.h.b16 %v6156
    %v6428 = vunpack.c.l.b16 %v6157
    %v6429 = vunpack.c.h.b16 %v6157
    %v6430 = vunpack.c.l.b16 %v6158
    %v6431 = vunpack.c.h.b16 %v6158
    %v6432 = vunpack.c.l.b16 %v6159
    %v6433 = vunpack.c.h.b16 %v6159
    %v6434 = vunpack.c.l.b16 %v6160
    %v6435 = vunpack.c.h.b16 %v6160
    %v6436 = vunpack.c.l.b16 %v6161
    %v6437 = vunpack.c.h.b16 %v6161
    %v6438 = vunpack.c.l.b16 %v6162
    %v6439 = vunpack.c.h.b16 %v6162
    %v6440 = vunpack.c.l.b16 %v6163
    %v6441 = vunpack.c.h.b16 %v6163
    %v6442 = vunpack.c.l.b16 %v6164
    %v6443 = vunpack.c.h.b16 %v6164
    %v6444 = vunpack.c.l.b16 %v6165
    %v6445 = vunpack.c.h.b16 %v6165
    %v6446 = vunpack.c.l.b16 %v6166
    %v6447 = vunpack.c.h.b16 %v6166
    %v6448 = vunpack.c.l.b16 %v6167
    %v6449 = vunpack.c.h.b16 %v6167
    %v6450 = vunpack.c.l.b16 %v6168
    %v6451 = vunpack.c.h.b16 %v6168
    %v6452 = vunpack.c.l.b16 %v6169
    %v6453 = vunpack.c.h.b16 %v6169
    %v6454 = vunpack.c.l.b16 %v6170
    %v6455 = vunpack.c.h.b16 %v6170
    %v6456 = vunpack.c.l.b16 %v6171
    %v6457 = vunpack.c.h.b16 %v6171
    %v6458 = vunpack.c.l.b16 %v6172
    %v6459 = vunpack.c.h.b16 %v6172
    %v6460 = vunpack.c.l.b16 %v6173
    %v6461 = vunpack.c.h.b16 %v6173
    %v6462 = vpack.c.b16 %v6276, %v6270
    %v6463 = vpack.c.b16 %v6277, %v6271
    %v6464 = vpack.c.b16 %v6278, %v6272
    %v6465 = vpack.c.b16 %v6279, %v6273
    %v6466 = vpack.c.b16 %v6280, %v6274
    %v6467 = vpack.c.b16 %v6281, %v6275
    %v6468 = vpack.c.b16 %v6288, %v6282
    %v6469 = vpack.c.b16 %v6289, %v6283
    %v6470 = vpack.c.b16 %v6290, %v6284
    %v6471 = vpack.c.b16 %v6291, %v6285
    %v6472 = vpack.c.b16 %v6292, %v6286
    %v6473 = vpack.c.b16 %v6293, %v6287
    %v6474 = vpack.c.b16 %v6300, %v6294
    %v6475 = vpack.c.b16 %v6301, %v6295
    %v6476 = vpack.c.b16 %v6302, %v6296
    %v6477 = vpack.c.b16 %v6303, %v6297
    %v6478 = vpack.c.b16 %v6304, %v6298
    %v6479 = vpack.c.b16 %v6305, %v6299
    %v6480 = vpack.c.b16 %v6312, %v6306
    %v6481 = vpack.c.b16 %v6313, %v6307
    %v6482 = vpack.c.b16 %v6314, %v6308
    %v6483 = vpack.c.b16 %v6315, %v6309
    %v6484 = vpack.c.b16 %v6316, %v6310
    %v6485 = vpack.c.b16 %v6317, %v6311
    %v6486 = vpack.c.b16 %v6324, %v6318
    %v6487 = vpack.c.b16 %v6325, %v6319
    %v6488 = vpack.c.b16 %v6326, %v6320
    %v6489 = vpack.c.b16 %v6327, %v6321
    %v6490 = vpack.c.b16 %v6328, %v6322
    %v6491 = vpack.c.b16 %v6329, %v6323
    %v6492 = vpack.c.b16 %v6336, %v6330
    %v6493 = vpack.c.b16 %v6337, %v6331
    %v6494 = vpack.c.b16 %v6338, %v6332
    %v6495 = vpack.c.b16 %v6339, %v6333
    %v6496 = vpack.c.b16 %v6340, %v6334
    %v6497 = vpack.c.b16 %v6341, %v6335
    %v6498 = vpack.c.b16 %v6348, %v6342
    %v6499 = vpack.c.b16 %v6349, %v6343
    %v6500 = vpack.c.b16 %v6350, %v6344
    %v6501 = vpack.c.b16 %v6351, %v6345
    %v6502 = vpack.c.b16 %v6352, %v6346
    %v6503 = vpack.c.b16 %v6353, %v6347
    %v6504 = vpack.c.b16 %v6360, %v6354
    %v6505 = vpack.c.b16 %v6361, %v6355
    %v6506 = vpack.c.b16 %v6362, %v6356
    %v6507 = vpack.c.b16 %v6363, %v6357
    %v6508 = vpack.c.b16 %v6364, %v6358
    %v6509 = vpack.c.b16 %v6365, %v6359
    %v6510 = vpack.c.b16 %v6372, %v6366
    %v6511 = vpack.c.b16 %v6373, %v6367
    %v6512 = vpack.c.b16 %v6374, %v6368
    %v6513 = vpack.c.b16 %v6375, %v6369
    %v6514 = vpack.c.b16 %v6376, %v6370
    %v6515 = vpack.c.b16 %v6377, %v6371
    %v6516 = vpack.c.b16 %v6384, %v6378
    %v6517 = vpack.c.b16 %v6385, %v6379
    %v6518 = vpack.c.b16 %v6386, %v6380
    %v6519 = vpack.c.b16 %v6387, %v6381
    %v6520 = vpack.c.b16 %v6388, %v6382
    %v6521 = vpack.c.b16 %v6389, %v6383
    %v6522 = vpack.c.b16 %v6396, %v6390
    %v6523 = vpack.c.b16 %v6397, %v6391
    %v6524 = vpack.c.b16 %v6398, %v6392
    %v6525 = vpack.c.b16 %v6399, %v6393
    %v6526 = vpack.c.b16 %v6400, %v6394
    %v6527 = vpack.c.b16 %v6401, %v6395
    %v6528 = vpack.c.b16 %v6408, %v6402
    %v6529 = vpack.c.b16 %v6409, %v6403
    %v6530 = vpack.c.b16 %v6410, %v6404
    %v6531 = vpack.c.b16 %v6411, %v6405
    %v6532 = vpack.c.b16 %v6412, %v6406
    %v6533 = vpack.c.b16 %v6413, %v6407
    %v6534 = vpack.c.b16 %v6420, %v6414
    %v6535 = vpack.c.b16 %v6421, %v6415
    %v6536 = vpack.c.b16 %v6422, %v6416
    %v6537 = vpack.c.b16 %v6423, %v6417
    %v6538 = vpack.c.b16 %v6424, %v6418
    %v6539 = vpack.c.b16 %v6425, %v6419
    %v6540 = vpack.c.b16 %v6432, %v6426
    %v6541 = vpack.c.b16 %v6433, %v6427
    %v6542 = vpack.c.b16 %v6434, %v6428
    %v6543 = vpack.c.b16 %v6435, %v6429
    %v6544 = vpack.c.b16 %v6436, %v6430
    %v6545 = vpack.c.b16 %v6437, %v6431
    %v6546 = vpack.c.b16 %v6444, %v6438
    %v6547 = vpack.c.b16 %v6445, %v6439
    %v6548 = vpack.c.b16 %v6446, %v6440
    %v6549 = vpack.c.b16 %v6447, %v6441
    %v6550 = vpack.c.b16 %v6448, %v6442
    %v6551 = vpack.c.b16 %v6449, %v6443
    %v6552 = vpack.c.b16 %v6456, %v6450
    %v6553 = vpack.c.b16 %v6457, %v6451
    %v6554 = vpack.c.b16 %v6458, %v6452
    %v6555 = vpack.c.b16 %v6459, %v6453
    %v6556 = vpack.c.b16 %v6460, %v6454
    %v6557 = vpack.c.b16 %v6461, %v6455
    %6654 = vmatprep.subr.bf16.mxu0 %v6463
    %6655 = vmatpush1.bf16.msra.mxu0 %v6462
    %6656 = vmatprep.subr.bf16.mxu0 %v6469
    %6657 = vmatpush1.bf16.msra.mxu0 %v6468
    %6658 = vmatprep.subr.bf16.mxu0 %v6475
    %6659 = vmatpush1.bf16.msra.mxu0 %v6474
    %6660 = vmatprep.subr.bf16.mxu0 %v6481
    %6661 = vmatpush1.bf16.msra.mxu0 %v6480
    %6662 = vmatprep.subr.bf16.mxu0 %v6487
    %6663 = vmatpush1.bf16.msra.mxu0 %v6486
    %6664 = vmatprep.subr.bf16.mxu0 %v6493
    %6665 = vmatpush1.bf16.msra.mxu0 %v6492
    %6666 = vmatprep.subr.bf16.mxu0 %v6499
    %6667 = vmatpush1.bf16.msra.mxu0 %v6498
    %6668 = vmatprep.subr.bf16.mxu0 %v6505
    %6669 = vmatpush1.bf16.msra.mxu0 %v6504
    %6670 = vmatprep.subr.bf16.mxu0 %v6511
    %6671 = vmatpush1.bf16.msra.mxu0 %v6510
    %6672 = vmatprep.subr.bf16.mxu0 %v6517
    %6673 = vmatpush1.bf16.msra.mxu0 %v6516
    %6674 = vmatprep.subr.bf16.mxu0 %v6523
    %6675 = vmatpush1.bf16.msra.mxu0 %v6522
    %6676 = vmatprep.subr.bf16.mxu0 %v6529
    %6677 = vmatpush1.bf16.msra.mxu0 %v6528
    %6678 = vmatprep.subr.bf16.mxu0 %v6535
    %6679 = vmatpush1.bf16.msra.mxu0 %v6534
    %6680 = vmatprep.subr.bf16.mxu0 %v6541
    %6681 = vmatpush1.bf16.msra.mxu0 %v6540
    %6682 = vmatprep.subr.bf16.mxu0 %v6547
    %6683 = vmatpush1.bf16.msra.mxu0 %v6546
    %6684 = vmatprep.subr.bf16.mxu0 %v6553
    %6685 = vmatpush1.bf16.msra.mxu0 %v6552
    %6686 = vmatprep.mubr.bf16.mxu0 %v6077
    %6687 = vmatmul.mubr.bf16.gmra.mrb[0].mxu0 %v6076
    %v6688 = vpop.f32.mrb[0].mxu0
    %v6689 = vadd.f32 0.0, %v6688
    %v6690 = vpop.f32.mrb[0].mxu0
    %v6691 = vadd.f32 0.0, %v6690
    %v6692 = vpop.f32.mrb[0].mxu0
    %v6693 = vpop.f32.mrb[0].mxu0
    %6694 = vdwg.mxu0
    %6695 = vmatprep.subr.bf16.mxu0 %v6465
    %6696 = vmatpush1.bf16.msra.mxu0 %v6464
    %6697 = vmatprep.subr.bf16.mxu0 %v6471
    %6698 = vmatpush1.bf16.msra.mxu0 %v6470
    %6699 = vmatprep.subr.bf16.mxu0 %v6477
    %6700 = vmatpush1.bf16.msra.mxu0 %v6476
    %6701 = vmatprep.subr.bf16.mxu0 %v6483
    %6702 = vmatpush1.bf16.msra.mxu0 %v6482
    %6703 = vmatprep.subr.bf16.mxu0 %v6489
    %6704 = vmatpush1.bf16.msra.mxu0 %v6488
    %6705 = vmatprep.subr.bf16.mxu0 %v6495
    %6706 = vmatpush1.bf16.msra.mxu0 %v6494
    %6707 = vmatprep.subr.bf16.mxu0 %v6501
    %6708 = vmatpush1.bf16.msra.mxu0 %v6500
    %6709 = vmatprep.subr.bf16.mxu0 %v6507
    %6710 = vmatpush1.bf16.msra.mxu0 %v6506
    %6711 = vmatprep.subr.bf16.mxu0 %v6513
    %6712 = vmatpush1.bf16.msra.mxu0 %v6512
    %6713 = vmatprep.subr.bf16.mxu0 %v6519
    %6714 = vmatpush1.bf16.msra.mxu0 %v6518
    %6715 = vmatprep.subr.bf16.mxu0 %v6525
    %6716 = vmatpush1.bf16.msra.mxu0 %v6524
    %6717 = vmatprep.subr.bf16.mxu0 %v6531
    %6718 = vmatpush1.bf16.msra.mxu0 %v6530
    %6719 = vmatprep.subr.bf16.mxu0 %v6537
    %6720 = vmatpush1.bf16.msra.mxu0 %v6536
    %6721 = vmatprep.subr.bf16.mxu0 %v6543
    %6722 = vmatpush1.bf16.msra.mxu0 %v6542
    %6723 = vmatprep.subr.bf16.mxu0 %v6549
    %6724 = vmatpush1.bf16.msra.mxu0 %v6548
    %6725 = vmatprep.subr.bf16.mxu0 %v6555
    %6726 = vmatpush1.bf16.msra.mxu0 %v6554
    %6727 = vmatprep.mubr.bf16.mxu0 %v6077
    %6728 = vmatmul.mubr.bf16.gmra.mrb[0].mxu0 %v6076
    %v6729 = vpop.f32.mrb[0].mxu0
    %v6730 = vadd.f32 0.0, %v6729
    %v6731 = vpop.f32.mrb[0].mxu0
    %v6732 = vadd.f32 0.0, %v6731
    %v6733 = vpop.f32.mrb[0].mxu0
    %v6734 = vpop.f32.mrb[0].mxu0
    %6735 = vdwg.mxu0
    %6736 = vmatprep.subr.bf16.mxu0 %v6467
    %6737 = vmatpush1.bf16.msra.mxu0 %v6466
    %6738 = vmatprep.subr.bf16.mxu0 %v6473
    %6739 = vmatpush1.bf16.msra.mxu0 %v6472
    %6740 = vmatprep.subr.bf16.mxu0 %v6479
    %6741 = vmatpush1.bf16.msra.mxu0 %v6478
    %6742 = vmatprep.subr.bf16.mxu0 %v6485
    %6743 = vmatpush1.bf16.msra.mxu0 %v6484
    %6744 = vmatprep.subr.bf16.mxu0 %v6491
    %6745 = vmatpush1.bf16.msra.mxu0 %v6490
    %6746 = vmatprep.subr.bf16.mxu0 %v6497
    %6747 = vmatpush1.bf16.msra.mxu0 %v6496
    %6748 = vmatprep.subr.bf16.mxu0 %v6503
    %6749 = vmatpush1.bf16.msra.mxu0 %v6502
    %6750 = vmatprep.subr.bf16.mxu0 %v6509
    %6751 = vmatpush1.bf16.msra.mxu0 %v6508
    %6752 = vmatprep.subr.bf16.mxu0 %v6515
    %6753 = vmatpush1.bf16.msra.mxu0 %v6514
    %6754 = vmatprep.subr.bf16.mxu0 %v6521
    %6755 = vmatpush1.bf16.msra.mxu0 %v6520
    %6756 = vmatprep.subr.bf16.mxu0 %v6527
    %6757 = vmatpush1.bf16.msra.mxu0 %v6526
    %6758 = vmatprep.subr.bf16.mxu0 %v6533
    %6759 = vmatpush1.bf16.msra.mxu0 %v6532
    %6760 = vmatprep.subr.bf16.mxu0 %v6539
    %6761 = vmatpush1.bf16.msra.mxu0 %v6538
    %6762 = vmatprep.subr.bf16.mxu0 %v6545
    %6763 = vmatpush1.bf16.msra.mxu0 %v6544
    %6764 = vmatprep.subr.bf16.mxu0 %v6551
    %6765 = vmatpush1.bf16.msra.mxu0 %v6550
    %6766 = vmatprep.subr.bf16.mxu0 %v6557
    %6767 = vmatpush1.bf16.msra.mxu0 %v6556
    %6768 = vmatprep.mubr.bf16.mxu0 %v6077
    %6769 = vmatmul.mubr.bf16.gmra.mrb[0].mxu0 %v6076
    %v6770 = vpop.f32.mrb[0].mxu0
    %v6771 = vadd.f32 0.0, %v6770
    %v6772 = vpop.f32.mrb[0].mxu0
    %v6773 = vadd.f32 0.0, %v6772
    %v6774 = vpop.f32.mrb[0].mxu0
    %v6775 = vpop.f32.mrb[0].mxu0
    %6776 = vdwg.mxu0
    %s6777 = scalar_lea.vmem [#allocation2], 168
    %v6778 = vld [vmem:[%s6777] sm:$0xff]
    %v6779 = vld [vmem:[%s6777 + $0x8] sm:$0xff]
    %v6780 = vld [vmem:[%s6777 + $0x10] sm:$0xff]
    %v6781 = vld [vmem:[#allocation3] sm:$0xff]
    %v6782 = vld [vmem:[#allocation3 + $0x8] sm:$0xff]
    %v6783 = vld [vmem:[#allocation3 + $0x10] sm:$0xff]
    %v6784 = vadd.f32 %v6778, %v6689
    %v6785 = vadd.f32 %v6779, %v6691
    %v6786 = vxor.u32 %v6784, 2147483648
    %v6787 = vxor.u32 %v6785, 2147483648
    %v6788 = vmul.f32 %v6786, 1.442695
    %v6789 = vpow.pop %v6788
    %v6790 = vmul.f32 %v6787, 1.442695
    %v6791 = vpow.pop %v6790
    %v6792 = vadd.f32 %v6789, 1.0
    %v6793 = vadd.f32 %v6791, 1.0
    %v6794 = vrcp.pop %v6792
    %v6795 = vmul.f32 1.0, %v6794
    %v6796 = vrcp.pop %v6793
    %v6797 = vmul.f32 1.0, %v6796
    %v6798 = vadd.f32 %v6730, %v697
    %v6799 = vmul.f32 %v6795, %v6798
    %v6800 = vadd.f32 %v6780, %v6799
    %v6801 = vtanh.pop %v6800
    %v6802 = vsub.f32 1.0, %v6797
    %v6803 = vmul.f32 %v6802, %v6801
    %v6804 = vmul.f32 %v6797, %v6074
    %v6805 = vadd.f32 %v6803, %v6804
    %v6806 = vadd.f32 %v6781, %v6732
    %v6807 = vadd.f32 %v6782, %v6771
    %v6808 = vxor.u32 %v6806, 2147483648
    %v6809 = vxor.u32 %v6807, 2147483648
    %v6810 = vmul.f32 %v6808, 1.442695
    %v6811 = vpow.pop %v6810
    %v6812 = vmul.f32 %v6809, 1.442695
    %v6813 = vpow.pop %v6812
    %v6814 = vadd.f32 %v6811, 1.0
    %v6815 = vadd.f32 %v6813, 1.0
    %v6816 = vrcp.pop %v6814
    %v6817 = vmul.f32 1.0, %v6816
    %v6818 = vrcp.pop %v6815
    %v6819 = vmul.f32 1.0, %v6818
    %v6820 = vadd.f32 %v6773, %v704
    %v6821 = vmul.f32 %v6817, %v6820
    %v6822 = vadd.f32 %v6783, %v6821
    %v6823 = vtanh.pop %v6822
    %v6824 = vsub.f32 1.0, %v6819
    %v6825 = vmul.f32 %v6824, %v6823
    %v6826 = vmul.f32 %v6819, %v6075
    %v6827 = vadd.f32 %v6825, %v6826
    %v6828 = vsel %vm1470, %v6805, 0.0
    %s6829 = scalar_lea.vmem [#allocation11], 56
    %6830 = vst [vmem:[%s6829] sm:$0xff] %v6828
    %v6831 = vsel %vm1463, %v6827, 0.0
    %6832 = vst [vmem:[#allocation4] sm:$0xff] %v6831
    %v6833 = vsel %vm1470, %v6805, %v6074
    %v6834 = vsel %vm1463, %v6827, %v6075
    %v6835 = vld [vmem:[#allocation11] sm:$0xff]
    %v6836 = vld [vmem:[#allocation11 + $0x8] sm:$0xff]
    %v6837 = vld [vmem:[#allocation11 + $0x10] sm:$0xff]
    %v6838 = vld [vmem:[#allocation11 + $0x18] sm:$0xff]
    %v6839 = vld [vmem:[#allocation11 + $0x20] sm:$0xff]
    %v6840 = vld [vmem:[#allocation11 + $0x28] sm:$0xff]
    %v6841 = vld [vmem:[#allocation11 + $0x30] sm:$0xff]
    %v6842 = vld [vmem:[#allocation11 + $0x38] sm:$0xff]
    %v6843 = vld [vmem:[#allocation4] sm:$0xff]
    %v6844 = vld [vmem:[#allocation4 + $0x8] sm:$0xff]
    %v6845 = vld [vmem:[#allocation4 + $0x10] sm:$0xff]
    %v6846 = vld [vmem:[#allocation4 + $0x18] sm:$0xff]
    %v6847 = vld [vmem:[#allocation4 + $0x20] sm:$0xff]
    %v6848 = vld [vmem:[#allocation4 + $0x28] sm:$0xff]
    %v6849 = vld [vmem:[#allocation4 + $0x30] sm:$0xff]
    %v6850 = vld [vmem:[#allocation4 + $0x38] sm:$0xff]
    %v6851 = vadd.f32 %v6835, %v6843
    %v6852 = vadd.f32 %v6836, %v6844
    %v6853 = vadd.f32 %v6837, %v6845
    %v6854 = vadd.f32 %v6838, %v6846
    %v6855 = vadd.f32 %v6839, %v6847
    %v6856 = vadd.f32 %v6840, %v6848
    %v6857 = vadd.f32 %v6841, %v6849
    %v6858 = vadd.f32 %v6842, %v6850
    %6859 = vst [vmem:[#allocation11] sm:$0xff] %v6851
    %6860 = vst [vmem:[#allocation11 + $0x8] sm:$0xff] %v6852
    %6861 = vst [vmem:[#allocation11 + $0x10] sm:$0xff] %v6853
    %6862 = vst [vmem:[#allocation11 + $0x18] sm:$0xff] %v6854
    %6863 = vst [vmem:[#allocation11 + $0x20] sm:$0xff] %v6855
    %6864 = vst [vmem:[#allocation11 + $0x28] sm:$0xff] %v6856
    %6865 = vst [vmem:[#allocation11 + $0x30] sm:$0xff] %v6857
    %6866 = vst [vmem:[#allocation11 + $0x38] sm:$0xff] %v6858
    %6867 = vst [vmem:[#allocation12] sm:$0xff] %v6833
    %s6868 = scalar_lea.vmem [#allocation12], 8
    %6869 = vst [vmem:[%s6868] sm:$0xff] %v6834
    // Predicated region
    $region42: #{tpu_custom_call.1} parent=1 // pred_check
      _
    $region43: #{tpu_custom_call.1} parent=1 // pred_check_branch
      %6871 = sbr.rel (0) target = $region45
    $region44: #{tpu_custom_call.1} parent=1 // pred_region
      %s6873 = ssub.s32 1024, 1024
      %6874 = vsyncadd [#allocation7], %s6873
      %s6875 = sshll.u32 [#allocation11], 4
      %s6876 = int_to_ptr.vmem [resolvable:$true] %s6875
      %6881 = dma.vmem_to_hbm [thread:$0]  %s6876, 1024, %s7, [#allocation7], 128, 128, 8
    $region45: #{tpu_custom_call.1} parent=1 // pred_fallthru
      _
    // Predicated region
    $region46: #{tpu_custom_call.1} parent=1 // pred_check
      _
    $region47: #{tpu_custom_call.1} parent=1 // pred_check_branch
      %6883 = sbr.rel (0) target = $region49
    $region48: #{tpu_custom_call.1} parent=1 // pred_region
      %s6885 = ssub.s32 256, 256
      %6886 = vsyncadd [#allocation13], %s6885
      %s6887 = sshll.u32 [#allocation12], 4
      %s6888 = int_to_ptr.vmem [resolvable:$true] %s6887
      %6893 = dma.vmem_to_hbm [thread:$0]  %s6888, 256, %s8, [#allocation13], 128, 128, 8
    $region49: #{tpu_custom_call.1} parent=1 // pred_fallthru
      _
    // Predicated region
    $region50: #{tpu_custom_call.1} parent=1 // pred_check
      _
    $region51: #{tpu_custom_call.1} parent=1 // pred_check_branch
      %6895 = sbr.rel (0) target = $region53
    $region52: #{tpu_custom_call.1} parent=1 // pred_region
      %6896 = dma.done [#allocation7], 1024
    $region53: #{tpu_custom_call.1} parent=1 // pred_fallthru
      _
    // Predicated region
    $region54: #{tpu_custom_call.1} parent=1 // pred_check
      _
    $region55: #{tpu_custom_call.1} parent=1 // pred_check_branch
      %6898 = sbr.rel (0) target = $region57
    $region56: #{tpu_custom_call.1} parent=1 // pred_region
      %6899 = dma.done [#allocation13], 256
    $region57: #{tpu_custom_call.1} parent=1 // pred_fallthru
      _
    %6900 = vsyncpa [#allocation6], 1
    %6901 = vsyncpa [#allocation9], 1
    %6902 = vsyncpa [#allocation7], 1
    %6903 = vsyncpa [#allocation13], 1

</llo_original>
